<compile_context>
chip_gen: v7x
topology: tpu7x:2x2x1
jax: 0.10.0
libtpu: 0.0.40
codegen_flags: <defaults>
</compile_context>

<pallas_src>
import functools

import jax
import jax.numpy as jnp
from jax import lax
from jax.experimental import pallas as pl
from jax.experimental.pallas import tpu as pltpu


# ----------------------------------------------------------------------------
# Kernel 1: one GRU layer, both directions (grid=(2,) over direction).
#   x_ref   : (P, T*B, Din)   shared input (P=1 for layer 0, P=2 afterwards)
#   wih_ref : (1, P*3, Din, H) this direction's input weights, index p*3+g,
#                              gate order [r, z, n] (PyTorch convention)
#   whh_ref : (1, 3, H, H)     this direction's recurrent weights
#   bih_ref : (1, 3, 1, H)     input biases
#   bhh_ref : (1, 3, 1, H)     recurrent biases
#   len_ref : (B, 1) int32     per-example valid lengths
#   out_ref : (1, T*B, H)      this direction's output slot
# ----------------------------------------------------------------------------
def _gru_layer_kernel(x_ref, wih_ref, whh_ref, bih_ref, bhh_ref, len_ref,
                      out_ref, gi_r_ref, gi_z_ref, gi_n_ref,
                      *, hid_dim, n_parts, t_len, batch):
    H, P, T, B = hid_dim, n_parts, t_len, batch
    is_bw = pl.program_id(0) == 1

    # --- input projection hoisted out of the recurrence: one big matmul per
    #     gate over all T*B rows instead of T tiny per-step matmuls.
    gi_refs = (gi_r_ref, gi_z_ref, gi_n_ref)
    for g in range(3):
        acc = jnp.dot(x_ref[0], wih_ref[0, g],
                      preferred_element_type=jnp.float32)
        for p in range(1, P):
            acc = acc + jnp.dot(x_ref[p], wih_ref[0, p * 3 + g],
                                preferred_element_type=jnp.float32)
        bias = bih_ref[0, g]
        if g < 2:                       # fold recurrent bias for r, z gates
            bias = bias + bhh_ref[0, g]
        gi_refs[g][...] = acc + bias    # (T*B, H)

    whh_r = whh_ref[0, 0]
    whh_z = whh_ref[0, 1]
    whh_n = whh_ref[0, 2]

    # Hoisted broadcasts (JAX does not CSE broadcast_in_dim inside the loop).
    len_bh = jnp.broadcast_to(len_ref[...], (B, H))
    bhh_n_bh = jnp.broadcast_to(bhh_ref[0, 2], (B, H))  # stays inside r*(...)

    def step(i, h):
        t = jnp.where(is_bw, T - 1 - i, i)
        row = pl.multiple_of(t * B, B)
        g_r = gi_r_ref[pl.ds(row, B), :]
        g_z = gi_z_ref[pl.ds(row, B), :]
        g_n = gi_n_ref[pl.ds(row, B), :]
        r = jax.nn.sigmoid(g_r + jnp.dot(h, whh_r,
                                         preferred_element_type=jnp.float32))
        z = jax.nn.sigmoid(g_z + jnp.dot(h, whh_z,
                                         preferred_element_type=jnp.float32))
        n = jnp.tanh(g_n + r * (jnp.dot(h, whh_n,
                                        preferred_element_type=jnp.float32)
                                + bhh_n_bh))
        h_cand = (1.0 - z) * n + z * h

        valid = t < len_bh                         # packed-sequence mask
        h_next = jnp.where(valid, h_cand, h)       # skip update past length
        out_ref[0, pl.ds(row, B), :] = jnp.where(valid, h_cand, 0.0)
        return h_next

    lax.fori_loop(0, T, step, jnp.zeros((B, H), jnp.float32), unroll=True)


def gru_layer(x_flat, w_ih, w_hh, b_ih, b_hh, len2d, *, hid_dim, t_len, batch):
    P, TB, Din = x_flat.shape
    H = hid_dim
    kernel = functools.partial(_gru_layer_kernel, hid_dim=H, n_parts=P,
                               t_len=t_len, batch=batch)
    return pl.pallas_call(
        kernel,
        out_shape=jax.ShapeDtypeStruct((2, TB, H), jnp.float32),
        grid=(2,),
        in_specs=[
            pl.BlockSpec((P, TB, Din), lambda d: (0, 0, 0)),
            pl.BlockSpec((1, 3 * P, Din, H), lambda d: (d, 0, 0, 0)),
            pl.BlockSpec((1, 3, H, H), lambda d: (d, 0, 0, 0)),
            pl.BlockSpec((1, 3, 1, H), lambda d: (d, 0, 0, 0)),
            pl.BlockSpec((1, 3, 1, H), lambda d: (d, 0, 0, 0)),
            pl.BlockSpec((batch, 1), lambda d: (0, 0)),
        ],
        out_specs=pl.BlockSpec((1, TB, H), lambda d: (d, 0, 0)),
        scratch_shapes=[pltpu.VMEM((TB, H), jnp.float32),
                        pltpu.VMEM((TB, H), jnp.float32),
                        pltpu.VMEM((TB, H), jnp.float32)],
        compiler_params=pltpu.CompilerParams(
            dimension_semantics=("parallel",)),   # 2 directions -> 2 TCs on v7x
    )(x_flat, w_ih, w_hh, b_ih, b_hh, len2d)


# ----------------------------------------------------------------------------
# Kernel 2: fw+bw combine, max/mean pooling over time, Linear + sigmoid.
# ----------------------------------------------------------------------------
def _pool_out_kernel(y_ref, wmean_ref, wmax_ref, bout_ref, tdiv_ref,
                     logits_ref):
    comb = y_ref[0] + y_ref[1]                   # (T, B, H)  fw + bw
    # Note: padded timesteps are 0, so max includes zeros for padded rows —
    # same as torch.max over pad_packed_sequence output.
    max_pooled = jnp.max(comb, axis=0)           # (B, H)
    mean_pooled = jnp.sum(comb, axis=0) * (1.0 / tdiv_ref[...])  # / max(lengths)
    logits = (jnp.dot(mean_pooled, wmean_ref[...],
                      preferred_element_type=jnp.float32)
              + jnp.dot(max_pooled, wmax_ref[...],
                        preferred_element_type=jnp.float32)
              + bout_ref[...])
    logits_ref[...] = jax.nn.sigmoid(logits)


def pool_and_project(y, w_mean, w_max, b_out2d, t_div):
    _, T, B, H = y.shape
    O = w_mean.shape[1]
    return pl.pallas_call(
        _pool_out_kernel,
        out_shape=jax.ShapeDtypeStruct((B, O), jnp.float32),
        grid=(1,),
        in_specs=[
            pl.BlockSpec((2, T, B, H), lambda i: (0, 0, 0, 0)),
            pl.BlockSpec((H, O), lambda i: (0, 0)),
            pl.BlockSpec((H, O), lambda i: (0, 0)),
            pl.BlockSpec((1, O), lambda i: (0, 0)),
            pl.BlockSpec((1, 1), lambda i: (0, 0)),
        ],
        out_specs=pl.BlockSpec((B, O), lambda i: (0, 0)),
    )(y, w_mean, w_max, b_out2d, t_div)


# ----------------------------------------------------------------------------
# Parameter initialization (deterministic; shapes follow nn.Module __init__).
# Gate order along the gate axis is [r, z, n] like torch.nn.GRU; for l > 0
# "part" 0 / 1 are the rows of PyTorch's weight_ih that multiply the forward /
# backward halves of the concatenated input (so no concat is needed).
# ----------------------------------------------------------------------------
def init_params(key, input_dim, emb_dim, hid_dim, output_dim, n_layers,
                pad_idx):
    params = {}
    k_iter = iter(jax.random.split(key, 2 + 4 * n_layers))

    emb = jax.random.normal(next(k_iter), (input_dim, emb_dim), jnp.float32)
    emb = emb.at[pad_idx].set(0.0)              # padding_idx row is zero
    params["embedding"] = emb

    k_gru = 1.0 / (hid_dim ** 0.5)
    u = lambda kk, shape: jax.random.uniform(kk, shape, jnp.float32,
                                             -k_gru, k_gru)
    for l in range(n_layers):
        P = 1 if l == 0 else 2
        din = emb_dim if l == 0 else hid_dim
        params[f"w_ih_l{l}"] = u(next(k_iter), (2, P * 3, din, hid_dim))
        params[f"w_hh_l{l}"] = u(next(k_iter), (2, 3, hid_dim, hid_dim))
        params[f"b_ih_l{l}"] = u(next(k_iter), (2, 3, 1, hid_dim))
        params[f"b_hh_l{l}"] = u(next(k_iter), (2, 3, 1, hid_dim))

    k_lin = 1.0 / ((2 * hid_dim) ** 0.5)
    params["w_out"] = jax.random.uniform(next(k_iter),
                                         (2 * hid_dim, output_dim),
                                         jnp.float32, -k_lin, k_lin)
    params["b_out"] = jnp.zeros((output_dim,), jnp.float32)
    return params


# ----------------------------------------------------------------------------
# Full forward pass (embedding gather is plain-JAX glue).  Fully jittable:
# no host sync on lengths.
# ----------------------------------------------------------------------------
def bigru_forward(params, src, src_length, hid_dim, n_layers):
    T, B = src.shape
    lengths = jnp.asarray(src_length, jnp.int32)
    len2d = lengths.reshape(B, 1)
    # pad_packed_sequence length (max of lengths), as a device scalar.
    t_div = jnp.max(lengths).astype(jnp.float32).reshape(1, 1)

    embedded = jnp.take(params["embedding"], src, axis=0).astype(jnp.float32)
    x_flat = embedded.reshape(1, T * B, -1)      # (P=1, T*B, E); dropout = id

    y_flat = None
    for l in range(n_layers):
        y_flat = gru_layer(x_flat,
                           params[f"w_ih_l{l}"], params[f"w_hh_l{l}"],
                           params[f"b_ih_l{l}"], params[f"b_hh_l{l}"],
                           len2d, hid_dim=hid_dim, t_len=T, batch=B)
        x_flat = y_flat                          # (2, T*B, H) — no concat

    y = y_flat.reshape(2, T, B, hid_dim)         # free contiguous reshape
    H = hid_dim
    w_out = params["w_out"]
    return pool_and_project(y, w_out[:H], w_out[H:],
                            params["b_out"].reshape(1, -1), t_div)


# ----------------------------------------------------------------------------
if __name__ == "__main__":
    INPUT_DIM = 64      # vocab size
    EMB_DIM = 64
    HID_DIM = 128       # lane-aligned hidden size
    OUTPUT_DIM = 6      # toxic-comment labels
    N_LAYERS = 2
    PAD_IDX = 0
    SEQ_LEN = 12
    BATCH = 8           # sublane-aligned batch

    key = jax.random.PRNGKey(0)
    k_param, k_tok = jax.random.split(key)

    params = init_params(k_param, INPUT_DIM, EMB_DIM, HID_DIM, OUTPUT_DIM,
                         N_LAYERS, PAD_IDX)

    # lengths sorted descending (pack_padded_sequence enforce_sorted=True);
    # max(lengths) == SEQ_LEN as pack/pad_packed would produce.
    src_length = jnp.array([12, 11, 9, 8, 6, 5, 3, 2], dtype=jnp.int32)
    src = jax.random.randint(k_tok, (SEQ_LEN, BATCH), 1, INPUT_DIM,
                             dtype=jnp.int32)
    t_idx = jnp.arange(SEQ_LEN)[:, None]                 # (T, 1)
    src = jnp.where(t_idx < src_length[None, :], src, PAD_IDX)

    fwd = jax.jit(functools.partial(bigru_forward, hid_dim=HID_DIM,
                                    n_layers=N_LAYERS))
    logits = fwd(params, src, src_length)
    logits = jax.block_until_ready(logits)

    assert logits.shape == (BATCH, OUTPUT_DIM)
    assert bool(jnp.all(jnp.isfinite(logits)))
    print("KERNEL_OK")
</pallas_src>

<mosaic_0001>
module attributes {stable_mosaic.version = 11 : i64} {
  func.func @_pool_out_kernel(%arg0: i32, %arg1: memref<2x12x8x128xf32, #tpu.memory_space<vmem>>, %arg2: memref<128x6xf32, #tpu.memory_space<vmem>>, %arg3: memref<128x6xf32, #tpu.memory_space<vmem>>, %arg4: memref<1x6xf32, #tpu.memory_space<vmem>>, %arg5: memref<1x1xf32, #tpu.memory_space<vmem>>, %arg6: memref<8x6xf32, #tpu.memory_space<vmem>>) attributes {dimension_semantics = [#tpu.dimension_semantics<arbitrary>], iteration_bounds = array<i64: 1>, scalar_prefetch = 0 : i64, scratch_operands = 0 : i64, tpu.core_type = #tpu.core_type<tc>, window_params = [{pipeline_mode = #tpu.pipeline_mode<synchronous>, transform_indices = @transform_0, window_bounds = array<i64: 2, 12, 8, 128>}, {pipeline_mode = #tpu.pipeline_mode<synchronous>, transform_indices = @transform_1, window_bounds = array<i64: 128, 6>}, {pipeline_mode = #tpu.pipeline_mode<synchronous>, transform_indices = @transform_2, window_bounds = array<i64: 128, 6>}, {pipeline_mode = #tpu.pipeline_mode<synchronous>, transform_indices = @transform_3, window_bounds = array<i64: 1, 6>}, {pipeline_mode = #tpu.pipeline_mode<synchronous>, transform_indices = @transform_4, window_bounds = array<i64: 1, 1>}, {pipeline_mode = #tpu.pipeline_mode<synchronous>, transform_indices = @transform_5, window_bounds = array<i64: 8, 6>}]} {
    %c0 = arith.constant 0 : index
    %c0_0 = arith.constant 0 : index
    %c0_1 = arith.constant 0 : index
    %c0_2 = arith.constant 0 : index
    %0 = vector.load %arg1[%c0, %c0_0, %c0_1, %c0_2] : memref<2x12x8x128xf32, #tpu.memory_space<vmem>>, vector<1x12x8x128xf32>
    %1 = vector.shape_cast %0 : vector<1x12x8x128xf32> to vector<12x8x128xf32>
    %c1 = arith.constant 1 : index
    %c0_3 = arith.constant 0 : index
    %c0_4 = arith.constant 0 : index
    %c0_5 = arith.constant 0 : index
    %2 = vector.load %arg1[%c1, %c0_3, %c0_4, %c0_5] : memref<2x12x8x128xf32, #tpu.memory_space<vmem>>, vector<1x12x8x128xf32>
    %3 = vector.shape_cast %2 : vector<1x12x8x128xf32> to vector<12x8x128xf32>
    %4 = arith.addf %1, %3 : vector<12x8x128xf32>
    %cst = arith.constant dense<0xFF800000> : vector<8x128xf32>
    %5 = vector.multi_reduction <maximumf>, %4, %cst [0] : vector<12x8x128xf32> to vector<8x128xf32>
    %cst_6 = arith.constant dense<0.000000e+00> : vector<8x128xf32>
    %6 = vector.multi_reduction <add>, %4, %cst_6 [0] : vector<12x8x128xf32> to vector<8x128xf32>
    %c0_7 = arith.constant 0 : index
    %c0_8 = arith.constant 0 : index
    %7 = vector.load %arg5[%c0_7, %c0_8] : memref<1x1xf32, #tpu.memory_space<vmem>>, vector<1x1xf32>
    %cst_9 = arith.constant 1.000000e+00 : f32
    %8 = vector.broadcast %cst_9 : f32 to vector<1x1xf32>
    %9 = arith.divf %8, %7 : vector<1x1xf32>
    %10 = vector.broadcast %9 : vector<1x1xf32> to vector<8x128xf32>
    %11 = arith.mulf %6, %10 : vector<8x128xf32>
    %c0_10 = arith.constant 0 : index
    %c0_11 = arith.constant 0 : index
    %12 = vector.load %arg2[%c0_10, %c0_11] : memref<128x6xf32, #tpu.memory_space<vmem>>, vector<128x6xf32>
    %cst_12 = arith.constant dense<0.000000e+00> : vector<8x6xf32>
    %13 = tpu.matmul %11, %12, %cst_12 {dimension_numbers = #tpu.dot_dimension_numbers<[1], [0], [0], [1], [0, 0, 1, 1], [], []>} : vector<8x128xf32>, vector<128x6xf32>, vector<8x6xf32> -> vector<8x6xf32>
    %c0_13 = arith.constant 0 : index
    %c0_14 = arith.constant 0 : index
    %14 = vector.load %arg3[%c0_13, %c0_14] : memref<128x6xf32, #tpu.memory_space<vmem>>, vector<128x6xf32>
    %cst_15 = arith.constant dense<0.000000e+00> : vector<8x6xf32>
    %15 = tpu.matmul %5, %14, %cst_15 {dimension_numbers = #tpu.dot_dimension_numbers<[1], [0], [0], [1], [0, 0, 1, 1], [], []>} : vector<8x128xf32>, vector<128x6xf32>, vector<8x6xf32> -> vector<8x6xf32>
    %16 = arith.addf %13, %15 : vector<8x6xf32>
    %c0_16 = arith.constant 0 : index
    %c0_17 = arith.constant 0 : index
    %17 = vector.load %arg4[%c0_16, %c0_17] : memref<1x6xf32, #tpu.memory_space<vmem>>, vector<1x6xf32>
    %18 = vector.broadcast %17 : vector<1x6xf32> to vector<8x6xf32>
    %19 = arith.addf %16, %18 : vector<8x6xf32>
    %20 = arith.negf %19 : vector<8x6xf32>
    %21 = math.exp %20 : vector<8x6xf32>
    %cst_18 = arith.constant 1.000000e+00 : f32
    %22 = vector.broadcast %cst_18 : f32 to vector<8x6xf32>
    %23 = arith.addf %22, %21 : vector<8x6xf32>
    %24 = arith.divf %22, %23 : vector<8x6xf32>
    %c0_19 = arith.constant 0 : index
    %c0_20 = arith.constant 0 : index
    %25 = vector.load %arg6[%c0_19, %c0_20] : memref<8x6xf32, #tpu.memory_space<vmem>>, vector<8x6xf32>
    tpu.vector_store %arg6[%c0_19, %c0_20], %24 {strides = array<i32>} : memref<8x6xf32, #tpu.memory_space<vmem>>, vector<8x6xf32>,
    return
  }
  func.func @transform_0(%arg0: i32) -> (i32, i32, i32, i32) {
    %c0_i32 = arith.constant 0 : i32
    %c0_i32_0 = arith.constant 0 : i32
    %c0_i32_1 = arith.constant 0 : i32
    %c0_i32_2 = arith.constant 0 : i32
    %c0_i32_3 = arith.constant 0 : i32
    return %c0_i32, %c0_i32_0, %c0_i32_1, %c0_i32_2 : i32, i32, i32, i32
  }
  func.func @transform_1(%arg0: i32) -> (i32, i32) {
    %c0_i32 = arith.constant 0 : i32
    %c0_i32_0 = arith.constant 0 : i32
    %c0_i32_1 = arith.constant 0 : i32
    return %c0_i32, %c0_i32_0 : i32, i32
  }
  func.func @transform_2(%arg0: i32) -> (i32, i32) {
    %c0_i32 = arith.constant 0 : i32
    %c0_i32_0 = arith.constant 0 : i32
    %c0_i32_1 = arith.constant 0 : i32
    return %c0_i32, %c0_i32_0 : i32, i32
  }
  func.func @transform_3(%arg0: i32) -> (i32, i32) {
    %c0_i32 = arith.constant 0 : i32
    %c0_i32_0 = arith.constant 0 : i32
    %c0_i32_1 = arith.constant 0 : i32
    return %c0_i32, %c0_i32_0 : i32, i32
  }
  func.func @transform_4(%arg0: i32) -> (i32, i32) {
    %c0_i32 = arith.constant 0 : i32
    %c0_i32_0 = arith.constant 0 : i32
    %c0_i32_1 = arith.constant 0 : i32
    return %c0_i32, %c0_i32_0 : i32, i32
  }
  func.func @transform_5(%arg0: i32) -> (i32, i32) {
    %c0_i32 = arith.constant 0 : i32
    %c0_i32_0 = arith.constant 0 : i32
    %c0_i32_1 = arith.constant 0 : i32
    return %c0_i32, %c0_i32_0 : i32, i32
  }
}

module attributes {stable_mosaic.version = 11 : i64} {
  func.func @_gru_layer_kernel(%arg0: i32, %arg1: memref<1x96x64xf32, #tpu.memory_space<vmem>>, %arg2: memref<1x3x64x128xf32, #tpu.memory_space<vmem>>, %arg3: memref<1x3x128x128xf32, #tpu.memory_space<vmem>>, %arg4: memref<1x3x1x128xf32, #tpu.memory_space<vmem>>, %arg5: memref<1x3x1x128xf32, #tpu.memory_space<vmem>>, %arg6: memref<8x1xi32, #tpu.memory_space<vmem>>, %arg7: memref<1x96x128xf32, #tpu.memory_space<vmem>>, %arg8: memref<96x128xf32, #tpu.memory_space<vmem>>, %arg9: memref<96x128xf32, #tpu.memory_space<vmem>>, %arg10: memref<96x128xf32, #tpu.memory_space<vmem>>) attributes {dimension_semantics = [#tpu.dimension_semantics<parallel>], iteration_bounds = array<i64: 2>, scalar_prefetch = 0 : i64, scratch_operands = 3 : i64, tpu.core_type = #tpu.core_type<tc>, window_params = [{pipeline_mode = #tpu.pipeline_mode<synchronous>, transform_indices = @transform_0, window_bounds = array<i64: 1, 96, 64>}, {transform_indices = @transform_1, window_bounds = array<i64: 1, 3, 64, 128>}, {transform_indices = @transform_2, window_bounds = array<i64: 1, 3, 128, 128>}, {transform_indices = @transform_3, window_bounds = array<i64: 1, 3, 1, 128>}, {transform_indices = @transform_4, window_bounds = array<i64: 1, 3, 1, 128>}, {pipeline_mode = #tpu.pipeline_mode<synchronous>, transform_indices = @transform_5, window_bounds = array<i64: 8, 1>}, {transform_indices = @transform_6, window_bounds = array<i64: 1, 96, 128>}]} {
    %c1_i32 = arith.constant 1 : i32
    %0 = arith.cmpi eq, %arg0, %c1_i32 : i32
    %c0 = arith.constant 0 : index
    %c0_0 = arith.constant 0 : index
    %c0_1 = arith.constant 0 : index
    %1 = vector.load %arg1[%c0, %c0_0, %c0_1] : memref<1x96x64xf32, #tpu.memory_space<vmem>>, vector<1x96x64xf32>
    %2 = vector.shape_cast %1 : vector<1x96x64xf32> to vector<96x64xf32>
    %c0_2 = arith.constant 0 : index
    %c0_3 = arith.constant 0 : index
    %c0_4 = arith.constant 0 : index
    %c0_5 = arith.constant 0 : index
    %3 = vector.load %arg2[%c0_2, %c0_3, %c0_4, %c0_5] : memref<1x3x64x128xf32, #tpu.memory_space<vmem>>, vector<1x1x64x128xf32>
    %4 = vector.shape_cast %3 : vector<1x1x64x128xf32> to vector<64x128xf32>
    %cst = arith.constant dense<0.000000e+00> : vector<96x128xf32>
    %5 = tpu.matmul %2, %4, %cst {dimension_numbers = #tpu.dot_dimension_numbers<[1], [0], [0], [1], [0, 0, 1, 1], [], []>} : vector<96x64xf32>, vector<64x128xf32>, vector<96x128xf32> -> vector<96x128xf32>
    %c0_6 = arith.constant 0 : index
    %c0_7 = arith.constant 0 : index
    %c0_8 = arith.constant 0 : index
    %c0_9 = arith.constant 0 : index
    %6 = vector.load %arg4[%c0_6, %c0_7, %c0_8, %c0_9] : memref<1x3x1x128xf32, #tpu.memory_space<vmem>>, vector<1x1x1x128xf32>
    %7 = vector.shape_cast %6 : vector<1x1x1x128xf32> to vector<1x128xf32>
    %c0_10 = arith.constant 0 : index
    %c0_11 = arith.constant 0 : index
    %c0_12 = arith.constant 0 : index
    %c0_13 = arith.constant 0 : index
    %8 = vector.load %arg5[%c0_10, %c0_11, %c0_12, %c0_13] : memref<1x3x1x128xf32, #tpu.memory_space<vmem>>, vector<1x1x1x128xf32>
    %9 = vector.shape_cast %8 : vector<1x1x1x128xf32> to vector<1x128xf32>
    %10 = arith.addf %7, %9 : vector<1x128xf32>
    %11 = vector.broadcast %10 : vector<1x128xf32> to vector<96x128xf32>
    %12 = arith.addf %5, %11 : vector<96x128xf32>
    %c0_14 = arith.constant 0 : index
    %c0_15 = arith.constant 0 : index
    %13 = vector.load %arg8[%c0_14, %c0_15] : memref<96x128xf32, #tpu.memory_space<vmem>>, vector<96x128xf32>
    tpu.vector_store %arg8[%c0_14, %c0_15], %12 {strides = array<i32>} : memref<96x128xf32, #tpu.memory_space<vmem>>, vector<96x128xf32>,
    %c0_16 = arith.constant 0 : index
    %c0_17 = arith.constant 0 : index
    %c0_18 = arith.constant 0 : index
    %14 = vector.load %arg1[%c0_16, %c0_17, %c0_18] : memref<1x96x64xf32, #tpu.memory_space<vmem>>, vector<1x96x64xf32>
    %15 = vector.shape_cast %14 : vector<1x96x64xf32> to vector<96x64xf32>
    %c0_19 = arith.constant 0 : index
    %c1 = arith.constant 1 : index
    %c0_20 = arith.constant 0 : index
    %c0_21 = arith.constant 0 : index
    %16 = vector.load %arg2[%c0_19, %c1, %c0_20, %c0_21] : memref<1x3x64x128xf32, #tpu.memory_space<vmem>>, vector<1x1x64x128xf32>
    %17 = vector.shape_cast %16 : vector<1x1x64x128xf32> to vector<64x128xf32>
    %cst_22 = arith.constant dense<0.000000e+00> : vector<96x128xf32>
    %18 = tpu.matmul %15, %17, %cst_22 {dimension_numbers = #tpu.dot_dimension_numbers<[1], [0], [0], [1], [0, 0, 1, 1], [], []>} : vector<96x64xf32>, vector<64x128xf32>, vector<96x128xf32> -> vector<96x128xf32>
    %c0_23 = arith.constant 0 : index
    %c1_24 = arith.constant 1 : index
    %c0_25 = arith.constant 0 : index
    %c0_26 = arith.constant 0 : index
    %19 = vector.load %arg4[%c0_23, %c1_24, %c0_25, %c0_26] : memref<1x3x1x128xf32, #tpu.memory_space<vmem>>, vector<1x1x1x128xf32>
    %20 = vector.shape_cast %19 : vector<1x1x1x128xf32> to vector<1x128xf32>
    %c0_27 = arith.constant 0 : index
    %c1_28 = arith.constant 1 : index
    %c0_29 = arith.constant 0 : index
    %c0_30 = arith.constant 0 : index
    %21 = vector.load %arg5[%c0_27, %c1_28, %c0_29, %c0_30] : memref<1x3x1x128xf32, #tpu.memory_space<vmem>>, vector<1x1x1x128xf32>
    %22 = vector.shape_cast %21 : vector<1x1x1x128xf32> to vector<1x128xf32>
    %23 = arith.addf %20, %22 : vector<1x128xf32>
    %24 = vector.broadcast %23 : vector<1x128xf32> to vector<96x128xf32>
    %25 = arith.addf %18, %24 : vector<96x128xf32>
    %c0_31 = arith.constant 0 : index
    %c0_32 = arith.constant 0 : index
    %26 = vector.load %arg9[%c0_31, %c0_32] : memref<96x128xf32, #tpu.memory_space<vmem>>, vector<96x128xf32>
    tpu.vector_store %arg9[%c0_31, %c0_32], %25 {strides = array<i32>} : memref<96x128xf32, #tpu.memory_space<vmem>>, vector<96x128xf32>,
    %c0_33 = arith.constant 0 : index
    %c0_34 = arith.constant 0 : index
    %c0_35 = arith.constant 0 : index
    %27 = vector.load %arg1[%c0_33, %c0_34, %c0_35] : memref<1x96x64xf32, #tpu.memory_space<vmem>>, vector<1x96x64xf32>
    %28 = vector.shape_cast %27 : vector<1x96x64xf32> to vector<96x64xf32>
    %c0_36 = arith.constant 0 : index
    %c2 = arith.constant 2 : index
    %c0_37 = arith.constant 0 : index
    %c0_38 = arith.constant 0 : index
    %29 = vector.load %arg2[%c0_36, %c2, %c0_37, %c0_38] : memref<1x3x64x128xf32, #tpu.memory_space<vmem>>, vector<1x1x64x128xf32>
    %30 = vector.shape_cast %29 : vector<1x1x64x128xf32> to vector<64x128xf32>
    %cst_39 = arith.constant dense<0.000000e+00> : vector<96x128xf32>
    %31 = tpu.matmul %28, %30, %cst_39 {dimension_numbers = #tpu.dot_dimension_numbers<[1], [0], [0], [1], [0, 0, 1, 1], [], []>} : vector<96x64xf32>, vector<64x128xf32>, vector<96x128xf32> -> vector<96x128xf32>
    %c0_40 = arith.constant 0 : index
    %c2_41 = arith.constant 2 : index
    %c0_42 = arith.constant 0 : index
    %c0_43 = arith.constant 0 : index
    %32 = vector.load %arg4[%c0_40, %c2_41, %c0_42, %c0_43] : memref<1x3x1x128xf32, #tpu.memory_space<vmem>>, vector<1x1x1x128xf32>
    %33 = vector.shape_cast %32 : vector<1x1x1x128xf32> to vector<1x128xf32>
    %34 = vector.broadcast %33 : vector<1x128xf32> to vector<96x128xf32>
    %35 = arith.addf %31, %34 : vector<96x128xf32>
    %c0_44 = arith.constant 0 : index
    %c0_45 = arith.constant 0 : index
    %36 = vector.load %arg10[%c0_44, %c0_45] : memref<96x128xf32, #tpu.memory_space<vmem>>, vector<96x128xf32>
    tpu.vector_store %arg10[%c0_44, %c0_45], %35 {strides = array<i32>} : memref<96x128xf32, #tpu.memory_space<vmem>>, vector<96x128xf32>,
    %c0_46 = arith.constant 0 : index
    %c0_47 = arith.constant 0 : index
    %c0_48 = arith.constant 0 : index
    %c0_49 = arith.constant 0 : index
    %37 = vector.load %arg3[%c0_46, %c0_47, %c0_48, %c0_49] : memref<1x3x128x128xf32, #tpu.memory_space<vmem>>, vector<1x1x128x128xf32>
    %38 = vector.shape_cast %37 : vector<1x1x128x128xf32> to vector<128x128xf32>
    %c0_50 = arith.constant 0 : index
    %c1_51 = arith.constant 1 : index
    %c0_52 = arith.constant 0 : index
    %c0_53 = arith.constant 0 : index
    %39 = vector.load %arg3[%c0_50, %c1_51, %c0_52, %c0_53] : memref<1x3x128x128xf32, #tpu.memory_space<vmem>>, vector<1x1x128x128xf32>
    %40 = vector.shape_cast %39 : vector<1x1x128x128xf32> to vector<128x128xf32>
    %c0_54 = arith.constant 0 : index
    %c2_55 = arith.constant 2 : index
    %c0_56 = arith.constant 0 : index
    %c0_57 = arith.constant 0 : index
    %41 = vector.load %arg3[%c0_54, %c2_55, %c0_56, %c0_57] : memref<1x3x128x128xf32, #tpu.memory_space<vmem>>, vector<1x1x128x128xf32>
    %42 = vector.shape_cast %41 : vector<1x1x128x128xf32> to vector<128x128xf32>
    %c0_58 = arith.constant 0 : index
    %c0_59 = arith.constant 0 : index
    %43 = vector.load %arg6[%c0_58, %c0_59] : memref<8x1xi32, #tpu.memory_space<vmem>>, vector<8x1xi32>
    %44 = vector.shape_cast %43 : vector<8x1xi32> to vector<8x1xi32>
    %45 = vector.broadcast %44 : vector<8x1xi32> to vector<8x128xi32>
    %c0_60 = arith.constant 0 : index
    %c2_61 = arith.constant 2 : index
    %c0_62 = arith.constant 0 : index
    %c0_63 = arith.constant 0 : index
    %46 = vector.load %arg5[%c0_60, %c2_61, %c0_62, %c0_63] : memref<1x3x1x128xf32, #tpu.memory_space<vmem>>, vector<1x1x1x128xf32>
    %47 = vector.shape_cast %46 : vector<1x1x1x128xf32> to vector<1x128xf32>
    %48 = vector.shape_cast %47 : vector<1x128xf32> to vector<1x128xf32>
    %49 = vector.broadcast %48 : vector<1x128xf32> to vector<8x128xf32>
    %cst_64 = arith.constant 0.000000e+00 : f32
    %50 = vector.broadcast %cst_64 : f32 to vector<8x128xf32>
    %c0_i32 = arith.constant 0 : i32
    %c11_i32 = arith.constant 11 : i32
    %51 = arith.subi %c11_i32, %c0_i32 : i32
    %52 = arith.select %0, %51, %c0_i32 : i32
    %c8_i32 = arith.constant 8 : i32
    %53 = arith.muli %52, %c8_i32 : i32
    %54 = tpu.assume_multiple %53, 8 : i32
    %55 = arith.index_cast %54 : i32 to index
    %c0_65 = arith.constant 0 : index
    %56 = vector.load %arg8[%55, %c0_65] : memref<96x128xf32, #tpu.memory_space<vmem>>, vector<8x128xf32>
    %57 = arith.index_cast %54 : i32 to index
    %c0_66 = arith.constant 0 : index
    %58 = vector.load %arg9[%57, %c0_66] : memref<96x128xf32, #tpu.memory_space<vmem>>, vector<8x128xf32>
    %59 = arith.index_cast %54 : i32 to index
    %c0_67 = arith.constant 0 : index
    %60 = vector.load %arg10[%59, %c0_67] : memref<96x128xf32, #tpu.memory_space<vmem>>, vector<8x128xf32>
    %cst_68 = arith.constant dense<0.000000e+00> : vector<8x128xf32>
    %61 = tpu.matmul %50, %38, %cst_68 {dimension_numbers = #tpu.dot_dimension_numbers<[1], [0], [0], [1], [0, 0, 1, 1], [], []>} : vector<8x128xf32>, vector<128x128xf32>, vector<8x128xf32> -> vector<8x128xf32>
    %62 = arith.addf %56, %61 : vector<8x128xf32>
    %63 = arith.negf %62 : vector<8x128xf32>
    %64 = math.exp %63 : vector<8x128xf32>
    %cst_69 = arith.constant 1.000000e+00 : f32
    %65 = vector.broadcast %cst_69 : f32 to vector<8x128xf32>
    %66 = arith.addf %65, %64 : vector<8x128xf32>
    %67 = arith.divf %65, %66 : vector<8x128xf32>
    %cst_70 = arith.constant dense<0.000000e+00> : vector<8x128xf32>
    %68 = tpu.matmul %50, %40, %cst_70 {dimension_numbers = #tpu.dot_dimension_numbers<[1], [0], [0], [1], [0, 0, 1, 1], [], []>} : vector<8x128xf32>, vector<128x128xf32>, vector<8x128xf32> -> vector<8x128xf32>
    %69 = arith.addf %58, %68 : vector<8x128xf32>
    %70 = arith.negf %69 : vector<8x128xf32>
    %71 = math.exp %70 : vector<8x128xf32>
    %cst_71 = arith.constant 1.000000e+00 : f32
    %72 = vector.broadcast %cst_71 : f32 to vector<8x128xf32>
    %73 = arith.addf %72, %71 : vector<8x128xf32>
    %74 = arith.divf %72, %73 : vector<8x128xf32>
    %cst_72 = arith.constant dense<0.000000e+00> : vector<8x128xf32>
    %75 = tpu.matmul %50, %42, %cst_72 {dimension_numbers = #tpu.dot_dimension_numbers<[1], [0], [0], [1], [0, 0, 1, 1], [], []>} : vector<8x128xf32>, vector<128x128xf32>, vector<8x128xf32> -> vector<8x128xf32>
    %76 = arith.addf %75, %49 : vector<8x128xf32>
    %77 = arith.mulf %67, %76 : vector<8x128xf32>
    %78 = arith.addf %60, %77 : vector<8x128xf32>
    %79 = math.tanh %78 : vector<8x128xf32>
    %cst_73 = arith.constant 1.000000e+00 : f32
    %80 = vector.broadcast %cst_73 : f32 to vector<8x128xf32>
    %81 = arith.subf %80, %74 : vector<8x128xf32>
    %82 = arith.mulf %81, %79 : vector<8x128xf32>
    %83 = arith.mulf %74, %50 : vector<8x128xf32>
    %84 = arith.addf %82, %83 : vector<8x128xf32>
    %85 = vector.broadcast %52 : i32 to vector<8x128xi32>
    %86 = arith.cmpi slt, %85, %45 : vector<8x128xi32>
    %87 = arith.select %86, %84, %50 : vector<8x128xi1>, vector<8x128xf32>
    %cst_74 = arith.constant 0.000000e+00 : f32
    %88 = vector.broadcast %cst_74 : f32 to vector<8x128xf32>
    %89 = arith.select %86, %84, %88 : vector<8x128xi1>, vector<8x128xf32>
    %c0_75 = arith.constant 0 : index
    %90 = arith.index_cast %54 : i32 to index
    %c0_76 = arith.constant 0 : index
    %91 = vector.load %arg7[%c0_75, %90, %c0_76] : memref<1x96x128xf32, #tpu.memory_space<vmem>>, vector<1x8x128xf32>
    %92 = vector.shape_cast %91 : vector<1x8x128xf32> to vector<8x128xf32>
    %93 = vector.shape_cast %89 : vector<8x128xf32> to vector<1x8x128xf32>
    tpu.vector_store %arg7[%c0_75, %90, %c0_76], %93 {strides = array<i32>} : memref<1x96x128xf32, #tpu.memory_space<vmem>>, vector<1x8x128xf32>,
    %c1_i32_77 = arith.constant 1 : i32
    %c11_i32_78 = arith.constant 11 : i32
    %94 = arith.subi %c11_i32_78, %c1_i32_77 : i32
    %95 = arith.select %0, %94, %c1_i32_77 : i32
    %c8_i32_79 = arith.constant 8 : i32
    %96 = arith.muli %95, %c8_i32_79 : i32
    %97 = tpu.assume_multiple %96, 8 : i32
    %98 = arith.index_cast %97 : i32 to index
    %c0_80 = arith.constant 0 : index
    %99 = vector.load %arg8[%98, %c0_80] : memref<96x128xf32, #tpu.memory_space<vmem>>, vector<8x128xf32>
    %100 = arith.index_cast %97 : i32 to index
    %c0_81 = arith.constant 0 : index
    %101 = vector.load %arg9[%100, %c0_81] : memref<96x128xf32, #tpu.memory_space<vmem>>, vector<8x128xf32>
    %102 = arith.index_cast %97 : i32 to index
    %c0_82 = arith.constant 0 : index
    %103 = vector.load %arg10[%102, %c0_82] : memref<96x128xf32, #tpu.memory_space<vmem>>, vector<8x128xf32>
    %cst_83 = arith.constant dense<0.000000e+00> : vector<8x128xf32>
    %104 = tpu.matmul %87, %38, %cst_83 {dimension_numbers = #tpu.dot_dimension_numbers<[1], [0], [0], [1], [0, 0, 1, 1], [], []>} : vector<8x128xf32>, vector<128x128xf32>, vector<8x128xf32> -> vector<8x128xf32>
    %105 = arith.addf %99, %104 : vector<8x128xf32>
    %106 = arith.negf %105 : vector<8x128xf32>
    %107 = math.exp %106 : vector<8x128xf32>
    %cst_84 = arith.constant 1.000000e+00 : f32
    %108 = vector.broadcast %cst_84 : f32 to vector<8x128xf32>
    %109 = arith.addf %108, %107 : vector<8x128xf32>
    %110 = arith.divf %108, %109 : vector<8x128xf32>
    %cst_85 = arith.constant dense<0.000000e+00> : vector<8x128xf32>
    %111 = tpu.matmul %87, %40, %cst_85 {dimension_numbers = #tpu.dot_dimension_numbers<[1], [0], [0], [1], [0, 0, 1, 1], [], []>} : vector<8x128xf32>, vector<128x128xf32>, vector<8x128xf32> -> vector<8x128xf32>
    %112 = arith.addf %101, %111 : vector<8x128xf32>
    %113 = arith.negf %112 : vector<8x128xf32>
    %114 = math.exp %113 : vector<8x128xf32>
    %cst_86 = arith.constant 1.000000e+00 : f32
    %115 = vector.broadcast %cst_86 : f32 to vector<8x128xf32>
    %116 = arith.addf %115, %114 : vector<8x128xf32>
    %117 = arith.divf %115, %116 : vector<8x128xf32>
    %cst_87 = arith.constant dense<0.000000e+00> : vector<8x128xf32>
    %118 = tpu.matmul %87, %42, %cst_87 {dimension_numbers = #tpu.dot_dimension_numbers<[1], [0], [0], [1], [0, 0, 1, 1], [], []>} : vector<8x128xf32>, vector<128x128xf32>, vector<8x128xf32> -> vector<8x128xf32>
    %119 = arith.addf %118, %49 : vector<8x128xf32>
    %120 = arith.mulf %110, %119 : vector<8x128xf32>
    %121 = arith.addf %103, %120 : vector<8x128xf32>
    %122 = math.tanh %121 : vector<8x128xf32>
    %cst_88 = arith.constant 1.000000e+00 : f32
    %123 = vector.broadcast %cst_88 : f32 to vector<8x128xf32>
    %124 = arith.subf %123, %117 : vector<8x128xf32>
    %125 = arith.mulf %124, %122 : vector<8x128xf32>
    %126 = arith.mulf %117, %87 : vector<8x128xf32>
    %127 = arith.addf %125, %126 : vector<8x128xf32>
    %128 = vector.broadcast %95 : i32 to vector<8x128xi32>
    %129 = arith.cmpi slt, %128, %45 : vector<8x128xi32>
    %130 = arith.select %129, %127, %87 : vector<8x128xi1>, vector<8x128xf32>
    %cst_89 = arith.constant 0.000000e+00 : f32
    %131 = vector.broadcast %cst_89 : f32 to vector<8x128xf32>
    %132 = arith.select %129, %127, %131 : vector<8x128xi1>, vector<8x128xf32>
    %c0_90 = arith.constant 0 : index
    %133 = arith.index_cast %97 : i32 to index
    %c0_91 = arith.constant 0 : index
    %134 = vector.load %arg7[%c0_90, %133, %c0_91] : memref<1x96x128xf32, #tpu.memory_space<vmem>>, vector<1x8x128xf32>
    %135 = vector.shape_cast %134 : vector<1x8x128xf32> to vector<8x128xf32>
    %136 = vector.shape_cast %132 : vector<8x128xf32> to vector<1x8x128xf32>
    tpu.vector_store %arg7[%c0_90, %133, %c0_91], %136 {strides = array<i32>} : memref<1x96x128xf32, #tpu.memory_space<vmem>>, vector<1x8x128xf32>,
    %c2_i32 = arith.constant 2 : i32
    %c11_i32_92 = arith.constant 11 : i32
    %137 = arith.subi %c11_i32_92, %c2_i32 : i32
    %138 = arith.select %0, %137, %c2_i32 : i32
    %c8_i32_93 = arith.constant 8 : i32
    %139 = arith.muli %138, %c8_i32_93 : i32
    %140 = tpu.assume_multiple %139, 8 : i32
    %141 = arith.index_cast %140 : i32 to index
    %c0_94 = arith.constant 0 : index
    %142 = vector.load %arg8[%141, %c0_94] : memref<96x128xf32, #tpu.memory_space<vmem>>, vector<8x128xf32>
    %143 = arith.index_cast %140 : i32 to index
    %c0_95 = arith.constant 0 : index
    %144 = vector.load %arg9[%143, %c0_95] : memref<96x128xf32, #tpu.memory_space<vmem>>, vector<8x128xf32>
    %145 = arith.index_cast %140 : i32 to index
    %c0_96 = arith.constant 0 : index
    %146 = vector.load %arg10[%145, %c0_96] : memref<96x128xf32, #tpu.memory_space<vmem>>, vector<8x128xf32>
    %cst_97 = arith.constant dense<0.000000e+00> : vector<8x128xf32>
    %147 = tpu.matmul %130, %38, %cst_97 {dimension_numbers = #tpu.dot_dimension_numbers<[1], [0], [0], [1], [0, 0, 1, 1], [], []>} : vector<8x128xf32>, vector<128x128xf32>, vector<8x128xf32> -> vector<8x128xf32>
    %148 = arith.addf %142, %147 : vector<8x128xf32>
    %149 = arith.negf %148 : vector<8x128xf32>
    %150 = math.exp %149 : vector<8x128xf32>
    %cst_98 = arith.constant 1.000000e+00 : f32
    %151 = vector.broadcast %cst_98 : f32 to vector<8x128xf32>
    %152 = arith.addf %151, %150 : vector<8x128xf32>
    %153 = arith.divf %151, %152 : vector<8x128xf32>
    %cst_99 = arith.constant dense<0.000000e+00> : vector<8x128xf32>
    %154 = tpu.matmul %130, %40, %cst_99 {dimension_numbers = #tpu.dot_dimension_numbers<[1], [0], [0], [1], [0, 0, 1, 1], [], []>} : vector<8x128xf32>, vector<128x128xf32>, vector<8x128xf32> -> vector<8x128xf32>
    %155 = arith.addf %144, %154 : vector<8x128xf32>
    %156 = arith.negf %155 : vector<8x128xf32>
    %157 = math.exp %156 : vector<8x128xf32>
    %cst_100 = arith.constant 1.000000e+00 : f32
    %158 = vector.broadcast %cst_100 : f32 to vector<8x128xf32>
    %159 = arith.addf %158, %157 : vector<8x128xf32>
    %160 = arith.divf %158, %159 : vector<8x128xf32>
    %cst_101 = arith.constant dense<0.000000e+00> : vector<8x128xf32>
    %161 = tpu.matmul %130, %42, %cst_101 {dimension_numbers = #tpu.dot_dimension_numbers<[1], [0], [0], [1], [0, 0, 1, 1], [], []>} : vector<8x128xf32>, vector<128x128xf32>, vector<8x128xf32> -> vector<8x128xf32>
    %162 = arith.addf %161, %49 : vector<8x128xf32>
    %163 = arith.mulf %153, %162 : vector<8x128xf32>
    %164 = arith.addf %146, %163 : vector<8x128xf32>
    %165 = math.tanh %164 : vector<8x128xf32>
    %cst_102 = arith.constant 1.000000e+00 : f32
    %166 = vector.broadcast %cst_102 : f32 to vector<8x128xf32>
    %167 = arith.subf %166, %160 : vector<8x128xf32>
    %168 = arith.mulf %167, %165 : vector<8x128xf32>
    %169 = arith.mulf %160, %130 : vector<8x128xf32>
    %170 = arith.addf %168, %169 : vector<8x128xf32>
    %171 = vector.broadcast %138 : i32 to vector<8x128xi32>
    %172 = arith.cmpi slt, %171, %45 : vector<8x128xi32>
    %173 = arith.select %172, %170, %130 : vector<8x128xi1>, vector<8x128xf32>
    %cst_103 = arith.constant 0.000000e+00 : f32
    %174 = vector.broadcast %cst_103 : f32 to vector<8x128xf32>
    %175 = arith.select %172, %170, %174 : vector<8x128xi1>, vector<8x128xf32>
    %c0_104 = arith.constant 0 : index
    %176 = arith.index_cast %140 : i32 to index
    %c0_105 = arith.constant 0 : index
    %177 = vector.load %arg7[%c0_104, %176, %c0_105] : memref<1x96x128xf32, #tpu.memory_space<vmem>>, vector<1x8x128xf32>
    %178 = vector.shape_cast %177 : vector<1x8x128xf32> to vector<8x128xf32>
    %179 = vector.shape_cast %175 : vector<8x128xf32> to vector<1x8x128xf32>
    tpu.vector_store %arg7[%c0_104, %176, %c0_105], %179 {strides = array<i32>} : memref<1x96x128xf32, #tpu.memory_space<vmem>>, vector<1x8x128xf32>,
    %c3_i32 = arith.constant 3 : i32
    %c11_i32_106 = arith.constant 11 : i32
    %180 = arith.subi %c11_i32_106, %c3_i32 : i32
    %181 = arith.select %0, %180, %c3_i32 : i32
    %c8_i32_107 = arith.constant 8 : i32
    %182 = arith.muli %181, %c8_i32_107 : i32
    %183 = tpu.assume_multiple %182, 8 : i32
    %184 = arith.index_cast %183 : i32 to index
    %c0_108 = arith.constant 0 : index
    %185 = vector.load %arg8[%184, %c0_108] : memref<96x128xf32, #tpu.memory_space<vmem>>, vector<8x128xf32>
    %186 = arith.index_cast %183 : i32 to index
    %c0_109 = arith.constant 0 : index
    %187 = vector.load %arg9[%186, %c0_109] : memref<96x128xf32, #tpu.memory_space<vmem>>, vector<8x128xf32>
    %188 = arith.index_cast %183 : i32 to index
    %c0_110 = arith.constant 0 : index
    %189 = vector.load %arg10[%188, %c0_110] : memref<96x128xf32, #tpu.memory_space<vmem>>, vector<8x128xf32>
    %cst_111 = arith.constant dense<0.000000e+00> : vector<8x128xf32>
    %190 = tpu.matmul %173, %38, %cst_111 {dimension_numbers = #tpu.dot_dimension_numbers<[1], [0], [0], [1], [0, 0, 1, 1], [], []>} : vector<8x128xf32>, vector<128x128xf32>, vector<8x128xf32> -> vector<8x128xf32>
    %191 = arith.addf %185, %190 : vector<8x128xf32>
    %192 = arith.negf %191 : vector<8x128xf32>
    %193 = math.exp %192 : vector<8x128xf32>
    %cst_112 = arith.constant 1.000000e+00 : f32
    %194 = vector.broadcast %cst_112 : f32 to vector<8x128xf32>
    %195 = arith.addf %194, %193 : vector<8x128xf32>
    %196 = arith.divf %194, %195 : vector<8x128xf32>
    %cst_113 = arith.constant dense<0.000000e+00> : vector<8x128xf32>
    %197 = tpu.matmul %173, %40, %cst_113 {dimension_numbers = #tpu.dot_dimension_numbers<[1], [0], [0], [1], [0, 0, 1, 1], [], []>} : vector<8x128xf32>, vector<128x128xf32>, vector<8x128xf32> -> vector<8x128xf32>
    %198 = arith.addf %187, %197 : vector<8x128xf32>
    %199 = arith.negf %198 : vector<8x128xf32>
    %200 = math.exp %199 : vector<8x128xf32>
    %cst_114 = arith.constant 1.000000e+00 : f32
    %201 = vector.broadcast %cst_114 : f32 to vector<8x128xf32>
    %202 = arith.addf %201, %200 : vector<8x128xf32>
    %203 = arith.divf %201, %202 : vector<8x128xf32>
    %cst_115 = arith.constant dense<0.000000e+00> : vector<8x128xf32>
    %204 = tpu.matmul %173, %42, %cst_115 {dimension_numbers = #tpu.dot_dimension_numbers<[1], [0], [0], [1], [0, 0, 1, 1], [], []>} : vector<8x128xf32>, vector<128x128xf32>, vector<8x128xf32> -> vector<8x128xf32>
    %205 = arith.addf %204, %49 : vector<8x128xf32>
    %206 = arith.mulf %196, %205 : vector<8x128xf32>
    %207 = arith.addf %189, %206 : vector<8x128xf32>
    %208 = math.tanh %207 : vector<8x128xf32>
    %cst_116 = arith.constant 1.000000e+00 : f32
    %209 = vector.broadcast %cst_116 : f32 to vector<8x128xf32>
    %210 = arith.subf %209, %203 : vector<8x128xf32>
    %211 = arith.mulf %210, %208 : vector<8x128xf32>
    %212 = arith.mulf %203, %173 : vector<8x128xf32>
    %213 = arith.addf %211, %212 : vector<8x128xf32>
    %214 = vector.broadcast %181 : i32 to vector<8x128xi32>
    %215 = arith.cmpi slt, %214, %45 : vector<8x128xi32>
    %216 = arith.select %215, %213, %173 : vector<8x128xi1>, vector<8x128xf32>
    %cst_117 = arith.constant 0.000000e+00 : f32
    %217 = vector.broadcast %cst_117 : f32 to vector<8x128xf32>
    %218 = arith.select %215, %213, %217 : vector<8x128xi1>, vector<8x128xf32>
    %c0_118 = arith.constant 0 : index
    %219 = arith.index_cast %183 : i32 to index
    %c0_119 = arith.constant 0 : index
    %220 = vector.load %arg7[%c0_118, %219, %c0_119] : memref<1x96x128xf32, #tpu.memory_space<vmem>>, vector<1x8x128xf32>
    %221 = vector.shape_cast %220 : vector<1x8x128xf32> to vector<8x128xf32>
    %222 = vector.shape_cast %218 : vector<8x128xf32> to vector<1x8x128xf32>
    tpu.vector_store %arg7[%c0_118, %219, %c0_119], %222 {strides = array<i32>} : memref<1x96x128xf32, #tpu.memory_space<vmem>>, vector<1x8x128xf32>,
    %c4_i32 = arith.constant 4 : i32
    %c11_i32_120 = arith.constant 11 : i32
    %223 = arith.subi %c11_i32_120, %c4_i32 : i32
    %224 = arith.select %0, %223, %c4_i32 : i32
    %c8_i32_121 = arith.constant 8 : i32
    %225 = arith.muli %224, %c8_i32_121 : i32
    %226 = tpu.assume_multiple %225, 8 : i32
    %227 = arith.index_cast %226 : i32 to index
    %c0_122 = arith.constant 0 : index
    %228 = vector.load %arg8[%227, %c0_122] : memref<96x128xf32, #tpu.memory_space<vmem>>, vector<8x128xf32>
    %229 = arith.index_cast %226 : i32 to index
    %c0_123 = arith.constant 0 : index
    %230 = vector.load %arg9[%229, %c0_123] : memref<96x128xf32, #tpu.memory_space<vmem>>, vector<8x128xf32>
    %231 = arith.index_cast %226 : i32 to index
    %c0_124 = arith.constant 0 : index
    %232 = vector.load %arg10[%231, %c0_124] : memref<96x128xf32, #tpu.memory_space<vmem>>, vector<8x128xf32>
    %cst_125 = arith.constant dense<0.000000e+00> : vector<8x128xf32>
    %233 = tpu.matmul %216, %38, %cst_125 {dimension_numbers = #tpu.dot_dimension_numbers<[1], [0], [0], [1], [0, 0, 1, 1], [], []>} : vector<8x128xf32>, vector<128x128xf32>, vector<8x128xf32> -> vector<8x128xf32>
    %234 = arith.addf %228, %233 : vector<8x128xf32>
    %235 = arith.negf %234 : vector<8x128xf32>
    %236 = math.exp %235 : vector<8x128xf32>
    %cst_126 = arith.constant 1.000000e+00 : f32
    %237 = vector.broadcast %cst_126 : f32 to vector<8x128xf32>
    %238 = arith.addf %237, %236 : vector<8x128xf32>
    %239 = arith.divf %237, %238 : vector<8x128xf32>
    %cst_127 = arith.constant dense<0.000000e+00> : vector<8x128xf32>
    %240 = tpu.matmul %216, %40, %cst_127 {dimension_numbers = #tpu.dot_dimension_numbers<[1], [0], [0], [1], [0, 0, 1, 1], [], []>} : vector<8x128xf32>, vector<128x128xf32>, vector<8x128xf32> -> vector<8x128xf32>
    %241 = arith.addf %230, %240 : vector<8x128xf32>
    %242 = arith.negf %241 : vector<8x128xf32>
    %243 = math.exp %242 : vector<8x128xf32>
    %cst_128 = arith.constant 1.000000e+00 : f32
    %244 = vector.broadcast %cst_128 : f32 to vector<8x128xf32>
    %245 = arith.addf %244, %243 : vector<8x128xf32>
    %246 = arith.divf %244, %245 : vector<8x128xf32>
    %cst_129 = arith.constant dense<0.000000e+00> : vector<8x128xf32>
    %247 = tpu.matmul %216, %42, %cst_129 {dimension_numbers = #tpu.dot_dimension_numbers<[1], [0], [0], [1], [0, 0, 1, 1], [], []>} : vector<8x128xf32>, vector<128x128xf32>, vector<8x128xf32> -> vector<8x128xf32>
    %248 = arith.addf %247, %49 : vector<8x128xf32>
    %249 = arith.mulf %239, %248 : vector<8x128xf32>
    %250 = arith.addf %232, %249 : vector<8x128xf32>
    %251 = math.tanh %250 : vector<8x128xf32>
    %cst_130 = arith.constant 1.000000e+00 : f32
    %252 = vector.broadcast %cst_130 : f32 to vector<8x128xf32>
    %253 = arith.subf %252, %246 : vector<8x128xf32>
    %254 = arith.mulf %253, %251 : vector<8x128xf32>
    %255 = arith.mulf %246, %216 : vector<8x128xf32>
    %256 = arith.addf %254, %255 : vector<8x128xf32>
    %257 = vector.broadcast %224 : i32 to vector<8x128xi32>
    %258 = arith.cmpi slt, %257, %45 : vector<8x128xi32>
    %259 = arith.select %258, %256, %216 : vector<8x128xi1>, vector<8x128xf32>
    %cst_131 = arith.constant 0.000000e+00 : f32
    %260 = vector.broadcast %cst_131 : f32 to vector<8x128xf32>
    %261 = arith.select %258, %256, %260 : vector<8x128xi1>, vector<8x128xf32>
    %c0_132 = arith.constant 0 : index
    %262 = arith.index_cast %226 : i32 to index
    %c0_133 = arith.constant 0 : index
    %263 = vector.load %arg7[%c0_132, %262, %c0_133] : memref<1x96x128xf32, #tpu.memory_space<vmem>>, vector<1x8x128xf32>
    %264 = vector.shape_cast %263 : vector<1x8x128xf32> to vector<8x128xf32>
    %265 = vector.shape_cast %261 : vector<8x128xf32> to vector<1x8x128xf32>
    tpu.vector_store %arg7[%c0_132, %262, %c0_133], %265 {strides = array<i32>} : memref<1x96x128xf32, #tpu.memory_space<vmem>>, vector<1x8x128xf32>,
    %c5_i32 = arith.constant 5 : i32
    %c11_i32_134 = arith.constant 11 : i32
    %266 = arith.subi %c11_i32_134, %c5_i32 : i32
    %267 = arith.select %0, %266, %c5_i32 : i32
    %c8_i32_135 = arith.constant 8 : i32
    %268 = arith.muli %267, %c8_i32_135 : i32
    %269 = tpu.assume_multiple %268, 8 : i32
    %270 = arith.index_cast %269 : i32 to index
    %c0_136 = arith.constant 0 : index
    %271 = vector.load %arg8[%270, %c0_136] : memref<96x128xf32, #tpu.memory_space<vmem>>, vector<8x128xf32>
    %272 = arith.index_cast %269 : i32 to index
    %c0_137 = arith.constant 0 : index
    %273 = vector.load %arg9[%272, %c0_137] : memref<96x128xf32, #tpu.memory_space<vmem>>, vector<8x128xf32>
    %274 = arith.index_cast %269 : i32 to index
    %c0_138 = arith.constant 0 : index
    %275 = vector.load %arg10[%274, %c0_138] : memref<96x128xf32, #tpu.memory_space<vmem>>, vector<8x128xf32>
    %cst_139 = arith.constant dense<0.000000e+00> : vector<8x128xf32>
    %276 = tpu.matmul %259, %38, %cst_139 {dimension_numbers = #tpu.dot_dimension_numbers<[1], [0], [0], [1], [0, 0, 1, 1], [], []>} : vector<8x128xf32>, vector<128x128xf32>, vector<8x128xf32> -> vector<8x128xf32>
    %277 = arith.addf %271, %276 : vector<8x128xf32>
    %278 = arith.negf %277 : vector<8x128xf32>
    %279 = math.exp %278 : vector<8x128xf32>
    %cst_140 = arith.constant 1.000000e+00 : f32
    %280 = vector.broadcast %cst_140 : f32 to vector<8x128xf32>
    %281 = arith.addf %280, %279 : vector<8x128xf32>
    %282 = arith.divf %280, %281 : vector<8x128xf32>
    %cst_141 = arith.constant dense<0.000000e+00> : vector<8x128xf32>
    %283 = tpu.matmul %259, %40, %cst_141 {dimension_numbers = #tpu.dot_dimension_numbers<[1], [0], [0], [1], [0, 0, 1, 1], [], []>} : vector<8x128xf32>, vector<128x128xf32>, vector<8x128xf32> -> vector<8x128xf32>
    %284 = arith.addf %273, %283 : vector<8x128xf32>
    %285 = arith.negf %284 : vector<8x128xf32>
    %286 = math.exp %285 : vector<8x128xf32>
    %cst_142 = arith.constant 1.000000e+00 : f32
    %287 = vector.broadcast %cst_142 : f32 to vector<8x128xf32>
    %288 = arith.addf %287, %286 : vector<8x128xf32>
    %289 = arith.divf %287, %288 : vector<8x128xf32>
    %cst_143 = arith.constant dense<0.000000e+00> : vector<8x128xf32>
    %290 = tpu.matmul %259, %42, %cst_143 {dimension_numbers = #tpu.dot_dimension_numbers<[1], [0], [0], [1], [0, 0, 1, 1], [], []>} : vector<8x128xf32>, vector<128x128xf32>, vector<8x128xf32> -> vector<8x128xf32>
    %291 = arith.addf %290, %49 : vector<8x128xf32>
    %292 = arith.mulf %282, %291 : vector<8x128xf32>
    %293 = arith.addf %275, %292 : vector<8x128xf32>
    %294 = math.tanh %293 : vector<8x128xf32>
    %cst_144 = arith.constant 1.000000e+00 : f32
    %295 = vector.broadcast %cst_144 : f32 to vector<8x128xf32>
    %296 = arith.subf %295, %289 : vector<8x128xf32>
    %297 = arith.mulf %296, %294 : vector<8x128xf32>
    %298 = arith.mulf %289, %259 : vector<8x128xf32>
    %299 = arith.addf %297, %298 : vector<8x128xf32>
    %300 = vector.broadcast %267 : i32 to vector<8x128xi32>
    %301 = arith.cmpi slt, %300, %45 : vector<8x128xi32>
    %302 = arith.select %301, %299, %259 : vector<8x128xi1>, vector<8x128xf32>
    %cst_145 = arith.constant 0.000000e+00 : f32
    %303 = vector.broadcast %cst_145 : f32 to vector<8x128xf32>
    %304 = arith.select %301, %299, %303 : vector<8x128xi1>, vector<8x128xf32>
    %c0_146 = arith.constant 0 : index
    %305 = arith.index_cast %269 : i32 to index
    %c0_147 = arith.constant 0 : index
    %306 = vector.load %arg7[%c0_146, %305, %c0_147] : memref<1x96x128xf32, #tpu.memory_space<vmem>>, vector<1x8x128xf32>
    %307 = vector.shape_cast %306 : vector<1x8x128xf32> to vector<8x128xf32>
    %308 = vector.shape_cast %304 : vector<8x128xf32> to vector<1x8x128xf32>
    tpu.vector_store %arg7[%c0_146, %305, %c0_147], %308 {strides = array<i32>} : memref<1x96x128xf32, #tpu.memory_space<vmem>>, vector<1x8x128xf32>,
    %c6_i32 = arith.constant 6 : i32
    %c11_i32_148 = arith.constant 11 : i32
    %309 = arith.subi %c11_i32_148, %c6_i32 : i32
    %310 = arith.select %0, %309, %c6_i32 : i32
    %c8_i32_149 = arith.constant 8 : i32
    %311 = arith.muli %310, %c8_i32_149 : i32
    %312 = tpu.assume_multiple %311, 8 : i32
    %313 = arith.index_cast %312 : i32 to index
    %c0_150 = arith.constant 0 : index
    %314 = vector.load %arg8[%313, %c0_150] : memref<96x128xf32, #tpu.memory_space<vmem>>, vector<8x128xf32>
    %315 = arith.index_cast %312 : i32 to index
    %c0_151 = arith.constant 0 : index
    %316 = vector.load %arg9[%315, %c0_151] : memref<96x128xf32, #tpu.memory_space<vmem>>, vector<8x128xf32>
    %317 = arith.index_cast %312 : i32 to index
    %c0_152 = arith.constant 0 : index
    %318 = vector.load %arg10[%317, %c0_152] : memref<96x128xf32, #tpu.memory_space<vmem>>, vector<8x128xf32>
    %cst_153 = arith.constant dense<0.000000e+00> : vector<8x128xf32>
    %319 = tpu.matmul %302, %38, %cst_153 {dimension_numbers = #tpu.dot_dimension_numbers<[1], [0], [0], [1], [0, 0, 1, 1], [], []>} : vector<8x128xf32>, vector<128x128xf32>, vector<8x128xf32> -> vector<8x128xf32>
    %320 = arith.addf %314, %319 : vector<8x128xf32>
    %321 = arith.negf %320 : vector<8x128xf32>
    %322 = math.exp %321 : vector<8x128xf32>
    %cst_154 = arith.constant 1.000000e+00 : f32
    %323 = vector.broadcast %cst_154 : f32 to vector<8x128xf32>
    %324 = arith.addf %323, %322 : vector<8x128xf32>
    %325 = arith.divf %323, %324 : vector<8x128xf32>
    %cst_155 = arith.constant dense<0.000000e+00> : vector<8x128xf32>
    %326 = tpu.matmul %302, %40, %cst_155 {dimension_numbers = #tpu.dot_dimension_numbers<[1], [0], [0], [1], [0, 0, 1, 1], [], []>} : vector<8x128xf32>, vector<128x128xf32>, vector<8x128xf32> -> vector<8x128xf32>
    %327 = arith.addf %316, %326 : vector<8x128xf32>
    %328 = arith.negf %327 : vector<8x128xf32>
    %329 = math.exp %328 : vector<8x128xf32>
    %cst_156 = arith.constant 1.000000e+00 : f32
    %330 = vector.broadcast %cst_156 : f32 to vector<8x128xf32>
    %331 = arith.addf %330, %329 : vector<8x128xf32>
    %332 = arith.divf %330, %331 : vector<8x128xf32>
    %cst_157 = arith.constant dense<0.000000e+00> : vector<8x128xf32>
    %333 = tpu.matmul %302, %42, %cst_157 {dimension_numbers = #tpu.dot_dimension_numbers<[1], [0], [0], [1], [0, 0, 1, 1], [], []>} : vector<8x128xf32>, vector<128x128xf32>, vector<8x128xf32> -> vector<8x128xf32>
    %334 = arith.addf %333, %49 : vector<8x128xf32>
    %335 = arith.mulf %325, %334 : vector<8x128xf32>
    %336 = arith.addf %318, %335 : vector<8x128xf32>
    %337 = math.tanh %336 : vector<8x128xf32>
    %cst_158 = arith.constant 1.000000e+00 : f32
    %338 = vector.broadcast %cst_158 : f32 to vector<8x128xf32>
    %339 = arith.subf %338, %332 : vector<8x128xf32>
    %340 = arith.mulf %339, %337 : vector<8x128xf32>
    %341 = arith.mulf %332, %302 : vector<8x128xf32>
    %342 = arith.addf %340, %341 : vector<8x128xf32>
    %343 = vector.broadcast %310 : i32 to vector<8x128xi32>
    %344 = arith.cmpi slt, %343, %45 : vector<8x128xi32>
    %345 = arith.select %344, %342, %302 : vector<8x128xi1>, vector<8x128xf32>
    %cst_159 = arith.constant 0.000000e+00 : f32
    %346 = vector.broadcast %cst_159 : f32 to vector<8x128xf32>
    %347 = arith.select %344, %342, %346 : vector<8x128xi1>, vector<8x128xf32>
    %c0_160 = arith.constant 0 : index
    %348 = arith.index_cast %312 : i32 to index
    %c0_161 = arith.constant 0 : index
    %349 = vector.load %arg7[%c0_160, %348, %c0_161] : memref<1x96x128xf32, #tpu.memory_space<vmem>>, vector<1x8x128xf32>
    %350 = vector.shape_cast %349 : vector<1x8x128xf32> to vector<8x128xf32>
    %351 = vector.shape_cast %347 : vector<8x128xf32> to vector<1x8x128xf32>
    tpu.vector_store %arg7[%c0_160, %348, %c0_161], %351 {strides = array<i32>} : memref<1x96x128xf32, #tpu.memory_space<vmem>>, vector<1x8x128xf32>,
    %c7_i32 = arith.constant 7 : i32
    %c11_i32_162 = arith.constant 11 : i32
    %352 = arith.subi %c11_i32_162, %c7_i32 : i32
    %353 = arith.select %0, %352, %c7_i32 : i32
    %c8_i32_163 = arith.constant 8 : i32
    %354 = arith.muli %353, %c8_i32_163 : i32
    %355 = tpu.assume_multiple %354, 8 : i32
    %356 = arith.index_cast %355 : i32 to index
    %c0_164 = arith.constant 0 : index
    %357 = vector.load %arg8[%356, %c0_164] : memref<96x128xf32, #tpu.memory_space<vmem>>, vector<8x128xf32>
    %358 = arith.index_cast %355 : i32 to index
    %c0_165 = arith.constant 0 : index
    %359 = vector.load %arg9[%358, %c0_165] : memref<96x128xf32, #tpu.memory_space<vmem>>, vector<8x128xf32>
    %360 = arith.index_cast %355 : i32 to index
    %c0_166 = arith.constant 0 : index
    %361 = vector.load %arg10[%360, %c0_166] : memref<96x128xf32, #tpu.memory_space<vmem>>, vector<8x128xf32>
    %cst_167 = arith.constant dense<0.000000e+00> : vector<8x128xf32>
    %362 = tpu.matmul %345, %38, %cst_167 {dimension_numbers = #tpu.dot_dimension_numbers<[1], [0], [0], [1], [0, 0, 1, 1], [], []>} : vector<8x128xf32>, vector<128x128xf32>, vector<8x128xf32> -> vector<8x128xf32>
    %363 = arith.addf %357, %362 : vector<8x128xf32>
    %364 = arith.negf %363 : vector<8x128xf32>
    %365 = math.exp %364 : vector<8x128xf32>
    %cst_168 = arith.constant 1.000000e+00 : f32
    %366 = vector.broadcast %cst_168 : f32 to vector<8x128xf32>
    %367 = arith.addf %366, %365 : vector<8x128xf32>
    %368 = arith.divf %366, %367 : vector<8x128xf32>
    %cst_169 = arith.constant dense<0.000000e+00> : vector<8x128xf32>
    %369 = tpu.matmul %345, %40, %cst_169 {dimension_numbers = #tpu.dot_dimension_numbers<[1], [0], [0], [1], [0, 0, 1, 1], [], []>} : vector<8x128xf32>, vector<128x128xf32>, vector<8x128xf32> -> vector<8x128xf32>
    %370 = arith.addf %359, %369 : vector<8x128xf32>
    %371 = arith.negf %370 : vector<8x128xf32>
    %372 = math.exp %371 : vector<8x128xf32>
    %cst_170 = arith.constant 1.000000e+00 : f32
    %373 = vector.broadcast %cst_170 : f32 to vector<8x128xf32>
    %374 = arith.addf %373, %372 : vector<8x128xf32>
    %375 = arith.divf %373, %374 : vector<8x128xf32>
    %cst_171 = arith.constant dense<0.000000e+00> : vector<8x128xf32>
    %376 = tpu.matmul %345, %42, %cst_171 {dimension_numbers = #tpu.dot_dimension_numbers<[1], [0], [0], [1], [0, 0, 1, 1], [], []>} : vector<8x128xf32>, vector<128x128xf32>, vector<8x128xf32> -> vector<8x128xf32>
    %377 = arith.addf %376, %49 : vector<8x128xf32>
    %378 = arith.mulf %368, %377 : vector<8x128xf32>
    %379 = arith.addf %361, %378 : vector<8x128xf32>
    %380 = math.tanh %379 : vector<8x128xf32>
    %cst_172 = arith.constant 1.000000e+00 : f32
    %381 = vector.broadcast %cst_172 : f32 to vector<8x128xf32>
    %382 = arith.subf %381, %375 : vector<8x128xf32>
    %383 = arith.mulf %382, %380 : vector<8x128xf32>
    %384 = arith.mulf %375, %345 : vector<8x128xf32>
    %385 = arith.addf %383, %384 : vector<8x128xf32>
    %386 = vector.broadcast %353 : i32 to vector<8x128xi32>
    %387 = arith.cmpi slt, %386, %45 : vector<8x128xi32>
    %388 = arith.select %387, %385, %345 : vector<8x128xi1>, vector<8x128xf32>
    %cst_173 = arith.constant 0.000000e+00 : f32
    %389 = vector.broadcast %cst_173 : f32 to vector<8x128xf32>
    %390 = arith.select %387, %385, %389 : vector<8x128xi1>, vector<8x128xf32>
    %c0_174 = arith.constant 0 : index
    %391 = arith.index_cast %355 : i32 to index
    %c0_175 = arith.constant 0 : index
    %392 = vector.load %arg7[%c0_174, %391, %c0_175] : memref<1x96x128xf32, #tpu.memory_space<vmem>>, vector<1x8x128xf32>
    %393 = vector.shape_cast %392 : vector<1x8x128xf32> to vector<8x128xf32>
    %394 = vector.shape_cast %390 : vector<8x128xf32> to vector<1x8x128xf32>
    tpu.vector_store %arg7[%c0_174, %391, %c0_175], %394 {strides = array<i32>} : memref<1x96x128xf32, #tpu.memory_space<vmem>>, vector<1x8x128xf32>,
    %c8_i32_176 = arith.constant 8 : i32
    %c11_i32_177 = arith.constant 11 : i32
    %395 = arith.subi %c11_i32_177, %c8_i32_176 : i32
    %396 = arith.select %0, %395, %c8_i32_176 : i32
    %c8_i32_178 = arith.constant 8 : i32
    %397 = arith.muli %396, %c8_i32_178 : i32
    %398 = tpu.assume_multiple %397, 8 : i32
    %399 = arith.index_cast %398 : i32 to index
    %c0_179 = arith.constant 0 : index
    %400 = vector.load %arg8[%399, %c0_179] : memref<96x128xf32, #tpu.memory_space<vmem>>, vector<8x128xf32>
    %401 = arith.index_cast %398 : i32 to index
    %c0_180 = arith.constant 0 : index
    %402 = vector.load %arg9[%401, %c0_180] : memref<96x128xf32, #tpu.memory_space<vmem>>, vector<8x128xf32>
    %403 = arith.index_cast %398 : i32 to index
    %c0_181 = arith.constant 0 : index
    %404 = vector.load %arg10[%403, %c0_181] : memref<96x128xf32, #tpu.memory_space<vmem>>, vector<8x128xf32>
    %cst_182 = arith.constant dense<0.000000e+00> : vector<8x128xf32>
    %405 = tpu.matmul %388, %38, %cst_182 {dimension_numbers = #tpu.dot_dimension_numbers<[1], [0], [0], [1], [0, 0, 1, 1], [], []>} : vector<8x128xf32>, vector<128x128xf32>, vector<8x128xf32> -> vector<8x128xf32>
    %406 = arith.addf %400, %405 : vector<8x128xf32>
    %407 = arith.negf %406 : vector<8x128xf32>
    %408 = math.exp %407 : vector<8x128xf32>
    %cst_183 = arith.constant 1.000000e+00 : f32
    %409 = vector.broadcast %cst_183 : f32 to vector<8x128xf32>
    %410 = arith.addf %409, %408 : vector<8x128xf32>
    %411 = arith.divf %409, %410 : vector<8x128xf32>
    %cst_184 = arith.constant dense<0.000000e+00> : vector<8x128xf32>
    %412 = tpu.matmul %388, %40, %cst_184 {dimension_numbers = #tpu.dot_dimension_numbers<[1], [0], [0], [1], [0, 0, 1, 1], [], []>} : vector<8x128xf32>, vector<128x128xf32>, vector<8x128xf32> -> vector<8x128xf32>
    %413 = arith.addf %402, %412 : vector<8x128xf32>
    %414 = arith.negf %413 : vector<8x128xf32>
    %415 = math.exp %414 : vector<8x128xf32>
    %cst_185 = arith.constant 1.000000e+00 : f32
    %416 = vector.broadcast %cst_185 : f32 to vector<8x128xf32>
    %417 = arith.addf %416, %415 : vector<8x128xf32>
    %418 = arith.divf %416, %417 : vector<8x128xf32>
    %cst_186 = arith.constant dense<0.000000e+00> : vector<8x128xf32>
    %419 = tpu.matmul %388, %42, %cst_186 {dimension_numbers = #tpu.dot_dimension_numbers<[1], [0], [0], [1], [0, 0, 1, 1], [], []>} : vector<8x128xf32>, vector<128x128xf32>, vector<8x128xf32> -> vector<8x128xf32>
    %420 = arith.addf %419, %49 : vector<8x128xf32>
    %421 = arith.mulf %411, %420 : vector<8x128xf32>
    %422 = arith.addf %404, %421 : vector<8x128xf32>
    %423 = math.tanh %422 : vector<8x128xf32>
    %cst_187 = arith.constant 1.000000e+00 : f32
    %424 = vector.broadcast %cst_187 : f32 to vector<8x128xf32>
    %425 = arith.subf %424, %418 : vector<8x128xf32>
    %426 = arith.mulf %425, %423 : vector<8x128xf32>
    %427 = arith.mulf %418, %388 : vector<8x128xf32>
    %428 = arith.addf %426, %427 : vector<8x128xf32>
    %429 = vector.broadcast %396 : i32 to vector<8x128xi32>
    %430 = arith.cmpi slt, %429, %45 : vector<8x128xi32>
    %431 = arith.select %430, %428, %388 : vector<8x128xi1>, vector<8x128xf32>
    %cst_188 = arith.constant 0.000000e+00 : f32
    %432 = vector.broadcast %cst_188 : f32 to vector<8x128xf32>
    %433 = arith.select %430, %428, %432 : vector<8x128xi1>, vector<8x128xf32>
    %c0_189 = arith.constant 0 : index
    %434 = arith.index_cast %398 : i32 to index
    %c0_190 = arith.constant 0 : index
    %435 = vector.load %arg7[%c0_189, %434, %c0_190] : memref<1x96x128xf32, #tpu.memory_space<vmem>>, vector<1x8x128xf32>
    %436 = vector.shape_cast %435 : vector<1x8x128xf32> to vector<8x128xf32>
    %437 = vector.shape_cast %433 : vector<8x128xf32> to vector<1x8x128xf32>
    tpu.vector_store %arg7[%c0_189, %434, %c0_190], %437 {strides = array<i32>} : memref<1x96x128xf32, #tpu.memory_space<vmem>>, vector<1x8x128xf32>,
    %c9_i32 = arith.constant 9 : i32
    %c11_i32_191 = arith.constant 11 : i32
    %438 = arith.subi %c11_i32_191, %c9_i32 : i32
    %439 = arith.select %0, %438, %c9_i32 : i32
    %c8_i32_192 = arith.constant 8 : i32
    %440 = arith.muli %439, %c8_i32_192 : i32
    %441 = tpu.assume_multiple %440, 8 : i32
    %442 = arith.index_cast %441 : i32 to index
    %c0_193 = arith.constant 0 : index
    %443 = vector.load %arg8[%442, %c0_193] : memref<96x128xf32, #tpu.memory_space<vmem>>, vector<8x128xf32>
    %444 = arith.index_cast %441 : i32 to index
    %c0_194 = arith.constant 0 : index
    %445 = vector.load %arg9[%444, %c0_194] : memref<96x128xf32, #tpu.memory_space<vmem>>, vector<8x128xf32>
    %446 = arith.index_cast %441 : i32 to index
    %c0_195 = arith.constant 0 : index
    %447 = vector.load %arg10[%446, %c0_195] : memref<96x128xf32, #tpu.memory_space<vmem>>, vector<8x128xf32>
    %cst_196 = arith.constant dense<0.000000e+00> : vector<8x128xf32>
    %448 = tpu.matmul %431, %38, %cst_196 {dimension_numbers = #tpu.dot_dimension_numbers<[1], [0], [0], [1], [0, 0, 1, 1], [], []>} : vector<8x128xf32>, vector<128x128xf32>, vector<8x128xf32> -> vector<8x128xf32>
    %449 = arith.addf %443, %448 : vector<8x128xf32>
    %450 = arith.negf %449 : vector<8x128xf32>
    %451 = math.exp %450 : vector<8x128xf32>
    %cst_197 = arith.constant 1.000000e+00 : f32
    %452 = vector.broadcast %cst_197 : f32 to vector<8x128xf32>
    %453 = arith.addf %452, %451 : vector<8x128xf32>
    %454 = arith.divf %452, %453 : vector<8x128xf32>
    %cst_198 = arith.constant dense<0.000000e+00> : vector<8x128xf32>
    %455 = tpu.matmul %431, %40, %cst_198 {dimension_numbers = #tpu.dot_dimension_numbers<[1], [0], [0], [1], [0, 0, 1, 1], [], []>} : vector<8x128xf32>, vector<128x128xf32>, vector<8x128xf32> -> vector<8x128xf32>
    %456 = arith.addf %445, %455 : vector<8x128xf32>
    %457 = arith.negf %456 : vector<8x128xf32>
    %458 = math.exp %457 : vector<8x128xf32>
    %cst_199 = arith.constant 1.000000e+00 : f32
    %459 = vector.broadcast %cst_199 : f32 to vector<8x128xf32>
    %460 = arith.addf %459, %458 : vector<8x128xf32>
    %461 = arith.divf %459, %460 : vector<8x128xf32>
    %cst_200 = arith.constant dense<0.000000e+00> : vector<8x128xf32>
    %462 = tpu.matmul %431, %42, %cst_200 {dimension_numbers = #tpu.dot_dimension_numbers<[1], [0], [0], [1], [0, 0, 1, 1], [], []>} : vector<8x128xf32>, vector<128x128xf32>, vector<8x128xf32> -> vector<8x128xf32>
    %463 = arith.addf %462, %49 : vector<8x128xf32>
    %464 = arith.mulf %454, %463 : vector<8x128xf32>
    %465 = arith.addf %447, %464 : vector<8x128xf32>
    %466 = math.tanh %465 : vector<8x128xf32>
    %cst_201 = arith.constant 1.000000e+00 : f32
    %467 = vector.broadcast %cst_201 : f32 to vector<8x128xf32>
    %468 = arith.subf %467, %461 : vector<8x128xf32>
    %469 = arith.mulf %468, %466 : vector<8x128xf32>
    %470 = arith.mulf %461, %431 : vector<8x128xf32>
    %471 = arith.addf %469, %470 : vector<8x128xf32>
    %472 = vector.broadcast %439 : i32 to vector<8x128xi32>
    %473 = arith.cmpi slt, %472, %45 : vector<8x128xi32>
    %474 = arith.select %473, %471, %431 : vector<8x128xi1>, vector<8x128xf32>
    %cst_202 = arith.constant 0.000000e+00 : f32
    %475 = vector.broadcast %cst_202 : f32 to vector<8x128xf32>
    %476 = arith.select %473, %471, %475 : vector<8x128xi1>, vector<8x128xf32>
    %c0_203 = arith.constant 0 : index
    %477 = arith.index_cast %441 : i32 to index
    %c0_204 = arith.constant 0 : index
    %478 = vector.load %arg7[%c0_203, %477, %c0_204] : memref<1x96x128xf32, #tpu.memory_space<vmem>>, vector<1x8x128xf32>
    %479 = vector.shape_cast %478 : vector<1x8x128xf32> to vector<8x128xf32>
    %480 = vector.shape_cast %476 : vector<8x128xf32> to vector<1x8x128xf32>
    tpu.vector_store %arg7[%c0_203, %477, %c0_204], %480 {strides = array<i32>} : memref<1x96x128xf32, #tpu.memory_space<vmem>>, vector<1x8x128xf32>,
    %c10_i32 = arith.constant 10 : i32
    %c11_i32_205 = arith.constant 11 : i32
    %481 = arith.subi %c11_i32_205, %c10_i32 : i32
    %482 = arith.select %0, %481, %c10_i32 : i32
    %c8_i32_206 = arith.constant 8 : i32
    %483 = arith.muli %482, %c8_i32_206 : i32
    %484 = tpu.assume_multiple %483, 8 : i32
    %485 = arith.index_cast %484 : i32 to index
    %c0_207 = arith.constant 0 : index
    %486 = vector.load %arg8[%485, %c0_207] : memref<96x128xf32, #tpu.memory_space<vmem>>, vector<8x128xf32>
    %487 = arith.index_cast %484 : i32 to index
    %c0_208 = arith.constant 0 : index
    %488 = vector.load %arg9[%487, %c0_208] : memref<96x128xf32, #tpu.memory_space<vmem>>, vector<8x128xf32>
    %489 = arith.index_cast %484 : i32 to index
    %c0_209 = arith.constant 0 : index
    %490 = vector.load %arg10[%489, %c0_209] : memref<96x128xf32, #tpu.memory_space<vmem>>, vector<8x128xf32>
    %cst_210 = arith.constant dense<0.000000e+00> : vector<8x128xf32>
    %491 = tpu.matmul %474, %38, %cst_210 {dimension_numbers = #tpu.dot_dimension_numbers<[1], [0], [0], [1], [0, 0, 1, 1], [], []>} : vector<8x128xf32>, vector<128x128xf32>, vector<8x128xf32> -> vector<8x128xf32>
    %492 = arith.addf %486, %491 : vector<8x128xf32>
    %493 = arith.negf %492 : vector<8x128xf32>
    %494 = math.exp %493 : vector<8x128xf32>
    %cst_211 = arith.constant 1.000000e+00 : f32
    %495 = vector.broadcast %cst_211 : f32 to vector<8x128xf32>
    %496 = arith.addf %495, %494 : vector<8x128xf32>
    %497 = arith.divf %495, %496 : vector<8x128xf32>
    %cst_212 = arith.constant dense<0.000000e+00> : vector<8x128xf32>
    %498 = tpu.matmul %474, %40, %cst_212 {dimension_numbers = #tpu.dot_dimension_numbers<[1], [0], [0], [1], [0, 0, 1, 1], [], []>} : vector<8x128xf32>, vector<128x128xf32>, vector<8x128xf32> -> vector<8x128xf32>
    %499 = arith.addf %488, %498 : vector<8x128xf32>
    %500 = arith.negf %499 : vector<8x128xf32>
    %501 = math.exp %500 : vector<8x128xf32>
    %cst_213 = arith.constant 1.000000e+00 : f32
    %502 = vector.broadcast %cst_213 : f32 to vector<8x128xf32>
    %503 = arith.addf %502, %501 : vector<8x128xf32>
    %504 = arith.divf %502, %503 : vector<8x128xf32>
    %cst_214 = arith.constant dense<0.000000e+00> : vector<8x128xf32>
    %505 = tpu.matmul %474, %42, %cst_214 {dimension_numbers = #tpu.dot_dimension_numbers<[1], [0], [0], [1], [0, 0, 1, 1], [], []>} : vector<8x128xf32>, vector<128x128xf32>, vector<8x128xf32> -> vector<8x128xf32>
    %506 = arith.addf %505, %49 : vector<8x128xf32>
    %507 = arith.mulf %497, %506 : vector<8x128xf32>
    %508 = arith.addf %490, %507 : vector<8x128xf32>
    %509 = math.tanh %508 : vector<8x128xf32>
    %cst_215 = arith.constant 1.000000e+00 : f32
    %510 = vector.broadcast %cst_215 : f32 to vector<8x128xf32>
    %511 = arith.subf %510, %504 : vector<8x128xf32>
    %512 = arith.mulf %511, %509 : vector<8x128xf32>
    %513 = arith.mulf %504, %474 : vector<8x128xf32>
    %514 = arith.addf %512, %513 : vector<8x128xf32>
    %515 = vector.broadcast %482 : i32 to vector<8x128xi32>
    %516 = arith.cmpi slt, %515, %45 : vector<8x128xi32>
    %517 = arith.select %516, %514, %474 : vector<8x128xi1>, vector<8x128xf32>
    %cst_216 = arith.constant 0.000000e+00 : f32
    %518 = vector.broadcast %cst_216 : f32 to vector<8x128xf32>
    %519 = arith.select %516, %514, %518 : vector<8x128xi1>, vector<8x128xf32>
    %c0_217 = arith.constant 0 : index
    %520 = arith.index_cast %484 : i32 to index
    %c0_218 = arith.constant 0 : index
    %521 = vector.load %arg7[%c0_217, %520, %c0_218] : memref<1x96x128xf32, #tpu.memory_space<vmem>>, vector<1x8x128xf32>
    %522 = vector.shape_cast %521 : vector<1x8x128xf32> to vector<8x128xf32>
    %523 = vector.shape_cast %519 : vector<8x128xf32> to vector<1x8x128xf32>
    tpu.vector_store %arg7[%c0_217, %520, %c0_218], %523 {strides = array<i32>} : memref<1x96x128xf32, #tpu.memory_space<vmem>>, vector<1x8x128xf32>,
    %c11_i32_219 = arith.constant 11 : i32
    %c11_i32_220 = arith.constant 11 : i32
    %524 = arith.subi %c11_i32_220, %c11_i32_219 : i32
    %525 = arith.select %0, %524, %c11_i32_219 : i32
    %c8_i32_221 = arith.constant 8 : i32
    %526 = arith.muli %525, %c8_i32_221 : i32
    %527 = tpu.assume_multiple %526, 8 : i32
    %528 = arith.index_cast %527 : i32 to index
    %c0_222 = arith.constant 0 : index
    %529 = vector.load %arg8[%528, %c0_222] : memref<96x128xf32, #tpu.memory_space<vmem>>, vector<8x128xf32>
    %530 = arith.index_cast %527 : i32 to index
    %c0_223 = arith.constant 0 : index
    %531 = vector.load %arg9[%530, %c0_223] : memref<96x128xf32, #tpu.memory_space<vmem>>, vector<8x128xf32>
    %532 = arith.index_cast %527 : i32 to index
    %c0_224 = arith.constant 0 : index
    %533 = vector.load %arg10[%532, %c0_224] : memref<96x128xf32, #tpu.memory_space<vmem>>, vector<8x128xf32>
    %cst_225 = arith.constant dense<0.000000e+00> : vector<8x128xf32>
    %534 = tpu.matmul %517, %38, %cst_225 {dimension_numbers = #tpu.dot_dimension_numbers<[1], [0], [0], [1], [0, 0, 1, 1], [], []>} : vector<8x128xf32>, vector<128x128xf32>, vector<8x128xf32> -> vector<8x128xf32>
    %535 = arith.addf %529, %534 : vector<8x128xf32>
    %536 = arith.negf %535 : vector<8x128xf32>
    %537 = math.exp %536 : vector<8x128xf32>
    %cst_226 = arith.constant 1.000000e+00 : f32
    %538 = vector.broadcast %cst_226 : f32 to vector<8x128xf32>
    %539 = arith.addf %538, %537 : vector<8x128xf32>
    %540 = arith.divf %538, %539 : vector<8x128xf32>
    %cst_227 = arith.constant dense<0.000000e+00> : vector<8x128xf32>
    %541 = tpu.matmul %517, %40, %cst_227 {dimension_numbers = #tpu.dot_dimension_numbers<[1], [0], [0], [1], [0, 0, 1, 1], [], []>} : vector<8x128xf32>, vector<128x128xf32>, vector<8x128xf32> -> vector<8x128xf32>
    %542 = arith.addf %531, %541 : vector<8x128xf32>
    %543 = arith.negf %542 : vector<8x128xf32>
    %544 = math.exp %543 : vector<8x128xf32>
    %cst_228 = arith.constant 1.000000e+00 : f32
    %545 = vector.broadcast %cst_228 : f32 to vector<8x128xf32>
    %546 = arith.addf %545, %544 : vector<8x128xf32>
    %547 = arith.divf %545, %546 : vector<8x128xf32>
    %cst_229 = arith.constant dense<0.000000e+00> : vector<8x128xf32>
    %548 = tpu.matmul %517, %42, %cst_229 {dimension_numbers = #tpu.dot_dimension_numbers<[1], [0], [0], [1], [0, 0, 1, 1], [], []>} : vector<8x128xf32>, vector<128x128xf32>, vector<8x128xf32> -> vector<8x128xf32>
    %549 = arith.addf %548, %49 : vector<8x128xf32>
    %550 = arith.mulf %540, %549 : vector<8x128xf32>
    %551 = arith.addf %533, %550 : vector<8x128xf32>
    %552 = math.tanh %551 : vector<8x128xf32>
    %cst_230 = arith.constant 1.000000e+00 : f32
    %553 = vector.broadcast %cst_230 : f32 to vector<8x128xf32>
    %554 = arith.subf %553, %547 : vector<8x128xf32>
    %555 = arith.mulf %554, %552 : vector<8x128xf32>
    %556 = arith.mulf %547, %517 : vector<8x128xf32>
    %557 = arith.addf %555, %556 : vector<8x128xf32>
    %558 = vector.broadcast %525 : i32 to vector<8x128xi32>
    %559 = arith.cmpi slt, %558, %45 : vector<8x128xi32>
    %560 = arith.select %559, %557, %517 : vector<8x128xi1>, vector<8x128xf32>
    %cst_231 = arith.constant 0.000000e+00 : f32
    %561 = vector.broadcast %cst_231 : f32 to vector<8x128xf32>
    %562 = arith.select %559, %557, %561 : vector<8x128xi1>, vector<8x128xf32>
    %c0_232 = arith.constant 0 : index
    %563 = arith.index_cast %527 : i32 to index
    %c0_233 = arith.constant 0 : index
    %564 = vector.load %arg7[%c0_232, %563, %c0_233] : memref<1x96x128xf32, #tpu.memory_space<vmem>>, vector<1x8x128xf32>
    %565 = vector.shape_cast %564 : vector<1x8x128xf32> to vector<8x128xf32>
    %566 = vector.shape_cast %562 : vector<8x128xf32> to vector<1x8x128xf32>
    tpu.vector_store %arg7[%c0_232, %563, %c0_233], %566 {strides = array<i32>} : memref<1x96x128xf32, #tpu.memory_space<vmem>>, vector<1x8x128xf32>,
    %c12_i32 = arith.constant 12 : i32
    return
  }
  func.func @transform_0(%arg0: i32) -> (i32, i32, i32) {
    %c0_i32 = arith.constant 0 : i32
    %c0_i32_0 = arith.constant 0 : i32
    %c0_i32_1 = arith.constant 0 : i32
    %c0_i32_2 = arith.constant 0 : i32
    return %c0_i32, %c0_i32_0, %c0_i32_1 : i32, i32, i32
  }
  func.func @transform_1(%arg0: i32) -> (i32, i32, i32, i32) {
    %c0_i32 = arith.constant 0 : i32
    %c0_i32_0 = arith.constant 0 : i32
    %c0_i32_1 = arith.constant 0 : i32
    %c0_i32_2 = arith.constant 0 : i32
    return %arg0, %c0_i32, %c0_i32_0, %c0_i32_1 : i32, i32, i32, i32
  }
  func.func @transform_2(%arg0: i32) -> (i32, i32, i32, i32) {
    %c0_i32 = arith.constant 0 : i32
    %c0_i32_0 = arith.constant 0 : i32
    %c0_i32_1 = arith.constant 0 : i32
    %c0_i32_2 = arith.constant 0 : i32
    return %arg0, %c0_i32, %c0_i32_0, %c0_i32_1 : i32, i32, i32, i32
  }
  func.func @transform_3(%arg0: i32) -> (i32, i32, i32, i32) {
    %c0_i32 = arith.constant 0 : i32
    %c0_i32_0 = arith.constant 0 : i32
    %c0_i32_1 = arith.constant 0 : i32
    %c0_i32_2 = arith.constant 0 : i32
    return %arg0, %c0_i32, %c0_i32_0, %c0_i32_1 : i32, i32, i32, i32
  }
  func.func @transform_4(%arg0: i32) -> (i32, i32, i32, i32) {
    %c0_i32 = arith.constant 0 : i32
    %c0_i32_0 = arith.constant 0 : i32
    %c0_i32_1 = arith.constant 0 : i32
    %c0_i32_2 = arith.constant 0 : i32
    return %arg0, %c0_i32, %c0_i32_0, %c0_i32_1 : i32, i32, i32, i32
  }
  func.func @transform_5(%arg0: i32) -> (i32, i32) {
    %c0_i32 = arith.constant 0 : i32
    %c0_i32_0 = arith.constant 0 : i32
    %c0_i32_1 = arith.constant 0 : i32
    return %c0_i32, %c0_i32_0 : i32, i32
  }
  func.func @transform_6(%arg0: i32) -> (i32, i32, i32) {
    %c0_i32 = arith.constant 0 : i32
    %c0_i32_0 = arith.constant 0 : i32
    %c0_i32_1 = arith.constant 0 : i32
    return %arg0, %c0_i32, %c0_i32_0 : i32, i32, i32
  }
}

module attributes {stable_mosaic.version = 11 : i64} {
  func.func @_gru_layer_kernel(%arg0: i32, %arg1: memref<2x96x128xf32, #tpu.memory_space<vmem>>, %arg2: memref<1x6x128x128xf32, #tpu.memory_space<vmem>>, %arg3: memref<1x3x128x128xf32, #tpu.memory_space<vmem>>, %arg4: memref<1x3x1x128xf32, #tpu.memory_space<vmem>>, %arg5: memref<1x3x1x128xf32, #tpu.memory_space<vmem>>, %arg6: memref<8x1xi32, #tpu.memory_space<vmem>>, %arg7: memref<1x96x128xf32, #tpu.memory_space<vmem>>, %arg8: memref<96x128xf32, #tpu.memory_space<vmem>>, %arg9: memref<96x128xf32, #tpu.memory_space<vmem>>, %arg10: memref<96x128xf32, #tpu.memory_space<vmem>>) attributes {dimension_semantics = [#tpu.dimension_semantics<parallel>], iteration_bounds = array<i64: 2>, scalar_prefetch = 0 : i64, scratch_operands = 3 : i64, tpu.core_type = #tpu.core_type<tc>, window_params = [{pipeline_mode = #tpu.pipeline_mode<synchronous>, transform_indices = @transform_0, window_bounds = array<i64: 2, 96, 128>}, {transform_indices = @transform_1, window_bounds = array<i64: 1, 6, 128, 128>}, {transform_indices = @transform_2, window_bounds = array<i64: 1, 3, 128, 128>}, {transform_indices = @transform_3, window_bounds = array<i64: 1, 3, 1, 128>}, {transform_indices = @transform_4, window_bounds = array<i64: 1, 3, 1, 128>}, {pipeline_mode = #tpu.pipeline_mode<synchronous>, transform_indices = @transform_5, window_bounds = array<i64: 8, 1>}, {transform_indices = @transform_6, window_bounds = array<i64: 1, 96, 128>}]} {
    %c1_i32 = arith.constant 1 : i32
    %0 = arith.cmpi eq, %arg0, %c1_i32 : i32
    %c0 = arith.constant 0 : index
    %c0_0 = arith.constant 0 : index
    %c0_1 = arith.constant 0 : index
    %1 = vector.load %arg1[%c0, %c0_0, %c0_1] : memref<2x96x128xf32, #tpu.memory_space<vmem>>, vector<1x96x128xf32>
    %2 = vector.shape_cast %1 : vector<1x96x128xf32> to vector<96x128xf32>
    %c0_2 = arith.constant 0 : index
    %c0_3 = arith.constant 0 : index
    %c0_4 = arith.constant 0 : index
    %c0_5 = arith.constant 0 : index
    %3 = vector.load %arg2[%c0_2, %c0_3, %c0_4, %c0_5] : memref<1x6x128x128xf32, #tpu.memory_space<vmem>>, vector<1x1x128x128xf32>
    %4 = vector.shape_cast %3 : vector<1x1x128x128xf32> to vector<128x128xf32>
    %cst = arith.constant dense<0.000000e+00> : vector<96x128xf32>
    %5 = tpu.matmul %2, %4, %cst {dimension_numbers = #tpu.dot_dimension_numbers<[1], [0], [0], [1], [0, 0, 1, 1], [], []>} : vector<96x128xf32>, vector<128x128xf32>, vector<96x128xf32> -> vector<96x128xf32>
    %c1 = arith.constant 1 : index
    %c0_6 = arith.constant 0 : index
    %c0_7 = arith.constant 0 : index
    %6 = vector.load %arg1[%c1, %c0_6, %c0_7] : memref<2x96x128xf32, #tpu.memory_space<vmem>>, vector<1x96x128xf32>
    %7 = vector.shape_cast %6 : vector<1x96x128xf32> to vector<96x128xf32>
    %c0_8 = arith.constant 0 : index
    %c3 = arith.constant 3 : index
    %c0_9 = arith.constant 0 : index
    %c0_10 = arith.constant 0 : index
    %8 = vector.load %arg2[%c0_8, %c3, %c0_9, %c0_10] : memref<1x6x128x128xf32, #tpu.memory_space<vmem>>, vector<1x1x128x128xf32>
    %9 = vector.shape_cast %8 : vector<1x1x128x128xf32> to vector<128x128xf32>
    %cst_11 = arith.constant dense<0.000000e+00> : vector<96x128xf32>
    %10 = tpu.matmul %7, %9, %cst_11 {dimension_numbers = #tpu.dot_dimension_numbers<[1], [0], [0], [1], [0, 0, 1, 1], [], []>} : vector<96x128xf32>, vector<128x128xf32>, vector<96x128xf32> -> vector<96x128xf32>
    %11 = arith.addf %5, %10 : vector<96x128xf32>
    %c0_12 = arith.constant 0 : index
    %c0_13 = arith.constant 0 : index
    %c0_14 = arith.constant 0 : index
    %c0_15 = arith.constant 0 : index
    %12 = vector.load %arg4[%c0_12, %c0_13, %c0_14, %c0_15] : memref<1x3x1x128xf32, #tpu.memory_space<vmem>>, vector<1x1x1x128xf32>
    %13 = vector.shape_cast %12 : vector<1x1x1x128xf32> to vector<1x128xf32>
    %c0_16 = arith.constant 0 : index
    %c0_17 = arith.constant 0 : index
    %c0_18 = arith.constant 0 : index
    %c0_19 = arith.constant 0 : index
    %14 = vector.load %arg5[%c0_16, %c0_17, %c0_18, %c0_19] : memref<1x3x1x128xf32, #tpu.memory_space<vmem>>, vector<1x1x1x128xf32>
    %15 = vector.shape_cast %14 : vector<1x1x1x128xf32> to vector<1x128xf32>
    %16 = arith.addf %13, %15 : vector<1x128xf32>
    %17 = vector.broadcast %16 : vector<1x128xf32> to vector<96x128xf32>
    %18 = arith.addf %11, %17 : vector<96x128xf32>
    %c0_20 = arith.constant 0 : index
    %c0_21 = arith.constant 0 : index
    %19 = vector.load %arg8[%c0_20, %c0_21] : memref<96x128xf32, #tpu.memory_space<vmem>>, vector<96x128xf32>
    tpu.vector_store %arg8[%c0_20, %c0_21], %18 {strides = array<i32>} : memref<96x128xf32, #tpu.memory_space<vmem>>, vector<96x128xf32>,
    %c0_22 = arith.constant 0 : index
    %c0_23 = arith.constant 0 : index
    %c0_24 = arith.constant 0 : index
    %20 = vector.load %arg1[%c0_22, %c0_23, %c0_24] : memref<2x96x128xf32, #tpu.memory_space<vmem>>, vector<1x96x128xf32>
    %21 = vector.shape_cast %20 : vector<1x96x128xf32> to vector<96x128xf32>
    %c0_25 = arith.constant 0 : index
    %c1_26 = arith.constant 1 : index
    %c0_27 = arith.constant 0 : index
    %c0_28 = arith.constant 0 : index
    %22 = vector.load %arg2[%c0_25, %c1_26, %c0_27, %c0_28] : memref<1x6x128x128xf32, #tpu.memory_space<vmem>>, vector<1x1x128x128xf32>
    %23 = vector.shape_cast %22 : vector<1x1x128x128xf32> to vector<128x128xf32>
    %cst_29 = arith.constant dense<0.000000e+00> : vector<96x128xf32>
    %24 = tpu.matmul %21, %23, %cst_29 {dimension_numbers = #tpu.dot_dimension_numbers<[1], [0], [0], [1], [0, 0, 1, 1], [], []>} : vector<96x128xf32>, vector<128x128xf32>, vector<96x128xf32> -> vector<96x128xf32>
    %c1_30 = arith.constant 1 : index
    %c0_31 = arith.constant 0 : index
    %c0_32 = arith.constant 0 : index
    %25 = vector.load %arg1[%c1_30, %c0_31, %c0_32] : memref<2x96x128xf32, #tpu.memory_space<vmem>>, vector<1x96x128xf32>
    %26 = vector.shape_cast %25 : vector<1x96x128xf32> to vector<96x128xf32>
    %c0_33 = arith.constant 0 : index
    %c4 = arith.constant 4 : index
    %c0_34 = arith.constant 0 : index
    %c0_35 = arith.constant 0 : index
    %27 = vector.load %arg2[%c0_33, %c4, %c0_34, %c0_35] : memref<1x6x128x128xf32, #tpu.memory_space<vmem>>, vector<1x1x128x128xf32>
    %28 = vector.shape_cast %27 : vector<1x1x128x128xf32> to vector<128x128xf32>
    %cst_36 = arith.constant dense<0.000000e+00> : vector<96x128xf32>
    %29 = tpu.matmul %26, %28, %cst_36 {dimension_numbers = #tpu.dot_dimension_numbers<[1], [0], [0], [1], [0, 0, 1, 1], [], []>} : vector<96x128xf32>, vector<128x128xf32>, vector<96x128xf32> -> vector<96x128xf32>
    %30 = arith.addf %24, %29 : vector<96x128xf32>
    %c0_37 = arith.constant 0 : index
    %c1_38 = arith.constant 1 : index
    %c0_39 = arith.constant 0 : index
    %c0_40 = arith.constant 0 : index
    %31 = vector.load %arg4[%c0_37, %c1_38, %c0_39, %c0_40] : memref<1x3x1x128xf32, #tpu.memory_space<vmem>>, vector<1x1x1x128xf32>
    %32 = vector.shape_cast %31 : vector<1x1x1x128xf32> to vector<1x128xf32>
    %c0_41 = arith.constant 0 : index
    %c1_42 = arith.constant 1 : index
    %c0_43 = arith.constant 0 : index
    %c0_44 = arith.constant 0 : index
    %33 = vector.load %arg5[%c0_41, %c1_42, %c0_43, %c0_44] : memref<1x3x1x128xf32, #tpu.memory_space<vmem>>, vector<1x1x1x128xf32>
    %34 = vector.shape_cast %33 : vector<1x1x1x128xf32> to vector<1x128xf32>
    %35 = arith.addf %32, %34 : vector<1x128xf32>
    %36 = vector.broadcast %35 : vector<1x128xf32> to vector<96x128xf32>
    %37 = arith.addf %30, %36 : vector<96x128xf32>
    %c0_45 = arith.constant 0 : index
    %c0_46 = arith.constant 0 : index
    %38 = vector.load %arg9[%c0_45, %c0_46] : memref<96x128xf32, #tpu.memory_space<vmem>>, vector<96x128xf32>
    tpu.vector_store %arg9[%c0_45, %c0_46], %37 {strides = array<i32>} : memref<96x128xf32, #tpu.memory_space<vmem>>, vector<96x128xf32>,
    %c0_47 = arith.constant 0 : index
    %c0_48 = arith.constant 0 : index
    %c0_49 = arith.constant 0 : index
    %39 = vector.load %arg1[%c0_47, %c0_48, %c0_49] : memref<2x96x128xf32, #tpu.memory_space<vmem>>, vector<1x96x128xf32>
    %40 = vector.shape_cast %39 : vector<1x96x128xf32> to vector<96x128xf32>
    %c0_50 = arith.constant 0 : index
    %c2 = arith.constant 2 : index
    %c0_51 = arith.constant 0 : index
    %c0_52 = arith.constant 0 : index
    %41 = vector.load %arg2[%c0_50, %c2, %c0_51, %c0_52] : memref<1x6x128x128xf32, #tpu.memory_space<vmem>>, vector<1x1x128x128xf32>
    %42 = vector.shape_cast %41 : vector<1x1x128x128xf32> to vector<128x128xf32>
    %cst_53 = arith.constant dense<0.000000e+00> : vector<96x128xf32>
    %43 = tpu.matmul %40, %42, %cst_53 {dimension_numbers = #tpu.dot_dimension_numbers<[1], [0], [0], [1], [0, 0, 1, 1], [], []>} : vector<96x128xf32>, vector<128x128xf32>, vector<96x128xf32> -> vector<96x128xf32>
    %c1_54 = arith.constant 1 : index
    %c0_55 = arith.constant 0 : index
    %c0_56 = arith.constant 0 : index
    %44 = vector.load %arg1[%c1_54, %c0_55, %c0_56] : memref<2x96x128xf32, #tpu.memory_space<vmem>>, vector<1x96x128xf32>
    %45 = vector.shape_cast %44 : vector<1x96x128xf32> to vector<96x128xf32>
    %c0_57 = arith.constant 0 : index
    %c5 = arith.constant 5 : index
    %c0_58 = arith.constant 0 : index
    %c0_59 = arith.constant 0 : index
    %46 = vector.load %arg2[%c0_57, %c5, %c0_58, %c0_59] : memref<1x6x128x128xf32, #tpu.memory_space<vmem>>, vector<1x1x128x128xf32>
    %47 = vector.shape_cast %46 : vector<1x1x128x128xf32> to vector<128x128xf32>
    %cst_60 = arith.constant dense<0.000000e+00> : vector<96x128xf32>
    %48 = tpu.matmul %45, %47, %cst_60 {dimension_numbers = #tpu.dot_dimension_numbers<[1], [0], [0], [1], [0, 0, 1, 1], [], []>} : vector<96x128xf32>, vector<128x128xf32>, vector<96x128xf32> -> vector<96x128xf32>
    %49 = arith.addf %43, %48 : vector<96x128xf32>
    %c0_61 = arith.constant 0 : index
    %c2_62 = arith.constant 2 : index
    %c0_63 = arith.constant 0 : index
    %c0_64 = arith.constant 0 : index
    %50 = vector.load %arg4[%c0_61, %c2_62, %c0_63, %c0_64] : memref<1x3x1x128xf32, #tpu.memory_space<vmem>>, vector<1x1x1x128xf32>
    %51 = vector.shape_cast %50 : vector<1x1x1x128xf32> to vector<1x128xf32>
    %52 = vector.broadcast %51 : vector<1x128xf32> to vector<96x128xf32>
    %53 = arith.addf %49, %52 : vector<96x128xf32>
    %c0_65 = arith.constant 0 : index
    %c0_66 = arith.constant 0 : index
    %54 = vector.load %arg10[%c0_65, %c0_66] : memref<96x128xf32, #tpu.memory_space<vmem>>, vector<96x128xf32>
    tpu.vector_store %arg10[%c0_65, %c0_66], %53 {strides = array<i32>} : memref<96x128xf32, #tpu.memory_space<vmem>>, vector<96x128xf32>,
    %c0_67 = arith.constant 0 : index
    %c0_68 = arith.constant 0 : index
    %c0_69 = arith.constant 0 : index
    %c0_70 = arith.constant 0 : index
    %55 = vector.load %arg3[%c0_67, %c0_68, %c0_69, %c0_70] : memref<1x3x128x128xf32, #tpu.memory_space<vmem>>, vector<1x1x128x128xf32>
    %56 = vector.shape_cast %55 : vector<1x1x128x128xf32> to vector<128x128xf32>
    %c0_71 = arith.constant 0 : index
    %c1_72 = arith.constant 1 : index
    %c0_73 = arith.constant 0 : index
    %c0_74 = arith.constant 0 : index
    %57 = vector.load %arg3[%c0_71, %c1_72, %c0_73, %c0_74] : memref<1x3x128x128xf32, #tpu.memory_space<vmem>>, vector<1x1x128x128xf32>
    %58 = vector.shape_cast %57 : vector<1x1x128x128xf32> to vector<128x128xf32>
    %c0_75 = arith.constant 0 : index
    %c2_76 = arith.constant 2 : index
    %c0_77 = arith.constant 0 : index
    %c0_78 = arith.constant 0 : index
    %59 = vector.load %arg3[%c0_75, %c2_76, %c0_77, %c0_78] : memref<1x3x128x128xf32, #tpu.memory_space<vmem>>, vector<1x1x128x128xf32>
    %60 = vector.shape_cast %59 : vector<1x1x128x128xf32> to vector<128x128xf32>
    %c0_79 = arith.constant 0 : index
    %c0_80 = arith.constant 0 : index
    %61 = vector.load %arg6[%c0_79, %c0_80] : memref<8x1xi32, #tpu.memory_space<vmem>>, vector<8x1xi32>
    %62 = vector.shape_cast %61 : vector<8x1xi32> to vector<8x1xi32>
    %63 = vector.broadcast %62 : vector<8x1xi32> to vector<8x128xi32>
    %c0_81 = arith.constant 0 : index
    %c2_82 = arith.constant 2 : index
    %c0_83 = arith.constant 0 : index
    %c0_84 = arith.constant 0 : index
    %64 = vector.load %arg5[%c0_81, %c2_82, %c0_83, %c0_84] : memref<1x3x1x128xf32, #tpu.memory_space<vmem>>, vector<1x1x1x128xf32>
    %65 = vector.shape_cast %64 : vector<1x1x1x128xf32> to vector<1x128xf32>
    %66 = vector.shape_cast %65 : vector<1x128xf32> to vector<1x128xf32>
    %67 = vector.broadcast %66 : vector<1x128xf32> to vector<8x128xf32>
    %cst_85 = arith.constant 0.000000e+00 : f32
    %68 = vector.broadcast %cst_85 : f32 to vector<8x128xf32>
    %c0_i32 = arith.constant 0 : i32
    %c11_i32 = arith.constant 11 : i32
    %69 = arith.subi %c11_i32, %c0_i32 : i32
    %70 = arith.select %0, %69, %c0_i32 : i32
    %c8_i32 = arith.constant 8 : i32
    %71 = arith.muli %70, %c8_i32 : i32
    %72 = tpu.assume_multiple %71, 8 : i32
    %73 = arith.index_cast %72 : i32 to index
    %c0_86 = arith.constant 0 : index
    %74 = vector.load %arg8[%73, %c0_86] : memref<96x128xf32, #tpu.memory_space<vmem>>, vector<8x128xf32>
    %75 = arith.index_cast %72 : i32 to index
    %c0_87 = arith.constant 0 : index
    %76 = vector.load %arg9[%75, %c0_87] : memref<96x128xf32, #tpu.memory_space<vmem>>, vector<8x128xf32>
    %77 = arith.index_cast %72 : i32 to index
    %c0_88 = arith.constant 0 : index
    %78 = vector.load %arg10[%77, %c0_88] : memref<96x128xf32, #tpu.memory_space<vmem>>, vector<8x128xf32>
    %cst_89 = arith.constant dense<0.000000e+00> : vector<8x128xf32>
    %79 = tpu.matmul %68, %56, %cst_89 {dimension_numbers = #tpu.dot_dimension_numbers<[1], [0], [0], [1], [0, 0, 1, 1], [], []>} : vector<8x128xf32>, vector<128x128xf32>, vector<8x128xf32> -> vector<8x128xf32>
    %80 = arith.addf %74, %79 : vector<8x128xf32>
    %81 = arith.negf %80 : vector<8x128xf32>
    %82 = math.exp %81 : vector<8x128xf32>
    %cst_90 = arith.constant 1.000000e+00 : f32
    %83 = vector.broadcast %cst_90 : f32 to vector<8x128xf32>
    %84 = arith.addf %83, %82 : vector<8x128xf32>
    %85 = arith.divf %83, %84 : vector<8x128xf32>
    %cst_91 = arith.constant dense<0.000000e+00> : vector<8x128xf32>
    %86 = tpu.matmul %68, %58, %cst_91 {dimension_numbers = #tpu.dot_dimension_numbers<[1], [0], [0], [1], [0, 0, 1, 1], [], []>} : vector<8x128xf32>, vector<128x128xf32>, vector<8x128xf32> -> vector<8x128xf32>
    %87 = arith.addf %76, %86 : vector<8x128xf32>
    %88 = arith.negf %87 : vector<8x128xf32>
    %89 = math.exp %88 : vector<8x128xf32>
    %cst_92 = arith.constant 1.000000e+00 : f32
    %90 = vector.broadcast %cst_92 : f32 to vector<8x128xf32>
    %91 = arith.addf %90, %89 : vector<8x128xf32>
    %92 = arith.divf %90, %91 : vector<8x128xf32>
    %cst_93 = arith.constant dense<0.000000e+00> : vector<8x128xf32>
    %93 = tpu.matmul %68, %60, %cst_93 {dimension_numbers = #tpu.dot_dimension_numbers<[1], [0], [0], [1], [0, 0, 1, 1], [], []>} : vector<8x128xf32>, vector<128x128xf32>, vector<8x128xf32> -> vector<8x128xf32>
    %94 = arith.addf %93, %67 : vector<8x128xf32>
    %95 = arith.mulf %85, %94 : vector<8x128xf32>
    %96 = arith.addf %78, %95 : vector<8x128xf32>
    %97 = math.tanh %96 : vector<8x128xf32>
    %cst_94 = arith.constant 1.000000e+00 : f32
    %98 = vector.broadcast %cst_94 : f32 to vector<8x128xf32>
    %99 = arith.subf %98, %92 : vector<8x128xf32>
    %100 = arith.mulf %99, %97 : vector<8x128xf32>
    %101 = arith.mulf %92, %68 : vector<8x128xf32>
    %102 = arith.addf %100, %101 : vector<8x128xf32>
    %103 = vector.broadcast %70 : i32 to vector<8x128xi32>
    %104 = arith.cmpi slt, %103, %63 : vector<8x128xi32>
    %105 = arith.select %104, %102, %68 : vector<8x128xi1>, vector<8x128xf32>
    %cst_95 = arith.constant 0.000000e+00 : f32
    %106 = vector.broadcast %cst_95 : f32 to vector<8x128xf32>
    %107 = arith.select %104, %102, %106 : vector<8x128xi1>, vector<8x128xf32>
    %c0_96 = arith.constant 0 : index
    %108 = arith.index_cast %72 : i32 to index
    %c0_97 = arith.constant 0 : index
    %109 = vector.load %arg7[%c0_96, %108, %c0_97] : memref<1x96x128xf32, #tpu.memory_space<vmem>>, vector<1x8x128xf32>
    %110 = vector.shape_cast %109 : vector<1x8x128xf32> to vector<8x128xf32>
    %111 = vector.shape_cast %107 : vector<8x128xf32> to vector<1x8x128xf32>
    tpu.vector_store %arg7[%c0_96, %108, %c0_97], %111 {strides = array<i32>} : memref<1x96x128xf32, #tpu.memory_space<vmem>>, vector<1x8x128xf32>,
    %c1_i32_98 = arith.constant 1 : i32
    %c11_i32_99 = arith.constant 11 : i32
    %112 = arith.subi %c11_i32_99, %c1_i32_98 : i32
    %113 = arith.select %0, %112, %c1_i32_98 : i32
    %c8_i32_100 = arith.constant 8 : i32
    %114 = arith.muli %113, %c8_i32_100 : i32
    %115 = tpu.assume_multiple %114, 8 : i32
    %116 = arith.index_cast %115 : i32 to index
    %c0_101 = arith.constant 0 : index
    %117 = vector.load %arg8[%116, %c0_101] : memref<96x128xf32, #tpu.memory_space<vmem>>, vector<8x128xf32>
    %118 = arith.index_cast %115 : i32 to index
    %c0_102 = arith.constant 0 : index
    %119 = vector.load %arg9[%118, %c0_102] : memref<96x128xf32, #tpu.memory_space<vmem>>, vector<8x128xf32>
    %120 = arith.index_cast %115 : i32 to index
    %c0_103 = arith.constant 0 : index
    %121 = vector.load %arg10[%120, %c0_103] : memref<96x128xf32, #tpu.memory_space<vmem>>, vector<8x128xf32>
    %cst_104 = arith.constant dense<0.000000e+00> : vector<8x128xf32>
    %122 = tpu.matmul %105, %56, %cst_104 {dimension_numbers = #tpu.dot_dimension_numbers<[1], [0], [0], [1], [0, 0, 1, 1], [], []>} : vector<8x128xf32>, vector<128x128xf32>, vector<8x128xf32> -> vector<8x128xf32>
    %123 = arith.addf %117, %122 : vector<8x128xf32>
    %124 = arith.negf %123 : vector<8x128xf32>
    %125 = math.exp %124 : vector<8x128xf32>
    %cst_105 = arith.constant 1.000000e+00 : f32
    %126 = vector.broadcast %cst_105 : f32 to vector<8x128xf32>
    %127 = arith.addf %126, %125 : vector<8x128xf32>
    %128 = arith.divf %126, %127 : vector<8x128xf32>
    %cst_106 = arith.constant dense<0.000000e+00> : vector<8x128xf32>
    %129 = tpu.matmul %105, %58, %cst_106 {dimension_numbers = #tpu.dot_dimension_numbers<[1], [0], [0], [1], [0, 0, 1, 1], [], []>} : vector<8x128xf32>, vector<128x128xf32>, vector<8x128xf32> -> vector<8x128xf32>
    %130 = arith.addf %119, %129 : vector<8x128xf32>
    %131 = arith.negf %130 : vector<8x128xf32>
    %132 = math.exp %131 : vector<8x128xf32>
    %cst_107 = arith.constant 1.000000e+00 : f32
    %133 = vector.broadcast %cst_107 : f32 to vector<8x128xf32>
    %134 = arith.addf %133, %132 : vector<8x128xf32>
    %135 = arith.divf %133, %134 : vector<8x128xf32>
    %cst_108 = arith.constant dense<0.000000e+00> : vector<8x128xf32>
    %136 = tpu.matmul %105, %60, %cst_108 {dimension_numbers = #tpu.dot_dimension_numbers<[1], [0], [0], [1], [0, 0, 1, 1], [], []>} : vector<8x128xf32>, vector<128x128xf32>, vector<8x128xf32> -> vector<8x128xf32>
    %137 = arith.addf %136, %67 : vector<8x128xf32>
    %138 = arith.mulf %128, %137 : vector<8x128xf32>
    %139 = arith.addf %121, %138 : vector<8x128xf32>
    %140 = math.tanh %139 : vector<8x128xf32>
    %cst_109 = arith.constant 1.000000e+00 : f32
    %141 = vector.broadcast %cst_109 : f32 to vector<8x128xf32>
    %142 = arith.subf %141, %135 : vector<8x128xf32>
    %143 = arith.mulf %142, %140 : vector<8x128xf32>
    %144 = arith.mulf %135, %105 : vector<8x128xf32>
    %145 = arith.addf %143, %144 : vector<8x128xf32>
    %146 = vector.broadcast %113 : i32 to vector<8x128xi32>
    %147 = arith.cmpi slt, %146, %63 : vector<8x128xi32>
    %148 = arith.select %147, %145, %105 : vector<8x128xi1>, vector<8x128xf32>
    %cst_110 = arith.constant 0.000000e+00 : f32
    %149 = vector.broadcast %cst_110 : f32 to vector<8x128xf32>
    %150 = arith.select %147, %145, %149 : vector<8x128xi1>, vector<8x128xf32>
    %c0_111 = arith.constant 0 : index
    %151 = arith.index_cast %115 : i32 to index
    %c0_112 = arith.constant 0 : index
    %152 = vector.load %arg7[%c0_111, %151, %c0_112] : memref<1x96x128xf32, #tpu.memory_space<vmem>>, vector<1x8x128xf32>
    %153 = vector.shape_cast %152 : vector<1x8x128xf32> to vector<8x128xf32>
    %154 = vector.shape_cast %150 : vector<8x128xf32> to vector<1x8x128xf32>
    tpu.vector_store %arg7[%c0_111, %151, %c0_112], %154 {strides = array<i32>} : memref<1x96x128xf32, #tpu.memory_space<vmem>>, vector<1x8x128xf32>,
    %c2_i32 = arith.constant 2 : i32
    %c11_i32_113 = arith.constant 11 : i32
    %155 = arith.subi %c11_i32_113, %c2_i32 : i32
    %156 = arith.select %0, %155, %c2_i32 : i32
    %c8_i32_114 = arith.constant 8 : i32
    %157 = arith.muli %156, %c8_i32_114 : i32
    %158 = tpu.assume_multiple %157, 8 : i32
    %159 = arith.index_cast %158 : i32 to index
    %c0_115 = arith.constant 0 : index
    %160 = vector.load %arg8[%159, %c0_115] : memref<96x128xf32, #tpu.memory_space<vmem>>, vector<8x128xf32>
    %161 = arith.index_cast %158 : i32 to index
    %c0_116 = arith.constant 0 : index
    %162 = vector.load %arg9[%161, %c0_116] : memref<96x128xf32, #tpu.memory_space<vmem>>, vector<8x128xf32>
    %163 = arith.index_cast %158 : i32 to index
    %c0_117 = arith.constant 0 : index
    %164 = vector.load %arg10[%163, %c0_117] : memref<96x128xf32, #tpu.memory_space<vmem>>, vector<8x128xf32>
    %cst_118 = arith.constant dense<0.000000e+00> : vector<8x128xf32>
    %165 = tpu.matmul %148, %56, %cst_118 {dimension_numbers = #tpu.dot_dimension_numbers<[1], [0], [0], [1], [0, 0, 1, 1], [], []>} : vector<8x128xf32>, vector<128x128xf32>, vector<8x128xf32> -> vector<8x128xf32>
    %166 = arith.addf %160, %165 : vector<8x128xf32>
    %167 = arith.negf %166 : vector<8x128xf32>
    %168 = math.exp %167 : vector<8x128xf32>
    %cst_119 = arith.constant 1.000000e+00 : f32
    %169 = vector.broadcast %cst_119 : f32 to vector<8x128xf32>
    %170 = arith.addf %169, %168 : vector<8x128xf32>
    %171 = arith.divf %169, %170 : vector<8x128xf32>
    %cst_120 = arith.constant dense<0.000000e+00> : vector<8x128xf32>
    %172 = tpu.matmul %148, %58, %cst_120 {dimension_numbers = #tpu.dot_dimension_numbers<[1], [0], [0], [1], [0, 0, 1, 1], [], []>} : vector<8x128xf32>, vector<128x128xf32>, vector<8x128xf32> -> vector<8x128xf32>
    %173 = arith.addf %162, %172 : vector<8x128xf32>
    %174 = arith.negf %173 : vector<8x128xf32>
    %175 = math.exp %174 : vector<8x128xf32>
    %cst_121 = arith.constant 1.000000e+00 : f32
    %176 = vector.broadcast %cst_121 : f32 to vector<8x128xf32>
    %177 = arith.addf %176, %175 : vector<8x128xf32>
    %178 = arith.divf %176, %177 : vector<8x128xf32>
    %cst_122 = arith.constant dense<0.000000e+00> : vector<8x128xf32>
    %179 = tpu.matmul %148, %60, %cst_122 {dimension_numbers = #tpu.dot_dimension_numbers<[1], [0], [0], [1], [0, 0, 1, 1], [], []>} : vector<8x128xf32>, vector<128x128xf32>, vector<8x128xf32> -> vector<8x128xf32>
    %180 = arith.addf %179, %67 : vector<8x128xf32>
    %181 = arith.mulf %171, %180 : vector<8x128xf32>
    %182 = arith.addf %164, %181 : vector<8x128xf32>
    %183 = math.tanh %182 : vector<8x128xf32>
    %cst_123 = arith.constant 1.000000e+00 : f32
    %184 = vector.broadcast %cst_123 : f32 to vector<8x128xf32>
    %185 = arith.subf %184, %178 : vector<8x128xf32>
    %186 = arith.mulf %185, %183 : vector<8x128xf32>
    %187 = arith.mulf %178, %148 : vector<8x128xf32>
    %188 = arith.addf %186, %187 : vector<8x128xf32>
    %189 = vector.broadcast %156 : i32 to vector<8x128xi32>
    %190 = arith.cmpi slt, %189, %63 : vector<8x128xi32>
    %191 = arith.select %190, %188, %148 : vector<8x128xi1>, vector<8x128xf32>
    %cst_124 = arith.constant 0.000000e+00 : f32
    %192 = vector.broadcast %cst_124 : f32 to vector<8x128xf32>
    %193 = arith.select %190, %188, %192 : vector<8x128xi1>, vector<8x128xf32>
    %c0_125 = arith.constant 0 : index
    %194 = arith.index_cast %158 : i32 to index
    %c0_126 = arith.constant 0 : index
    %195 = vector.load %arg7[%c0_125, %194, %c0_126] : memref<1x96x128xf32, #tpu.memory_space<vmem>>, vector<1x8x128xf32>
    %196 = vector.shape_cast %195 : vector<1x8x128xf32> to vector<8x128xf32>
    %197 = vector.shape_cast %193 : vector<8x128xf32> to vector<1x8x128xf32>
    tpu.vector_store %arg7[%c0_125, %194, %c0_126], %197 {strides = array<i32>} : memref<1x96x128xf32, #tpu.memory_space<vmem>>, vector<1x8x128xf32>,
    %c3_i32 = arith.constant 3 : i32
    %c11_i32_127 = arith.constant 11 : i32
    %198 = arith.subi %c11_i32_127, %c3_i32 : i32
    %199 = arith.select %0, %198, %c3_i32 : i32
    %c8_i32_128 = arith.constant 8 : i32
    %200 = arith.muli %199, %c8_i32_128 : i32
    %201 = tpu.assume_multiple %200, 8 : i32
    %202 = arith.index_cast %201 : i32 to index
    %c0_129 = arith.constant 0 : index
    %203 = vector.load %arg8[%202, %c0_129] : memref<96x128xf32, #tpu.memory_space<vmem>>, vector<8x128xf32>
    %204 = arith.index_cast %201 : i32 to index
    %c0_130 = arith.constant 0 : index
    %205 = vector.load %arg9[%204, %c0_130] : memref<96x128xf32, #tpu.memory_space<vmem>>, vector<8x128xf32>
    %206 = arith.index_cast %201 : i32 to index
    %c0_131 = arith.constant 0 : index
    %207 = vector.load %arg10[%206, %c0_131] : memref<96x128xf32, #tpu.memory_space<vmem>>, vector<8x128xf32>
    %cst_132 = arith.constant dense<0.000000e+00> : vector<8x128xf32>
    %208 = tpu.matmul %191, %56, %cst_132 {dimension_numbers = #tpu.dot_dimension_numbers<[1], [0], [0], [1], [0, 0, 1, 1], [], []>} : vector<8x128xf32>, vector<128x128xf32>, vector<8x128xf32> -> vector<8x128xf32>
    %209 = arith.addf %203, %208 : vector<8x128xf32>
    %210 = arith.negf %209 : vector<8x128xf32>
    %211 = math.exp %210 : vector<8x128xf32>
    %cst_133 = arith.constant 1.000000e+00 : f32
    %212 = vector.broadcast %cst_133 : f32 to vector<8x128xf32>
    %213 = arith.addf %212, %211 : vector<8x128xf32>
    %214 = arith.divf %212, %213 : vector<8x128xf32>
    %cst_134 = arith.constant dense<0.000000e+00> : vector<8x128xf32>
    %215 = tpu.matmul %191, %58, %cst_134 {dimension_numbers = #tpu.dot_dimension_numbers<[1], [0], [0], [1], [0, 0, 1, 1], [], []>} : vector<8x128xf32>, vector<128x128xf32>, vector<8x128xf32> -> vector<8x128xf32>
    %216 = arith.addf %205, %215 : vector<8x128xf32>
    %217 = arith.negf %216 : vector<8x128xf32>
    %218 = math.exp %217 : vector<8x128xf32>
    %cst_135 = arith.constant 1.000000e+00 : f32
    %219 = vector.broadcast %cst_135 : f32 to vector<8x128xf32>
    %220 = arith.addf %219, %218 : vector<8x128xf32>
    %221 = arith.divf %219, %220 : vector<8x128xf32>
    %cst_136 = arith.constant dense<0.000000e+00> : vector<8x128xf32>
    %222 = tpu.matmul %191, %60, %cst_136 {dimension_numbers = #tpu.dot_dimension_numbers<[1], [0], [0], [1], [0, 0, 1, 1], [], []>} : vector<8x128xf32>, vector<128x128xf32>, vector<8x128xf32> -> vector<8x128xf32>
    %223 = arith.addf %222, %67 : vector<8x128xf32>
    %224 = arith.mulf %214, %223 : vector<8x128xf32>
    %225 = arith.addf %207, %224 : vector<8x128xf32>
    %226 = math.tanh %225 : vector<8x128xf32>
    %cst_137 = arith.constant 1.000000e+00 : f32
    %227 = vector.broadcast %cst_137 : f32 to vector<8x128xf32>
    %228 = arith.subf %227, %221 : vector<8x128xf32>
    %229 = arith.mulf %228, %226 : vector<8x128xf32>
    %230 = arith.mulf %221, %191 : vector<8x128xf32>
    %231 = arith.addf %229, %230 : vector<8x128xf32>
    %232 = vector.broadcast %199 : i32 to vector<8x128xi32>
    %233 = arith.cmpi slt, %232, %63 : vector<8x128xi32>
    %234 = arith.select %233, %231, %191 : vector<8x128xi1>, vector<8x128xf32>
    %cst_138 = arith.constant 0.000000e+00 : f32
    %235 = vector.broadcast %cst_138 : f32 to vector<8x128xf32>
    %236 = arith.select %233, %231, %235 : vector<8x128xi1>, vector<8x128xf32>
    %c0_139 = arith.constant 0 : index
    %237 = arith.index_cast %201 : i32 to index
    %c0_140 = arith.constant 0 : index
    %238 = vector.load %arg7[%c0_139, %237, %c0_140] : memref<1x96x128xf32, #tpu.memory_space<vmem>>, vector<1x8x128xf32>
    %239 = vector.shape_cast %238 : vector<1x8x128xf32> to vector<8x128xf32>
    %240 = vector.shape_cast %236 : vector<8x128xf32> to vector<1x8x128xf32>
    tpu.vector_store %arg7[%c0_139, %237, %c0_140], %240 {strides = array<i32>} : memref<1x96x128xf32, #tpu.memory_space<vmem>>, vector<1x8x128xf32>,
    %c4_i32 = arith.constant 4 : i32
    %c11_i32_141 = arith.constant 11 : i32
    %241 = arith.subi %c11_i32_141, %c4_i32 : i32
    %242 = arith.select %0, %241, %c4_i32 : i32
    %c8_i32_142 = arith.constant 8 : i32
    %243 = arith.muli %242, %c8_i32_142 : i32
    %244 = tpu.assume_multiple %243, 8 : i32
    %245 = arith.index_cast %244 : i32 to index
    %c0_143 = arith.constant 0 : index
    %246 = vector.load %arg8[%245, %c0_143] : memref<96x128xf32, #tpu.memory_space<vmem>>, vector<8x128xf32>
    %247 = arith.index_cast %244 : i32 to index
    %c0_144 = arith.constant 0 : index
    %248 = vector.load %arg9[%247, %c0_144] : memref<96x128xf32, #tpu.memory_space<vmem>>, vector<8x128xf32>
    %249 = arith.index_cast %244 : i32 to index
    %c0_145 = arith.constant 0 : index
    %250 = vector.load %arg10[%249, %c0_145] : memref<96x128xf32, #tpu.memory_space<vmem>>, vector<8x128xf32>
    %cst_146 = arith.constant dense<0.000000e+00> : vector<8x128xf32>
    %251 = tpu.matmul %234, %56, %cst_146 {dimension_numbers = #tpu.dot_dimension_numbers<[1], [0], [0], [1], [0, 0, 1, 1], [], []>} : vector<8x128xf32>, vector<128x128xf32>, vector<8x128xf32> -> vector<8x128xf32>
    %252 = arith.addf %246, %251 : vector<8x128xf32>
    %253 = arith.negf %252 : vector<8x128xf32>
    %254 = math.exp %253 : vector<8x128xf32>
    %cst_147 = arith.constant 1.000000e+00 : f32
    %255 = vector.broadcast %cst_147 : f32 to vector<8x128xf32>
    %256 = arith.addf %255, %254 : vector<8x128xf32>
    %257 = arith.divf %255, %256 : vector<8x128xf32>
    %cst_148 = arith.constant dense<0.000000e+00> : vector<8x128xf32>
    %258 = tpu.matmul %234, %58, %cst_148 {dimension_numbers = #tpu.dot_dimension_numbers<[1], [0], [0], [1], [0, 0, 1, 1], [], []>} : vector<8x128xf32>, vector<128x128xf32>, vector<8x128xf32> -> vector<8x128xf32>
    %259 = arith.addf %248, %258 : vector<8x128xf32>
    %260 = arith.negf %259 : vector<8x128xf32>
    %261 = math.exp %260 : vector<8x128xf32>
    %cst_149 = arith.constant 1.000000e+00 : f32
    %262 = vector.broadcast %cst_149 : f32 to vector<8x128xf32>
    %263 = arith.addf %262, %261 : vector<8x128xf32>
    %264 = arith.divf %262, %263 : vector<8x128xf32>
    %cst_150 = arith.constant dense<0.000000e+00> : vector<8x128xf32>
    %265 = tpu.matmul %234, %60, %cst_150 {dimension_numbers = #tpu.dot_dimension_numbers<[1], [0], [0], [1], [0, 0, 1, 1], [], []>} : vector<8x128xf32>, vector<128x128xf32>, vector<8x128xf32> -> vector<8x128xf32>
    %266 = arith.addf %265, %67 : vector<8x128xf32>
    %267 = arith.mulf %257, %266 : vector<8x128xf32>
    %268 = arith.addf %250, %267 : vector<8x128xf32>
    %269 = math.tanh %268 : vector<8x128xf32>
    %cst_151 = arith.constant 1.000000e+00 : f32
    %270 = vector.broadcast %cst_151 : f32 to vector<8x128xf32>
    %271 = arith.subf %270, %264 : vector<8x128xf32>
    %272 = arith.mulf %271, %269 : vector<8x128xf32>
    %273 = arith.mulf %264, %234 : vector<8x128xf32>
    %274 = arith.addf %272, %273 : vector<8x128xf32>
    %275 = vector.broadcast %242 : i32 to vector<8x128xi32>
    %276 = arith.cmpi slt, %275, %63 : vector<8x128xi32>
    %277 = arith.select %276, %274, %234 : vector<8x128xi1>, vector<8x128xf32>
    %cst_152 = arith.constant 0.000000e+00 : f32
    %278 = vector.broadcast %cst_152 : f32 to vector<8x128xf32>
    %279 = arith.select %276, %274, %278 : vector<8x128xi1>, vector<8x128xf32>
    %c0_153 = arith.constant 0 : index
    %280 = arith.index_cast %244 : i32 to index
    %c0_154 = arith.constant 0 : index
    %281 = vector.load %arg7[%c0_153, %280, %c0_154] : memref<1x96x128xf32, #tpu.memory_space<vmem>>, vector<1x8x128xf32>
    %282 = vector.shape_cast %281 : vector<1x8x128xf32> to vector<8x128xf32>
    %283 = vector.shape_cast %279 : vector<8x128xf32> to vector<1x8x128xf32>
    tpu.vector_store %arg7[%c0_153, %280, %c0_154], %283 {strides = array<i32>} : memref<1x96x128xf32, #tpu.memory_space<vmem>>, vector<1x8x128xf32>,
    %c5_i32 = arith.constant 5 : i32
    %c11_i32_155 = arith.constant 11 : i32
    %284 = arith.subi %c11_i32_155, %c5_i32 : i32
    %285 = arith.select %0, %284, %c5_i32 : i32
    %c8_i32_156 = arith.constant 8 : i32
    %286 = arith.muli %285, %c8_i32_156 : i32
    %287 = tpu.assume_multiple %286, 8 : i32
    %288 = arith.index_cast %287 : i32 to index
    %c0_157 = arith.constant 0 : index
    %289 = vector.load %arg8[%288, %c0_157] : memref<96x128xf32, #tpu.memory_space<vmem>>, vector<8x128xf32>
    %290 = arith.index_cast %287 : i32 to index
    %c0_158 = arith.constant 0 : index
    %291 = vector.load %arg9[%290, %c0_158] : memref<96x128xf32, #tpu.memory_space<vmem>>, vector<8x128xf32>
    %292 = arith.index_cast %287 : i32 to index
    %c0_159 = arith.constant 0 : index
    %293 = vector.load %arg10[%292, %c0_159] : memref<96x128xf32, #tpu.memory_space<vmem>>, vector<8x128xf32>
    %cst_160 = arith.constant dense<0.000000e+00> : vector<8x128xf32>
    %294 = tpu.matmul %277, %56, %cst_160 {dimension_numbers = #tpu.dot_dimension_numbers<[1], [0], [0], [1], [0, 0, 1, 1], [], []>} : vector<8x128xf32>, vector<128x128xf32>, vector<8x128xf32> -> vector<8x128xf32>
    %295 = arith.addf %289, %294 : vector<8x128xf32>
    %296 = arith.negf %295 : vector<8x128xf32>
    %297 = math.exp %296 : vector<8x128xf32>
    %cst_161 = arith.constant 1.000000e+00 : f32
    %298 = vector.broadcast %cst_161 : f32 to vector<8x128xf32>
    %299 = arith.addf %298, %297 : vector<8x128xf32>
    %300 = arith.divf %298, %299 : vector<8x128xf32>
    %cst_162 = arith.constant dense<0.000000e+00> : vector<8x128xf32>
    %301 = tpu.matmul %277, %58, %cst_162 {dimension_numbers = #tpu.dot_dimension_numbers<[1], [0], [0], [1], [0, 0, 1, 1], [], []>} : vector<8x128xf32>, vector<128x128xf32>, vector<8x128xf32> -> vector<8x128xf32>
    %302 = arith.addf %291, %301 : vector<8x128xf32>
    %303 = arith.negf %302 : vector<8x128xf32>
    %304 = math.exp %303 : vector<8x128xf32>
    %cst_163 = arith.constant 1.000000e+00 : f32
    %305 = vector.broadcast %cst_163 : f32 to vector<8x128xf32>
    %306 = arith.addf %305, %304 : vector<8x128xf32>
    %307 = arith.divf %305, %306 : vector<8x128xf32>
    %cst_164 = arith.constant dense<0.000000e+00> : vector<8x128xf32>
    %308 = tpu.matmul %277, %60, %cst_164 {dimension_numbers = #tpu.dot_dimension_numbers<[1], [0], [0], [1], [0, 0, 1, 1], [], []>} : vector<8x128xf32>, vector<128x128xf32>, vector<8x128xf32> -> vector<8x128xf32>
    %309 = arith.addf %308, %67 : vector<8x128xf32>
    %310 = arith.mulf %300, %309 : vector<8x128xf32>
    %311 = arith.addf %293, %310 : vector<8x128xf32>
    %312 = math.tanh %311 : vector<8x128xf32>
    %cst_165 = arith.constant 1.000000e+00 : f32
    %313 = vector.broadcast %cst_165 : f32 to vector<8x128xf32>
    %314 = arith.subf %313, %307 : vector<8x128xf32>
    %315 = arith.mulf %314, %312 : vector<8x128xf32>
    %316 = arith.mulf %307, %277 : vector<8x128xf32>
    %317 = arith.addf %315, %316 : vector<8x128xf32>
    %318 = vector.broadcast %285 : i32 to vector<8x128xi32>
    %319 = arith.cmpi slt, %318, %63 : vector<8x128xi32>
    %320 = arith.select %319, %317, %277 : vector<8x128xi1>, vector<8x128xf32>
    %cst_166 = arith.constant 0.000000e+00 : f32
    %321 = vector.broadcast %cst_166 : f32 to vector<8x128xf32>
    %322 = arith.select %319, %317, %321 : vector<8x128xi1>, vector<8x128xf32>
    %c0_167 = arith.constant 0 : index
    %323 = arith.index_cast %287 : i32 to index
    %c0_168 = arith.constant 0 : index
    %324 = vector.load %arg7[%c0_167, %323, %c0_168] : memref<1x96x128xf32, #tpu.memory_space<vmem>>, vector<1x8x128xf32>
    %325 = vector.shape_cast %324 : vector<1x8x128xf32> to vector<8x128xf32>
    %326 = vector.shape_cast %322 : vector<8x128xf32> to vector<1x8x128xf32>
    tpu.vector_store %arg7[%c0_167, %323, %c0_168], %326 {strides = array<i32>} : memref<1x96x128xf32, #tpu.memory_space<vmem>>, vector<1x8x128xf32>,
    %c6_i32 = arith.constant 6 : i32
    %c11_i32_169 = arith.constant 11 : i32
    %327 = arith.subi %c11_i32_169, %c6_i32 : i32
    %328 = arith.select %0, %327, %c6_i32 : i32
    %c8_i32_170 = arith.constant 8 : i32
    %329 = arith.muli %328, %c8_i32_170 : i32
    %330 = tpu.assume_multiple %329, 8 : i32
    %331 = arith.index_cast %330 : i32 to index
    %c0_171 = arith.constant 0 : index
    %332 = vector.load %arg8[%331, %c0_171] : memref<96x128xf32, #tpu.memory_space<vmem>>, vector<8x128xf32>
    %333 = arith.index_cast %330 : i32 to index
    %c0_172 = arith.constant 0 : index
    %334 = vector.load %arg9[%333, %c0_172] : memref<96x128xf32, #tpu.memory_space<vmem>>, vector<8x128xf32>
    %335 = arith.index_cast %330 : i32 to index
    %c0_173 = arith.constant 0 : index
    %336 = vector.load %arg10[%335, %c0_173] : memref<96x128xf32, #tpu.memory_space<vmem>>, vector<8x128xf32>
    %cst_174 = arith.constant dense<0.000000e+00> : vector<8x128xf32>
    %337 = tpu.matmul %320, %56, %cst_174 {dimension_numbers = #tpu.dot_dimension_numbers<[1], [0], [0], [1], [0, 0, 1, 1], [], []>} : vector<8x128xf32>, vector<128x128xf32>, vector<8x128xf32> -> vector<8x128xf32>
    %338 = arith.addf %332, %337 : vector<8x128xf32>
    %339 = arith.negf %338 : vector<8x128xf32>
    %340 = math.exp %339 : vector<8x128xf32>
    %cst_175 = arith.constant 1.000000e+00 : f32
    %341 = vector.broadcast %cst_175 : f32 to vector<8x128xf32>
    %342 = arith.addf %341, %340 : vector<8x128xf32>
    %343 = arith.divf %341, %342 : vector<8x128xf32>
    %cst_176 = arith.constant dense<0.000000e+00> : vector<8x128xf32>
    %344 = tpu.matmul %320, %58, %cst_176 {dimension_numbers = #tpu.dot_dimension_numbers<[1], [0], [0], [1], [0, 0, 1, 1], [], []>} : vector<8x128xf32>, vector<128x128xf32>, vector<8x128xf32> -> vector<8x128xf32>
    %345 = arith.addf %334, %344 : vector<8x128xf32>
    %346 = arith.negf %345 : vector<8x128xf32>
    %347 = math.exp %346 : vector<8x128xf32>
    %cst_177 = arith.constant 1.000000e+00 : f32
    %348 = vector.broadcast %cst_177 : f32 to vector<8x128xf32>
    %349 = arith.addf %348, %347 : vector<8x128xf32>
    %350 = arith.divf %348, %349 : vector<8x128xf32>
    %cst_178 = arith.constant dense<0.000000e+00> : vector<8x128xf32>
    %351 = tpu.matmul %320, %60, %cst_178 {dimension_numbers = #tpu.dot_dimension_numbers<[1], [0], [0], [1], [0, 0, 1, 1], [], []>} : vector<8x128xf32>, vector<128x128xf32>, vector<8x128xf32> -> vector<8x128xf32>
    %352 = arith.addf %351, %67 : vector<8x128xf32>
    %353 = arith.mulf %343, %352 : vector<8x128xf32>
    %354 = arith.addf %336, %353 : vector<8x128xf32>
    %355 = math.tanh %354 : vector<8x128xf32>
    %cst_179 = arith.constant 1.000000e+00 : f32
    %356 = vector.broadcast %cst_179 : f32 to vector<8x128xf32>
    %357 = arith.subf %356, %350 : vector<8x128xf32>
    %358 = arith.mulf %357, %355 : vector<8x128xf32>
    %359 = arith.mulf %350, %320 : vector<8x128xf32>
    %360 = arith.addf %358, %359 : vector<8x128xf32>
    %361 = vector.broadcast %328 : i32 to vector<8x128xi32>
    %362 = arith.cmpi slt, %361, %63 : vector<8x128xi32>
    %363 = arith.select %362, %360, %320 : vector<8x128xi1>, vector<8x128xf32>
    %cst_180 = arith.constant 0.000000e+00 : f32
    %364 = vector.broadcast %cst_180 : f32 to vector<8x128xf32>
    %365 = arith.select %362, %360, %364 : vector<8x128xi1>, vector<8x128xf32>
    %c0_181 = arith.constant 0 : index
    %366 = arith.index_cast %330 : i32 to index
    %c0_182 = arith.constant 0 : index
    %367 = vector.load %arg7[%c0_181, %366, %c0_182] : memref<1x96x128xf32, #tpu.memory_space<vmem>>, vector<1x8x128xf32>
    %368 = vector.shape_cast %367 : vector<1x8x128xf32> to vector<8x128xf32>
    %369 = vector.shape_cast %365 : vector<8x128xf32> to vector<1x8x128xf32>
    tpu.vector_store %arg7[%c0_181, %366, %c0_182], %369 {strides = array<i32>} : memref<1x96x128xf32, #tpu.memory_space<vmem>>, vector<1x8x128xf32>,
    %c7_i32 = arith.constant 7 : i32
    %c11_i32_183 = arith.constant 11 : i32
    %370 = arith.subi %c11_i32_183, %c7_i32 : i32
    %371 = arith.select %0, %370, %c7_i32 : i32
    %c8_i32_184 = arith.constant 8 : i32
    %372 = arith.muli %371, %c8_i32_184 : i32
    %373 = tpu.assume_multiple %372, 8 : i32
    %374 = arith.index_cast %373 : i32 to index
    %c0_185 = arith.constant 0 : index
    %375 = vector.load %arg8[%374, %c0_185] : memref<96x128xf32, #tpu.memory_space<vmem>>, vector<8x128xf32>
    %376 = arith.index_cast %373 : i32 to index
    %c0_186 = arith.constant 0 : index
    %377 = vector.load %arg9[%376, %c0_186] : memref<96x128xf32, #tpu.memory_space<vmem>>, vector<8x128xf32>
    %378 = arith.index_cast %373 : i32 to index
    %c0_187 = arith.constant 0 : index
    %379 = vector.load %arg10[%378, %c0_187] : memref<96x128xf32, #tpu.memory_space<vmem>>, vector<8x128xf32>
    %cst_188 = arith.constant dense<0.000000e+00> : vector<8x128xf32>
    %380 = tpu.matmul %363, %56, %cst_188 {dimension_numbers = #tpu.dot_dimension_numbers<[1], [0], [0], [1], [0, 0, 1, 1], [], []>} : vector<8x128xf32>, vector<128x128xf32>, vector<8x128xf32> -> vector<8x128xf32>
    %381 = arith.addf %375, %380 : vector<8x128xf32>
    %382 = arith.negf %381 : vector<8x128xf32>
    %383 = math.exp %382 : vector<8x128xf32>
    %cst_189 = arith.constant 1.000000e+00 : f32
    %384 = vector.broadcast %cst_189 : f32 to vector<8x128xf32>
    %385 = arith.addf %384, %383 : vector<8x128xf32>
    %386 = arith.divf %384, %385 : vector<8x128xf32>
    %cst_190 = arith.constant dense<0.000000e+00> : vector<8x128xf32>
    %387 = tpu.matmul %363, %58, %cst_190 {dimension_numbers = #tpu.dot_dimension_numbers<[1], [0], [0], [1], [0, 0, 1, 1], [], []>} : vector<8x128xf32>, vector<128x128xf32>, vector<8x128xf32> -> vector<8x128xf32>
    %388 = arith.addf %377, %387 : vector<8x128xf32>
    %389 = arith.negf %388 : vector<8x128xf32>
    %390 = math.exp %389 : vector<8x128xf32>
    %cst_191 = arith.constant 1.000000e+00 : f32
    %391 = vector.broadcast %cst_191 : f32 to vector<8x128xf32>
    %392 = arith.addf %391, %390 : vector<8x128xf32>
    %393 = arith.divf %391, %392 : vector<8x128xf32>
    %cst_192 = arith.constant dense<0.000000e+00> : vector<8x128xf32>
    %394 = tpu.matmul %363, %60, %cst_192 {dimension_numbers = #tpu.dot_dimension_numbers<[1], [0], [0], [1], [0, 0, 1, 1], [], []>} : vector<8x128xf32>, vector<128x128xf32>, vector<8x128xf32> -> vector<8x128xf32>
    %395 = arith.addf %394, %67 : vector<8x128xf32>
    %396 = arith.mulf %386, %395 : vector<8x128xf32>
    %397 = arith.addf %379, %396 : vector<8x128xf32>
    %398 = math.tanh %397 : vector<8x128xf32>
    %cst_193 = arith.constant 1.000000e+00 : f32
    %399 = vector.broadcast %cst_193 : f32 to vector<8x128xf32>
    %400 = arith.subf %399, %393 : vector<8x128xf32>
    %401 = arith.mulf %400, %398 : vector<8x128xf32>
    %402 = arith.mulf %393, %363 : vector<8x128xf32>
    %403 = arith.addf %401, %402 : vector<8x128xf32>
    %404 = vector.broadcast %371 : i32 to vector<8x128xi32>
    %405 = arith.cmpi slt, %404, %63 : vector<8x128xi32>
    %406 = arith.select %405, %403, %363 : vector<8x128xi1>, vector<8x128xf32>
    %cst_194 = arith.constant 0.000000e+00 : f32
    %407 = vector.broadcast %cst_194 : f32 to vector<8x128xf32>
    %408 = arith.select %405, %403, %407 : vector<8x128xi1>, vector<8x128xf32>
    %c0_195 = arith.constant 0 : index
    %409 = arith.index_cast %373 : i32 to index
    %c0_196 = arith.constant 0 : index
    %410 = vector.load %arg7[%c0_195, %409, %c0_196] : memref<1x96x128xf32, #tpu.memory_space<vmem>>, vector<1x8x128xf32>
    %411 = vector.shape_cast %410 : vector<1x8x128xf32> to vector<8x128xf32>
    %412 = vector.shape_cast %408 : vector<8x128xf32> to vector<1x8x128xf32>
    tpu.vector_store %arg7[%c0_195, %409, %c0_196], %412 {strides = array<i32>} : memref<1x96x128xf32, #tpu.memory_space<vmem>>, vector<1x8x128xf32>,
    %c8_i32_197 = arith.constant 8 : i32
    %c11_i32_198 = arith.constant 11 : i32
    %413 = arith.subi %c11_i32_198, %c8_i32_197 : i32
    %414 = arith.select %0, %413, %c8_i32_197 : i32
    %c8_i32_199 = arith.constant 8 : i32
    %415 = arith.muli %414, %c8_i32_199 : i32
    %416 = tpu.assume_multiple %415, 8 : i32
    %417 = arith.index_cast %416 : i32 to index
    %c0_200 = arith.constant 0 : index
    %418 = vector.load %arg8[%417, %c0_200] : memref<96x128xf32, #tpu.memory_space<vmem>>, vector<8x128xf32>
    %419 = arith.index_cast %416 : i32 to index
    %c0_201 = arith.constant 0 : index
    %420 = vector.load %arg9[%419, %c0_201] : memref<96x128xf32, #tpu.memory_space<vmem>>, vector<8x128xf32>
    %421 = arith.index_cast %416 : i32 to index
    %c0_202 = arith.constant 0 : index
    %422 = vector.load %arg10[%421, %c0_202] : memref<96x128xf32, #tpu.memory_space<vmem>>, vector<8x128xf32>
    %cst_203 = arith.constant dense<0.000000e+00> : vector<8x128xf32>
    %423 = tpu.matmul %406, %56, %cst_203 {dimension_numbers = #tpu.dot_dimension_numbers<[1], [0], [0], [1], [0, 0, 1, 1], [], []>} : vector<8x128xf32>, vector<128x128xf32>, vector<8x128xf32> -> vector<8x128xf32>
    %424 = arith.addf %418, %423 : vector<8x128xf32>
    %425 = arith.negf %424 : vector<8x128xf32>
    %426 = math.exp %425 : vector<8x128xf32>
    %cst_204 = arith.constant 1.000000e+00 : f32
    %427 = vector.broadcast %cst_204 : f32 to vector<8x128xf32>
    %428 = arith.addf %427, %426 : vector<8x128xf32>
    %429 = arith.divf %427, %428 : vector<8x128xf32>
    %cst_205 = arith.constant dense<0.000000e+00> : vector<8x128xf32>
    %430 = tpu.matmul %406, %58, %cst_205 {dimension_numbers = #tpu.dot_dimension_numbers<[1], [0], [0], [1], [0, 0, 1, 1], [], []>} : vector<8x128xf32>, vector<128x128xf32>, vector<8x128xf32> -> vector<8x128xf32>
    %431 = arith.addf %420, %430 : vector<8x128xf32>
    %432 = arith.negf %431 : vector<8x128xf32>
    %433 = math.exp %432 : vector<8x128xf32>
    %cst_206 = arith.constant 1.000000e+00 : f32
    %434 = vector.broadcast %cst_206 : f32 to vector<8x128xf32>
    %435 = arith.addf %434, %433 : vector<8x128xf32>
    %436 = arith.divf %434, %435 : vector<8x128xf32>
    %cst_207 = arith.constant dense<0.000000e+00> : vector<8x128xf32>
    %437 = tpu.matmul %406, %60, %cst_207 {dimension_numbers = #tpu.dot_dimension_numbers<[1], [0], [0], [1], [0, 0, 1, 1], [], []>} : vector<8x128xf32>, vector<128x128xf32>, vector<8x128xf32> -> vector<8x128xf32>
    %438 = arith.addf %437, %67 : vector<8x128xf32>
    %439 = arith.mulf %429, %438 : vector<8x128xf32>
    %440 = arith.addf %422, %439 : vector<8x128xf32>
    %441 = math.tanh %440 : vector<8x128xf32>
    %cst_208 = arith.constant 1.000000e+00 : f32
    %442 = vector.broadcast %cst_208 : f32 to vector<8x128xf32>
    %443 = arith.subf %442, %436 : vector<8x128xf32>
    %444 = arith.mulf %443, %441 : vector<8x128xf32>
    %445 = arith.mulf %436, %406 : vector<8x128xf32>
    %446 = arith.addf %444, %445 : vector<8x128xf32>
    %447 = vector.broadcast %414 : i32 to vector<8x128xi32>
    %448 = arith.cmpi slt, %447, %63 : vector<8x128xi32>
    %449 = arith.select %448, %446, %406 : vector<8x128xi1>, vector<8x128xf32>
    %cst_209 = arith.constant 0.000000e+00 : f32
    %450 = vector.broadcast %cst_209 : f32 to vector<8x128xf32>
    %451 = arith.select %448, %446, %450 : vector<8x128xi1>, vector<8x128xf32>
    %c0_210 = arith.constant 0 : index
    %452 = arith.index_cast %416 : i32 to index
    %c0_211 = arith.constant 0 : index
    %453 = vector.load %arg7[%c0_210, %452, %c0_211] : memref<1x96x128xf32, #tpu.memory_space<vmem>>, vector<1x8x128xf32>
    %454 = vector.shape_cast %453 : vector<1x8x128xf32> to vector<8x128xf32>
    %455 = vector.shape_cast %451 : vector<8x128xf32> to vector<1x8x128xf32>
    tpu.vector_store %arg7[%c0_210, %452, %c0_211], %455 {strides = array<i32>} : memref<1x96x128xf32, #tpu.memory_space<vmem>>, vector<1x8x128xf32>,
    %c9_i32 = arith.constant 9 : i32
    %c11_i32_212 = arith.constant 11 : i32
    %456 = arith.subi %c11_i32_212, %c9_i32 : i32
    %457 = arith.select %0, %456, %c9_i32 : i32
    %c8_i32_213 = arith.constant 8 : i32
    %458 = arith.muli %457, %c8_i32_213 : i32
    %459 = tpu.assume_multiple %458, 8 : i32
    %460 = arith.index_cast %459 : i32 to index
    %c0_214 = arith.constant 0 : index
    %461 = vector.load %arg8[%460, %c0_214] : memref<96x128xf32, #tpu.memory_space<vmem>>, vector<8x128xf32>
    %462 = arith.index_cast %459 : i32 to index
    %c0_215 = arith.constant 0 : index
    %463 = vector.load %arg9[%462, %c0_215] : memref<96x128xf32, #tpu.memory_space<vmem>>, vector<8x128xf32>
    %464 = arith.index_cast %459 : i32 to index
    %c0_216 = arith.constant 0 : index
    %465 = vector.load %arg10[%464, %c0_216] : memref<96x128xf32, #tpu.memory_space<vmem>>, vector<8x128xf32>
    %cst_217 = arith.constant dense<0.000000e+00> : vector<8x128xf32>
    %466 = tpu.matmul %449, %56, %cst_217 {dimension_numbers = #tpu.dot_dimension_numbers<[1], [0], [0], [1], [0, 0, 1, 1], [], []>} : vector<8x128xf32>, vector<128x128xf32>, vector<8x128xf32> -> vector<8x128xf32>
    %467 = arith.addf %461, %466 : vector<8x128xf32>
    %468 = arith.negf %467 : vector<8x128xf32>
    %469 = math.exp %468 : vector<8x128xf32>
    %cst_218 = arith.constant 1.000000e+00 : f32
    %470 = vector.broadcast %cst_218 : f32 to vector<8x128xf32>
    %471 = arith.addf %470, %469 : vector<8x128xf32>
    %472 = arith.divf %470, %471 : vector<8x128xf32>
    %cst_219 = arith.constant dense<0.000000e+00> : vector<8x128xf32>
    %473 = tpu.matmul %449, %58, %cst_219 {dimension_numbers = #tpu.dot_dimension_numbers<[1], [0], [0], [1], [0, 0, 1, 1], [], []>} : vector<8x128xf32>, vector<128x128xf32>, vector<8x128xf32> -> vector<8x128xf32>
    %474 = arith.addf %463, %473 : vector<8x128xf32>
    %475 = arith.negf %474 : vector<8x128xf32>
    %476 = math.exp %475 : vector<8x128xf32>
    %cst_220 = arith.constant 1.000000e+00 : f32
    %477 = vector.broadcast %cst_220 : f32 to vector<8x128xf32>
    %478 = arith.addf %477, %476 : vector<8x128xf32>
    %479 = arith.divf %477, %478 : vector<8x128xf32>
    %cst_221 = arith.constant dense<0.000000e+00> : vector<8x128xf32>
    %480 = tpu.matmul %449, %60, %cst_221 {dimension_numbers = #tpu.dot_dimension_numbers<[1], [0], [0], [1], [0, 0, 1, 1], [], []>} : vector<8x128xf32>, vector<128x128xf32>, vector<8x128xf32> -> vector<8x128xf32>
    %481 = arith.addf %480, %67 : vector<8x128xf32>
    %482 = arith.mulf %472, %481 : vector<8x128xf32>
    %483 = arith.addf %465, %482 : vector<8x128xf32>
    %484 = math.tanh %483 : vector<8x128xf32>
    %cst_222 = arith.constant 1.000000e+00 : f32
    %485 = vector.broadcast %cst_222 : f32 to vector<8x128xf32>
    %486 = arith.subf %485, %479 : vector<8x128xf32>
    %487 = arith.mulf %486, %484 : vector<8x128xf32>
    %488 = arith.mulf %479, %449 : vector<8x128xf32>
    %489 = arith.addf %487, %488 : vector<8x128xf32>
    %490 = vector.broadcast %457 : i32 to vector<8x128xi32>
    %491 = arith.cmpi slt, %490, %63 : vector<8x128xi32>
    %492 = arith.select %491, %489, %449 : vector<8x128xi1>, vector<8x128xf32>
    %cst_223 = arith.constant 0.000000e+00 : f32
    %493 = vector.broadcast %cst_223 : f32 to vector<8x128xf32>
    %494 = arith.select %491, %489, %493 : vector<8x128xi1>, vector<8x128xf32>
    %c0_224 = arith.constant 0 : index
    %495 = arith.index_cast %459 : i32 to index
    %c0_225 = arith.constant 0 : index
    %496 = vector.load %arg7[%c0_224, %495, %c0_225] : memref<1x96x128xf32, #tpu.memory_space<vmem>>, vector<1x8x128xf32>
    %497 = vector.shape_cast %496 : vector<1x8x128xf32> to vector<8x128xf32>
    %498 = vector.shape_cast %494 : vector<8x128xf32> to vector<1x8x128xf32>
    tpu.vector_store %arg7[%c0_224, %495, %c0_225], %498 {strides = array<i32>} : memref<1x96x128xf32, #tpu.memory_space<vmem>>, vector<1x8x128xf32>,
    %c10_i32 = arith.constant 10 : i32
    %c11_i32_226 = arith.constant 11 : i32
    %499 = arith.subi %c11_i32_226, %c10_i32 : i32
    %500 = arith.select %0, %499, %c10_i32 : i32
    %c8_i32_227 = arith.constant 8 : i32
    %501 = arith.muli %500, %c8_i32_227 : i32
    %502 = tpu.assume_multiple %501, 8 : i32
    %503 = arith.index_cast %502 : i32 to index
    %c0_228 = arith.constant 0 : index
    %504 = vector.load %arg8[%503, %c0_228] : memref<96x128xf32, #tpu.memory_space<vmem>>, vector<8x128xf32>
    %505 = arith.index_cast %502 : i32 to index
    %c0_229 = arith.constant 0 : index
    %506 = vector.load %arg9[%505, %c0_229] : memref<96x128xf32, #tpu.memory_space<vmem>>, vector<8x128xf32>
    %507 = arith.index_cast %502 : i32 to index
    %c0_230 = arith.constant 0 : index
    %508 = vector.load %arg10[%507, %c0_230] : memref<96x128xf32, #tpu.memory_space<vmem>>, vector<8x128xf32>
    %cst_231 = arith.constant dense<0.000000e+00> : vector<8x128xf32>
    %509 = tpu.matmul %492, %56, %cst_231 {dimension_numbers = #tpu.dot_dimension_numbers<[1], [0], [0], [1], [0, 0, 1, 1], [], []>} : vector<8x128xf32>, vector<128x128xf32>, vector<8x128xf32> -> vector<8x128xf32>
    %510 = arith.addf %504, %509 : vector<8x128xf32>
    %511 = arith.negf %510 : vector<8x128xf32>
    %512 = math.exp %511 : vector<8x128xf32>
    %cst_232 = arith.constant 1.000000e+00 : f32
    %513 = vector.broadcast %cst_232 : f32 to vector<8x128xf32>
    %514 = arith.addf %513, %512 : vector<8x128xf32>
    %515 = arith.divf %513, %514 : vector<8x128xf32>
    %cst_233 = arith.constant dense<0.000000e+00> : vector<8x128xf32>
    %516 = tpu.matmul %492, %58, %cst_233 {dimension_numbers = #tpu.dot_dimension_numbers<[1], [0], [0], [1], [0, 0, 1, 1], [], []>} : vector<8x128xf32>, vector<128x128xf32>, vector<8x128xf32> -> vector<8x128xf32>
    %517 = arith.addf %506, %516 : vector<8x128xf32>
    %518 = arith.negf %517 : vector<8x128xf32>
    %519 = math.exp %518 : vector<8x128xf32>
    %cst_234 = arith.constant 1.000000e+00 : f32
    %520 = vector.broadcast %cst_234 : f32 to vector<8x128xf32>
    %521 = arith.addf %520, %519 : vector<8x128xf32>
    %522 = arith.divf %520, %521 : vector<8x128xf32>
    %cst_235 = arith.constant dense<0.000000e+00> : vector<8x128xf32>
    %523 = tpu.matmul %492, %60, %cst_235 {dimension_numbers = #tpu.dot_dimension_numbers<[1], [0], [0], [1], [0, 0, 1, 1], [], []>} : vector<8x128xf32>, vector<128x128xf32>, vector<8x128xf32> -> vector<8x128xf32>
    %524 = arith.addf %523, %67 : vector<8x128xf32>
    %525 = arith.mulf %515, %524 : vector<8x128xf32>
    %526 = arith.addf %508, %525 : vector<8x128xf32>
    %527 = math.tanh %526 : vector<8x128xf32>
    %cst_236 = arith.constant 1.000000e+00 : f32
    %528 = vector.broadcast %cst_236 : f32 to vector<8x128xf32>
    %529 = arith.subf %528, %522 : vector<8x128xf32>
    %530 = arith.mulf %529, %527 : vector<8x128xf32>
    %531 = arith.mulf %522, %492 : vector<8x128xf32>
    %532 = arith.addf %530, %531 : vector<8x128xf32>
    %533 = vector.broadcast %500 : i32 to vector<8x128xi32>
    %534 = arith.cmpi slt, %533, %63 : vector<8x128xi32>
    %535 = arith.select %534, %532, %492 : vector<8x128xi1>, vector<8x128xf32>
    %cst_237 = arith.constant 0.000000e+00 : f32
    %536 = vector.broadcast %cst_237 : f32 to vector<8x128xf32>
    %537 = arith.select %534, %532, %536 : vector<8x128xi1>, vector<8x128xf32>
    %c0_238 = arith.constant 0 : index
    %538 = arith.index_cast %502 : i32 to index
    %c0_239 = arith.constant 0 : index
    %539 = vector.load %arg7[%c0_238, %538, %c0_239] : memref<1x96x128xf32, #tpu.memory_space<vmem>>, vector<1x8x128xf32>
    %540 = vector.shape_cast %539 : vector<1x8x128xf32> to vector<8x128xf32>
    %541 = vector.shape_cast %537 : vector<8x128xf32> to vector<1x8x128xf32>
    tpu.vector_store %arg7[%c0_238, %538, %c0_239], %541 {strides = array<i32>} : memref<1x96x128xf32, #tpu.memory_space<vmem>>, vector<1x8x128xf32>,
    %c11_i32_240 = arith.constant 11 : i32
    %c11_i32_241 = arith.constant 11 : i32
    %542 = arith.subi %c11_i32_241, %c11_i32_240 : i32
    %543 = arith.select %0, %542, %c11_i32_240 : i32
    %c8_i32_242 = arith.constant 8 : i32
    %544 = arith.muli %543, %c8_i32_242 : i32
    %545 = tpu.assume_multiple %544, 8 : i32
    %546 = arith.index_cast %545 : i32 to index
    %c0_243 = arith.constant 0 : index
    %547 = vector.load %arg8[%546, %c0_243] : memref<96x128xf32, #tpu.memory_space<vmem>>, vector<8x128xf32>
    %548 = arith.index_cast %545 : i32 to index
    %c0_244 = arith.constant 0 : index
    %549 = vector.load %arg9[%548, %c0_244] : memref<96x128xf32, #tpu.memory_space<vmem>>, vector<8x128xf32>
    %550 = arith.index_cast %545 : i32 to index
    %c0_245 = arith.constant 0 : index
    %551 = vector.load %arg10[%550, %c0_245] : memref<96x128xf32, #tpu.memory_space<vmem>>, vector<8x128xf32>
    %cst_246 = arith.constant dense<0.000000e+00> : vector<8x128xf32>
    %552 = tpu.matmul %535, %56, %cst_246 {dimension_numbers = #tpu.dot_dimension_numbers<[1], [0], [0], [1], [0, 0, 1, 1], [], []>} : vector<8x128xf32>, vector<128x128xf32>, vector<8x128xf32> -> vector<8x128xf32>
    %553 = arith.addf %547, %552 : vector<8x128xf32>
    %554 = arith.negf %553 : vector<8x128xf32>
    %555 = math.exp %554 : vector<8x128xf32>
    %cst_247 = arith.constant 1.000000e+00 : f32
    %556 = vector.broadcast %cst_247 : f32 to vector<8x128xf32>
    %557 = arith.addf %556, %555 : vector<8x128xf32>
    %558 = arith.divf %556, %557 : vector<8x128xf32>
    %cst_248 = arith.constant dense<0.000000e+00> : vector<8x128xf32>
    %559 = tpu.matmul %535, %58, %cst_248 {dimension_numbers = #tpu.dot_dimension_numbers<[1], [0], [0], [1], [0, 0, 1, 1], [], []>} : vector<8x128xf32>, vector<128x128xf32>, vector<8x128xf32> -> vector<8x128xf32>
    %560 = arith.addf %549, %559 : vector<8x128xf32>
    %561 = arith.negf %560 : vector<8x128xf32>
    %562 = math.exp %561 : vector<8x128xf32>
    %cst_249 = arith.constant 1.000000e+00 : f32
    %563 = vector.broadcast %cst_249 : f32 to vector<8x128xf32>
    %564 = arith.addf %563, %562 : vector<8x128xf32>
    %565 = arith.divf %563, %564 : vector<8x128xf32>
    %cst_250 = arith.constant dense<0.000000e+00> : vector<8x128xf32>
    %566 = tpu.matmul %535, %60, %cst_250 {dimension_numbers = #tpu.dot_dimension_numbers<[1], [0], [0], [1], [0, 0, 1, 1], [], []>} : vector<8x128xf32>, vector<128x128xf32>, vector<8x128xf32> -> vector<8x128xf32>
    %567 = arith.addf %566, %67 : vector<8x128xf32>
    %568 = arith.mulf %558, %567 : vector<8x128xf32>
    %569 = arith.addf %551, %568 : vector<8x128xf32>
    %570 = math.tanh %569 : vector<8x128xf32>
    %cst_251 = arith.constant 1.000000e+00 : f32
    %571 = vector.broadcast %cst_251 : f32 to vector<8x128xf32>
    %572 = arith.subf %571, %565 : vector<8x128xf32>
    %573 = arith.mulf %572, %570 : vector<8x128xf32>
    %574 = arith.mulf %565, %535 : vector<8x128xf32>
    %575 = arith.addf %573, %574 : vector<8x128xf32>
    %576 = vector.broadcast %543 : i32 to vector<8x128xi32>
    %577 = arith.cmpi slt, %576, %63 : vector<8x128xi32>
    %578 = arith.select %577, %575, %535 : vector<8x128xi1>, vector<8x128xf32>
    %cst_252 = arith.constant 0.000000e+00 : f32
    %579 = vector.broadcast %cst_252 : f32 to vector<8x128xf32>
    %580 = arith.select %577, %575, %579 : vector<8x128xi1>, vector<8x128xf32>
    %c0_253 = arith.constant 0 : index
    %581 = arith.index_cast %545 : i32 to index
    %c0_254 = arith.constant 0 : index
    %582 = vector.load %arg7[%c0_253, %581, %c0_254] : memref<1x96x128xf32, #tpu.memory_space<vmem>>, vector<1x8x128xf32>
    %583 = vector.shape_cast %582 : vector<1x8x128xf32> to vector<8x128xf32>
    %584 = vector.shape_cast %580 : vector<8x128xf32> to vector<1x8x128xf32>
    tpu.vector_store %arg7[%c0_253, %581, %c0_254], %584 {strides = array<i32>} : memref<1x96x128xf32, #tpu.memory_space<vmem>>, vector<1x8x128xf32>,
    %c12_i32 = arith.constant 12 : i32
    return
  }
  func.func @transform_0(%arg0: i32) -> (i32, i32, i32) {
    %c0_i32 = arith.constant 0 : i32
    %c0_i32_0 = arith.constant 0 : i32
    %c0_i32_1 = arith.constant 0 : i32
    %c0_i32_2 = arith.constant 0 : i32
    return %c0_i32, %c0_i32_0, %c0_i32_1 : i32, i32, i32
  }
  func.func @transform_1(%arg0: i32) -> (i32, i32, i32, i32) {
    %c0_i32 = arith.constant 0 : i32
    %c0_i32_0 = arith.constant 0 : i32
    %c0_i32_1 = arith.constant 0 : i32
    %c0_i32_2 = arith.constant 0 : i32
    return %arg0, %c0_i32, %c0_i32_0, %c0_i32_1 : i32, i32, i32, i32
  }
  func.func @transform_2(%arg0: i32) -> (i32, i32, i32, i32) {
    %c0_i32 = arith.constant 0 : i32
    %c0_i32_0 = arith.constant 0 : i32
    %c0_i32_1 = arith.constant 0 : i32
    %c0_i32_2 = arith.constant 0 : i32
    return %arg0, %c0_i32, %c0_i32_0, %c0_i32_1 : i32, i32, i32, i32
  }
  func.func @transform_3(%arg0: i32) -> (i32, i32, i32, i32) {
    %c0_i32 = arith.constant 0 : i32
    %c0_i32_0 = arith.constant 0 : i32
    %c0_i32_1 = arith.constant 0 : i32
    %c0_i32_2 = arith.constant 0 : i32
    return %arg0, %c0_i32, %c0_i32_0, %c0_i32_1 : i32, i32, i32, i32
  }
  func.func @transform_4(%arg0: i32) -> (i32, i32, i32, i32) {
    %c0_i32 = arith.constant 0 : i32
    %c0_i32_0 = arith.constant 0 : i32
    %c0_i32_1 = arith.constant 0 : i32
    %c0_i32_2 = arith.constant 0 : i32
    return %arg0, %c0_i32, %c0_i32_0, %c0_i32_1 : i32, i32, i32, i32
  }
  func.func @transform_5(%arg0: i32) -> (i32, i32) {
    %c0_i32 = arith.constant 0 : i32
    %c0_i32_0 = arith.constant 0 : i32
    %c0_i32_1 = arith.constant 0 : i32
    return %c0_i32, %c0_i32_0 : i32, i32
  }
  func.func @transform_6(%arg0: i32) -> (i32, i32, i32) {
    %c0_i32 = arith.constant 0 : i32
    %c0_i32_0 = arith.constant 0 : i32
    %c0_i32_1 = arith.constant 0 : i32
    return %arg0, %c0_i32, %c0_i32_0 : i32, i32, i32
  }
}

</mosaic_0001>

<llo_original>
// kernel: bigru_forward.5
$region0: #{bigru_forward.5}
  #allocation0 [shape = 'u32[]', space=smem, size = 0x4, offset = 0x4, fixed_abs, tag = 'smem constant byte address 0x4 - core index']
  #allocation1 [shape = 'u32[144,128]{1,0:T(1,128)}', space=vmem, size = 0x12000, scoped, tag = 'internal scratch']
  #allocation2 [shape = 'f32[1,1]{1,0:T(1,128)S(1)}', space=vmem, size = 0x200, scoped, tag = 'scoped memory for bigru_forward.5']
  %s0 = inlined_call_operand.vmem [shape: f32[2,12,8,128], index: 0, kind: input, shape index: {}]
  %s1 = inlined_call_operand.vmem [shape: f32[128,6], index: 1, kind: input, shape index: {}]
  %s2 = inlined_call_operand.vmem [shape: f32[128,6], index: 2, kind: input, shape index: {}]
  %s3 = inlined_call_operand.vmem [shape: f32[1,6], index: 3, kind: input, shape index: {}]
  %s4 = inlined_call_operand.<no memory space> [shape: f32[1,1], index: 4, kind: input, shape index: {}]
  %s5 = inlined_call_operand.hbm [shape: f32[8,6], index: 5, kind: output, shape index: {}]
  %s6 = sld [smem:[#allocation0]]
  $region30: #{bigru_forward.5} parent=0
    _
  %s8 = ssub.s32 1, %s6
  %s9 = scalar_select 0, %s8, %s6
  %v10 = vstv %s4
  %11 = vst [vmem:[#allocation2] sm:$0x1] %v10
  $region1: #{bigru_forward.5} parent=0
    #allocation3 [shape = 'u8[4096]{0}', space=vmem, size = 0x1000, scoped, tag = 'output window, operand 0, single buffered']
    #allocation4 [shape = 's32[1]{0}', space=sflag, size = 0x4, scoped, tag = 'scoped memory for bigru_forward.5']
    %12 = vsyncpa [#allocation4], 0
    // Predicated region
    $region2: #{bigru_forward.5} parent=1 // pred_check
      _
    $region3: #{bigru_forward.5} parent=1 // pred_check_branch
      %14 = sbr.rel (0) target = $region5
    $region4: #{bigru_forward.5} parent=1 // pred_region
      _
    $region5: #{bigru_forward.5} parent=1 // pred_fallthru
      _
    // Predicated region
    $region6: #{bigru_forward.5} parent=1 // pred_check
      _
    $region7: #{bigru_forward.5} parent=1 // pred_check_branch
      %16 = sbr.rel (0) target = $region9
    $region8: #{bigru_forward.5} parent=1 // pred_region
      _
    $region9: #{bigru_forward.5} parent=1 // pred_fallthru
      _
    // Predicated region
    $region10: #{bigru_forward.5} parent=1 // pred_check
      _
    $region11: #{bigru_forward.5} parent=1 // pred_check_branch
      %18 = sbr.rel (0) target = $region13
    $region12: #{bigru_forward.5} parent=1 // pred_region
      _
    $region13: #{bigru_forward.5} parent=1 // pred_fallthru
      _
    // Predicated region
    $region14: #{bigru_forward.5} parent=1 // pred_check
      _
    $region15: #{bigru_forward.5} parent=1 // pred_check_branch
      %20 = sbr.rel (0) target = $region17
    $region16: #{bigru_forward.5} parent=1 // pred_region
      _
    $region17: #{bigru_forward.5} parent=1 // pred_fallthru
      _
    // Predicated region
    $region18: #{bigru_forward.5} parent=1 // pred_check
      _
    $region19: #{bigru_forward.5} parent=1 // pred_check_branch
      %22 = sbr.rel (0) target = $region21
    $region20: #{bigru_forward.5} parent=1 // pred_region
      _
    $region21: #{bigru_forward.5} parent=1 // pred_fallthru
      _
    %v23 = vld [vmem:[%s0] sm:$0xff]
    %v24 = vld [vmem:[%s0 + $0x8] sm:$0xff]
    %v25 = vld [vmem:[%s0 + $0x10] sm:$0xff]
    %v26 = vld [vmem:[%s0 + $0x18] sm:$0xff]
    %v27 = vld [vmem:[%s0 + $0x20] sm:$0xff]
    %v28 = vld [vmem:[%s0 + $0x28] sm:$0xff]
    %v29 = vld [vmem:[%s0 + $0x30] sm:$0xff]
    %v30 = vld [vmem:[%s0 + $0x38] sm:$0xff]
    %v31 = vld [vmem:[%s0 + $0x40] sm:$0xff]
    %v32 = vld [vmem:[%s0 + $0x48] sm:$0xff]
    %v33 = vld [vmem:[%s0 + $0x50] sm:$0xff]
    %v34 = vld [vmem:[%s0 + $0x58] sm:$0xff]
    %s35 = scalar_lea.vmem %s0, 96
    %v36 = vld [vmem:[%s35] sm:$0xff]
    %v37 = vld [vmem:[%s35 + $0x8] sm:$0xff]
    %v38 = vld [vmem:[%s35 + $0x10] sm:$0xff]
    %v39 = vld [vmem:[%s35 + $0x18] sm:$0xff]
    %v40 = vld [vmem:[%s35 + $0x20] sm:$0xff]
    %v41 = vld [vmem:[%s35 + $0x28] sm:$0xff]
    %v42 = vld [vmem:[%s35 + $0x30] sm:$0xff]
    %v43 = vld [vmem:[%s35 + $0x38] sm:$0xff]
    %v44 = vld [vmem:[%s35 + $0x40] sm:$0xff]
    %v45 = vld [vmem:[%s35 + $0x48] sm:$0xff]
    %v46 = vld [vmem:[%s35 + $0x50] sm:$0xff]
    %v47 = vld [vmem:[%s35 + $0x58] sm:$0xff]
    %v48 = vadd.f32 %v23, %v36
    %v49 = vadd.f32 %v24, %v37
    %v50 = vadd.f32 %v25, %v38
    %v51 = vadd.f32 %v26, %v39
    %v52 = vadd.f32 %v27, %v40
    %v53 = vadd.f32 %v28, %v41
    %v54 = vadd.f32 %v29, %v42
    %v55 = vadd.f32 %v30, %v43
    %v56 = vadd.f32 %v31, %v44
    %v57 = vadd.f32 %v32, %v45
    %v58 = vadd.f32 %v33, %v46
    %v59 = vadd.f32 %v34, %v47
    %v60 = vmax.f32 %v48, %v52
    %v61 = vmax.f32 %v49, %v53
    %v62 = vmax.f32 %v50, %v54
    %v63 = vmax.f32 %v51, %v55
    %v64 = vmax.f32 %v60, %v56
    %v65 = vmax.f32 %v61, %v57
    %v66 = vmax.f32 %v62, %v58
    %v67 = vmax.f32 %v63, %v59
    %v68 = vmax.f32 %v64, %v65
    %v69 = vmax.f32 %v66, %v67
    %v70 = vmax.f32 %v68, %v69
    %v71 = vadd.f32 %v48, %v49
    %v72 = vadd.f32 %v71, %v50
    %v73 = vadd.f32 %v72, %v51
    %v74 = vadd.f32 %v73, %v52
    %v75 = vadd.f32 %v74, %v53
    %v76 = vadd.f32 %v75, %v54
    %v77 = vadd.f32 %v76, %v55
    %v78 = vadd.f32 %v77, %v56
    %v79 = vadd.f32 %v78, %v57
    %v80 = vadd.f32 %v79, %v58
    %v81 = vadd.f32 %v80, %v59
    %v82 = vld [vmem:[#allocation2] sm:$0x1]
    %v83 = vrcp.pop %v82
    %v84 = vmul.f32 1.0, %v83
    %v86 = vlaneseq
    %v87 = vshrl.u32 %v86, 7
    %v88 = vsub.s32 0, %v87
    %v89 = vrot.slane %v84, %v88
    %90 = vset.pattern.permute.xlu0 0
    %91 = vperm.xlu0 %90, %v89
    %v92 = vpop.permute.xlu0 %91
    %v94 = vmul.f32 %v81, %v92
    %v95 = vld [vmem:[%s1] sm:$0xff]
    %v96 = vld [vmem:[%s1 + $0x8] sm:$0xff]
    %v97 = vld [vmem:[%s1 + $0x10] sm:$0xff]
    %v98 = vld [vmem:[%s1 + $0x18] sm:$0xff]
    %v99 = vld [vmem:[%s1 + $0x20] sm:$0xff]
    %v100 = vld [vmem:[%s1 + $0x28] sm:$0xff]
    %v101 = vld [vmem:[%s1 + $0x30] sm:$0xff]
    %v102 = vld [vmem:[%s1 + $0x38] sm:$0xff]
    %v103 = vld [vmem:[%s1 + $0x40] sm:$0xff]
    %v104 = vld [vmem:[%s1 + $0x48] sm:$0xff]
    %v105 = vld [vmem:[%s1 + $0x50] sm:$0xff]
    %v106 = vld [vmem:[%s1 + $0x58] sm:$0xff]
    %v107 = vld [vmem:[%s1 + $0x60] sm:$0xff]
    %v108 = vld [vmem:[%s1 + $0x68] sm:$0xff]
    %v109 = vld [vmem:[%s1 + $0x70] sm:$0xff]
    %v110 = vld [vmem:[%s1 + $0x78] sm:$0xff]
    %v111 = vld [vmem:[%s2] sm:$0xff]
    %v112 = vld [vmem:[%s2 + $0x8] sm:$0xff]
    %v113 = vld [vmem:[%s2 + $0x10] sm:$0xff]
    %v114 = vld [vmem:[%s2 + $0x18] sm:$0xff]
    %v115 = vld [vmem:[%s2 + $0x20] sm:$0xff]
    %v116 = vld [vmem:[%s2 + $0x28] sm:$0xff]
    %v117 = vld [vmem:[%s2 + $0x30] sm:$0xff]
    %v118 = vld [vmem:[%s2 + $0x38] sm:$0xff]
    %v119 = vld [vmem:[%s2 + $0x40] sm:$0xff]
    %v120 = vld [vmem:[%s2 + $0x48] sm:$0xff]
    %v121 = vld [vmem:[%s2 + $0x50] sm:$0xff]
    %v122 = vld [vmem:[%s2 + $0x58] sm:$0xff]
    %v123 = vld [vmem:[%s2 + $0x60] sm:$0xff]
    %v124 = vld [vmem:[%s2 + $0x68] sm:$0xff]
    %v125 = vld [vmem:[%s2 + $0x70] sm:$0xff]
    %v126 = vld [vmem:[%s2 + $0x78] sm:$0xff]
    %127 = vmatprep.subr.mxu0 0.0
    %128 = vmatpush1.msra.mxu0 %v111
    %129 = vmatprep.subr.mxu0 0.0
    %130 = vmatpush1.msra.mxu0 %v112
    %131 = vmatprep.subr.mxu0 0.0
    %132 = vmatpush1.msra.mxu0 %v113
    %133 = vmatprep.subr.mxu0 0.0
    %134 = vmatpush1.msra.mxu0 %v114
    %135 = vmatprep.subr.mxu0 0.0
    %136 = vmatpush1.msra.mxu0 %v115
    %137 = vmatprep.subr.mxu0 0.0
    %138 = vmatpush1.msra.mxu0 %v116
    %139 = vmatprep.subr.mxu0 0.0
    %140 = vmatpush1.msra.mxu0 %v117
    %141 = vmatprep.subr.mxu0 0.0
    %142 = vmatpush1.msra.mxu0 %v118
    %143 = vmatprep.subr.mxu0 0.0
    %144 = vmatpush1.msra.mxu0 %v119
    %145 = vmatprep.subr.mxu0 0.0
    %146 = vmatpush1.msra.mxu0 %v120
    %147 = vmatprep.subr.mxu0 0.0
    %148 = vmatpush1.msra.mxu0 %v121
    %149 = vmatprep.subr.mxu0 0.0
    %150 = vmatpush1.msra.mxu0 %v122
    %151 = vmatprep.subr.mxu0 0.0
    %152 = vmatpush1.msra.mxu0 %v123
    %153 = vmatprep.subr.mxu0 0.0
    %154 = vmatpush1.msra.mxu0 %v124
    %155 = vmatprep.subr.mxu0 0.0
    %156 = vmatpush1.msra.mxu0 %v125
    %157 = vmatprep.subr.mxu0 0.0
    %158 = vmatpush1.msra.mxu0 %v126
    %159 = vmatprep.subr.mxu0 0.0
    %160 = vmatpush1.msra.mxu0 0.0
    %161 = vmatprep.subr.mxu0 0.0
    %162 = vmatpush1.msra.mxu0 0.0
    %163 = vmatprep.subr.mxu0 0.0
    %164 = vmatpush1.msra.mxu0 0.0
    %165 = vmatprep.subr.mxu0 0.0
    %166 = vmatpush1.msra.mxu0 0.0
    %167 = vmatprep.subr.mxu0 0.0
    %168 = vmatpush1.msra.mxu0 0.0
    %169 = vmatprep.subr.mxu0 0.0
    %170 = vmatpush1.msra.mxu0 0.0
    %171 = vmatprep.subr.mxu0 0.0
    %172 = vmatpush1.msra.mxu0 0.0
    %173 = vmatprep.subr.mxu0 0.0
    %174 = vmatpush1.msra.mxu0 0.0
    %175 = vmatprep.subr.mxu0 0.0
    %176 = vmatpush1.msra.mxu0 0.0
    %177 = vmatprep.subr.mxu0 0.0
    %178 = vmatpush1.msra.mxu0 0.0
    %179 = vmatprep.subr.mxu0 0.0
    %180 = vmatpush1.msra.mxu0 0.0
    %181 = vmatprep.subr.mxu0 0.0
    %182 = vmatpush1.msra.mxu0 0.0
    %183 = vmatprep.subr.mxu0 0.0
    %184 = vmatpush1.msra.mxu0 0.0
    %185 = vmatprep.subr.mxu0 0.0
    %186 = vmatpush1.msra.mxu0 0.0
    %187 = vmatprep.subr.mxu0 0.0
    %188 = vmatpush1.msra.mxu0 0.0
    %189 = vmatprep.subr.mxu0 0.0
    %190 = vmatpush1.msra.mxu0 0.0
    %191 = vmatprep.mubr.f32.mxu0 0.0
    %192 = vmatmul.mubr.f32.gmra.mrb[0].mxu0 %v70
    %v193 = vpop.f32.mrb[0].mxu0
    %v194 = vadd.f32 0.0, %v193
    %v195 = vpop.f32.mrb[0].mxu0
    %196 = vdwg.mxu0
    %197 = vmatprep.subr.mxu0 0.0
    %198 = vmatpush1.msra.mxu0 %v95
    %199 = vmatprep.subr.mxu0 0.0
    %200 = vmatpush1.msra.mxu0 %v96
    %201 = vmatprep.subr.mxu0 0.0
    %202 = vmatpush1.msra.mxu0 %v97
    %203 = vmatprep.subr.mxu0 0.0
    %204 = vmatpush1.msra.mxu0 %v98
    %205 = vmatprep.subr.mxu0 0.0
    %206 = vmatpush1.msra.mxu0 %v99
    %207 = vmatprep.subr.mxu0 0.0
    %208 = vmatpush1.msra.mxu0 %v100
    %209 = vmatprep.subr.mxu0 0.0
    %210 = vmatpush1.msra.mxu0 %v101
    %211 = vmatprep.subr.mxu0 0.0
    %212 = vmatpush1.msra.mxu0 %v102
    %213 = vmatprep.subr.mxu0 0.0
    %214 = vmatpush1.msra.mxu0 %v103
    %215 = vmatprep.subr.mxu0 0.0
    %216 = vmatpush1.msra.mxu0 %v104
    %217 = vmatprep.subr.mxu0 0.0
    %218 = vmatpush1.msra.mxu0 %v105
    %219 = vmatprep.subr.mxu0 0.0
    %220 = vmatpush1.msra.mxu0 %v106
    %221 = vmatprep.subr.mxu0 0.0
    %222 = vmatpush1.msra.mxu0 %v107
    %223 = vmatprep.subr.mxu0 0.0
    %224 = vmatpush1.msra.mxu0 %v108
    %225 = vmatprep.subr.mxu0 0.0
    %226 = vmatpush1.msra.mxu0 %v109
    %227 = vmatprep.subr.mxu0 0.0
    %228 = vmatpush1.msra.mxu0 %v110
    %229 = vmatprep.subr.mxu0 0.0
    %230 = vmatpush1.msra.mxu0 0.0
    %231 = vmatprep.subr.mxu0 0.0
    %232 = vmatpush1.msra.mxu0 0.0
    %233 = vmatprep.subr.mxu0 0.0
    %234 = vmatpush1.msra.mxu0 0.0
    %235 = vmatprep.subr.mxu0 0.0
    %236 = vmatpush1.msra.mxu0 0.0
    %237 = vmatprep.subr.mxu0 0.0
    %238 = vmatpush1.msra.mxu0 0.0
    %239 = vmatprep.subr.mxu0 0.0
    %240 = vmatpush1.msra.mxu0 0.0
    %241 = vmatprep.subr.mxu0 0.0
    %242 = vmatpush1.msra.mxu0 0.0
    %243 = vmatprep.subr.mxu0 0.0
    %244 = vmatpush1.msra.mxu0 0.0
    %245 = vmatprep.subr.mxu0 0.0
    %246 = vmatpush1.msra.mxu0 0.0
    %247 = vmatprep.subr.mxu0 0.0
    %248 = vmatpush1.msra.mxu0 0.0
    %249 = vmatprep.subr.mxu0 0.0
    %250 = vmatpush1.msra.mxu0 0.0
    %251 = vmatprep.subr.mxu0 0.0
    %252 = vmatpush1.msra.mxu0 0.0
    %253 = vmatprep.subr.mxu0 0.0
    %254 = vmatpush1.msra.mxu0 0.0
    %255 = vmatprep.subr.mxu0 0.0
    %256 = vmatpush1.msra.mxu0 0.0
    %257 = vmatprep.subr.mxu0 0.0
    %258 = vmatpush1.msra.mxu0 0.0
    %259 = vmatprep.subr.mxu0 0.0
    %260 = vmatpush1.msra.mxu0 0.0
    %261 = vmatprep.mubr.f32.mxu0 0.0
    %262 = vmatmul.mubr.f32.gmra.mrb[0].mxu0 %v94
    %v263 = vpop.f32.mrb[0].mxu0
    %v264 = vadd.f32 %v194, %v263
    %v265 = vpop.f32.mrb[0].mxu0
    %266 = vdwg.mxu0
    %v267 = vld [vmem:[%s3] sm:$0x1]
    %v269 = vlaneseq
    %v270 = vshrl.u32 %v269, 7
    %v271 = vsub.s32 0, %v270
    %v272 = vrot.slane %v267, %v271
    %v274 = vadd.f32 %v264, %v272
    %v275 = vxor.u32 %v274, 2147483648
    %v276 = vmul.f32 %v275, 1.442695
    %v277 = vpow.pop %v276
    %v278 = vadd.f32 %v277, 1.0
    %v279 = vrcp.pop %v278
    %v280 = vmul.f32 1.0, %v279
    %vm281 = vcmask 48128
    %282 = vst.msk [vmem:[#allocation3] sm:$0xff] %vm281, %v280
    // Predicated region
    $region22: #{bigru_forward.5} parent=1 // pred_check
      _
    $region23: #{bigru_forward.5} parent=1 // pred_check_branch
      %284 = sbr.rel (0) target = $region25
    $region24: #{bigru_forward.5} parent=1 // pred_region
      %s286 = ssub.s32 128, 128
      %287 = vsyncadd [#allocation4], %s286
      %s289 = sshll.u32 [#allocation3], 4
      %s290 = int_to_ptr.vmem [resolvable:$true] %s289
      %292 = dma.vmem_to_hbm [thread:$0]  %s290, 128, %s5, [#allocation4]
    $region25: #{bigru_forward.5} parent=1 // pred_fallthru
      _
    // Predicated region
    $region26: #{bigru_forward.5} parent=1 // pred_check
      _
    $region27: #{bigru_forward.5} parent=1 // pred_check_branch
      %294 = sbr.rel (0) target = $region29
    $region28: #{bigru_forward.5} parent=1 // pred_region
      %295 = dma.done [#allocation4], 128
    $region29: #{bigru_forward.5} parent=1 // pred_fallthru
      _
    %296 = vsyncpa [#allocation4], 1

// kernel: bigru_forward.3
$region0: #{bigru_forward.3}
  #allocation0 [shape = 'u32[]', space=smem, size = 0x4, offset = 0x4, fixed_abs, tag = 'smem constant byte address 0x4 - core index']
  #allocation1 [shape = 'u32[144,128]{1,0:T(1,128)}', space=vmem, size = 0x12000, scoped, tag = 'internal scratch']
  #allocation2 [shape = 'f32[96,128]{1,0:T(8,128)}', space=vmem, size = 0xc000, scoped, tag = 'scratch operand']
  #allocation3 [shape = 'f32[96,128]{1,0:T(8,128)}', space=vmem, size = 0xc000, scoped, tag = 'scratch operand']
  #allocation4 [shape = 'f32[96,128]{1,0:T(8,128)}', space=vmem, size = 0xc000, scoped, tag = 'scratch operand']
  %s0 = inlined_call_operand.vmem [shape: f32[1,96,64], index: 0, kind: input, shape index: {}]
  %s1 = inlined_call_operand.hbm [shape: f32[2,3,64,128], index: 1, kind: input, shape index: {}]
  %s2 = inlined_call_operand.hbm [shape: f32[2,3,128,128], index: 2, kind: input, shape index: {}]
  %s3 = inlined_call_operand.hbm [shape: f32[2,3,1,128], index: 3, kind: input, shape index: {}]
  %s4 = inlined_call_operand.hbm [shape: f32[2,3,1,128], index: 4, kind: input, shape index: {}]
  %s5 = inlined_call_operand.vmem [shape: s32[8,1], index: 5, kind: input, shape index: {}]
  %s6 = inlined_call_operand.vmem [shape: f32[2,96,128], index: 6, kind: output, shape index: {}]
  %s7 = sld [smem:[#allocation0]]
  $region73: #{bigru_forward.3} parent=0
    _
  %s9 = ssub.s32 1, %s7
  %s10 = scalar_select 0, %s9, %s7
  $region1: #{bigru_forward.3} parent=0
    #allocation5 [shape = 'u8[196608]{0}', space=vmem, size = 0x30000, scoped, tag = 'input window, operand 1']
    #allocation6 [shape = 's32[2]{0}', space=sflag, size = 0x8, scoped, tag = 'scoped memory for bigru_forward.3']
    #allocation7 [shape = 'u8[393216]{0}', space=vmem, size = 0x60000, scoped, tag = 'input window, operand 2']
    #allocation8 [shape = 's32[2]{0}', space=sflag, size = 0x8, scoped, tag = 'scoped memory for bigru_forward.3']
    #allocation9 [shape = 'u8[3072]{0}', space=vmem, size = 0xc00, scoped, tag = 'input window, operand 3']
    #allocation10 [shape = 'u8[3072]{0}', space=vmem, size = 0xc00, scoped, tag = 'input window, operand 4']
    #allocation11 [shape = 's32[2]{0}', space=sflag, size = 0x8, scoped, tag = 'scoped memory for bigru_forward.3']
    %11 = vsyncpa [#allocation6], 0
    %s12 = scalar_lea.sflag [#allocation6], 1
    %13 = vsyncpa %s12, 0
    %14 = vsyncpa [#allocation8], 0
    %s15 = scalar_lea.sflag [#allocation8], 1
    %16 = vsyncpa %s15, 0
    %17 = vsyncpa [#allocation11], 0
    %s18 = scalar_lea.sflag [#allocation11], 1
    %19 = vsyncpa %s18, 0
    loop: start=0, step=1, limit=4
    $region2: #{bigru_forward.3} parent=1 // loop_pre_header
      _
    $region3: #{bigru_forward.3} parent=1 // loop_header
      %s21 = sphi 0, %s25
      %p22 = scmp.ge.s32.totalorder %s21, 4
      %s29 = sphi 0, %s29
      %s31 = sphi 0, %s29
      %s32 = sphi 0, %s31
      %s46 = sphi 0, %s32
      %s52 = sphi 0, %s54
      %s55 = sphi 0, %s52
      %s56 = sphi 0, %s55
      %s72 = sphi 0, %s56
      %s78 = sphi 0, %s80
      %s81 = sphi 0, %s78
      %s82 = sphi 0, %s81
      %s98 = sphi 0, %s82
      %s104 = sphi 0, %s106
      %s107 = sphi 0, %s104
      %s108 = sphi 0, %s107
      %s124 = sphi 0, %s108
      %s130 = sphi 0, %s132
      %s133 = sphi 0, %s130
      %s134 = sphi 0, %s133
      %s150 = sphi 0, %s134
      %s154 = sphi 0, %s154
      %s156 = sphi 0, %s154
      %s157 = sphi 0, %s156
      %s171 = sphi 0, %s157
      %s177 = sphi 0, %s179
      %s180 = sphi 0, %s177
      %s181 = sphi 0, %s180
      %s197 = sphi 0, %s181
    $region4: #{bigru_forward.3} parent=1 // loop_header_branch
      %24 = sbr.rel (%p22) target = $region8
    $region5: #{bigru_forward.3} parent=1 // loop_body
      %s26 = ssub.s32 %s21, 1
      %s27 = ssub.s32 %s21, 2
      %s28 = sadd.s32 %s21, 1
      %s30 = sadd.s32 %s29, 1
      %p33 = scmp.eq.s32.totalorder %s21, 1
      %p34 = scmp.ne.s32.totalorder %s29, %s31
      %p35 = scmp.eq.s32.totalorder %s21, 0
      %p36 = por %p34, %p35
      %p37 = scmp.ne.s32.totalorder %s29, %s31
      %p38 = scmp.eq.s32.totalorder %s26, 1
      %p39 = por %p37, %p38
      %p40 = scmp.ne.s32.totalorder %s31, %s32
      %p41 = scmp.eq.s32.totalorder %s26, 0
      %p42 = por %p40, %p41
      %p43 = scmp.ne.s32.totalorder %s31, %s32
      %p44 = scmp.eq.s32.totalorder %s27, 1
      %p45 = por %p43, %p44
      %p47 = scmp.ne.s32.totalorder %s32, %s46
      %p48 = scmp.eq.s32.totalorder %s27, 0
      %p49 = por %p47, %p48
      %s50 = ssub.s32 %s21, %s28
      %p51 = scmp.eq.s32.totalorder %s50, 0
      %s53 = sadd.s32 %s52, 1
      %s54 = scalar_select %p51, %s52, %s53
      %p57 = pneg %p51
      %p58 = scmp.eq.s32.totalorder %s21, 1
      %p59 = por %p57, %p58
      %p60 = scmp.ne.s32.totalorder %s52, %s55
      %p61 = scmp.eq.s32.totalorder %s21, 0
      %p62 = por %p60, %p61
      %p63 = scmp.ne.s32.totalorder %s52, %s55
      %p64 = scmp.eq.s32.totalorder %s26, 1
      %p65 = por %p63, %p64
      %p66 = scmp.ne.s32.totalorder %s55, %s56
      %p67 = scmp.eq.s32.totalorder %s26, 0
      %p68 = por %p66, %p67
      %p69 = scmp.ne.s32.totalorder %s55, %s56
      %p70 = scmp.eq.s32.totalorder %s27, 1
      %p71 = por %p69, %p70
      %p73 = scmp.ne.s32.totalorder %s56, %s72
      %p74 = scmp.eq.s32.totalorder %s27, 0
      %p75 = por %p73, %p74
      %s76 = ssub.s32 %s21, %s28
      %p77 = scmp.eq.s32.totalorder %s76, 0
      %s79 = sadd.s32 %s78, 1
      %s80 = scalar_select %p77, %s78, %s79
      %p83 = pneg %p77
      %p84 = scmp.eq.s32.totalorder %s21, 1
      %p85 = por %p83, %p84
      %p86 = scmp.ne.s32.totalorder %s78, %s81
      %p87 = scmp.eq.s32.totalorder %s21, 0
      %p88 = por %p86, %p87
      %p89 = scmp.ne.s32.totalorder %s78, %s81
      %p90 = scmp.eq.s32.totalorder %s26, 1
      %p91 = por %p89, %p90
      %p92 = scmp.ne.s32.totalorder %s81, %s82
      %p93 = scmp.eq.s32.totalorder %s26, 0
      %p94 = por %p92, %p93
      %p95 = scmp.ne.s32.totalorder %s81, %s82
      %p96 = scmp.eq.s32.totalorder %s27, 1
      %p97 = por %p95, %p96
      %p99 = scmp.ne.s32.totalorder %s82, %s98
      %p100 = scmp.eq.s32.totalorder %s27, 0
      %p101 = por %p99, %p100
      %s102 = ssub.s32 %s21, %s28
      %p103 = scmp.eq.s32.totalorder %s102, 0
      %s105 = sadd.s32 %s104, 1
      %s106 = scalar_select %p103, %s104, %s105
      %p109 = pneg %p103
      %p110 = scmp.eq.s32.totalorder %s21, 1
      %p111 = por %p109, %p110
      %p112 = scmp.ne.s32.totalorder %s104, %s107
      %p113 = scmp.eq.s32.totalorder %s21, 0
      %p114 = por %p112, %p113
      %p115 = scmp.ne.s32.totalorder %s104, %s107
      %p116 = scmp.eq.s32.totalorder %s26, 1
      %p117 = por %p115, %p116
      %p118 = scmp.ne.s32.totalorder %s107, %s108
      %p119 = scmp.eq.s32.totalorder %s26, 0
      %p120 = por %p118, %p119
      %p121 = scmp.ne.s32.totalorder %s107, %s108
      %p122 = scmp.eq.s32.totalorder %s27, 1
      %p123 = por %p121, %p122
      %p125 = scmp.ne.s32.totalorder %s108, %s124
      %p126 = scmp.eq.s32.totalorder %s27, 0
      %p127 = por %p125, %p126
      %s128 = ssub.s32 %s21, %s28
      %p129 = scmp.eq.s32.totalorder %s128, 0
      %s131 = sadd.s32 %s130, 1
      %s132 = scalar_select %p129, %s130, %s131
      %p135 = pneg %p129
      %p136 = scmp.eq.s32.totalorder %s21, 1
      %p137 = por %p135, %p136
      %p138 = scmp.ne.s32.totalorder %s130, %s133
      %p139 = scmp.eq.s32.totalorder %s21, 0
      %p140 = por %p138, %p139
      %p141 = scmp.ne.s32.totalorder %s130, %s133
      %p142 = scmp.eq.s32.totalorder %s26, 1
      %p143 = por %p141, %p142
      %p144 = scmp.ne.s32.totalorder %s133, %s134
      %p145 = scmp.eq.s32.totalorder %s26, 0
      %p146 = por %p144, %p145
      %p147 = scmp.ne.s32.totalorder %s133, %s134
      %p148 = scmp.eq.s32.totalorder %s27, 1
      %p149 = por %p147, %p148
      %p151 = scmp.ne.s32.totalorder %s134, %s150
      %p152 = scmp.eq.s32.totalorder %s27, 0
      %p153 = por %p151, %p152
      %s155 = sadd.s32 %s154, 1
      %p158 = scmp.eq.s32.totalorder %s21, 1
      %p159 = scmp.ne.s32.totalorder %s154, %s156
      %p160 = scmp.eq.s32.totalorder %s21, 0
      %p161 = por %p159, %p160
      %p162 = scmp.ne.s32.totalorder %s154, %s156
      %p163 = scmp.eq.s32.totalorder %s26, 1
      %p164 = por %p162, %p163
      %p165 = scmp.ne.s32.totalorder %s156, %s157
      %p166 = scmp.eq.s32.totalorder %s26, 0
      %p167 = por %p165, %p166
      %p168 = scmp.ne.s32.totalorder %s156, %s157
      %p169 = scmp.eq.s32.totalorder %s27, 1
      %p170 = por %p168, %p169
      %p172 = scmp.ne.s32.totalorder %s157, %s171
      %p173 = scmp.eq.s32.totalorder %s27, 0
      %p174 = por %p172, %p173
      %s175 = ssub.s32 %s21, %s28
      %p176 = scmp.eq.s32.totalorder %s175, 0
      %s178 = sadd.s32 %s177, 1
      %s179 = scalar_select %p176, %s177, %s178
      %p182 = pneg %p176
      %p183 = scmp.eq.s32.totalorder %s21, 1
      %p184 = por %p182, %p183
      %p185 = scmp.ne.s32.totalorder %s177, %s180
      %p186 = scmp.eq.s32.totalorder %s21, 0
      %p187 = por %p185, %p186
      %p188 = scmp.ne.s32.totalorder %s177, %s180
      %p189 = scmp.eq.s32.totalorder %s26, 1
      %p190 = por %p188, %p189
      %p191 = scmp.ne.s32.totalorder %s180, %s181
      %p192 = scmp.eq.s32.totalorder %s26, 0
      %p193 = por %p191, %p192
      %p194 = scmp.ne.s32.totalorder %s180, %s181
      %p195 = scmp.eq.s32.totalorder %s27, 1
      %p196 = por %p194, %p195
      %p198 = scmp.ne.s32.totalorder %s181, %s197
      %p199 = scmp.eq.s32.totalorder %s27, 0
      %p200 = por %p198, %p199
      %p201 = scmp.le.s32.totalorder 1, %s21
      %p202 = scmp.lt.s32.totalorder %s21, 3
      %p203 = pnand %p201, %p202
      %p204 = pneg %p203
      // Predicated region
      $region9: #{bigru_forward.3} parent=5 // pred_check
        _
      $region10: #{bigru_forward.3} parent=5 // pred_check_branch
        %206 = sbr.rel (%p203) target = $region12
      $region11: #{bigru_forward.3} parent=5 // pred_region
        %s207 = ssub.s32 %s21, 1
        // Predicated region
        $region13: #{bigru_forward.3} parent=11 // pred_check
          %p208 = pneg %p42
        $region14: #{bigru_forward.3} parent=11 // pred_check_branch
          %210 = sbr.rel (%p208) target = $region16
        $region15: #{bigru_forward.3} parent=11 // pred_region
          _
        $region16: #{bigru_forward.3} parent=11 // pred_fallthru
          _
        // Predicated region
        $region17: #{bigru_forward.3} parent=11 // pred_check
          %p211 = pneg %p167
        $region18: #{bigru_forward.3} parent=11 // pred_check_branch
          %213 = sbr.rel (%p211) target = $region20
        $region19: #{bigru_forward.3} parent=11 // pred_region
          _
        $region20: #{bigru_forward.3} parent=11 // pred_fallthru
          _
      $region12: #{bigru_forward.3} parent=5 // pred_fallthru
        _
      %p214 = scmp.lt.s32.totalorder %s21, 2
      // Predicated region
      $region21: #{bigru_forward.3} parent=5 // pred_check
        %p215 = pneg %p214
      $region22: #{bigru_forward.3} parent=5 // pred_check_branch
        %217 = sbr.rel (%p215) target = $region24
      $region23: #{bigru_forward.3} parent=5 // pred_region
        // Predicated region
        $region25: #{bigru_forward.3} parent=23 // pred_check
          %p218 = pneg %p62
        $region26: #{bigru_forward.3} parent=23 // pred_check_branch
          %220 = sbr.rel (%p218) target = $region28
        $region27: #{bigru_forward.3} parent=23 // pred_region
          %s221 = sand.u32 %s52, 1
          %s222 = scalar_lea.sflag [#allocation6], %s221
          %s223 = sand.u32 %s52, 1
          %s224 = smul.addr %s223, 192
          %s225 = scalar_lea.vmem [#allocation5], %s224
          %s227 = ssub.s32 3072, 3072
          %228 = vsyncadd %s222, %s227
          %s229 = smul.addr %s21, 24
          %s230 = smul.addr %s229, 128
          %s231 = scalar_lea.hbm %s1, %s230
          %s232 = sshll.u32 %s225, 4
          %s233 = int_to_ptr.vmem [resolvable:$true] %s232
          %238 = dma.hbm_to_vmem [thread:$0]  %s231, 3072, %s233, %s222, 128, 128, 8
        $region28: #{bigru_forward.3} parent=23 // pred_fallthru
          _
        // Predicated region
        $region29: #{bigru_forward.3} parent=23 // pred_check
          %p239 = pneg %p88
        $region30: #{bigru_forward.3} parent=23 // pred_check_branch
          %241 = sbr.rel (%p239) target = $region32
        $region31: #{bigru_forward.3} parent=23 // pred_region
          %s242 = sand.u32 %s21, 1
          %s243 = scalar_lea.sflag [#allocation8], %s242
          %s244 = sand.u32 %s78, 1
          %s245 = smul.addr %s244, 384
          %s246 = scalar_lea.vmem [#allocation7], %s245
          %s248 = ssub.s32 6144, 6144
          %249 = vsyncadd %s243, %s248
          %s250 = smul.addr %s21, 48
          %s251 = smul.addr %s250, 128
          %s252 = scalar_lea.hbm %s2, %s251
          %s253 = sshll.u32 %s246, 4
          %s254 = int_to_ptr.vmem [resolvable:$true] %s253
          %259 = dma.hbm_to_vmem [thread:$0]  %s252, 6144, %s254, %s243, 128, 128, 8
        $region32: #{bigru_forward.3} parent=23 // pred_fallthru
          _
        // Predicated region
        $region33: #{bigru_forward.3} parent=23 // pred_check
          %p260 = pneg %p114
        $region34: #{bigru_forward.3} parent=23 // pred_check_branch
          %262 = sbr.rel (%p260) target = $region36
        $region35: #{bigru_forward.3} parent=23 // pred_region
          %s263 = sand.u32 %s21, 1
          %s264 = scalar_lea.sflag [#allocation8], %s263
          %s265 = sand.u32 %s104, 1
          %s266 = smul.addr %s265, 3
          %s267 = scalar_lea.vmem [#allocation9], %s266
          %s269 = ssub.s32 48, 48
          %270 = vsyncadd %s264, %s269
          %s271 = smul.addr %s21, 3
          %s272 = smul.addr %s271, 16
          %s273 = scalar_lea.hbm %s3, %s272
          %s274 = sshll.u32 %s267, 4
          %s275 = int_to_ptr.vmem [resolvable:$true] %s274
          %280 = dma.hbm_to_vmem [thread:$0]  %s273, 48, %s275, %s264, 16, 16, 1
        $region36: #{bigru_forward.3} parent=23 // pred_fallthru
          _
        // Predicated region
        $region37: #{bigru_forward.3} parent=23 // pred_check
          %p281 = pneg %p140
        $region38: #{bigru_forward.3} parent=23 // pred_check_branch
          %283 = sbr.rel (%p281) target = $region40
        $region39: #{bigru_forward.3} parent=23 // pred_region
          %s284 = sand.u32 %s130, 1
          %s285 = scalar_lea.sflag [#allocation11], %s284
          %s286 = sand.u32 %s130, 1
          %s287 = smul.addr %s286, 3
          %s288 = scalar_lea.vmem [#allocation10], %s287
          %s290 = ssub.s32 48, 48
          %291 = vsyncadd %s285, %s290
          %s292 = smul.addr %s21, 3
          %s293 = smul.addr %s292, 16
          %s294 = scalar_lea.hbm %s4, %s293
          %s295 = sshll.u32 %s288, 4
          %s296 = int_to_ptr.vmem [resolvable:$true] %s295
          %301 = dma.hbm_to_vmem [thread:$0]  %s294, 48, %s296, %s285, 16, 16, 1
        $region40: #{bigru_forward.3} parent=23 // pred_fallthru
          _
      $region24: #{bigru_forward.3} parent=5 // pred_fallthru
        _
      %p302 = scmp.le.s32.totalorder 1, %s21
      %p303 = scmp.lt.s32.totalorder %s21, 3
      %p304 = pnand %p302, %p303
      %p305 = pneg %p304
      // Predicated region
      $region41: #{bigru_forward.3} parent=5 // pred_check
        _
      $region42: #{bigru_forward.3} parent=5 // pred_check_branch
        %307 = sbr.rel (%p304) target = $region44
      $region43: #{bigru_forward.3} parent=5 // pred_region
        %s308 = ssub.s32 %s21, 1
        %s309 = sand.u32 %s55, 1
        %s310 = scalar_lea.sflag [#allocation6], %s309
        %s311 = sand.u32 %s55, 1
        %s312 = smul.addr %s311, 192
        %s313 = scalar_lea.vmem [#allocation5], %s312
        // Predicated region
        $region45: #{bigru_forward.3} parent=43 // pred_check
          %p314 = pneg %p68
        $region46: #{bigru_forward.3} parent=43 // pred_check_branch
          %316 = sbr.rel (%p314) target = $region48
        $region47: #{bigru_forward.3} parent=43 // pred_region
          %317 = dma.done %s310, 3072
        $region48: #{bigru_forward.3} parent=43 // pred_fallthru
          _
        %s318 = sand.u32 %s26, 1
        %s319 = scalar_lea.sflag [#allocation8], %s318
        %s320 = sand.u32 %s81, 1
        %s321 = smul.addr %s320, 384
        %s322 = scalar_lea.vmem [#allocation7], %s321
        // Predicated region
        $region49: #{bigru_forward.3} parent=43 // pred_check
          %p323 = pneg %p94
        $region50: #{bigru_forward.3} parent=43 // pred_check_branch
          %325 = sbr.rel (%p323) target = $region52
        $region51: #{bigru_forward.3} parent=43 // pred_region
          %326 = dma.done %s319, 6144
        $region52: #{bigru_forward.3} parent=43 // pred_fallthru
          _
        %s327 = sand.u32 %s26, 1
        %s328 = scalar_lea.sflag [#allocation8], %s327
        %s329 = sand.u32 %s107, 1
        %s330 = smul.addr %s329, 3
        %s331 = scalar_lea.vmem [#allocation9], %s330
        // Predicated region
        $region53: #{bigru_forward.3} parent=43 // pred_check
          %p332 = pneg %p120
        $region54: #{bigru_forward.3} parent=43 // pred_check_branch
          %334 = sbr.rel (%p332) target = $region56
        $region55: #{bigru_forward.3} parent=43 // pred_region
          %335 = dma.done %s328, 48
        $region56: #{bigru_forward.3} parent=43 // pred_fallthru
          _
        %s336 = sand.u32 %s133, 1
        %s337 = scalar_lea.sflag [#allocation11], %s336
        %s338 = sand.u32 %s133, 1
        %s339 = smul.addr %s338, 3
        %s340 = scalar_lea.vmem [#allocation10], %s339
        // Predicated region
        $region57: #{bigru_forward.3} parent=43 // pred_check
          %p341 = pneg %p146
        $region58: #{bigru_forward.3} parent=43 // pred_check_branch
          %343 = sbr.rel (%p341) target = $region60
        $region59: #{bigru_forward.3} parent=43 // pred_region
          %344 = dma.done %s337, 48
        $region60: #{bigru_forward.3} parent=43 // pred_fallthru
          _
        %p345 = pneg %p42
        %p346 = pneg %p39
        %s347 = sand.u32 %s55, 1
        %s348 = scalar_lea.sflag [#allocation6], %s347
        %s349 = sand.u32 %s55, 1
        %s350 = smul.addr %s349, 192
        %s351 = scalar_lea.vmem [#allocation5], %s350
        %p352 = pneg %p68
        %p353 = pneg %p65
        %s354 = sand.u32 %s26, 1
        %s355 = scalar_lea.sflag [#allocation8], %s354
        %s356 = sand.u32 %s81, 1
        %s357 = smul.addr %s356, 384
        %s358 = scalar_lea.vmem [#allocation7], %s357
        %p359 = pneg %p94
        %p360 = pneg %p91
        %s361 = sand.u32 %s26, 1
        %s362 = scalar_lea.sflag [#allocation8], %s361
        %s363 = sand.u32 %s107, 1
        %s364 = smul.addr %s363, 3
        %s365 = scalar_lea.vmem [#allocation9], %s364
        %p366 = pneg %p120
        %p367 = pneg %p117
        %s368 = sand.u32 %s133, 1
        %s369 = scalar_lea.sflag [#allocation11], %s368
        %s370 = sand.u32 %s133, 1
        %s371 = smul.addr %s370, 3
        %s372 = scalar_lea.vmem [#allocation10], %s371
        %p373 = pneg %p146
        %p374 = pneg %p143
        %p375 = pneg %p167
        %p376 = pneg %p164
        %p377 = pneg %p193
        %p378 = pneg %p190
        %p379 = scmp.lt.s32.totalorder %s26, 1
        %s380 = scalar_select %p379, %s26, 1
        %s381 = smul.addr %s380, 12
        %s382 = smul.addr %s381, 8
        %s383 = scalar_lea.vmem %s6, %s382
        %p384 = scmp.lt.s32.totalorder %s26, 1
        %s385 = scalar_select %p384, %s26, 1
        %s386 = smul.addr %s385, 12
        %s387 = smul.addr %s386, 8
        %s388 = scalar_lea.vmem %s6, %s387
        %p389 = scmp.eq.s32.totalorder %s26, 1
        %v390 = vld [vmem:[%s0] sm:$0xff]
        %v391 = vld [vmem:[%s0 + $0x8] sm:$0xff]
        %v392 = vld [vmem:[%s0 + $0x10] sm:$0xff]
        %v393 = vld [vmem:[%s0 + $0x18] sm:$0xff]
        %v394 = vld [vmem:[%s0 + $0x20] sm:$0xff]
        %v395 = vld [vmem:[%s0 + $0x28] sm:$0xff]
        %v396 = vld [vmem:[%s0 + $0x30] sm:$0xff]
        %v397 = vld [vmem:[%s0 + $0x38] sm:$0xff]
        %v398 = vld [vmem:[%s0 + $0x40] sm:$0xff]
        %v399 = vld [vmem:[%s0 + $0x48] sm:$0xff]
        %v400 = vld [vmem:[%s0 + $0x50] sm:$0xff]
        %v401 = vld [vmem:[%s0 + $0x58] sm:$0xff]
        %v402 = vld [vmem:[%s313] sm:$0xff]
        %v403 = vld [vmem:[%s313 + $0x8] sm:$0xff]
        %v404 = vld [vmem:[%s313 + $0x10] sm:$0xff]
        %v405 = vld [vmem:[%s313 + $0x18] sm:$0xff]
        %v406 = vld [vmem:[%s313 + $0x20] sm:$0xff]
        %v407 = vld [vmem:[%s313 + $0x28] sm:$0xff]
        %v408 = vld [vmem:[%s313 + $0x30] sm:$0xff]
        %v409 = vld [vmem:[%s313 + $0x38] sm:$0xff]
        %v410 = vld [vmem:[%s331] sm:$0x1]
        %v411 = vld [vmem:[%s340] sm:$0x1]
        %v412 = vadd.f32 %v410, %v411
        %v414 = vlaneseq
        %v415 = vshrl.u32 %v414, 7
        %v416 = vsub.s32 0, %v415
        %v417 = vrot.slane %v412, %v416
        %vm419 = vcmask 523264
        %v421 = vsel %vm419, %v390, 0
        %v424 = vsel %vm419, %v391, 0
        %v427 = vsel %vm419, %v392, 0
        %v430 = vsel %vm419, %v393, 0
        %v433 = vsel %vm419, %v394, 0
        %v436 = vsel %vm419, %v395, 0
        %v439 = vsel %vm419, %v396, 0
        %v442 = vsel %vm419, %v397, 0
        %v445 = vsel %vm419, %v398, 0
        %v448 = vsel %vm419, %v399, 0
        %v451 = vsel %vm419, %v400, 0
        %v454 = vsel %vm419, %v401, 0
        %456 = vmatprep.subr.mxu0 0.0
        %457 = vmatpush1.msra.mxu0 %v402
        %458 = vmatprep.subr.mxu0 0.0
        %459 = vmatpush1.msra.mxu0 %v403
        %460 = vmatprep.subr.mxu0 0.0
        %461 = vmatpush1.msra.mxu0 %v404
        %462 = vmatprep.subr.mxu0 0.0
        %463 = vmatpush1.msra.mxu0 %v405
        %464 = vmatprep.subr.mxu0 0.0
        %465 = vmatpush1.msra.mxu0 %v406
        %466 = vmatprep.subr.mxu0 0.0
        %467 = vmatpush1.msra.mxu0 %v407
        %468 = vmatprep.subr.mxu0 0.0
        %469 = vmatpush1.msra.mxu0 %v408
        %470 = vmatprep.subr.mxu0 0.0
        %471 = vmatpush1.msra.mxu0 %v409
        %472 = vmatprep.subr.mxu0 0.0
        %473 = vmatpush1.msra.mxu0 0.0
        %474 = vmatprep.subr.mxu0 0.0
        %475 = vmatpush1.msra.mxu0 0.0
        %476 = vmatprep.subr.mxu0 0.0
        %477 = vmatpush1.msra.mxu0 0.0
        %478 = vmatprep.subr.mxu0 0.0
        %479 = vmatpush1.msra.mxu0 0.0
        %480 = vmatprep.subr.mxu0 0.0
        %481 = vmatpush1.msra.mxu0 0.0
        %482 = vmatprep.subr.mxu0 0.0
        %483 = vmatpush1.msra.mxu0 0.0
        %484 = vmatprep.subr.mxu0 0.0
        %485 = vmatpush1.msra.mxu0 0.0
        %486 = vmatprep.subr.mxu0 0.0
        %487 = vmatpush1.msra.mxu0 0.0
        %488 = vmatprep.subr.mxu0 0.0
        %489 = vmatpush1.msra.mxu0 0.0
        %490 = vmatprep.subr.mxu0 0.0
        %491 = vmatpush1.msra.mxu0 0.0
        %492 = vmatprep.subr.mxu0 0.0
        %493 = vmatpush1.msra.mxu0 0.0
        %494 = vmatprep.subr.mxu0 0.0
        %495 = vmatpush1.msra.mxu0 0.0
        %496 = vmatprep.subr.mxu0 0.0
        %497 = vmatpush1.msra.mxu0 0.0
        %498 = vmatprep.subr.mxu0 0.0
        %499 = vmatpush1.msra.mxu0 0.0
        %500 = vmatprep.subr.mxu0 0.0
        %501 = vmatpush1.msra.mxu0 0.0
        %502 = vmatprep.subr.mxu0 0.0
        %503 = vmatpush1.msra.mxu0 0.0
        %504 = vmatprep.subr.mxu0 0.0
        %505 = vmatpush1.msra.mxu0 0.0
        %506 = vmatprep.subr.mxu0 0.0
        %507 = vmatpush1.msra.mxu0 0.0
        %508 = vmatprep.subr.mxu0 0.0
        %509 = vmatpush1.msra.mxu0 0.0
        %510 = vmatprep.subr.mxu0 0.0
        %511 = vmatpush1.msra.mxu0 0.0
        %512 = vmatprep.subr.mxu0 0.0
        %513 = vmatpush1.msra.mxu0 0.0
        %514 = vmatprep.subr.mxu0 0.0
        %515 = vmatpush1.msra.mxu0 0.0
        %516 = vmatprep.subr.mxu0 0.0
        %517 = vmatpush1.msra.mxu0 0.0
        %518 = vmatprep.subr.mxu0 0.0
        %519 = vmatpush1.msra.mxu0 0.0
        %520 = vmatprep.mubr.f32.mxu0 0.0
        %521 = vmatmul.mubr.f32.gmra.mrb[0].mxu0 %v421
        %v522 = vpop.f32.mrb[0].mxu0
        %v523 = vadd.f32 %v417, %v522
        %v524 = vpop.f32.mrb[0].mxu0
        %525 = vmatprep.mubr.f32.mxu0 0.0
        %526 = vmatmul.mubr.f32.gmra.mrb[0].mxu0 %v424
        %v527 = vpop.f32.mrb[0].mxu0
        %v528 = vadd.f32 %v417, %v527
        %v529 = vpop.f32.mrb[0].mxu0
        %530 = vmatprep.mubr.f32.mxu0 0.0
        %531 = vmatmul.mubr.f32.gmra.mrb[0].mxu0 %v427
        %v532 = vpop.f32.mrb[0].mxu0
        %v533 = vadd.f32 %v417, %v532
        %v534 = vpop.f32.mrb[0].mxu0
        %535 = vmatprep.mubr.f32.mxu0 0.0
        %536 = vmatmul.mubr.f32.gmra.mrb[0].mxu0 %v430
        %v537 = vpop.f32.mrb[0].mxu0
        %v538 = vadd.f32 %v417, %v537
        %v539 = vpop.f32.mrb[0].mxu0
        %540 = vmatprep.mubr.f32.mxu0 0.0
        %541 = vmatmul.mubr.f32.gmra.mrb[0].mxu0 %v433
        %v542 = vpop.f32.mrb[0].mxu0
        %v543 = vadd.f32 %v417, %v542
        %v544 = vpop.f32.mrb[0].mxu0
        %545 = vmatprep.mubr.f32.mxu0 0.0
        %546 = vmatmul.mubr.f32.gmra.mrb[0].mxu0 %v436
        %v547 = vpop.f32.mrb[0].mxu0
        %v548 = vadd.f32 %v417, %v547
        %v549 = vpop.f32.mrb[0].mxu0
        %550 = vmatprep.mubr.f32.mxu0 0.0
        %551 = vmatmul.mubr.f32.gmra.mrb[0].mxu0 %v439
        %v552 = vpop.f32.mrb[0].mxu0
        %v553 = vadd.f32 %v417, %v552
        %v554 = vpop.f32.mrb[0].mxu0
        %555 = vmatprep.mubr.f32.mxu0 0.0
        %556 = vmatmul.mubr.f32.gmra.mrb[0].mxu0 %v442
        %v557 = vpop.f32.mrb[0].mxu0
        %v558 = vadd.f32 %v417, %v557
        %v559 = vpop.f32.mrb[0].mxu0
        %560 = vmatprep.mubr.f32.mxu0 0.0
        %561 = vmatmul.mubr.f32.gmra.mrb[0].mxu0 %v445
        %v562 = vpop.f32.mrb[0].mxu0
        %v563 = vadd.f32 %v417, %v562
        %v564 = vpop.f32.mrb[0].mxu0
        %565 = vmatprep.mubr.f32.mxu0 0.0
        %566 = vmatmul.mubr.f32.gmra.mrb[0].mxu0 %v448
        %v567 = vpop.f32.mrb[0].mxu0
        %v568 = vadd.f32 %v417, %v567
        %v569 = vpop.f32.mrb[0].mxu0
        %570 = vmatprep.mubr.f32.mxu0 0.0
        %571 = vmatmul.mubr.f32.gmra.mrb[0].mxu0 %v451
        %v572 = vpop.f32.mrb[0].mxu0
        %v573 = vadd.f32 %v417, %v572
        %v574 = vpop.f32.mrb[0].mxu0
        %575 = vmatprep.mubr.f32.mxu0 0.0
        %576 = vmatmul.mubr.f32.gmra.mrb[0].mxu0 %v454
        %v577 = vpop.f32.mrb[0].mxu0
        %v578 = vadd.f32 %v417, %v577
        %v579 = vpop.f32.mrb[0].mxu0
        %580 = vdwg.mxu0
        %581 = vst [vmem:[#allocation2] sm:$0xff] %v523
        %582 = vst [vmem:[#allocation2 + $0x8] sm:$0xff] %v528
        %583 = vst [vmem:[#allocation2 + $0x10] sm:$0xff] %v533
        %584 = vst [vmem:[#allocation2 + $0x18] sm:$0xff] %v538
        %585 = vst [vmem:[#allocation2 + $0x20] sm:$0xff] %v543
        %586 = vst [vmem:[#allocation2 + $0x28] sm:$0xff] %v548
        %587 = vst [vmem:[#allocation2 + $0x30] sm:$0xff] %v553
        %588 = vst [vmem:[#allocation2 + $0x38] sm:$0xff] %v558
        %589 = vst [vmem:[#allocation2 + $0x40] sm:$0xff] %v563
        %590 = vst [vmem:[#allocation2 + $0x48] sm:$0xff] %v568
        %591 = vst [vmem:[#allocation2 + $0x50] sm:$0xff] %v573
        %592 = vst [vmem:[#allocation2 + $0x58] sm:$0xff] %v578
        %v593 = vld [vmem:[%s0] sm:$0xff]
        %v594 = vld [vmem:[%s0 + $0x8] sm:$0xff]
        %v595 = vld [vmem:[%s0 + $0x10] sm:$0xff]
        %v596 = vld [vmem:[%s0 + $0x18] sm:$0xff]
        %v597 = vld [vmem:[%s0 + $0x20] sm:$0xff]
        %v598 = vld [vmem:[%s0 + $0x28] sm:$0xff]
        %v599 = vld [vmem:[%s0 + $0x30] sm:$0xff]
        %v600 = vld [vmem:[%s0 + $0x38] sm:$0xff]
        %v601 = vld [vmem:[%s0 + $0x40] sm:$0xff]
        %v602 = vld [vmem:[%s0 + $0x48] sm:$0xff]
        %v603 = vld [vmem:[%s0 + $0x50] sm:$0xff]
        %v604 = vld [vmem:[%s0 + $0x58] sm:$0xff]
        %s605 = scalar_lea.vmem %s313, 64 [#allocation5]
        %v606 = vld [vmem:[%s605] sm:$0xff]
        %v607 = vld [vmem:[%s605 + $0x8] sm:$0xff]
        %v608 = vld [vmem:[%s605 + $0x10] sm:$0xff]
        %v609 = vld [vmem:[%s605 + $0x18] sm:$0xff]
        %v610 = vld [vmem:[%s605 + $0x20] sm:$0xff]
        %v611 = vld [vmem:[%s605 + $0x28] sm:$0xff]
        %v612 = vld [vmem:[%s605 + $0x30] sm:$0xff]
        %v613 = vld [vmem:[%s605 + $0x38] sm:$0xff]
        %s614 = scalar_lea.vmem %s331, 1 [#allocation9]
        %v615 = vld [vmem:[%s614] sm:$0x1]
        %s616 = scalar_lea.vmem %s340, 1 [#allocation10]
        %v617 = vld [vmem:[%s616] sm:$0x1]
        %v618 = vadd.f32 %v615, %v617
        %v620 = vlaneseq
        %v621 = vshrl.u32 %v620, 7
        %v622 = vsub.s32 0, %v621
        %v623 = vrot.slane %v618, %v622
        %v626 = vsel %vm419, %v593, 0
        %v629 = vsel %vm419, %v594, 0
        %v632 = vsel %vm419, %v595, 0
        %v635 = vsel %vm419, %v596, 0
        %v638 = vsel %vm419, %v597, 0
        %v641 = vsel %vm419, %v598, 0
        %v644 = vsel %vm419, %v599, 0
        %v647 = vsel %vm419, %v600, 0
        %v650 = vsel %vm419, %v601, 0
        %v653 = vsel %vm419, %v602, 0
        %v656 = vsel %vm419, %v603, 0
        %v659 = vsel %vm419, %v604, 0
        %661 = vmatprep.subr.mxu0 0.0
        %662 = vmatpush1.msra.mxu0 %v606
        %663 = vmatprep.subr.mxu0 0.0
        %664 = vmatpush1.msra.mxu0 %v607
        %665 = vmatprep.subr.mxu0 0.0
        %666 = vmatpush1.msra.mxu0 %v608
        %667 = vmatprep.subr.mxu0 0.0
        %668 = vmatpush1.msra.mxu0 %v609
        %669 = vmatprep.subr.mxu0 0.0
        %670 = vmatpush1.msra.mxu0 %v610
        %671 = vmatprep.subr.mxu0 0.0
        %672 = vmatpush1.msra.mxu0 %v611
        %673 = vmatprep.subr.mxu0 0.0
        %674 = vmatpush1.msra.mxu0 %v612
        %675 = vmatprep.subr.mxu0 0.0
        %676 = vmatpush1.msra.mxu0 %v613
        %677 = vmatprep.subr.mxu0 0.0
        %678 = vmatpush1.msra.mxu0 0.0
        %679 = vmatprep.subr.mxu0 0.0
        %680 = vmatpush1.msra.mxu0 0.0
        %681 = vmatprep.subr.mxu0 0.0
        %682 = vmatpush1.msra.mxu0 0.0
        %683 = vmatprep.subr.mxu0 0.0
        %684 = vmatpush1.msra.mxu0 0.0
        %685 = vmatprep.subr.mxu0 0.0
        %686 = vmatpush1.msra.mxu0 0.0
        %687 = vmatprep.subr.mxu0 0.0
        %688 = vmatpush1.msra.mxu0 0.0
        %689 = vmatprep.subr.mxu0 0.0
        %690 = vmatpush1.msra.mxu0 0.0
        %691 = vmatprep.subr.mxu0 0.0
        %692 = vmatpush1.msra.mxu0 0.0
        %693 = vmatprep.subr.mxu0 0.0
        %694 = vmatpush1.msra.mxu0 0.0
        %695 = vmatprep.subr.mxu0 0.0
        %696 = vmatpush1.msra.mxu0 0.0
        %697 = vmatprep.subr.mxu0 0.0
        %698 = vmatpush1.msra.mxu0 0.0
        %699 = vmatprep.subr.mxu0 0.0
        %700 = vmatpush1.msra.mxu0 0.0
        %701 = vmatprep.subr.mxu0 0.0
        %702 = vmatpush1.msra.mxu0 0.0
        %703 = vmatprep.subr.mxu0 0.0
        %704 = vmatpush1.msra.mxu0 0.0
        %705 = vmatprep.subr.mxu0 0.0
        %706 = vmatpush1.msra.mxu0 0.0
        %707 = vmatprep.subr.mxu0 0.0
        %708 = vmatpush1.msra.mxu0 0.0
        %709 = vmatprep.subr.mxu0 0.0
        %710 = vmatpush1.msra.mxu0 0.0
        %711 = vmatprep.subr.mxu0 0.0
        %712 = vmatpush1.msra.mxu0 0.0
        %713 = vmatprep.subr.mxu0 0.0
        %714 = vmatpush1.msra.mxu0 0.0
        %715 = vmatprep.subr.mxu0 0.0
        %716 = vmatpush1.msra.mxu0 0.0
        %717 = vmatprep.subr.mxu0 0.0
        %718 = vmatpush1.msra.mxu0 0.0
        %719 = vmatprep.subr.mxu0 0.0
        %720 = vmatpush1.msra.mxu0 0.0
        %721 = vmatprep.subr.mxu0 0.0
        %722 = vmatpush1.msra.mxu0 0.0
        %723 = vmatprep.subr.mxu0 0.0
        %724 = vmatpush1.msra.mxu0 0.0
        %725 = vmatprep.mubr.f32.mxu0 0.0
        %726 = vmatmul.mubr.f32.gmra.mrb[0].mxu0 %v626
        %v727 = vpop.f32.mrb[0].mxu0
        %v728 = vadd.f32 %v623, %v727
        %v729 = vpop.f32.mrb[0].mxu0
        %730 = vmatprep.mubr.f32.mxu0 0.0
        %731 = vmatmul.mubr.f32.gmra.mrb[0].mxu0 %v629
        %v732 = vpop.f32.mrb[0].mxu0
        %v733 = vadd.f32 %v623, %v732
        %v734 = vpop.f32.mrb[0].mxu0
        %735 = vmatprep.mubr.f32.mxu0 0.0
        %736 = vmatmul.mubr.f32.gmra.mrb[0].mxu0 %v632
        %v737 = vpop.f32.mrb[0].mxu0
        %v738 = vadd.f32 %v623, %v737
        %v739 = vpop.f32.mrb[0].mxu0
        %740 = vmatprep.mubr.f32.mxu0 0.0
        %741 = vmatmul.mubr.f32.gmra.mrb[0].mxu0 %v635
        %v742 = vpop.f32.mrb[0].mxu0
        %v743 = vadd.f32 %v623, %v742
        %v744 = vpop.f32.mrb[0].mxu0
        %745 = vmatprep.mubr.f32.mxu0 0.0
        %746 = vmatmul.mubr.f32.gmra.mrb[0].mxu0 %v638
        %v747 = vpop.f32.mrb[0].mxu0
        %v748 = vadd.f32 %v623, %v747
        %v749 = vpop.f32.mrb[0].mxu0
        %750 = vmatprep.mubr.f32.mxu0 0.0
        %751 = vmatmul.mubr.f32.gmra.mrb[0].mxu0 %v641
        %v752 = vpop.f32.mrb[0].mxu0
        %v753 = vadd.f32 %v623, %v752
        %v754 = vpop.f32.mrb[0].mxu0
        %755 = vmatprep.mubr.f32.mxu0 0.0
        %756 = vmatmul.mubr.f32.gmra.mrb[0].mxu0 %v644
        %v757 = vpop.f32.mrb[0].mxu0
        %v758 = vadd.f32 %v623, %v757
        %v759 = vpop.f32.mrb[0].mxu0
        %760 = vmatprep.mubr.f32.mxu0 0.0
        %761 = vmatmul.mubr.f32.gmra.mrb[0].mxu0 %v647
        %v762 = vpop.f32.mrb[0].mxu0
        %v763 = vadd.f32 %v623, %v762
        %v764 = vpop.f32.mrb[0].mxu0
        %765 = vmatprep.mubr.f32.mxu0 0.0
        %766 = vmatmul.mubr.f32.gmra.mrb[0].mxu0 %v650
        %v767 = vpop.f32.mrb[0].mxu0
        %v768 = vadd.f32 %v623, %v767
        %v769 = vpop.f32.mrb[0].mxu0
        %770 = vmatprep.mubr.f32.mxu0 0.0
        %771 = vmatmul.mubr.f32.gmra.mrb[0].mxu0 %v653
        %v772 = vpop.f32.mrb[0].mxu0
        %v773 = vadd.f32 %v623, %v772
        %v774 = vpop.f32.mrb[0].mxu0
        %775 = vmatprep.mubr.f32.mxu0 0.0
        %776 = vmatmul.mubr.f32.gmra.mrb[0].mxu0 %v656
        %v777 = vpop.f32.mrb[0].mxu0
        %v778 = vadd.f32 %v623, %v777
        %v779 = vpop.f32.mrb[0].mxu0
        %780 = vmatprep.mubr.f32.mxu0 0.0
        %781 = vmatmul.mubr.f32.gmra.mrb[0].mxu0 %v659
        %v782 = vpop.f32.mrb[0].mxu0
        %v783 = vadd.f32 %v623, %v782
        %v784 = vpop.f32.mrb[0].mxu0
        %785 = vdwg.mxu0
        %786 = vst [vmem:[#allocation3] sm:$0xff] %v728
        %787 = vst [vmem:[#allocation3 + $0x8] sm:$0xff] %v733
        %788 = vst [vmem:[#allocation3 + $0x10] sm:$0xff] %v738
        %789 = vst [vmem:[#allocation3 + $0x18] sm:$0xff] %v743
        %790 = vst [vmem:[#allocation3 + $0x20] sm:$0xff] %v748
        %791 = vst [vmem:[#allocation3 + $0x28] sm:$0xff] %v753
        %792 = vst [vmem:[#allocation3 + $0x30] sm:$0xff] %v758
        %793 = vst [vmem:[#allocation3 + $0x38] sm:$0xff] %v763
        %794 = vst [vmem:[#allocation3 + $0x40] sm:$0xff] %v768
        %795 = vst [vmem:[#allocation3 + $0x48] sm:$0xff] %v773
        %796 = vst [vmem:[#allocation3 + $0x50] sm:$0xff] %v778
        %797 = vst [vmem:[#allocation3 + $0x58] sm:$0xff] %v783
        %v798 = vld [vmem:[%s0] sm:$0xff]
        %v799 = vld [vmem:[%s0 + $0x8] sm:$0xff]
        %v800 = vld [vmem:[%s0 + $0x10] sm:$0xff]
        %v801 = vld [vmem:[%s0 + $0x18] sm:$0xff]
        %v802 = vld [vmem:[%s0 + $0x20] sm:$0xff]
        %v803 = vld [vmem:[%s0 + $0x28] sm:$0xff]
        %v804 = vld [vmem:[%s0 + $0x30] sm:$0xff]
        %v805 = vld [vmem:[%s0 + $0x38] sm:$0xff]
        %v806 = vld [vmem:[%s0 + $0x40] sm:$0xff]
        %v807 = vld [vmem:[%s0 + $0x48] sm:$0xff]
        %v808 = vld [vmem:[%s0 + $0x50] sm:$0xff]
        %v809 = vld [vmem:[%s0 + $0x58] sm:$0xff]
        %s810 = scalar_lea.vmem %s313, 128 [#allocation5]
        %v811 = vld [vmem:[%s810] sm:$0xff]
        %v812 = vld [vmem:[%s810 + $0x8] sm:$0xff]
        %v813 = vld [vmem:[%s810 + $0x10] sm:$0xff]
        %v814 = vld [vmem:[%s810 + $0x18] sm:$0xff]
        %v815 = vld [vmem:[%s810 + $0x20] sm:$0xff]
        %v816 = vld [vmem:[%s810 + $0x28] sm:$0xff]
        %v817 = vld [vmem:[%s810 + $0x30] sm:$0xff]
        %v818 = vld [vmem:[%s810 + $0x38] sm:$0xff]
        %s819 = scalar_lea.vmem %s331, 2 [#allocation9]
        %v820 = vld [vmem:[%s819] sm:$0x1]
        %v822 = vlaneseq
        %v823 = vshrl.u32 %v822, 7
        %v824 = vsub.s32 0, %v823
        %v825 = vrot.slane %v820, %v824
        %v828 = vsel %vm419, %v798, 0
        %v831 = vsel %vm419, %v799, 0
        %v834 = vsel %vm419, %v800, 0
        %v837 = vsel %vm419, %v801, 0
        %v840 = vsel %vm419, %v802, 0
        %v843 = vsel %vm419, %v803, 0
        %v846 = vsel %vm419, %v804, 0
        %v849 = vsel %vm419, %v805, 0
        %v852 = vsel %vm419, %v806, 0
        %v855 = vsel %vm419, %v807, 0
        %v858 = vsel %vm419, %v808, 0
        %v861 = vsel %vm419, %v809, 0
        %863 = vmatprep.subr.mxu0 0.0
        %864 = vmatpush1.msra.mxu0 %v811
        %865 = vmatprep.subr.mxu0 0.0
        %866 = vmatpush1.msra.mxu0 %v812
        %867 = vmatprep.subr.mxu0 0.0
        %868 = vmatpush1.msra.mxu0 %v813
        %869 = vmatprep.subr.mxu0 0.0
        %870 = vmatpush1.msra.mxu0 %v814
        %871 = vmatprep.subr.mxu0 0.0
        %872 = vmatpush1.msra.mxu0 %v815
        %873 = vmatprep.subr.mxu0 0.0
        %874 = vmatpush1.msra.mxu0 %v816
        %875 = vmatprep.subr.mxu0 0.0
        %876 = vmatpush1.msra.mxu0 %v817
        %877 = vmatprep.subr.mxu0 0.0
        %878 = vmatpush1.msra.mxu0 %v818
        %879 = vmatprep.subr.mxu0 0.0
        %880 = vmatpush1.msra.mxu0 0.0
        %881 = vmatprep.subr.mxu0 0.0
        %882 = vmatpush1.msra.mxu0 0.0
        %883 = vmatprep.subr.mxu0 0.0
        %884 = vmatpush1.msra.mxu0 0.0
        %885 = vmatprep.subr.mxu0 0.0
        %886 = vmatpush1.msra.mxu0 0.0
        %887 = vmatprep.subr.mxu0 0.0
        %888 = vmatpush1.msra.mxu0 0.0
        %889 = vmatprep.subr.mxu0 0.0
        %890 = vmatpush1.msra.mxu0 0.0
        %891 = vmatprep.subr.mxu0 0.0
        %892 = vmatpush1.msra.mxu0 0.0
        %893 = vmatprep.subr.mxu0 0.0
        %894 = vmatpush1.msra.mxu0 0.0
        %895 = vmatprep.subr.mxu0 0.0
        %896 = vmatpush1.msra.mxu0 0.0
        %897 = vmatprep.subr.mxu0 0.0
        %898 = vmatpush1.msra.mxu0 0.0
        %899 = vmatprep.subr.mxu0 0.0
        %900 = vmatpush1.msra.mxu0 0.0
        %901 = vmatprep.subr.mxu0 0.0
        %902 = vmatpush1.msra.mxu0 0.0
        %903 = vmatprep.subr.mxu0 0.0
        %904 = vmatpush1.msra.mxu0 0.0
        %905 = vmatprep.subr.mxu0 0.0
        %906 = vmatpush1.msra.mxu0 0.0
        %907 = vmatprep.subr.mxu0 0.0
        %908 = vmatpush1.msra.mxu0 0.0
        %909 = vmatprep.subr.mxu0 0.0
        %910 = vmatpush1.msra.mxu0 0.0
        %911 = vmatprep.subr.mxu0 0.0
        %912 = vmatpush1.msra.mxu0 0.0
        %913 = vmatprep.subr.mxu0 0.0
        %914 = vmatpush1.msra.mxu0 0.0
        %915 = vmatprep.subr.mxu0 0.0
        %916 = vmatpush1.msra.mxu0 0.0
        %917 = vmatprep.subr.mxu0 0.0
        %918 = vmatpush1.msra.mxu0 0.0
        %919 = vmatprep.subr.mxu0 0.0
        %920 = vmatpush1.msra.mxu0 0.0
        %921 = vmatprep.subr.mxu0 0.0
        %922 = vmatpush1.msra.mxu0 0.0
        %923 = vmatprep.subr.mxu0 0.0
        %924 = vmatpush1.msra.mxu0 0.0
        %925 = vmatprep.subr.mxu0 0.0
        %926 = vmatpush1.msra.mxu0 0.0
        %927 = vmatprep.mubr.f32.mxu0 0.0
        %928 = vmatmul.mubr.f32.gmra.mrb[0].mxu0 %v828
        %v929 = vpop.f32.mrb[0].mxu0
        %v930 = vadd.f32 %v825, %v929
        %v931 = vpop.f32.mrb[0].mxu0
        %932 = vmatprep.mubr.f32.mxu0 0.0
        %933 = vmatmul.mubr.f32.gmra.mrb[0].mxu0 %v831
        %v934 = vpop.f32.mrb[0].mxu0
        %v935 = vadd.f32 %v825, %v934
        %v936 = vpop.f32.mrb[0].mxu0
        %937 = vmatprep.mubr.f32.mxu0 0.0
        %938 = vmatmul.mubr.f32.gmra.mrb[0].mxu0 %v834
        %v939 = vpop.f32.mrb[0].mxu0
        %v940 = vadd.f32 %v825, %v939
        %v941 = vpop.f32.mrb[0].mxu0
        %942 = vmatprep.mubr.f32.mxu0 0.0
        %943 = vmatmul.mubr.f32.gmra.mrb[0].mxu0 %v837
        %v944 = vpop.f32.mrb[0].mxu0
        %v945 = vadd.f32 %v825, %v944
        %v946 = vpop.f32.mrb[0].mxu0
        %947 = vmatprep.mubr.f32.mxu0 0.0
        %948 = vmatmul.mubr.f32.gmra.mrb[0].mxu0 %v840
        %v949 = vpop.f32.mrb[0].mxu0
        %v950 = vadd.f32 %v825, %v949
        %v951 = vpop.f32.mrb[0].mxu0
        %952 = vmatprep.mubr.f32.mxu0 0.0
        %953 = vmatmul.mubr.f32.gmra.mrb[0].mxu0 %v843
        %v954 = vpop.f32.mrb[0].mxu0
        %v955 = vadd.f32 %v825, %v954
        %v956 = vpop.f32.mrb[0].mxu0
        %957 = vmatprep.mubr.f32.mxu0 0.0
        %958 = vmatmul.mubr.f32.gmra.mrb[0].mxu0 %v846
        %v959 = vpop.f32.mrb[0].mxu0
        %v960 = vadd.f32 %v825, %v959
        %v961 = vpop.f32.mrb[0].mxu0
        %962 = vmatprep.mubr.f32.mxu0 0.0
        %963 = vmatmul.mubr.f32.gmra.mrb[0].mxu0 %v849
        %v964 = vpop.f32.mrb[0].mxu0
        %v965 = vadd.f32 %v825, %v964
        %v966 = vpop.f32.mrb[0].mxu0
        %967 = vmatprep.mubr.f32.mxu0 0.0
        %968 = vmatmul.mubr.f32.gmra.mrb[0].mxu0 %v852
        %v969 = vpop.f32.mrb[0].mxu0
        %v970 = vadd.f32 %v825, %v969
        %v971 = vpop.f32.mrb[0].mxu0
        %972 = vmatprep.mubr.f32.mxu0 0.0
        %973 = vmatmul.mubr.f32.gmra.mrb[0].mxu0 %v855
        %v974 = vpop.f32.mrb[0].mxu0
        %v975 = vadd.f32 %v825, %v974
        %v976 = vpop.f32.mrb[0].mxu0
        %977 = vmatprep.mubr.f32.mxu0 0.0
        %978 = vmatmul.mubr.f32.gmra.mrb[0].mxu0 %v858
        %v979 = vpop.f32.mrb[0].mxu0
        %v980 = vadd.f32 %v825, %v979
        %v981 = vpop.f32.mrb[0].mxu0
        %982 = vmatprep.mubr.f32.mxu0 0.0
        %983 = vmatmul.mubr.f32.gmra.mrb[0].mxu0 %v861
        %v984 = vpop.f32.mrb[0].mxu0
        %v985 = vadd.f32 %v825, %v984
        %v986 = vpop.f32.mrb[0].mxu0
        %987 = vdwg.mxu0
        %988 = vst [vmem:[#allocation4] sm:$0xff] %v930
        %989 = vst [vmem:[#allocation4 + $0x8] sm:$0xff] %v935
        %990 = vst [vmem:[#allocation4 + $0x10] sm:$0xff] %v940
        %991 = vst [vmem:[#allocation4 + $0x18] sm:$0xff] %v945
        %992 = vst [vmem:[#allocation4 + $0x20] sm:$0xff] %v950
        %993 = vst [vmem:[#allocation4 + $0x28] sm:$0xff] %v955
        %994 = vst [vmem:[#allocation4 + $0x30] sm:$0xff] %v960
        %995 = vst [vmem:[#allocation4 + $0x38] sm:$0xff] %v965
        %996 = vst [vmem:[#allocation4 + $0x40] sm:$0xff] %v970
        %997 = vst [vmem:[#allocation4 + $0x48] sm:$0xff] %v975
        %998 = vst [vmem:[#allocation4 + $0x50] sm:$0xff] %v980
        %999 = vst [vmem:[#allocation4 + $0x58] sm:$0xff] %v985
        %v1000 = vld [vmem:[%s322] sm:$0xff]
        %v1001 = vld [vmem:[%s322 + $0x8] sm:$0xff]
        %v1002 = vld [vmem:[%s322 + $0x10] sm:$0xff]
        %v1003 = vld [vmem:[%s322 + $0x18] sm:$0xff]
        %v1004 = vld [vmem:[%s322 + $0x20] sm:$0xff]
        %v1005 = vld [vmem:[%s322 + $0x28] sm:$0xff]
        %v1006 = vld [vmem:[%s322 + $0x30] sm:$0xff]
        %v1007 = vld [vmem:[%s322 + $0x38] sm:$0xff]
        %v1008 = vld [vmem:[%s322 + $0x40] sm:$0xff]
        %v1009 = vld [vmem:[%s322 + $0x48] sm:$0xff]
        %v1010 = vld [vmem:[%s322 + $0x50] sm:$0xff]
        %v1011 = vld [vmem:[%s322 + $0x58] sm:$0xff]
        %v1012 = vld [vmem:[%s322 + $0x60] sm:$0xff]
        %v1013 = vld [vmem:[%s322 + $0x68] sm:$0xff]
        %v1014 = vld [vmem:[%s322 + $0x70] sm:$0xff]
        %v1015 = vld [vmem:[%s322 + $0x78] sm:$0xff]
        %s1016 = scalar_lea.vmem %s322, 128 [#allocation7]
        %v1017 = vld [vmem:[%s1016] sm:$0xff]
        %v1018 = vld [vmem:[%s1016 + $0x8] sm:$0xff]
        %v1019 = vld [vmem:[%s1016 + $0x10] sm:$0xff]
        %v1020 = vld [vmem:[%s1016 + $0x18] sm:$0xff]
        %v1021 = vld [vmem:[%s1016 + $0x20] sm:$0xff]
        %v1022 = vld [vmem:[%s1016 + $0x28] sm:$0xff]
        %v1023 = vld [vmem:[%s1016 + $0x30] sm:$0xff]
        %v1024 = vld [vmem:[%s1016 + $0x38] sm:$0xff]
        %v1025 = vld [vmem:[%s1016 + $0x40] sm:$0xff]
        %v1026 = vld [vmem:[%s1016 + $0x48] sm:$0xff]
        %v1027 = vld [vmem:[%s1016 + $0x50] sm:$0xff]
        %v1028 = vld [vmem:[%s1016 + $0x58] sm:$0xff]
        %v1029 = vld [vmem:[%s1016 + $0x60] sm:$0xff]
        %v1030 = vld [vmem:[%s1016 + $0x68] sm:$0xff]
        %v1031 = vld [vmem:[%s1016 + $0x70] sm:$0xff]
        %v1032 = vld [vmem:[%s1016 + $0x78] sm:$0xff]
        %s1033 = scalar_lea.vmem %s322, 256 [#allocation7]
        %v1034 = vld [vmem:[%s1033] sm:$0xff]
        %v1035 = vld [vmem:[%s1033 + $0x8] sm:$0xff]
        %v1036 = vld [vmem:[%s1033 + $0x10] sm:$0xff]
        %v1037 = vld [vmem:[%s1033 + $0x18] sm:$0xff]
        %v1038 = vld [vmem:[%s1033 + $0x20] sm:$0xff]
        %v1039 = vld [vmem:[%s1033 + $0x28] sm:$0xff]
        %v1040 = vld [vmem:[%s1033 + $0x30] sm:$0xff]
        %v1041 = vld [vmem:[%s1033 + $0x38] sm:$0xff]
        %v1042 = vld [vmem:[%s1033 + $0x40] sm:$0xff]
        %v1043 = vld [vmem:[%s1033 + $0x48] sm:$0xff]
        %v1044 = vld [vmem:[%s1033 + $0x50] sm:$0xff]
        %v1045 = vld [vmem:[%s1033 + $0x58] sm:$0xff]
        %v1046 = vld [vmem:[%s1033 + $0x60] sm:$0xff]
        %v1047 = vld [vmem:[%s1033 + $0x68] sm:$0xff]
        %v1048 = vld [vmem:[%s1033 + $0x70] sm:$0xff]
        %v1049 = vld [vmem:[%s1033 + $0x78] sm:$0xff]
        %v1050 = vld [vmem:[%s5] sm:$0xff]
        %1051 = vset.pattern.permute.xlu0 0
        %1052 = vperm.xlu0 %1051, %v1050
        %v1053 = vpop.permute.xlu0 %1052
        %s1054 = scalar_lea.vmem %s340, 2 [#allocation10]
        %v1055 = vld [vmem:[%s1054] sm:$0x1]
        %v1057 = vlaneseq
        %v1058 = vshrl.u32 %v1057, 7
        %v1059 = vsub.s32 0, %v1058
        %v1060 = vrot.slane %v1055, %v1059
        %s1062 = scalar_select %p389, 11, 0
        %s1063 = smul.u32 %s1062, 8
        %s1064 = scalar_lea.vmem [#allocation2], %s1063
        %v1065 = vld [vmem:[%s1064] sm:$0xff]
        %s1066 = scalar_lea.vmem [#allocation3], %s1063
        %v1067 = vld [vmem:[%s1066] sm:$0xff]
        %s1068 = scalar_lea.vmem [#allocation4], %s1063
        %v1069 = vld [vmem:[%s1068] sm:$0xff]
        %1070 = vmatprep.subr.mxu0 0.0
        %1071 = vmatpush1.msra.mxu0 %v1000
        %1072 = vmatprep.subr.mxu0 0.0
        %1073 = vmatpush1.msra.mxu0 %v1001
        %1074 = vmatprep.subr.mxu0 0.0
        %1075 = vmatpush1.msra.mxu0 %v1002
        %1076 = vmatprep.subr.mxu0 0.0
        %1077 = vmatpush1.msra.mxu0 %v1003
        %1078 = vmatprep.subr.mxu0 0.0
        %1079 = vmatpush1.msra.mxu0 %v1004
        %1080 = vmatprep.subr.mxu0 0.0
        %1081 = vmatpush1.msra.mxu0 %v1005
        %1082 = vmatprep.subr.mxu0 0.0
        %1083 = vmatpush1.msra.mxu0 %v1006
        %1084 = vmatprep.subr.mxu0 0.0
        %1085 = vmatpush1.msra.mxu0 %v1007
        %1086 = vmatprep.subr.mxu0 0.0
        %1087 = vmatpush1.msra.mxu0 %v1008
        %1088 = vmatprep.subr.mxu0 0.0
        %1089 = vmatpush1.msra.mxu0 %v1009
        %1090 = vmatprep.subr.mxu0 0.0
        %1091 = vmatpush1.msra.mxu0 %v1010
        %1092 = vmatprep.subr.mxu0 0.0
        %1093 = vmatpush1.msra.mxu0 %v1011
        %1094 = vmatprep.subr.mxu0 0.0
        %1095 = vmatpush1.msra.mxu0 %v1012
        %1096 = vmatprep.subr.mxu0 0.0
        %1097 = vmatpush1.msra.mxu0 %v1013
        %1098 = vmatprep.subr.mxu0 0.0
        %1099 = vmatpush1.msra.mxu0 %v1014
        %1100 = vmatprep.subr.mxu0 0.0
        %1101 = vmatpush1.msra.mxu0 %v1015
        %1102 = vmatprep.subr.mxu0 0.0
        %1103 = vmatpush1.msra.mxu0 0.0
        %1104 = vmatprep.subr.mxu0 0.0
        %1105 = vmatpush1.msra.mxu0 0.0
        %1106 = vmatprep.subr.mxu0 0.0
        %1107 = vmatpush1.msra.mxu0 0.0
        %1108 = vmatprep.subr.mxu0 0.0
        %1109 = vmatpush1.msra.mxu0 0.0
        %1110 = vmatprep.subr.mxu0 0.0
        %1111 = vmatpush1.msra.mxu0 0.0
        %1112 = vmatprep.subr.mxu0 0.0
        %1113 = vmatpush1.msra.mxu0 0.0
        %1114 = vmatprep.subr.mxu0 0.0
        %1115 = vmatpush1.msra.mxu0 0.0
        %1116 = vmatprep.subr.mxu0 0.0
        %1117 = vmatpush1.msra.mxu0 0.0
        %1118 = vmatprep.subr.mxu0 0.0
        %1119 = vmatpush1.msra.mxu0 0.0
        %1120 = vmatprep.subr.mxu0 0.0
        %1121 = vmatpush1.msra.mxu0 0.0
        %1122 = vmatprep.subr.mxu0 0.0
        %1123 = vmatpush1.msra.mxu0 0.0
        %1124 = vmatprep.subr.mxu0 0.0
        %1125 = vmatpush1.msra.mxu0 0.0
        %1126 = vmatprep.subr.mxu0 0.0
        %1127 = vmatpush1.msra.mxu0 0.0
        %1128 = vmatprep.subr.mxu0 0.0
        %1129 = vmatpush1.msra.mxu0 0.0
        %1130 = vmatprep.subr.mxu0 0.0
        %1131 = vmatpush1.msra.mxu0 0.0
        %1132 = vmatprep.subr.mxu0 0.0
        %1133 = vmatpush1.msra.mxu0 0.0
        %1134 = vmatprep.mubr.f32.mxu0 0.0
        %1135 = vmatmul.mubr.f32.gmra.mrb[0].mxu0 0.0
        %v1136 = vpop.f32.mrb[0].mxu0
        %v1137 = vadd.f32 0.0, %v1136
        %v1138 = vpop.f32.mrb[0].mxu0
        %1139 = vdwg.mxu0
        %v1140 = vadd.f32 %v1065, %v1137
        %v1141 = vxor.u32 %v1140, 2147483648
        %v1142 = vmul.f32 %v1141, 1.442695
        %v1143 = vpow.pop %v1142
        %v1144 = vadd.f32 %v1143, 1.0
        %v1145 = vrcp.pop %v1144
        %v1146 = vmul.f32 1.0, %v1145
        %1147 = vmatprep.subr.mxu0 0.0
        %1148 = vmatpush1.msra.mxu0 %v1017
        %1149 = vmatprep.subr.mxu0 0.0
        %1150 = vmatpush1.msra.mxu0 %v1018
        %1151 = vmatprep.subr.mxu0 0.0
        %1152 = vmatpush1.msra.mxu0 %v1019
        %1153 = vmatprep.subr.mxu0 0.0
        %1154 = vmatpush1.msra.mxu0 %v1020
        %1155 = vmatprep.subr.mxu0 0.0
        %1156 = vmatpush1.msra.mxu0 %v1021
        %1157 = vmatprep.subr.mxu0 0.0
        %1158 = vmatpush1.msra.mxu0 %v1022
        %1159 = vmatprep.subr.mxu0 0.0
        %1160 = vmatpush1.msra.mxu0 %v1023
        %1161 = vmatprep.subr.mxu0 0.0
        %1162 = vmatpush1.msra.mxu0 %v1024
        %1163 = vmatprep.subr.mxu0 0.0
        %1164 = vmatpush1.msra.mxu0 %v1025
        %1165 = vmatprep.subr.mxu0 0.0
        %1166 = vmatpush1.msra.mxu0 %v1026
        %1167 = vmatprep.subr.mxu0 0.0
        %1168 = vmatpush1.msra.mxu0 %v1027
        %1169 = vmatprep.subr.mxu0 0.0
        %1170 = vmatpush1.msra.mxu0 %v1028
        %1171 = vmatprep.subr.mxu0 0.0
        %1172 = vmatpush1.msra.mxu0 %v1029
        %1173 = vmatprep.subr.mxu0 0.0
        %1174 = vmatpush1.msra.mxu0 %v1030
        %1175 = vmatprep.subr.mxu0 0.0
        %1176 = vmatpush1.msra.mxu0 %v1031
        %1177 = vmatprep.subr.mxu0 0.0
        %1178 = vmatpush1.msra.mxu0 %v1032
        %1179 = vmatprep.subr.mxu0 0.0
        %1180 = vmatpush1.msra.mxu0 0.0
        %1181 = vmatprep.subr.mxu0 0.0
        %1182 = vmatpush1.msra.mxu0 0.0
        %1183 = vmatprep.subr.mxu0 0.0
        %1184 = vmatpush1.msra.mxu0 0.0
        %1185 = vmatprep.subr.mxu0 0.0
        %1186 = vmatpush1.msra.mxu0 0.0
        %1187 = vmatprep.subr.mxu0 0.0
        %1188 = vmatpush1.msra.mxu0 0.0
        %1189 = vmatprep.subr.mxu0 0.0
        %1190 = vmatpush1.msra.mxu0 0.0
        %1191 = vmatprep.subr.mxu0 0.0
        %1192 = vmatpush1.msra.mxu0 0.0
        %1193 = vmatprep.subr.mxu0 0.0
        %1194 = vmatpush1.msra.mxu0 0.0
        %1195 = vmatprep.subr.mxu0 0.0
        %1196 = vmatpush1.msra.mxu0 0.0
        %1197 = vmatprep.subr.mxu0 0.0
        %1198 = vmatpush1.msra.mxu0 0.0
        %1199 = vmatprep.subr.mxu0 0.0
        %1200 = vmatpush1.msra.mxu0 0.0
        %1201 = vmatprep.subr.mxu0 0.0
        %1202 = vmatpush1.msra.mxu0 0.0
        %1203 = vmatprep.subr.mxu0 0.0
        %1204 = vmatpush1.msra.mxu0 0.0
        %1205 = vmatprep.subr.mxu0 0.0
        %1206 = vmatpush1.msra.mxu0 0.0
        %1207 = vmatprep.subr.mxu0 0.0
        %1208 = vmatpush1.msra.mxu0 0.0
        %1209 = vmatprep.subr.mxu0 0.0
        %1210 = vmatpush1.msra.mxu0 0.0
        %1211 = vmatprep.mubr.f32.mxu0 0.0
        %1212 = vmatmul.mubr.f32.gmra.mrb[0].mxu0 0.0
        %v1213 = vpop.f32.mrb[0].mxu0
        %v1214 = vadd.f32 0.0, %v1213
        %v1215 = vpop.f32.mrb[0].mxu0
        %1216 = vdwg.mxu0
        %v1217 = vadd.f32 %v1067, %v1214
        %v1218 = vxor.u32 %v1217, 2147483648
        %v1219 = vmul.f32 %v1218, 1.442695
        %v1220 = vpow.pop %v1219
        %v1221 = vadd.f32 %v1220, 1.0
        %v1222 = vrcp.pop %v1221
        %v1223 = vmul.f32 1.0, %v1222
        %1224 = vmatprep.subr.mxu0 0.0
        %1225 = vmatpush1.msra.mxu0 %v1034
        %1226 = vmatprep.subr.mxu0 0.0
        %1227 = vmatpush1.msra.mxu0 %v1035
        %1228 = vmatprep.subr.mxu0 0.0
        %1229 = vmatpush1.msra.mxu0 %v1036
        %1230 = vmatprep.subr.mxu0 0.0
        %1231 = vmatpush1.msra.mxu0 %v1037
        %1232 = vmatprep.subr.mxu0 0.0
        %1233 = vmatpush1.msra.mxu0 %v1038
        %1234 = vmatprep.subr.mxu0 0.0
        %1235 = vmatpush1.msra.mxu0 %v1039
        %1236 = vmatprep.subr.mxu0 0.0
        %1237 = vmatpush1.msra.mxu0 %v1040
        %1238 = vmatprep.subr.mxu0 0.0
        %1239 = vmatpush1.msra.mxu0 %v1041
        %1240 = vmatprep.subr.mxu0 0.0
        %1241 = vmatpush1.msra.mxu0 %v1042
        %1242 = vmatprep.subr.mxu0 0.0
        %1243 = vmatpush1.msra.mxu0 %v1043
        %1244 = vmatprep.subr.mxu0 0.0
        %1245 = vmatpush1.msra.mxu0 %v1044
        %1246 = vmatprep.subr.mxu0 0.0
        %1247 = vmatpush1.msra.mxu0 %v1045
        %1248 = vmatprep.subr.mxu0 0.0
        %1249 = vmatpush1.msra.mxu0 %v1046
        %1250 = vmatprep.subr.mxu0 0.0
        %1251 = vmatpush1.msra.mxu0 %v1047
        %1252 = vmatprep.subr.mxu0 0.0
        %1253 = vmatpush1.msra.mxu0 %v1048
        %1254 = vmatprep.subr.mxu0 0.0
        %1255 = vmatpush1.msra.mxu0 %v1049
        %1256 = vmatprep.subr.mxu0 0.0
        %1257 = vmatpush1.msra.mxu0 0.0
        %1258 = vmatprep.subr.mxu0 0.0
        %1259 = vmatpush1.msra.mxu0 0.0
        %1260 = vmatprep.subr.mxu0 0.0
        %1261 = vmatpush1.msra.mxu0 0.0
        %1262 = vmatprep.subr.mxu0 0.0
        %1263 = vmatpush1.msra.mxu0 0.0
        %1264 = vmatprep.subr.mxu0 0.0
        %1265 = vmatpush1.msra.mxu0 0.0
        %1266 = vmatprep.subr.mxu0 0.0
        %1267 = vmatpush1.msra.mxu0 0.0
        %1268 = vmatprep.subr.mxu0 0.0
        %1269 = vmatpush1.msra.mxu0 0.0
        %1270 = vmatprep.subr.mxu0 0.0
        %1271 = vmatpush1.msra.mxu0 0.0
        %1272 = vmatprep.subr.mxu0 0.0
        %1273 = vmatpush1.msra.mxu0 0.0
        %1274 = vmatprep.subr.mxu0 0.0
        %1275 = vmatpush1.msra.mxu0 0.0
        %1276 = vmatprep.subr.mxu0 0.0
        %1277 = vmatpush1.msra.mxu0 0.0
        %1278 = vmatprep.subr.mxu0 0.0
        %1279 = vmatpush1.msra.mxu0 0.0
        %1280 = vmatprep.subr.mxu0 0.0
        %1281 = vmatpush1.msra.mxu0 0.0
        %1282 = vmatprep.subr.mxu0 0.0
        %1283 = vmatpush1.msra.mxu0 0.0
        %1284 = vmatprep.subr.mxu0 0.0
        %1285 = vmatpush1.msra.mxu0 0.0
        %1286 = vmatprep.subr.mxu0 0.0
        %1287 = vmatpush1.msra.mxu0 0.0
        %1288 = vmatprep.mubr.f32.mxu0 0.0
        %1289 = vmatmul.mubr.f32.gmra.mrb[0].mxu0 0.0
        %v1290 = vpop.f32.mrb[0].mxu0
        %v1291 = vadd.f32 %v1060, %v1290
        %v1292 = vpop.f32.mrb[0].mxu0
        %1293 = vdwg.mxu0
        %v1294 = vmul.f32 %v1146, %v1291
        %v1295 = vadd.f32 %v1069, %v1294
        %v1296 = vtanh.pop %v1295
        %v1297 = vsub.f32 1.0, %v1223
        %v1298 = vmul.f32 %v1297, %v1296
        %v1299 = vmul.f32 %v1223, 0.0
        %v1300 = vadd.f32 %v1298, %v1299
        %v1301 = vstv %s1062
        %vm1302 = vcmp.lt.s32.totalorder %v1301, %v1053
        %v1303 = vsel %vm1302, %v1300, 0.0
        %s1304 = scalar_lea.vmem %s388, %s1063
        %1305 = vst [vmem:[%s1304] sm:$0xff] %v1303
        %s1306 = scalar_select %p389, 10, 1
        %s1307 = smul.u32 %s1306, 8
        %s1308 = scalar_lea.vmem [#allocation2], %s1307
        %v1309 = vld [vmem:[%s1308] sm:$0xff]
        %s1310 = scalar_lea.vmem [#allocation3], %s1307
        %v1311 = vld [vmem:[%s1310] sm:$0xff]
        %s1312 = scalar_lea.vmem [#allocation4], %s1307
        %v1313 = vld [vmem:[%s1312] sm:$0xff]
        %1314 = vmatprep.subr.mxu0 0.0
        %1315 = vmatpush1.msra.mxu0 %v1000
        %1316 = vmatprep.subr.mxu0 0.0
        %1317 = vmatpush1.msra.mxu0 %v1001
        %1318 = vmatprep.subr.mxu0 0.0
        %1319 = vmatpush1.msra.mxu0 %v1002
        %1320 = vmatprep.subr.mxu0 0.0
        %1321 = vmatpush1.msra.mxu0 %v1003
        %1322 = vmatprep.subr.mxu0 0.0
        %1323 = vmatpush1.msra.mxu0 %v1004
        %1324 = vmatprep.subr.mxu0 0.0
        %1325 = vmatpush1.msra.mxu0 %v1005
        %1326 = vmatprep.subr.mxu0 0.0
        %1327 = vmatpush1.msra.mxu0 %v1006
        %1328 = vmatprep.subr.mxu0 0.0
        %1329 = vmatpush1.msra.mxu0 %v1007
        %1330 = vmatprep.subr.mxu0 0.0
        %1331 = vmatpush1.msra.mxu0 %v1008
        %1332 = vmatprep.subr.mxu0 0.0
        %1333 = vmatpush1.msra.mxu0 %v1009
        %1334 = vmatprep.subr.mxu0 0.0
        %1335 = vmatpush1.msra.mxu0 %v1010
        %1336 = vmatprep.subr.mxu0 0.0
        %1337 = vmatpush1.msra.mxu0 %v1011
        %1338 = vmatprep.subr.mxu0 0.0
        %1339 = vmatpush1.msra.mxu0 %v1012
        %1340 = vmatprep.subr.mxu0 0.0
        %1341 = vmatpush1.msra.mxu0 %v1013
        %1342 = vmatprep.subr.mxu0 0.0
        %1343 = vmatpush1.msra.mxu0 %v1014
        %1344 = vmatprep.subr.mxu0 0.0
        %1345 = vmatpush1.msra.mxu0 %v1015
        %1346 = vmatprep.subr.mxu0 0.0
        %1347 = vmatpush1.msra.mxu0 0.0
        %1348 = vmatprep.subr.mxu0 0.0
        %1349 = vmatpush1.msra.mxu0 0.0
        %1350 = vmatprep.subr.mxu0 0.0
        %1351 = vmatpush1.msra.mxu0 0.0
        %1352 = vmatprep.subr.mxu0 0.0
        %1353 = vmatpush1.msra.mxu0 0.0
        %1354 = vmatprep.subr.mxu0 0.0
        %1355 = vmatpush1.msra.mxu0 0.0
        %1356 = vmatprep.subr.mxu0 0.0
        %1357 = vmatpush1.msra.mxu0 0.0
        %1358 = vmatprep.subr.mxu0 0.0
        %1359 = vmatpush1.msra.mxu0 0.0
        %1360 = vmatprep.subr.mxu0 0.0
        %1361 = vmatpush1.msra.mxu0 0.0
        %1362 = vmatprep.subr.mxu0 0.0
        %1363 = vmatpush1.msra.mxu0 0.0
        %1364 = vmatprep.subr.mxu0 0.0
        %1365 = vmatpush1.msra.mxu0 0.0
        %1366 = vmatprep.subr.mxu0 0.0
        %1367 = vmatpush1.msra.mxu0 0.0
        %1368 = vmatprep.subr.mxu0 0.0
        %1369 = vmatpush1.msra.mxu0 0.0
        %1370 = vmatprep.subr.mxu0 0.0
        %1371 = vmatpush1.msra.mxu0 0.0
        %1372 = vmatprep.subr.mxu0 0.0
        %1373 = vmatpush1.msra.mxu0 0.0
        %1374 = vmatprep.subr.mxu0 0.0
        %1375 = vmatpush1.msra.mxu0 0.0
        %1376 = vmatprep.subr.mxu0 0.0
        %1377 = vmatpush1.msra.mxu0 0.0
        %1378 = vmatprep.mubr.f32.mxu0 0.0
        %1379 = vmatmul.mubr.f32.gmra.mrb[0].mxu0 %v1303
        %v1380 = vpop.f32.mrb[0].mxu0
        %v1381 = vadd.f32 0.0, %v1380
        %v1382 = vpop.f32.mrb[0].mxu0
        %1383 = vdwg.mxu0
        %v1384 = vadd.f32 %v1309, %v1381
        %v1385 = vxor.u32 %v1384, 2147483648
        %v1386 = vmul.f32 %v1385, 1.442695
        %v1387 = vpow.pop %v1386
        %v1388 = vadd.f32 %v1387, 1.0
        %v1389 = vrcp.pop %v1388
        %v1390 = vmul.f32 1.0, %v1389
        %1391 = vmatprep.subr.mxu0 0.0
        %1392 = vmatpush1.msra.mxu0 %v1017
        %1393 = vmatprep.subr.mxu0 0.0
        %1394 = vmatpush1.msra.mxu0 %v1018
        %1395 = vmatprep.subr.mxu0 0.0
        %1396 = vmatpush1.msra.mxu0 %v1019
        %1397 = vmatprep.subr.mxu0 0.0
        %1398 = vmatpush1.msra.mxu0 %v1020
        %1399 = vmatprep.subr.mxu0 0.0
        %1400 = vmatpush1.msra.mxu0 %v1021
        %1401 = vmatprep.subr.mxu0 0.0
        %1402 = vmatpush1.msra.mxu0 %v1022
        %1403 = vmatprep.subr.mxu0 0.0
        %1404 = vmatpush1.msra.mxu0 %v1023
        %1405 = vmatprep.subr.mxu0 0.0
        %1406 = vmatpush1.msra.mxu0 %v1024
        %1407 = vmatprep.subr.mxu0 0.0
        %1408 = vmatpush1.msra.mxu0 %v1025
        %1409 = vmatprep.subr.mxu0 0.0
        %1410 = vmatpush1.msra.mxu0 %v1026
        %1411 = vmatprep.subr.mxu0 0.0
        %1412 = vmatpush1.msra.mxu0 %v1027
        %1413 = vmatprep.subr.mxu0 0.0
        %1414 = vmatpush1.msra.mxu0 %v1028
        %1415 = vmatprep.subr.mxu0 0.0
        %1416 = vmatpush1.msra.mxu0 %v1029
        %1417 = vmatprep.subr.mxu0 0.0
        %1418 = vmatpush1.msra.mxu0 %v1030
        %1419 = vmatprep.subr.mxu0 0.0
        %1420 = vmatpush1.msra.mxu0 %v1031
        %1421 = vmatprep.subr.mxu0 0.0
        %1422 = vmatpush1.msra.mxu0 %v1032
        %1423 = vmatprep.subr.mxu0 0.0
        %1424 = vmatpush1.msra.mxu0 0.0
        %1425 = vmatprep.subr.mxu0 0.0
        %1426 = vmatpush1.msra.mxu0 0.0
        %1427 = vmatprep.subr.mxu0 0.0
        %1428 = vmatpush1.msra.mxu0 0.0
        %1429 = vmatprep.subr.mxu0 0.0
        %1430 = vmatpush1.msra.mxu0 0.0
        %1431 = vmatprep.subr.mxu0 0.0
        %1432 = vmatpush1.msra.mxu0 0.0
        %1433 = vmatprep.subr.mxu0 0.0
        %1434 = vmatpush1.msra.mxu0 0.0
        %1435 = vmatprep.subr.mxu0 0.0
        %1436 = vmatpush1.msra.mxu0 0.0
        %1437 = vmatprep.subr.mxu0 0.0
        %1438 = vmatpush1.msra.mxu0 0.0
        %1439 = vmatprep.subr.mxu0 0.0
        %1440 = vmatpush1.msra.mxu0 0.0
        %1441 = vmatprep.subr.mxu0 0.0
        %1442 = vmatpush1.msra.mxu0 0.0
        %1443 = vmatprep.subr.mxu0 0.0
        %1444 = vmatpush1.msra.mxu0 0.0
        %1445 = vmatprep.subr.mxu0 0.0
        %1446 = vmatpush1.msra.mxu0 0.0
        %1447 = vmatprep.subr.mxu0 0.0
        %1448 = vmatpush1.msra.mxu0 0.0
        %1449 = vmatprep.subr.mxu0 0.0
        %1450 = vmatpush1.msra.mxu0 0.0
        %1451 = vmatprep.subr.mxu0 0.0
        %1452 = vmatpush1.msra.mxu0 0.0
        %1453 = vmatprep.subr.mxu0 0.0
        %1454 = vmatpush1.msra.mxu0 0.0
        %1455 = vmatprep.mubr.f32.mxu0 0.0
        %1456 = vmatmul.mubr.f32.gmra.mrb[0].mxu0 %v1303
        %v1457 = vpop.f32.mrb[0].mxu0
        %v1458 = vadd.f32 0.0, %v1457
        %v1459 = vpop.f32.mrb[0].mxu0
        %1460 = vdwg.mxu0
        %v1461 = vadd.f32 %v1311, %v1458
        %v1462 = vxor.u32 %v1461, 2147483648
        %v1463 = vmul.f32 %v1462, 1.442695
        %v1464 = vpow.pop %v1463
        %v1465 = vadd.f32 %v1464, 1.0
        %v1466 = vrcp.pop %v1465
        %v1467 = vmul.f32 1.0, %v1466
        %1468 = vmatprep.subr.mxu0 0.0
        %1469 = vmatpush1.msra.mxu0 %v1034
        %1470 = vmatprep.subr.mxu0 0.0
        %1471 = vmatpush1.msra.mxu0 %v1035
        %1472 = vmatprep.subr.mxu0 0.0
        %1473 = vmatpush1.msra.mxu0 %v1036
        %1474 = vmatprep.subr.mxu0 0.0
        %1475 = vmatpush1.msra.mxu0 %v1037
        %1476 = vmatprep.subr.mxu0 0.0
        %1477 = vmatpush1.msra.mxu0 %v1038
        %1478 = vmatprep.subr.mxu0 0.0
        %1479 = vmatpush1.msra.mxu0 %v1039
        %1480 = vmatprep.subr.mxu0 0.0
        %1481 = vmatpush1.msra.mxu0 %v1040
        %1482 = vmatprep.subr.mxu0 0.0
        %1483 = vmatpush1.msra.mxu0 %v1041
        %1484 = vmatprep.subr.mxu0 0.0
        %1485 = vmatpush1.msra.mxu0 %v1042
        %1486 = vmatprep.subr.mxu0 0.0
        %1487 = vmatpush1.msra.mxu0 %v1043
        %1488 = vmatprep.subr.mxu0 0.0
        %1489 = vmatpush1.msra.mxu0 %v1044
        %1490 = vmatprep.subr.mxu0 0.0
        %1491 = vmatpush1.msra.mxu0 %v1045
        %1492 = vmatprep.subr.mxu0 0.0
        %1493 = vmatpush1.msra.mxu0 %v1046
        %1494 = vmatprep.subr.mxu0 0.0
        %1495 = vmatpush1.msra.mxu0 %v1047
        %1496 = vmatprep.subr.mxu0 0.0
        %1497 = vmatpush1.msra.mxu0 %v1048
        %1498 = vmatprep.subr.mxu0 0.0
        %1499 = vmatpush1.msra.mxu0 %v1049
        %1500 = vmatprep.subr.mxu0 0.0
        %1501 = vmatpush1.msra.mxu0 0.0
        %1502 = vmatprep.subr.mxu0 0.0
        %1503 = vmatpush1.msra.mxu0 0.0
        %1504 = vmatprep.subr.mxu0 0.0
        %1505 = vmatpush1.msra.mxu0 0.0
        %1506 = vmatprep.subr.mxu0 0.0
        %1507 = vmatpush1.msra.mxu0 0.0
        %1508 = vmatprep.subr.mxu0 0.0
        %1509 = vmatpush1.msra.mxu0 0.0
        %1510 = vmatprep.subr.mxu0 0.0
        %1511 = vmatpush1.msra.mxu0 0.0
        %1512 = vmatprep.subr.mxu0 0.0
        %1513 = vmatpush1.msra.mxu0 0.0
        %1514 = vmatprep.subr.mxu0 0.0
        %1515 = vmatpush1.msra.mxu0 0.0
        %1516 = vmatprep.subr.mxu0 0.0
        %1517 = vmatpush1.msra.mxu0 0.0
        %1518 = vmatprep.subr.mxu0 0.0
        %1519 = vmatpush1.msra.mxu0 0.0
        %1520 = vmatprep.subr.mxu0 0.0
        %1521 = vmatpush1.msra.mxu0 0.0
        %1522 = vmatprep.subr.mxu0 0.0
        %1523 = vmatpush1.msra.mxu0 0.0
        %1524 = vmatprep.subr.mxu0 0.0
        %1525 = vmatpush1.msra.mxu0 0.0
        %1526 = vmatprep.subr.mxu0 0.0
        %1527 = vmatpush1.msra.mxu0 0.0
        %1528 = vmatprep.subr.mxu0 0.0
        %1529 = vmatpush1.msra.mxu0 0.0
        %1530 = vmatprep.subr.mxu0 0.0
        %1531 = vmatpush1.msra.mxu0 0.0
        %1532 = vmatprep.mubr.f32.mxu0 0.0
        %1533 = vmatmul.mubr.f32.gmra.mrb[0].mxu0 %v1303
        %v1534 = vpop.f32.mrb[0].mxu0
        %v1535 = vadd.f32 %v1060, %v1534
        %v1536 = vpop.f32.mrb[0].mxu0
        %1537 = vdwg.mxu0
        %v1538 = vmul.f32 %v1390, %v1535
        %v1539 = vadd.f32 %v1313, %v1538
        %v1540 = vtanh.pop %v1539
        %v1541 = vsub.f32 1.0, %v1467
        %v1542 = vmul.f32 %v1541, %v1540
        %v1543 = vmul.f32 %v1467, %v1303
        %v1544 = vadd.f32 %v1542, %v1543
        %v1545 = vstv %s1306
        %vm1546 = vcmp.lt.s32.totalorder %v1545, %v1053
        %v1547 = vsel %vm1546, %v1544, %v1303
        %v1548 = vsel %vm1546, %v1544, 0.0
        %s1549 = scalar_lea.vmem %s388, %s1307
        %1550 = vst [vmem:[%s1549] sm:$0xff] %v1548
        %s1551 = scalar_select %p389, 9, 2
        %s1552 = smul.u32 %s1551, 8
        %s1553 = scalar_lea.vmem [#allocation2], %s1552
        %v1554 = vld [vmem:[%s1553] sm:$0xff]
        %s1555 = scalar_lea.vmem [#allocation3], %s1552
        %v1556 = vld [vmem:[%s1555] sm:$0xff]
        %s1557 = scalar_lea.vmem [#allocation4], %s1552
        %v1558 = vld [vmem:[%s1557] sm:$0xff]
        %1559 = vmatprep.subr.mxu0 0.0
        %1560 = vmatpush1.msra.mxu0 %v1000
        %1561 = vmatprep.subr.mxu0 0.0
        %1562 = vmatpush1.msra.mxu0 %v1001
        %1563 = vmatprep.subr.mxu0 0.0
        %1564 = vmatpush1.msra.mxu0 %v1002
        %1565 = vmatprep.subr.mxu0 0.0
        %1566 = vmatpush1.msra.mxu0 %v1003
        %1567 = vmatprep.subr.mxu0 0.0
        %1568 = vmatpush1.msra.mxu0 %v1004
        %1569 = vmatprep.subr.mxu0 0.0
        %1570 = vmatpush1.msra.mxu0 %v1005
        %1571 = vmatprep.subr.mxu0 0.0
        %1572 = vmatpush1.msra.mxu0 %v1006
        %1573 = vmatprep.subr.mxu0 0.0
        %1574 = vmatpush1.msra.mxu0 %v1007
        %1575 = vmatprep.subr.mxu0 0.0
        %1576 = vmatpush1.msra.mxu0 %v1008
        %1577 = vmatprep.subr.mxu0 0.0
        %1578 = vmatpush1.msra.mxu0 %v1009
        %1579 = vmatprep.subr.mxu0 0.0
        %1580 = vmatpush1.msra.mxu0 %v1010
        %1581 = vmatprep.subr.mxu0 0.0
        %1582 = vmatpush1.msra.mxu0 %v1011
        %1583 = vmatprep.subr.mxu0 0.0
        %1584 = vmatpush1.msra.mxu0 %v1012
        %1585 = vmatprep.subr.mxu0 0.0
        %1586 = vmatpush1.msra.mxu0 %v1013
        %1587 = vmatprep.subr.mxu0 0.0
        %1588 = vmatpush1.msra.mxu0 %v1014
        %1589 = vmatprep.subr.mxu0 0.0
        %1590 = vmatpush1.msra.mxu0 %v1015
        %1591 = vmatprep.subr.mxu0 0.0
        %1592 = vmatpush1.msra.mxu0 0.0
        %1593 = vmatprep.subr.mxu0 0.0
        %1594 = vmatpush1.msra.mxu0 0.0
        %1595 = vmatprep.subr.mxu0 0.0
        %1596 = vmatpush1.msra.mxu0 0.0
        %1597 = vmatprep.subr.mxu0 0.0
        %1598 = vmatpush1.msra.mxu0 0.0
        %1599 = vmatprep.subr.mxu0 0.0
        %1600 = vmatpush1.msra.mxu0 0.0
        %1601 = vmatprep.subr.mxu0 0.0
        %1602 = vmatpush1.msra.mxu0 0.0
        %1603 = vmatprep.subr.mxu0 0.0
        %1604 = vmatpush1.msra.mxu0 0.0
        %1605 = vmatprep.subr.mxu0 0.0
        %1606 = vmatpush1.msra.mxu0 0.0
        %1607 = vmatprep.subr.mxu0 0.0
        %1608 = vmatpush1.msra.mxu0 0.0
        %1609 = vmatprep.subr.mxu0 0.0
        %1610 = vmatpush1.msra.mxu0 0.0
        %1611 = vmatprep.subr.mxu0 0.0
        %1612 = vmatpush1.msra.mxu0 0.0
        %1613 = vmatprep.subr.mxu0 0.0
        %1614 = vmatpush1.msra.mxu0 0.0
        %1615 = vmatprep.subr.mxu0 0.0
        %1616 = vmatpush1.msra.mxu0 0.0
        %1617 = vmatprep.subr.mxu0 0.0
        %1618 = vmatpush1.msra.mxu0 0.0
        %1619 = vmatprep.subr.mxu0 0.0
        %1620 = vmatpush1.msra.mxu0 0.0
        %1621 = vmatprep.subr.mxu0 0.0
        %1622 = vmatpush1.msra.mxu0 0.0
        %1623 = vmatprep.mubr.f32.mxu0 0.0
        %1624 = vmatmul.mubr.f32.gmra.mrb[0].mxu0 %v1547
        %v1625 = vpop.f32.mrb[0].mxu0
        %v1626 = vadd.f32 0.0, %v1625
        %v1627 = vpop.f32.mrb[0].mxu0
        %1628 = vdwg.mxu0
        %v1629 = vadd.f32 %v1554, %v1626
        %v1630 = vxor.u32 %v1629, 2147483648
        %v1631 = vmul.f32 %v1630, 1.442695
        %v1632 = vpow.pop %v1631
        %v1633 = vadd.f32 %v1632, 1.0
        %v1634 = vrcp.pop %v1633
        %v1635 = vmul.f32 1.0, %v1634
        %1636 = vmatprep.subr.mxu0 0.0
        %1637 = vmatpush1.msra.mxu0 %v1017
        %1638 = vmatprep.subr.mxu0 0.0
        %1639 = vmatpush1.msra.mxu0 %v1018
        %1640 = vmatprep.subr.mxu0 0.0
        %1641 = vmatpush1.msra.mxu0 %v1019
        %1642 = vmatprep.subr.mxu0 0.0
        %1643 = vmatpush1.msra.mxu0 %v1020
        %1644 = vmatprep.subr.mxu0 0.0
        %1645 = vmatpush1.msra.mxu0 %v1021
        %1646 = vmatprep.subr.mxu0 0.0
        %1647 = vmatpush1.msra.mxu0 %v1022
        %1648 = vmatprep.subr.mxu0 0.0
        %1649 = vmatpush1.msra.mxu0 %v1023
        %1650 = vmatprep.subr.mxu0 0.0
        %1651 = vmatpush1.msra.mxu0 %v1024
        %1652 = vmatprep.subr.mxu0 0.0
        %1653 = vmatpush1.msra.mxu0 %v1025
        %1654 = vmatprep.subr.mxu0 0.0
        %1655 = vmatpush1.msra.mxu0 %v1026
        %1656 = vmatprep.subr.mxu0 0.0
        %1657 = vmatpush1.msra.mxu0 %v1027
        %1658 = vmatprep.subr.mxu0 0.0
        %1659 = vmatpush1.msra.mxu0 %v1028
        %1660 = vmatprep.subr.mxu0 0.0
        %1661 = vmatpush1.msra.mxu0 %v1029
        %1662 = vmatprep.subr.mxu0 0.0
        %1663 = vmatpush1.msra.mxu0 %v1030
        %1664 = vmatprep.subr.mxu0 0.0
        %1665 = vmatpush1.msra.mxu0 %v1031
        %1666 = vmatprep.subr.mxu0 0.0
        %1667 = vmatpush1.msra.mxu0 %v1032
        %1668 = vmatprep.subr.mxu0 0.0
        %1669 = vmatpush1.msra.mxu0 0.0
        %1670 = vmatprep.subr.mxu0 0.0
        %1671 = vmatpush1.msra.mxu0 0.0
        %1672 = vmatprep.subr.mxu0 0.0
        %1673 = vmatpush1.msra.mxu0 0.0
        %1674 = vmatprep.subr.mxu0 0.0
        %1675 = vmatpush1.msra.mxu0 0.0
        %1676 = vmatprep.subr.mxu0 0.0
        %1677 = vmatpush1.msra.mxu0 0.0
        %1678 = vmatprep.subr.mxu0 0.0
        %1679 = vmatpush1.msra.mxu0 0.0
        %1680 = vmatprep.subr.mxu0 0.0
        %1681 = vmatpush1.msra.mxu0 0.0
        %1682 = vmatprep.subr.mxu0 0.0
        %1683 = vmatpush1.msra.mxu0 0.0
        %1684 = vmatprep.subr.mxu0 0.0
        %1685 = vmatpush1.msra.mxu0 0.0
        %1686 = vmatprep.subr.mxu0 0.0
        %1687 = vmatpush1.msra.mxu0 0.0
        %1688 = vmatprep.subr.mxu0 0.0
        %1689 = vmatpush1.msra.mxu0 0.0
        %1690 = vmatprep.subr.mxu0 0.0
        %1691 = vmatpush1.msra.mxu0 0.0
        %1692 = vmatprep.subr.mxu0 0.0
        %1693 = vmatpush1.msra.mxu0 0.0
        %1694 = vmatprep.subr.mxu0 0.0
        %1695 = vmatpush1.msra.mxu0 0.0
        %1696 = vmatprep.subr.mxu0 0.0
        %1697 = vmatpush1.msra.mxu0 0.0
        %1698 = vmatprep.subr.mxu0 0.0
        %1699 = vmatpush1.msra.mxu0 0.0
        %1700 = vmatprep.mubr.f32.mxu0 0.0
        %1701 = vmatmul.mubr.f32.gmra.mrb[0].mxu0 %v1547
        %v1702 = vpop.f32.mrb[0].mxu0
        %v1703 = vadd.f32 0.0, %v1702
        %v1704 = vpop.f32.mrb[0].mxu0
        %1705 = vdwg.mxu0
        %v1706 = vadd.f32 %v1556, %v1703
        %v1707 = vxor.u32 %v1706, 2147483648
        %v1708 = vmul.f32 %v1707, 1.442695
        %v1709 = vpow.pop %v1708
        %v1710 = vadd.f32 %v1709, 1.0
        %v1711 = vrcp.pop %v1710
        %v1712 = vmul.f32 1.0, %v1711
        %1713 = vmatprep.subr.mxu0 0.0
        %1714 = vmatpush1.msra.mxu0 %v1034
        %1715 = vmatprep.subr.mxu0 0.0
        %1716 = vmatpush1.msra.mxu0 %v1035
        %1717 = vmatprep.subr.mxu0 0.0
        %1718 = vmatpush1.msra.mxu0 %v1036
        %1719 = vmatprep.subr.mxu0 0.0
        %1720 = vmatpush1.msra.mxu0 %v1037
        %1721 = vmatprep.subr.mxu0 0.0
        %1722 = vmatpush1.msra.mxu0 %v1038
        %1723 = vmatprep.subr.mxu0 0.0
        %1724 = vmatpush1.msra.mxu0 %v1039
        %1725 = vmatprep.subr.mxu0 0.0
        %1726 = vmatpush1.msra.mxu0 %v1040
        %1727 = vmatprep.subr.mxu0 0.0
        %1728 = vmatpush1.msra.mxu0 %v1041
        %1729 = vmatprep.subr.mxu0 0.0
        %1730 = vmatpush1.msra.mxu0 %v1042
        %1731 = vmatprep.subr.mxu0 0.0
        %1732 = vmatpush1.msra.mxu0 %v1043
        %1733 = vmatprep.subr.mxu0 0.0
        %1734 = vmatpush1.msra.mxu0 %v1044
        %1735 = vmatprep.subr.mxu0 0.0
        %1736 = vmatpush1.msra.mxu0 %v1045
        %1737 = vmatprep.subr.mxu0 0.0
        %1738 = vmatpush1.msra.mxu0 %v1046
        %1739 = vmatprep.subr.mxu0 0.0
        %1740 = vmatpush1.msra.mxu0 %v1047
        %1741 = vmatprep.subr.mxu0 0.0
        %1742 = vmatpush1.msra.mxu0 %v1048
        %1743 = vmatprep.subr.mxu0 0.0
        %1744 = vmatpush1.msra.mxu0 %v1049
        %1745 = vmatprep.subr.mxu0 0.0
        %1746 = vmatpush1.msra.mxu0 0.0
        %1747 = vmatprep.subr.mxu0 0.0
        %1748 = vmatpush1.msra.mxu0 0.0
        %1749 = vmatprep.subr.mxu0 0.0
        %1750 = vmatpush1.msra.mxu0 0.0
        %1751 = vmatprep.subr.mxu0 0.0
        %1752 = vmatpush1.msra.mxu0 0.0
        %1753 = vmatprep.subr.mxu0 0.0
        %1754 = vmatpush1.msra.mxu0 0.0
        %1755 = vmatprep.subr.mxu0 0.0
        %1756 = vmatpush1.msra.mxu0 0.0
        %1757 = vmatprep.subr.mxu0 0.0
        %1758 = vmatpush1.msra.mxu0 0.0
        %1759 = vmatprep.subr.mxu0 0.0
        %1760 = vmatpush1.msra.mxu0 0.0
        %1761 = vmatprep.subr.mxu0 0.0
        %1762 = vmatpush1.msra.mxu0 0.0
        %1763 = vmatprep.subr.mxu0 0.0
        %1764 = vmatpush1.msra.mxu0 0.0
        %1765 = vmatprep.subr.mxu0 0.0
        %1766 = vmatpush1.msra.mxu0 0.0
        %1767 = vmatprep.subr.mxu0 0.0
        %1768 = vmatpush1.msra.mxu0 0.0
        %1769 = vmatprep.subr.mxu0 0.0
        %1770 = vmatpush1.msra.mxu0 0.0
        %1771 = vmatprep.subr.mxu0 0.0
        %1772 = vmatpush1.msra.mxu0 0.0
        %1773 = vmatprep.subr.mxu0 0.0
        %1774 = vmatpush1.msra.mxu0 0.0
        %1775 = vmatprep.subr.mxu0 0.0
        %1776 = vmatpush1.msra.mxu0 0.0
        %1777 = vmatprep.mubr.f32.mxu0 0.0
        %1778 = vmatmul.mubr.f32.gmra.mrb[0].mxu0 %v1547
        %v1779 = vpop.f32.mrb[0].mxu0
        %v1780 = vadd.f32 %v1060, %v1779
        %v1781 = vpop.f32.mrb[0].mxu0
        %1782 = vdwg.mxu0
        %v1783 = vmul.f32 %v1635, %v1780
        %v1784 = vadd.f32 %v1558, %v1783
        %v1785 = vtanh.pop %v1784
        %v1786 = vsub.f32 1.0, %v1712
        %v1787 = vmul.f32 %v1786, %v1785
        %v1788 = vmul.f32 %v1712, %v1547
        %v1789 = vadd.f32 %v1787, %v1788
        %v1790 = vstv %s1551
        %vm1791 = vcmp.lt.s32.totalorder %v1790, %v1053
        %v1792 = vsel %vm1791, %v1789, %v1547
        %v1793 = vsel %vm1791, %v1789, 0.0
        %s1794 = scalar_lea.vmem %s388, %s1552
        %1795 = vst [vmem:[%s1794] sm:$0xff] %v1793
        %s1796 = scalar_select %p389, 8, 3
        %s1797 = smul.u32 %s1796, 8
        %s1798 = scalar_lea.vmem [#allocation2], %s1797
        %v1799 = vld [vmem:[%s1798] sm:$0xff]
        %s1800 = scalar_lea.vmem [#allocation3], %s1797
        %v1801 = vld [vmem:[%s1800] sm:$0xff]
        %s1802 = scalar_lea.vmem [#allocation4], %s1797
        %v1803 = vld [vmem:[%s1802] sm:$0xff]
        %1804 = vmatprep.subr.mxu0 0.0
        %1805 = vmatpush1.msra.mxu0 %v1000
        %1806 = vmatprep.subr.mxu0 0.0
        %1807 = vmatpush1.msra.mxu0 %v1001
        %1808 = vmatprep.subr.mxu0 0.0
        %1809 = vmatpush1.msra.mxu0 %v1002
        %1810 = vmatprep.subr.mxu0 0.0
        %1811 = vmatpush1.msra.mxu0 %v1003
        %1812 = vmatprep.subr.mxu0 0.0
        %1813 = vmatpush1.msra.mxu0 %v1004
        %1814 = vmatprep.subr.mxu0 0.0
        %1815 = vmatpush1.msra.mxu0 %v1005
        %1816 = vmatprep.subr.mxu0 0.0
        %1817 = vmatpush1.msra.mxu0 %v1006
        %1818 = vmatprep.subr.mxu0 0.0
        %1819 = vmatpush1.msra.mxu0 %v1007
        %1820 = vmatprep.subr.mxu0 0.0
        %1821 = vmatpush1.msra.mxu0 %v1008
        %1822 = vmatprep.subr.mxu0 0.0
        %1823 = vmatpush1.msra.mxu0 %v1009
        %1824 = vmatprep.subr.mxu0 0.0
        %1825 = vmatpush1.msra.mxu0 %v1010
        %1826 = vmatprep.subr.mxu0 0.0
        %1827 = vmatpush1.msra.mxu0 %v1011
        %1828 = vmatprep.subr.mxu0 0.0
        %1829 = vmatpush1.msra.mxu0 %v1012
        %1830 = vmatprep.subr.mxu0 0.0
        %1831 = vmatpush1.msra.mxu0 %v1013
        %1832 = vmatprep.subr.mxu0 0.0
        %1833 = vmatpush1.msra.mxu0 %v1014
        %1834 = vmatprep.subr.mxu0 0.0
        %1835 = vmatpush1.msra.mxu0 %v1015
        %1836 = vmatprep.subr.mxu0 0.0
        %1837 = vmatpush1.msra.mxu0 0.0
        %1838 = vmatprep.subr.mxu0 0.0
        %1839 = vmatpush1.msra.mxu0 0.0
        %1840 = vmatprep.subr.mxu0 0.0
        %1841 = vmatpush1.msra.mxu0 0.0
        %1842 = vmatprep.subr.mxu0 0.0
        %1843 = vmatpush1.msra.mxu0 0.0
        %1844 = vmatprep.subr.mxu0 0.0
        %1845 = vmatpush1.msra.mxu0 0.0
        %1846 = vmatprep.subr.mxu0 0.0
        %1847 = vmatpush1.msra.mxu0 0.0
        %1848 = vmatprep.subr.mxu0 0.0
        %1849 = vmatpush1.msra.mxu0 0.0
        %1850 = vmatprep.subr.mxu0 0.0
        %1851 = vmatpush1.msra.mxu0 0.0
        %1852 = vmatprep.subr.mxu0 0.0
        %1853 = vmatpush1.msra.mxu0 0.0
        %1854 = vmatprep.subr.mxu0 0.0
        %1855 = vmatpush1.msra.mxu0 0.0
        %1856 = vmatprep.subr.mxu0 0.0
        %1857 = vmatpush1.msra.mxu0 0.0
        %1858 = vmatprep.subr.mxu0 0.0
        %1859 = vmatpush1.msra.mxu0 0.0
        %1860 = vmatprep.subr.mxu0 0.0
        %1861 = vmatpush1.msra.mxu0 0.0
        %1862 = vmatprep.subr.mxu0 0.0
        %1863 = vmatpush1.msra.mxu0 0.0
        %1864 = vmatprep.subr.mxu0 0.0
        %1865 = vmatpush1.msra.mxu0 0.0
        %1866 = vmatprep.subr.mxu0 0.0
        %1867 = vmatpush1.msra.mxu0 0.0
        %1868 = vmatprep.mubr.f32.mxu0 0.0
        %1869 = vmatmul.mubr.f32.gmra.mrb[0].mxu0 %v1792
        %v1870 = vpop.f32.mrb[0].mxu0
        %v1871 = vadd.f32 0.0, %v1870
        %v1872 = vpop.f32.mrb[0].mxu0
        %1873 = vdwg.mxu0
        %v1874 = vadd.f32 %v1799, %v1871
        %v1875 = vxor.u32 %v1874, 2147483648
        %v1876 = vmul.f32 %v1875, 1.442695
        %v1877 = vpow.pop %v1876
        %v1878 = vadd.f32 %v1877, 1.0
        %v1879 = vrcp.pop %v1878
        %v1880 = vmul.f32 1.0, %v1879
        %1881 = vmatprep.subr.mxu0 0.0
        %1882 = vmatpush1.msra.mxu0 %v1017
        %1883 = vmatprep.subr.mxu0 0.0
        %1884 = vmatpush1.msra.mxu0 %v1018
        %1885 = vmatprep.subr.mxu0 0.0
        %1886 = vmatpush1.msra.mxu0 %v1019
        %1887 = vmatprep.subr.mxu0 0.0
        %1888 = vmatpush1.msra.mxu0 %v1020
        %1889 = vmatprep.subr.mxu0 0.0
        %1890 = vmatpush1.msra.mxu0 %v1021
        %1891 = vmatprep.subr.mxu0 0.0
        %1892 = vmatpush1.msra.mxu0 %v1022
        %1893 = vmatprep.subr.mxu0 0.0
        %1894 = vmatpush1.msra.mxu0 %v1023
        %1895 = vmatprep.subr.mxu0 0.0
        %1896 = vmatpush1.msra.mxu0 %v1024
        %1897 = vmatprep.subr.mxu0 0.0
        %1898 = vmatpush1.msra.mxu0 %v1025
        %1899 = vmatprep.subr.mxu0 0.0
        %1900 = vmatpush1.msra.mxu0 %v1026
        %1901 = vmatprep.subr.mxu0 0.0
        %1902 = vmatpush1.msra.mxu0 %v1027
        %1903 = vmatprep.subr.mxu0 0.0
        %1904 = vmatpush1.msra.mxu0 %v1028
        %1905 = vmatprep.subr.mxu0 0.0
        %1906 = vmatpush1.msra.mxu0 %v1029
        %1907 = vmatprep.subr.mxu0 0.0
        %1908 = vmatpush1.msra.mxu0 %v1030
        %1909 = vmatprep.subr.mxu0 0.0
        %1910 = vmatpush1.msra.mxu0 %v1031
        %1911 = vmatprep.subr.mxu0 0.0
        %1912 = vmatpush1.msra.mxu0 %v1032
        %1913 = vmatprep.subr.mxu0 0.0
        %1914 = vmatpush1.msra.mxu0 0.0
        %1915 = vmatprep.subr.mxu0 0.0
        %1916 = vmatpush1.msra.mxu0 0.0
        %1917 = vmatprep.subr.mxu0 0.0
        %1918 = vmatpush1.msra.mxu0 0.0
        %1919 = vmatprep.subr.mxu0 0.0
        %1920 = vmatpush1.msra.mxu0 0.0
        %1921 = vmatprep.subr.mxu0 0.0
        %1922 = vmatpush1.msra.mxu0 0.0
        %1923 = vmatprep.subr.mxu0 0.0
        %1924 = vmatpush1.msra.mxu0 0.0
        %1925 = vmatprep.subr.mxu0 0.0
        %1926 = vmatpush1.msra.mxu0 0.0
        %1927 = vmatprep.subr.mxu0 0.0
        %1928 = vmatpush1.msra.mxu0 0.0
        %1929 = vmatprep.subr.mxu0 0.0
        %1930 = vmatpush1.msra.mxu0 0.0
        %1931 = vmatprep.subr.mxu0 0.0
        %1932 = vmatpush1.msra.mxu0 0.0
        %1933 = vmatprep.subr.mxu0 0.0
        %1934 = vmatpush1.msra.mxu0 0.0
        %1935 = vmatprep.subr.mxu0 0.0
        %1936 = vmatpush1.msra.mxu0 0.0
        %1937 = vmatprep.subr.mxu0 0.0
        %1938 = vmatpush1.msra.mxu0 0.0
        %1939 = vmatprep.subr.mxu0 0.0
        %1940 = vmatpush1.msra.mxu0 0.0
        %1941 = vmatprep.subr.mxu0 0.0
        %1942 = vmatpush1.msra.mxu0 0.0
        %1943 = vmatprep.subr.mxu0 0.0
        %1944 = vmatpush1.msra.mxu0 0.0
        %1945 = vmatprep.mubr.f32.mxu0 0.0
        %1946 = vmatmul.mubr.f32.gmra.mrb[0].mxu0 %v1792
        %v1947 = vpop.f32.mrb[0].mxu0
        %v1948 = vadd.f32 0.0, %v1947
        %v1949 = vpop.f32.mrb[0].mxu0
        %1950 = vdwg.mxu0
        %v1951 = vadd.f32 %v1801, %v1948
        %v1952 = vxor.u32 %v1951, 2147483648
        %v1953 = vmul.f32 %v1952, 1.442695
        %v1954 = vpow.pop %v1953
        %v1955 = vadd.f32 %v1954, 1.0
        %v1956 = vrcp.pop %v1955
        %v1957 = vmul.f32 1.0, %v1956
        %1958 = vmatprep.subr.mxu0 0.0
        %1959 = vmatpush1.msra.mxu0 %v1034
        %1960 = vmatprep.subr.mxu0 0.0
        %1961 = vmatpush1.msra.mxu0 %v1035
        %1962 = vmatprep.subr.mxu0 0.0
        %1963 = vmatpush1.msra.mxu0 %v1036
        %1964 = vmatprep.subr.mxu0 0.0
        %1965 = vmatpush1.msra.mxu0 %v1037
        %1966 = vmatprep.subr.mxu0 0.0
        %1967 = vmatpush1.msra.mxu0 %v1038
        %1968 = vmatprep.subr.mxu0 0.0
        %1969 = vmatpush1.msra.mxu0 %v1039
        %1970 = vmatprep.subr.mxu0 0.0
        %1971 = vmatpush1.msra.mxu0 %v1040
        %1972 = vmatprep.subr.mxu0 0.0
        %1973 = vmatpush1.msra.mxu0 %v1041
        %1974 = vmatprep.subr.mxu0 0.0
        %1975 = vmatpush1.msra.mxu0 %v1042
        %1976 = vmatprep.subr.mxu0 0.0
        %1977 = vmatpush1.msra.mxu0 %v1043
        %1978 = vmatprep.subr.mxu0 0.0
        %1979 = vmatpush1.msra.mxu0 %v1044
        %1980 = vmatprep.subr.mxu0 0.0
        %1981 = vmatpush1.msra.mxu0 %v1045
        %1982 = vmatprep.subr.mxu0 0.0
        %1983 = vmatpush1.msra.mxu0 %v1046
        %1984 = vmatprep.subr.mxu0 0.0
        %1985 = vmatpush1.msra.mxu0 %v1047
        %1986 = vmatprep.subr.mxu0 0.0
        %1987 = vmatpush1.msra.mxu0 %v1048
        %1988 = vmatprep.subr.mxu0 0.0
        %1989 = vmatpush1.msra.mxu0 %v1049
        %1990 = vmatprep.subr.mxu0 0.0
        %1991 = vmatpush1.msra.mxu0 0.0
        %1992 = vmatprep.subr.mxu0 0.0
        %1993 = vmatpush1.msra.mxu0 0.0
        %1994 = vmatprep.subr.mxu0 0.0
        %1995 = vmatpush1.msra.mxu0 0.0
        %1996 = vmatprep.subr.mxu0 0.0
        %1997 = vmatpush1.msra.mxu0 0.0
        %1998 = vmatprep.subr.mxu0 0.0
        %1999 = vmatpush1.msra.mxu0 0.0
        %2000 = vmatprep.subr.mxu0 0.0
        %2001 = vmatpush1.msra.mxu0 0.0
        %2002 = vmatprep.subr.mxu0 0.0
        %2003 = vmatpush1.msra.mxu0 0.0
        %2004 = vmatprep.subr.mxu0 0.0
        %2005 = vmatpush1.msra.mxu0 0.0
        %2006 = vmatprep.subr.mxu0 0.0
        %2007 = vmatpush1.msra.mxu0 0.0
        %2008 = vmatprep.subr.mxu0 0.0
        %2009 = vmatpush1.msra.mxu0 0.0
        %2010 = vmatprep.subr.mxu0 0.0
        %2011 = vmatpush1.msra.mxu0 0.0
        %2012 = vmatprep.subr.mxu0 0.0
        %2013 = vmatpush1.msra.mxu0 0.0
        %2014 = vmatprep.subr.mxu0 0.0
        %2015 = vmatpush1.msra.mxu0 0.0
        %2016 = vmatprep.subr.mxu0 0.0
        %2017 = vmatpush1.msra.mxu0 0.0
        %2018 = vmatprep.subr.mxu0 0.0
        %2019 = vmatpush1.msra.mxu0 0.0
        %2020 = vmatprep.subr.mxu0 0.0
        %2021 = vmatpush1.msra.mxu0 0.0
        %2022 = vmatprep.mubr.f32.mxu0 0.0
        %2023 = vmatmul.mubr.f32.gmra.mrb[0].mxu0 %v1792
        %v2024 = vpop.f32.mrb[0].mxu0
        %v2025 = vadd.f32 %v1060, %v2024
        %v2026 = vpop.f32.mrb[0].mxu0
        %2027 = vdwg.mxu0
        %v2028 = vmul.f32 %v1880, %v2025
        %v2029 = vadd.f32 %v1803, %v2028
        %v2030 = vtanh.pop %v2029
        %v2031 = vsub.f32 1.0, %v1957
        %v2032 = vmul.f32 %v2031, %v2030
        %v2033 = vmul.f32 %v1957, %v1792
        %v2034 = vadd.f32 %v2032, %v2033
        %v2035 = vstv %s1796
        %vm2036 = vcmp.lt.s32.totalorder %v2035, %v1053
        %v2037 = vsel %vm2036, %v2034, %v1792
        %v2038 = vsel %vm2036, %v2034, 0.0
        %s2039 = scalar_lea.vmem %s388, %s1797
        %2040 = vst [vmem:[%s2039] sm:$0xff] %v2038
        %s2041 = scalar_select %p389, 7, 4
        %s2042 = smul.u32 %s2041, 8
        %s2043 = scalar_lea.vmem [#allocation2], %s2042
        %v2044 = vld [vmem:[%s2043] sm:$0xff]
        %s2045 = scalar_lea.vmem [#allocation3], %s2042
        %v2046 = vld [vmem:[%s2045] sm:$0xff]
        %s2047 = scalar_lea.vmem [#allocation4], %s2042
        %v2048 = vld [vmem:[%s2047] sm:$0xff]
        %2049 = vmatprep.subr.mxu0 0.0
        %2050 = vmatpush1.msra.mxu0 %v1000
        %2051 = vmatprep.subr.mxu0 0.0
        %2052 = vmatpush1.msra.mxu0 %v1001
        %2053 = vmatprep.subr.mxu0 0.0
        %2054 = vmatpush1.msra.mxu0 %v1002
        %2055 = vmatprep.subr.mxu0 0.0
        %2056 = vmatpush1.msra.mxu0 %v1003
        %2057 = vmatprep.subr.mxu0 0.0
        %2058 = vmatpush1.msra.mxu0 %v1004
        %2059 = vmatprep.subr.mxu0 0.0
        %2060 = vmatpush1.msra.mxu0 %v1005
        %2061 = vmatprep.subr.mxu0 0.0
        %2062 = vmatpush1.msra.mxu0 %v1006
        %2063 = vmatprep.subr.mxu0 0.0
        %2064 = vmatpush1.msra.mxu0 %v1007
        %2065 = vmatprep.subr.mxu0 0.0
        %2066 = vmatpush1.msra.mxu0 %v1008
        %2067 = vmatprep.subr.mxu0 0.0
        %2068 = vmatpush1.msra.mxu0 %v1009
        %2069 = vmatprep.subr.mxu0 0.0
        %2070 = vmatpush1.msra.mxu0 %v1010
        %2071 = vmatprep.subr.mxu0 0.0
        %2072 = vmatpush1.msra.mxu0 %v1011
        %2073 = vmatprep.subr.mxu0 0.0
        %2074 = vmatpush1.msra.mxu0 %v1012
        %2075 = vmatprep.subr.mxu0 0.0
        %2076 = vmatpush1.msra.mxu0 %v1013
        %2077 = vmatprep.subr.mxu0 0.0
        %2078 = vmatpush1.msra.mxu0 %v1014
        %2079 = vmatprep.subr.mxu0 0.0
        %2080 = vmatpush1.msra.mxu0 %v1015
        %2081 = vmatprep.subr.mxu0 0.0
        %2082 = vmatpush1.msra.mxu0 0.0
        %2083 = vmatprep.subr.mxu0 0.0
        %2084 = vmatpush1.msra.mxu0 0.0
        %2085 = vmatprep.subr.mxu0 0.0
        %2086 = vmatpush1.msra.mxu0 0.0
        %2087 = vmatprep.subr.mxu0 0.0
        %2088 = vmatpush1.msra.mxu0 0.0
        %2089 = vmatprep.subr.mxu0 0.0
        %2090 = vmatpush1.msra.mxu0 0.0
        %2091 = vmatprep.subr.mxu0 0.0
        %2092 = vmatpush1.msra.mxu0 0.0
        %2093 = vmatprep.subr.mxu0 0.0
        %2094 = vmatpush1.msra.mxu0 0.0
        %2095 = vmatprep.subr.mxu0 0.0
        %2096 = vmatpush1.msra.mxu0 0.0
        %2097 = vmatprep.subr.mxu0 0.0
        %2098 = vmatpush1.msra.mxu0 0.0
        %2099 = vmatprep.subr.mxu0 0.0
        %2100 = vmatpush1.msra.mxu0 0.0
        %2101 = vmatprep.subr.mxu0 0.0
        %2102 = vmatpush1.msra.mxu0 0.0
        %2103 = vmatprep.subr.mxu0 0.0
        %2104 = vmatpush1.msra.mxu0 0.0
        %2105 = vmatprep.subr.mxu0 0.0
        %2106 = vmatpush1.msra.mxu0 0.0
        %2107 = vmatprep.subr.mxu0 0.0
        %2108 = vmatpush1.msra.mxu0 0.0
        %2109 = vmatprep.subr.mxu0 0.0
        %2110 = vmatpush1.msra.mxu0 0.0
        %2111 = vmatprep.subr.mxu0 0.0
        %2112 = vmatpush1.msra.mxu0 0.0
        %2113 = vmatprep.mubr.f32.mxu0 0.0
        %2114 = vmatmul.mubr.f32.gmra.mrb[0].mxu0 %v2037
        %v2115 = vpop.f32.mrb[0].mxu0
        %v2116 = vadd.f32 0.0, %v2115
        %v2117 = vpop.f32.mrb[0].mxu0
        %2118 = vdwg.mxu0
        %v2119 = vadd.f32 %v2044, %v2116
        %v2120 = vxor.u32 %v2119, 2147483648
        %v2121 = vmul.f32 %v2120, 1.442695
        %v2122 = vpow.pop %v2121
        %v2123 = vadd.f32 %v2122, 1.0
        %v2124 = vrcp.pop %v2123
        %v2125 = vmul.f32 1.0, %v2124
        %2126 = vmatprep.subr.mxu0 0.0
        %2127 = vmatpush1.msra.mxu0 %v1017
        %2128 = vmatprep.subr.mxu0 0.0
        %2129 = vmatpush1.msra.mxu0 %v1018
        %2130 = vmatprep.subr.mxu0 0.0
        %2131 = vmatpush1.msra.mxu0 %v1019
        %2132 = vmatprep.subr.mxu0 0.0
        %2133 = vmatpush1.msra.mxu0 %v1020
        %2134 = vmatprep.subr.mxu0 0.0
        %2135 = vmatpush1.msra.mxu0 %v1021
        %2136 = vmatprep.subr.mxu0 0.0
        %2137 = vmatpush1.msra.mxu0 %v1022
        %2138 = vmatprep.subr.mxu0 0.0
        %2139 = vmatpush1.msra.mxu0 %v1023
        %2140 = vmatprep.subr.mxu0 0.0
        %2141 = vmatpush1.msra.mxu0 %v1024
        %2142 = vmatprep.subr.mxu0 0.0
        %2143 = vmatpush1.msra.mxu0 %v1025
        %2144 = vmatprep.subr.mxu0 0.0
        %2145 = vmatpush1.msra.mxu0 %v1026
        %2146 = vmatprep.subr.mxu0 0.0
        %2147 = vmatpush1.msra.mxu0 %v1027
        %2148 = vmatprep.subr.mxu0 0.0
        %2149 = vmatpush1.msra.mxu0 %v1028
        %2150 = vmatprep.subr.mxu0 0.0
        %2151 = vmatpush1.msra.mxu0 %v1029
        %2152 = vmatprep.subr.mxu0 0.0
        %2153 = vmatpush1.msra.mxu0 %v1030
        %2154 = vmatprep.subr.mxu0 0.0
        %2155 = vmatpush1.msra.mxu0 %v1031
        %2156 = vmatprep.subr.mxu0 0.0
        %2157 = vmatpush1.msra.mxu0 %v1032
        %2158 = vmatprep.subr.mxu0 0.0
        %2159 = vmatpush1.msra.mxu0 0.0
        %2160 = vmatprep.subr.mxu0 0.0
        %2161 = vmatpush1.msra.mxu0 0.0
        %2162 = vmatprep.subr.mxu0 0.0
        %2163 = vmatpush1.msra.mxu0 0.0
        %2164 = vmatprep.subr.mxu0 0.0
        %2165 = vmatpush1.msra.mxu0 0.0
        %2166 = vmatprep.subr.mxu0 0.0
        %2167 = vmatpush1.msra.mxu0 0.0
        %2168 = vmatprep.subr.mxu0 0.0
        %2169 = vmatpush1.msra.mxu0 0.0
        %2170 = vmatprep.subr.mxu0 0.0
        %2171 = vmatpush1.msra.mxu0 0.0
        %2172 = vmatprep.subr.mxu0 0.0
        %2173 = vmatpush1.msra.mxu0 0.0
        %2174 = vmatprep.subr.mxu0 0.0
        %2175 = vmatpush1.msra.mxu0 0.0
        %2176 = vmatprep.subr.mxu0 0.0
        %2177 = vmatpush1.msra.mxu0 0.0
        %2178 = vmatprep.subr.mxu0 0.0
        %2179 = vmatpush1.msra.mxu0 0.0
        %2180 = vmatprep.subr.mxu0 0.0
        %2181 = vmatpush1.msra.mxu0 0.0
        %2182 = vmatprep.subr.mxu0 0.0
        %2183 = vmatpush1.msra.mxu0 0.0
        %2184 = vmatprep.subr.mxu0 0.0
        %2185 = vmatpush1.msra.mxu0 0.0
        %2186 = vmatprep.subr.mxu0 0.0
        %2187 = vmatpush1.msra.mxu0 0.0
        %2188 = vmatprep.subr.mxu0 0.0
        %2189 = vmatpush1.msra.mxu0 0.0
        %2190 = vmatprep.mubr.f32.mxu0 0.0
        %2191 = vmatmul.mubr.f32.gmra.mrb[0].mxu0 %v2037
        %v2192 = vpop.f32.mrb[0].mxu0
        %v2193 = vadd.f32 0.0, %v2192
        %v2194 = vpop.f32.mrb[0].mxu0
        %2195 = vdwg.mxu0
        %v2196 = vadd.f32 %v2046, %v2193
        %v2197 = vxor.u32 %v2196, 2147483648
        %v2198 = vmul.f32 %v2197, 1.442695
        %v2199 = vpow.pop %v2198
        %v2200 = vadd.f32 %v2199, 1.0
        %v2201 = vrcp.pop %v2200
        %v2202 = vmul.f32 1.0, %v2201
        %2203 = vmatprep.subr.mxu0 0.0
        %2204 = vmatpush1.msra.mxu0 %v1034
        %2205 = vmatprep.subr.mxu0 0.0
        %2206 = vmatpush1.msra.mxu0 %v1035
        %2207 = vmatprep.subr.mxu0 0.0
        %2208 = vmatpush1.msra.mxu0 %v1036
        %2209 = vmatprep.subr.mxu0 0.0
        %2210 = vmatpush1.msra.mxu0 %v1037
        %2211 = vmatprep.subr.mxu0 0.0
        %2212 = vmatpush1.msra.mxu0 %v1038
        %2213 = vmatprep.subr.mxu0 0.0
        %2214 = vmatpush1.msra.mxu0 %v1039
        %2215 = vmatprep.subr.mxu0 0.0
        %2216 = vmatpush1.msra.mxu0 %v1040
        %2217 = vmatprep.subr.mxu0 0.0
        %2218 = vmatpush1.msra.mxu0 %v1041
        %2219 = vmatprep.subr.mxu0 0.0
        %2220 = vmatpush1.msra.mxu0 %v1042
        %2221 = vmatprep.subr.mxu0 0.0
        %2222 = vmatpush1.msra.mxu0 %v1043
        %2223 = vmatprep.subr.mxu0 0.0
        %2224 = vmatpush1.msra.mxu0 %v1044
        %2225 = vmatprep.subr.mxu0 0.0
        %2226 = vmatpush1.msra.mxu0 %v1045
        %2227 = vmatprep.subr.mxu0 0.0
        %2228 = vmatpush1.msra.mxu0 %v1046
        %2229 = vmatprep.subr.mxu0 0.0
        %2230 = vmatpush1.msra.mxu0 %v1047
        %2231 = vmatprep.subr.mxu0 0.0
        %2232 = vmatpush1.msra.mxu0 %v1048
        %2233 = vmatprep.subr.mxu0 0.0
        %2234 = vmatpush1.msra.mxu0 %v1049
        %2235 = vmatprep.subr.mxu0 0.0
        %2236 = vmatpush1.msra.mxu0 0.0
        %2237 = vmatprep.subr.mxu0 0.0
        %2238 = vmatpush1.msra.mxu0 0.0
        %2239 = vmatprep.subr.mxu0 0.0
        %2240 = vmatpush1.msra.mxu0 0.0
        %2241 = vmatprep.subr.mxu0 0.0
        %2242 = vmatpush1.msra.mxu0 0.0
        %2243 = vmatprep.subr.mxu0 0.0
        %2244 = vmatpush1.msra.mxu0 0.0
        %2245 = vmatprep.subr.mxu0 0.0
        %2246 = vmatpush1.msra.mxu0 0.0
        %2247 = vmatprep.subr.mxu0 0.0
        %2248 = vmatpush1.msra.mxu0 0.0
        %2249 = vmatprep.subr.mxu0 0.0
        %2250 = vmatpush1.msra.mxu0 0.0
        %2251 = vmatprep.subr.mxu0 0.0
        %2252 = vmatpush1.msra.mxu0 0.0
        %2253 = vmatprep.subr.mxu0 0.0
        %2254 = vmatpush1.msra.mxu0 0.0
        %2255 = vmatprep.subr.mxu0 0.0
        %2256 = vmatpush1.msra.mxu0 0.0
        %2257 = vmatprep.subr.mxu0 0.0
        %2258 = vmatpush1.msra.mxu0 0.0
        %2259 = vmatprep.subr.mxu0 0.0
        %2260 = vmatpush1.msra.mxu0 0.0
        %2261 = vmatprep.subr.mxu0 0.0
        %2262 = vmatpush1.msra.mxu0 0.0
        %2263 = vmatprep.subr.mxu0 0.0
        %2264 = vmatpush1.msra.mxu0 0.0
        %2265 = vmatprep.subr.mxu0 0.0
        %2266 = vmatpush1.msra.mxu0 0.0
        %2267 = vmatprep.mubr.f32.mxu0 0.0
        %2268 = vmatmul.mubr.f32.gmra.mrb[0].mxu0 %v2037
        %v2269 = vpop.f32.mrb[0].mxu0
        %v2270 = vadd.f32 %v1060, %v2269
        %v2271 = vpop.f32.mrb[0].mxu0
        %2272 = vdwg.mxu0
        %v2273 = vmul.f32 %v2125, %v2270
        %v2274 = vadd.f32 %v2048, %v2273
        %v2275 = vtanh.pop %v2274
        %v2276 = vsub.f32 1.0, %v2202
        %v2277 = vmul.f32 %v2276, %v2275
        %v2278 = vmul.f32 %v2202, %v2037
        %v2279 = vadd.f32 %v2277, %v2278
        %v2280 = vstv %s2041
        %vm2281 = vcmp.lt.s32.totalorder %v2280, %v1053
        %v2282 = vsel %vm2281, %v2279, %v2037
        %v2283 = vsel %vm2281, %v2279, 0.0
        %s2284 = scalar_lea.vmem %s388, %s2042
        %2285 = vst [vmem:[%s2284] sm:$0xff] %v2283
        %s2286 = scalar_select %p389, 6, 5
        %s2287 = smul.u32 %s2286, 8
        %s2288 = scalar_lea.vmem [#allocation2], %s2287
        %v2289 = vld [vmem:[%s2288] sm:$0xff]
        %s2290 = scalar_lea.vmem [#allocation3], %s2287
        %v2291 = vld [vmem:[%s2290] sm:$0xff]
        %s2292 = scalar_lea.vmem [#allocation4], %s2287
        %v2293 = vld [vmem:[%s2292] sm:$0xff]
        %2294 = vmatprep.subr.mxu0 0.0
        %2295 = vmatpush1.msra.mxu0 %v1000
        %2296 = vmatprep.subr.mxu0 0.0
        %2297 = vmatpush1.msra.mxu0 %v1001
        %2298 = vmatprep.subr.mxu0 0.0
        %2299 = vmatpush1.msra.mxu0 %v1002
        %2300 = vmatprep.subr.mxu0 0.0
        %2301 = vmatpush1.msra.mxu0 %v1003
        %2302 = vmatprep.subr.mxu0 0.0
        %2303 = vmatpush1.msra.mxu0 %v1004
        %2304 = vmatprep.subr.mxu0 0.0
        %2305 = vmatpush1.msra.mxu0 %v1005
        %2306 = vmatprep.subr.mxu0 0.0
        %2307 = vmatpush1.msra.mxu0 %v1006
        %2308 = vmatprep.subr.mxu0 0.0
        %2309 = vmatpush1.msra.mxu0 %v1007
        %2310 = vmatprep.subr.mxu0 0.0
        %2311 = vmatpush1.msra.mxu0 %v1008
        %2312 = vmatprep.subr.mxu0 0.0
        %2313 = vmatpush1.msra.mxu0 %v1009
        %2314 = vmatprep.subr.mxu0 0.0
        %2315 = vmatpush1.msra.mxu0 %v1010
        %2316 = vmatprep.subr.mxu0 0.0
        %2317 = vmatpush1.msra.mxu0 %v1011
        %2318 = vmatprep.subr.mxu0 0.0
        %2319 = vmatpush1.msra.mxu0 %v1012
        %2320 = vmatprep.subr.mxu0 0.0
        %2321 = vmatpush1.msra.mxu0 %v1013
        %2322 = vmatprep.subr.mxu0 0.0
        %2323 = vmatpush1.msra.mxu0 %v1014
        %2324 = vmatprep.subr.mxu0 0.0
        %2325 = vmatpush1.msra.mxu0 %v1015
        %2326 = vmatprep.subr.mxu0 0.0
        %2327 = vmatpush1.msra.mxu0 0.0
        %2328 = vmatprep.subr.mxu0 0.0
        %2329 = vmatpush1.msra.mxu0 0.0
        %2330 = vmatprep.subr.mxu0 0.0
        %2331 = vmatpush1.msra.mxu0 0.0
        %2332 = vmatprep.subr.mxu0 0.0
        %2333 = vmatpush1.msra.mxu0 0.0
        %2334 = vmatprep.subr.mxu0 0.0
        %2335 = vmatpush1.msra.mxu0 0.0
        %2336 = vmatprep.subr.mxu0 0.0
        %2337 = vmatpush1.msra.mxu0 0.0
        %2338 = vmatprep.subr.mxu0 0.0
        %2339 = vmatpush1.msra.mxu0 0.0
        %2340 = vmatprep.subr.mxu0 0.0
        %2341 = vmatpush1.msra.mxu0 0.0
        %2342 = vmatprep.subr.mxu0 0.0
        %2343 = vmatpush1.msra.mxu0 0.0
        %2344 = vmatprep.subr.mxu0 0.0
        %2345 = vmatpush1.msra.mxu0 0.0
        %2346 = vmatprep.subr.mxu0 0.0
        %2347 = vmatpush1.msra.mxu0 0.0
        %2348 = vmatprep.subr.mxu0 0.0
        %2349 = vmatpush1.msra.mxu0 0.0
        %2350 = vmatprep.subr.mxu0 0.0
        %2351 = vmatpush1.msra.mxu0 0.0
        %2352 = vmatprep.subr.mxu0 0.0
        %2353 = vmatpush1.msra.mxu0 0.0
        %2354 = vmatprep.subr.mxu0 0.0
        %2355 = vmatpush1.msra.mxu0 0.0
        %2356 = vmatprep.subr.mxu0 0.0
        %2357 = vmatpush1.msra.mxu0 0.0
        %2358 = vmatprep.mubr.f32.mxu0 0.0
        %2359 = vmatmul.mubr.f32.gmra.mrb[0].mxu0 %v2282
        %v2360 = vpop.f32.mrb[0].mxu0
        %v2361 = vadd.f32 0.0, %v2360
        %v2362 = vpop.f32.mrb[0].mxu0
        %2363 = vdwg.mxu0
        %v2364 = vadd.f32 %v2289, %v2361
        %v2365 = vxor.u32 %v2364, 2147483648
        %v2366 = vmul.f32 %v2365, 1.442695
        %v2367 = vpow.pop %v2366
        %v2368 = vadd.f32 %v2367, 1.0
        %v2369 = vrcp.pop %v2368
        %v2370 = vmul.f32 1.0, %v2369
        %2371 = vmatprep.subr.mxu0 0.0
        %2372 = vmatpush1.msra.mxu0 %v1017
        %2373 = vmatprep.subr.mxu0 0.0
        %2374 = vmatpush1.msra.mxu0 %v1018
        %2375 = vmatprep.subr.mxu0 0.0
        %2376 = vmatpush1.msra.mxu0 %v1019
        %2377 = vmatprep.subr.mxu0 0.0
        %2378 = vmatpush1.msra.mxu0 %v1020
        %2379 = vmatprep.subr.mxu0 0.0
        %2380 = vmatpush1.msra.mxu0 %v1021
        %2381 = vmatprep.subr.mxu0 0.0
        %2382 = vmatpush1.msra.mxu0 %v1022
        %2383 = vmatprep.subr.mxu0 0.0
        %2384 = vmatpush1.msra.mxu0 %v1023
        %2385 = vmatprep.subr.mxu0 0.0
        %2386 = vmatpush1.msra.mxu0 %v1024
        %2387 = vmatprep.subr.mxu0 0.0
        %2388 = vmatpush1.msra.mxu0 %v1025
        %2389 = vmatprep.subr.mxu0 0.0
        %2390 = vmatpush1.msra.mxu0 %v1026
        %2391 = vmatprep.subr.mxu0 0.0
        %2392 = vmatpush1.msra.mxu0 %v1027
        %2393 = vmatprep.subr.mxu0 0.0
        %2394 = vmatpush1.msra.mxu0 %v1028
        %2395 = vmatprep.subr.mxu0 0.0
        %2396 = vmatpush1.msra.mxu0 %v1029
        %2397 = vmatprep.subr.mxu0 0.0
        %2398 = vmatpush1.msra.mxu0 %v1030
        %2399 = vmatprep.subr.mxu0 0.0
        %2400 = vmatpush1.msra.mxu0 %v1031
        %2401 = vmatprep.subr.mxu0 0.0
        %2402 = vmatpush1.msra.mxu0 %v1032
        %2403 = vmatprep.subr.mxu0 0.0
        %2404 = vmatpush1.msra.mxu0 0.0
        %2405 = vmatprep.subr.mxu0 0.0
        %2406 = vmatpush1.msra.mxu0 0.0
        %2407 = vmatprep.subr.mxu0 0.0
        %2408 = vmatpush1.msra.mxu0 0.0
        %2409 = vmatprep.subr.mxu0 0.0
        %2410 = vmatpush1.msra.mxu0 0.0
        %2411 = vmatprep.subr.mxu0 0.0
        %2412 = vmatpush1.msra.mxu0 0.0
        %2413 = vmatprep.subr.mxu0 0.0
        %2414 = vmatpush1.msra.mxu0 0.0
        %2415 = vmatprep.subr.mxu0 0.0
        %2416 = vmatpush1.msra.mxu0 0.0
        %2417 = vmatprep.subr.mxu0 0.0
        %2418 = vmatpush1.msra.mxu0 0.0
        %2419 = vmatprep.subr.mxu0 0.0
        %2420 = vmatpush1.msra.mxu0 0.0
        %2421 = vmatprep.subr.mxu0 0.0
        %2422 = vmatpush1.msra.mxu0 0.0
        %2423 = vmatprep.subr.mxu0 0.0
        %2424 = vmatpush1.msra.mxu0 0.0
        %2425 = vmatprep.subr.mxu0 0.0
        %2426 = vmatpush1.msra.mxu0 0.0
        %2427 = vmatprep.subr.mxu0 0.0
        %2428 = vmatpush1.msra.mxu0 0.0
        %2429 = vmatprep.subr.mxu0 0.0
        %2430 = vmatpush1.msra.mxu0 0.0
        %2431 = vmatprep.subr.mxu0 0.0
        %2432 = vmatpush1.msra.mxu0 0.0
        %2433 = vmatprep.subr.mxu0 0.0
        %2434 = vmatpush1.msra.mxu0 0.0
        %2435 = vmatprep.mubr.f32.mxu0 0.0
        %2436 = vmatmul.mubr.f32.gmra.mrb[0].mxu0 %v2282
        %v2437 = vpop.f32.mrb[0].mxu0
        %v2438 = vadd.f32 0.0, %v2437
        %v2439 = vpop.f32.mrb[0].mxu0
        %2440 = vdwg.mxu0
        %v2441 = vadd.f32 %v2291, %v2438
        %v2442 = vxor.u32 %v2441, 2147483648
        %v2443 = vmul.f32 %v2442, 1.442695
        %v2444 = vpow.pop %v2443
        %v2445 = vadd.f32 %v2444, 1.0
        %v2446 = vrcp.pop %v2445
        %v2447 = vmul.f32 1.0, %v2446
        %2448 = vmatprep.subr.mxu0 0.0
        %2449 = vmatpush1.msra.mxu0 %v1034
        %2450 = vmatprep.subr.mxu0 0.0
        %2451 = vmatpush1.msra.mxu0 %v1035
        %2452 = vmatprep.subr.mxu0 0.0
        %2453 = vmatpush1.msra.mxu0 %v1036
        %2454 = vmatprep.subr.mxu0 0.0
        %2455 = vmatpush1.msra.mxu0 %v1037
        %2456 = vmatprep.subr.mxu0 0.0
        %2457 = vmatpush1.msra.mxu0 %v1038
        %2458 = vmatprep.subr.mxu0 0.0
        %2459 = vmatpush1.msra.mxu0 %v1039
        %2460 = vmatprep.subr.mxu0 0.0
        %2461 = vmatpush1.msra.mxu0 %v1040
        %2462 = vmatprep.subr.mxu0 0.0
        %2463 = vmatpush1.msra.mxu0 %v1041
        %2464 = vmatprep.subr.mxu0 0.0
        %2465 = vmatpush1.msra.mxu0 %v1042
        %2466 = vmatprep.subr.mxu0 0.0
        %2467 = vmatpush1.msra.mxu0 %v1043
        %2468 = vmatprep.subr.mxu0 0.0
        %2469 = vmatpush1.msra.mxu0 %v1044
        %2470 = vmatprep.subr.mxu0 0.0
        %2471 = vmatpush1.msra.mxu0 %v1045
        %2472 = vmatprep.subr.mxu0 0.0
        %2473 = vmatpush1.msra.mxu0 %v1046
        %2474 = vmatprep.subr.mxu0 0.0
        %2475 = vmatpush1.msra.mxu0 %v1047
        %2476 = vmatprep.subr.mxu0 0.0
        %2477 = vmatpush1.msra.mxu0 %v1048
        %2478 = vmatprep.subr.mxu0 0.0
        %2479 = vmatpush1.msra.mxu0 %v1049
        %2480 = vmatprep.subr.mxu0 0.0
        %2481 = vmatpush1.msra.mxu0 0.0
        %2482 = vmatprep.subr.mxu0 0.0
        %2483 = vmatpush1.msra.mxu0 0.0
        %2484 = vmatprep.subr.mxu0 0.0
        %2485 = vmatpush1.msra.mxu0 0.0
        %2486 = vmatprep.subr.mxu0 0.0
        %2487 = vmatpush1.msra.mxu0 0.0
        %2488 = vmatprep.subr.mxu0 0.0
        %2489 = vmatpush1.msra.mxu0 0.0
        %2490 = vmatprep.subr.mxu0 0.0
        %2491 = vmatpush1.msra.mxu0 0.0
        %2492 = vmatprep.subr.mxu0 0.0
        %2493 = vmatpush1.msra.mxu0 0.0
        %2494 = vmatprep.subr.mxu0 0.0
        %2495 = vmatpush1.msra.mxu0 0.0
        %2496 = vmatprep.subr.mxu0 0.0
        %2497 = vmatpush1.msra.mxu0 0.0
        %2498 = vmatprep.subr.mxu0 0.0
        %2499 = vmatpush1.msra.mxu0 0.0
        %2500 = vmatprep.subr.mxu0 0.0
        %2501 = vmatpush1.msra.mxu0 0.0
        %2502 = vmatprep.subr.mxu0 0.0
        %2503 = vmatpush1.msra.mxu0 0.0
        %2504 = vmatprep.subr.mxu0 0.0
        %2505 = vmatpush1.msra.mxu0 0.0
        %2506 = vmatprep.subr.mxu0 0.0
        %2507 = vmatpush1.msra.mxu0 0.0
        %2508 = vmatprep.subr.mxu0 0.0
        %2509 = vmatpush1.msra.mxu0 0.0
        %2510 = vmatprep.subr.mxu0 0.0
        %2511 = vmatpush1.msra.mxu0 0.0
        %2512 = vmatprep.mubr.f32.mxu0 0.0
        %2513 = vmatmul.mubr.f32.gmra.mrb[0].mxu0 %v2282
        %v2514 = vpop.f32.mrb[0].mxu0
        %v2515 = vadd.f32 %v1060, %v2514
        %v2516 = vpop.f32.mrb[0].mxu0
        %2517 = vdwg.mxu0
        %v2518 = vmul.f32 %v2370, %v2515
        %v2519 = vadd.f32 %v2293, %v2518
        %v2520 = vtanh.pop %v2519
        %v2521 = vsub.f32 1.0, %v2447
        %v2522 = vmul.f32 %v2521, %v2520
        %v2523 = vmul.f32 %v2447, %v2282
        %v2524 = vadd.f32 %v2522, %v2523
        %v2525 = vstv %s2286
        %vm2526 = vcmp.lt.s32.totalorder %v2525, %v1053
        %v2527 = vsel %vm2526, %v2524, %v2282
        %v2528 = vsel %vm2526, %v2524, 0.0
        %s2529 = scalar_lea.vmem %s388, %s2287
        %2530 = vst [vmem:[%s2529] sm:$0xff] %v2528
        %s2531 = scalar_select %p389, 5, 6
        %s2532 = smul.u32 %s2531, 8
        %s2533 = scalar_lea.vmem [#allocation2], %s2532
        %v2534 = vld [vmem:[%s2533] sm:$0xff]
        %s2535 = scalar_lea.vmem [#allocation3], %s2532
        %v2536 = vld [vmem:[%s2535] sm:$0xff]
        %s2537 = scalar_lea.vmem [#allocation4], %s2532
        %v2538 = vld [vmem:[%s2537] sm:$0xff]
        %2539 = vmatprep.subr.mxu0 0.0
        %2540 = vmatpush1.msra.mxu0 %v1000
        %2541 = vmatprep.subr.mxu0 0.0
        %2542 = vmatpush1.msra.mxu0 %v1001
        %2543 = vmatprep.subr.mxu0 0.0
        %2544 = vmatpush1.msra.mxu0 %v1002
        %2545 = vmatprep.subr.mxu0 0.0
        %2546 = vmatpush1.msra.mxu0 %v1003
        %2547 = vmatprep.subr.mxu0 0.0
        %2548 = vmatpush1.msra.mxu0 %v1004
        %2549 = vmatprep.subr.mxu0 0.0
        %2550 = vmatpush1.msra.mxu0 %v1005
        %2551 = vmatprep.subr.mxu0 0.0
        %2552 = vmatpush1.msra.mxu0 %v1006
        %2553 = vmatprep.subr.mxu0 0.0
        %2554 = vmatpush1.msra.mxu0 %v1007
        %2555 = vmatprep.subr.mxu0 0.0
        %2556 = vmatpush1.msra.mxu0 %v1008
        %2557 = vmatprep.subr.mxu0 0.0
        %2558 = vmatpush1.msra.mxu0 %v1009
        %2559 = vmatprep.subr.mxu0 0.0
        %2560 = vmatpush1.msra.mxu0 %v1010
        %2561 = vmatprep.subr.mxu0 0.0
        %2562 = vmatpush1.msra.mxu0 %v1011
        %2563 = vmatprep.subr.mxu0 0.0
        %2564 = vmatpush1.msra.mxu0 %v1012
        %2565 = vmatprep.subr.mxu0 0.0
        %2566 = vmatpush1.msra.mxu0 %v1013
        %2567 = vmatprep.subr.mxu0 0.0
        %2568 = vmatpush1.msra.mxu0 %v1014
        %2569 = vmatprep.subr.mxu0 0.0
        %2570 = vmatpush1.msra.mxu0 %v1015
        %2571 = vmatprep.subr.mxu0 0.0
        %2572 = vmatpush1.msra.mxu0 0.0
        %2573 = vmatprep.subr.mxu0 0.0
        %2574 = vmatpush1.msra.mxu0 0.0
        %2575 = vmatprep.subr.mxu0 0.0
        %2576 = vmatpush1.msra.mxu0 0.0
        %2577 = vmatprep.subr.mxu0 0.0
        %2578 = vmatpush1.msra.mxu0 0.0
        %2579 = vmatprep.subr.mxu0 0.0
        %2580 = vmatpush1.msra.mxu0 0.0
        %2581 = vmatprep.subr.mxu0 0.0
        %2582 = vmatpush1.msra.mxu0 0.0
        %2583 = vmatprep.subr.mxu0 0.0
        %2584 = vmatpush1.msra.mxu0 0.0
        %2585 = vmatprep.subr.mxu0 0.0
        %2586 = vmatpush1.msra.mxu0 0.0
        %2587 = vmatprep.subr.mxu0 0.0
        %2588 = vmatpush1.msra.mxu0 0.0
        %2589 = vmatprep.subr.mxu0 0.0
        %2590 = vmatpush1.msra.mxu0 0.0
        %2591 = vmatprep.subr.mxu0 0.0
        %2592 = vmatpush1.msra.mxu0 0.0
        %2593 = vmatprep.subr.mxu0 0.0
        %2594 = vmatpush1.msra.mxu0 0.0
        %2595 = vmatprep.subr.mxu0 0.0
        %2596 = vmatpush1.msra.mxu0 0.0
        %2597 = vmatprep.subr.mxu0 0.0
        %2598 = vmatpush1.msra.mxu0 0.0
        %2599 = vmatprep.subr.mxu0 0.0
        %2600 = vmatpush1.msra.mxu0 0.0
        %2601 = vmatprep.subr.mxu0 0.0
        %2602 = vmatpush1.msra.mxu0 0.0
        %2603 = vmatprep.mubr.f32.mxu0 0.0
        %2604 = vmatmul.mubr.f32.gmra.mrb[0].mxu0 %v2527
        %v2605 = vpop.f32.mrb[0].mxu0
        %v2606 = vadd.f32 0.0, %v2605
        %v2607 = vpop.f32.mrb[0].mxu0
        %2608 = vdwg.mxu0
        %v2609 = vadd.f32 %v2534, %v2606
        %v2610 = vxor.u32 %v2609, 2147483648
        %v2611 = vmul.f32 %v2610, 1.442695
        %v2612 = vpow.pop %v2611
        %v2613 = vadd.f32 %v2612, 1.0
        %v2614 = vrcp.pop %v2613
        %v2615 = vmul.f32 1.0, %v2614
        %2616 = vmatprep.subr.mxu0 0.0
        %2617 = vmatpush1.msra.mxu0 %v1017
        %2618 = vmatprep.subr.mxu0 0.0
        %2619 = vmatpush1.msra.mxu0 %v1018
        %2620 = vmatprep.subr.mxu0 0.0
        %2621 = vmatpush1.msra.mxu0 %v1019
        %2622 = vmatprep.subr.mxu0 0.0
        %2623 = vmatpush1.msra.mxu0 %v1020
        %2624 = vmatprep.subr.mxu0 0.0
        %2625 = vmatpush1.msra.mxu0 %v1021
        %2626 = vmatprep.subr.mxu0 0.0
        %2627 = vmatpush1.msra.mxu0 %v1022
        %2628 = vmatprep.subr.mxu0 0.0
        %2629 = vmatpush1.msra.mxu0 %v1023
        %2630 = vmatprep.subr.mxu0 0.0
        %2631 = vmatpush1.msra.mxu0 %v1024
        %2632 = vmatprep.subr.mxu0 0.0
        %2633 = vmatpush1.msra.mxu0 %v1025
        %2634 = vmatprep.subr.mxu0 0.0
        %2635 = vmatpush1.msra.mxu0 %v1026
        %2636 = vmatprep.subr.mxu0 0.0
        %2637 = vmatpush1.msra.mxu0 %v1027
        %2638 = vmatprep.subr.mxu0 0.0
        %2639 = vmatpush1.msra.mxu0 %v1028
        %2640 = vmatprep.subr.mxu0 0.0
        %2641 = vmatpush1.msra.mxu0 %v1029
        %2642 = vmatprep.subr.mxu0 0.0
        %2643 = vmatpush1.msra.mxu0 %v1030
        %2644 = vmatprep.subr.mxu0 0.0
        %2645 = vmatpush1.msra.mxu0 %v1031
        %2646 = vmatprep.subr.mxu0 0.0
        %2647 = vmatpush1.msra.mxu0 %v1032
        %2648 = vmatprep.subr.mxu0 0.0
        %2649 = vmatpush1.msra.mxu0 0.0
        %2650 = vmatprep.subr.mxu0 0.0
        %2651 = vmatpush1.msra.mxu0 0.0
        %2652 = vmatprep.subr.mxu0 0.0
        %2653 = vmatpush1.msra.mxu0 0.0
        %2654 = vmatprep.subr.mxu0 0.0
        %2655 = vmatpush1.msra.mxu0 0.0
        %2656 = vmatprep.subr.mxu0 0.0
        %2657 = vmatpush1.msra.mxu0 0.0
        %2658 = vmatprep.subr.mxu0 0.0
        %2659 = vmatpush1.msra.mxu0 0.0
        %2660 = vmatprep.subr.mxu0 0.0
        %2661 = vmatpush1.msra.mxu0 0.0
        %2662 = vmatprep.subr.mxu0 0.0
        %2663 = vmatpush1.msra.mxu0 0.0
        %2664 = vmatprep.subr.mxu0 0.0
        %2665 = vmatpush1.msra.mxu0 0.0
        %2666 = vmatprep.subr.mxu0 0.0
        %2667 = vmatpush1.msra.mxu0 0.0
        %2668 = vmatprep.subr.mxu0 0.0
        %2669 = vmatpush1.msra.mxu0 0.0
        %2670 = vmatprep.subr.mxu0 0.0
        %2671 = vmatpush1.msra.mxu0 0.0
        %2672 = vmatprep.subr.mxu0 0.0
        %2673 = vmatpush1.msra.mxu0 0.0
        %2674 = vmatprep.subr.mxu0 0.0
        %2675 = vmatpush1.msra.mxu0 0.0
        %2676 = vmatprep.subr.mxu0 0.0
        %2677 = vmatpush1.msra.mxu0 0.0
        %2678 = vmatprep.subr.mxu0 0.0
        %2679 = vmatpush1.msra.mxu0 0.0
        %2680 = vmatprep.mubr.f32.mxu0 0.0
        %2681 = vmatmul.mubr.f32.gmra.mrb[0].mxu0 %v2527
        %v2682 = vpop.f32.mrb[0].mxu0
        %v2683 = vadd.f32 0.0, %v2682
        %v2684 = vpop.f32.mrb[0].mxu0
        %2685 = vdwg.mxu0
        %v2686 = vadd.f32 %v2536, %v2683
        %v2687 = vxor.u32 %v2686, 2147483648
        %v2688 = vmul.f32 %v2687, 1.442695
        %v2689 = vpow.pop %v2688
        %v2690 = vadd.f32 %v2689, 1.0
        %v2691 = vrcp.pop %v2690
        %v2692 = vmul.f32 1.0, %v2691
        %2693 = vmatprep.subr.mxu0 0.0
        %2694 = vmatpush1.msra.mxu0 %v1034
        %2695 = vmatprep.subr.mxu0 0.0
        %2696 = vmatpush1.msra.mxu0 %v1035
        %2697 = vmatprep.subr.mxu0 0.0
        %2698 = vmatpush1.msra.mxu0 %v1036
        %2699 = vmatprep.subr.mxu0 0.0
        %2700 = vmatpush1.msra.mxu0 %v1037
        %2701 = vmatprep.subr.mxu0 0.0
        %2702 = vmatpush1.msra.mxu0 %v1038
        %2703 = vmatprep.subr.mxu0 0.0
        %2704 = vmatpush1.msra.mxu0 %v1039
        %2705 = vmatprep.subr.mxu0 0.0
        %2706 = vmatpush1.msra.mxu0 %v1040
        %2707 = vmatprep.subr.mxu0 0.0
        %2708 = vmatpush1.msra.mxu0 %v1041
        %2709 = vmatprep.subr.mxu0 0.0
        %2710 = vmatpush1.msra.mxu0 %v1042
        %2711 = vmatprep.subr.mxu0 0.0
        %2712 = vmatpush1.msra.mxu0 %v1043
        %2713 = vmatprep.subr.mxu0 0.0
        %2714 = vmatpush1.msra.mxu0 %v1044
        %2715 = vmatprep.subr.mxu0 0.0
        %2716 = vmatpush1.msra.mxu0 %v1045
        %2717 = vmatprep.subr.mxu0 0.0
        %2718 = vmatpush1.msra.mxu0 %v1046
        %2719 = vmatprep.subr.mxu0 0.0
        %2720 = vmatpush1.msra.mxu0 %v1047
        %2721 = vmatprep.subr.mxu0 0.0
        %2722 = vmatpush1.msra.mxu0 %v1048
        %2723 = vmatprep.subr.mxu0 0.0
        %2724 = vmatpush1.msra.mxu0 %v1049
        %2725 = vmatprep.subr.mxu0 0.0
        %2726 = vmatpush1.msra.mxu0 0.0
        %2727 = vmatprep.subr.mxu0 0.0
        %2728 = vmatpush1.msra.mxu0 0.0
        %2729 = vmatprep.subr.mxu0 0.0
        %2730 = vmatpush1.msra.mxu0 0.0
        %2731 = vmatprep.subr.mxu0 0.0
        %2732 = vmatpush1.msra.mxu0 0.0
        %2733 = vmatprep.subr.mxu0 0.0
        %2734 = vmatpush1.msra.mxu0 0.0
        %2735 = vmatprep.subr.mxu0 0.0
        %2736 = vmatpush1.msra.mxu0 0.0
        %2737 = vmatprep.subr.mxu0 0.0
        %2738 = vmatpush1.msra.mxu0 0.0
        %2739 = vmatprep.subr.mxu0 0.0
        %2740 = vmatpush1.msra.mxu0 0.0
        %2741 = vmatprep.subr.mxu0 0.0
        %2742 = vmatpush1.msra.mxu0 0.0
        %2743 = vmatprep.subr.mxu0 0.0
        %2744 = vmatpush1.msra.mxu0 0.0
        %2745 = vmatprep.subr.mxu0 0.0
        %2746 = vmatpush1.msra.mxu0 0.0
        %2747 = vmatprep.subr.mxu0 0.0
        %2748 = vmatpush1.msra.mxu0 0.0
        %2749 = vmatprep.subr.mxu0 0.0
        %2750 = vmatpush1.msra.mxu0 0.0
        %2751 = vmatprep.subr.mxu0 0.0
        %2752 = vmatpush1.msra.mxu0 0.0
        %2753 = vmatprep.subr.mxu0 0.0
        %2754 = vmatpush1.msra.mxu0 0.0
        %2755 = vmatprep.subr.mxu0 0.0
        %2756 = vmatpush1.msra.mxu0 0.0
        %2757 = vmatprep.mubr.f32.mxu0 0.0
        %2758 = vmatmul.mubr.f32.gmra.mrb[0].mxu0 %v2527
        %v2759 = vpop.f32.mrb[0].mxu0
        %v2760 = vadd.f32 %v1060, %v2759
        %v2761 = vpop.f32.mrb[0].mxu0
        %2762 = vdwg.mxu0
        %v2763 = vmul.f32 %v2615, %v2760
        %v2764 = vadd.f32 %v2538, %v2763
        %v2765 = vtanh.pop %v2764
        %v2766 = vsub.f32 1.0, %v2692
        %v2767 = vmul.f32 %v2766, %v2765
        %v2768 = vmul.f32 %v2692, %v2527
        %v2769 = vadd.f32 %v2767, %v2768
        %v2770 = vstv %s2531
        %vm2771 = vcmp.lt.s32.totalorder %v2770, %v1053
        %v2772 = vsel %vm2771, %v2769, %v2527
        %v2773 = vsel %vm2771, %v2769, 0.0
        %s2774 = scalar_lea.vmem %s388, %s2532
        %2775 = vst [vmem:[%s2774] sm:$0xff] %v2773
        %s2776 = scalar_select %p389, 4, 7
        %s2777 = smul.u32 %s2776, 8
        %s2778 = scalar_lea.vmem [#allocation2], %s2777
        %v2779 = vld [vmem:[%s2778] sm:$0xff]
        %s2780 = scalar_lea.vmem [#allocation3], %s2777
        %v2781 = vld [vmem:[%s2780] sm:$0xff]
        %s2782 = scalar_lea.vmem [#allocation4], %s2777
        %v2783 = vld [vmem:[%s2782] sm:$0xff]
        %2784 = vmatprep.subr.mxu0 0.0
        %2785 = vmatpush1.msra.mxu0 %v1000
        %2786 = vmatprep.subr.mxu0 0.0
        %2787 = vmatpush1.msra.mxu0 %v1001
        %2788 = vmatprep.subr.mxu0 0.0
        %2789 = vmatpush1.msra.mxu0 %v1002
        %2790 = vmatprep.subr.mxu0 0.0
        %2791 = vmatpush1.msra.mxu0 %v1003
        %2792 = vmatprep.subr.mxu0 0.0
        %2793 = vmatpush1.msra.mxu0 %v1004
        %2794 = vmatprep.subr.mxu0 0.0
        %2795 = vmatpush1.msra.mxu0 %v1005
        %2796 = vmatprep.subr.mxu0 0.0
        %2797 = vmatpush1.msra.mxu0 %v1006
        %2798 = vmatprep.subr.mxu0 0.0
        %2799 = vmatpush1.msra.mxu0 %v1007
        %2800 = vmatprep.subr.mxu0 0.0
        %2801 = vmatpush1.msra.mxu0 %v1008
        %2802 = vmatprep.subr.mxu0 0.0
        %2803 = vmatpush1.msra.mxu0 %v1009
        %2804 = vmatprep.subr.mxu0 0.0
        %2805 = vmatpush1.msra.mxu0 %v1010
        %2806 = vmatprep.subr.mxu0 0.0
        %2807 = vmatpush1.msra.mxu0 %v1011
        %2808 = vmatprep.subr.mxu0 0.0
        %2809 = vmatpush1.msra.mxu0 %v1012
        %2810 = vmatprep.subr.mxu0 0.0
        %2811 = vmatpush1.msra.mxu0 %v1013
        %2812 = vmatprep.subr.mxu0 0.0
        %2813 = vmatpush1.msra.mxu0 %v1014
        %2814 = vmatprep.subr.mxu0 0.0
        %2815 = vmatpush1.msra.mxu0 %v1015
        %2816 = vmatprep.subr.mxu0 0.0
        %2817 = vmatpush1.msra.mxu0 0.0
        %2818 = vmatprep.subr.mxu0 0.0
        %2819 = vmatpush1.msra.mxu0 0.0
        %2820 = vmatprep.subr.mxu0 0.0
        %2821 = vmatpush1.msra.mxu0 0.0
        %2822 = vmatprep.subr.mxu0 0.0
        %2823 = vmatpush1.msra.mxu0 0.0
        %2824 = vmatprep.subr.mxu0 0.0
        %2825 = vmatpush1.msra.mxu0 0.0
        %2826 = vmatprep.subr.mxu0 0.0
        %2827 = vmatpush1.msra.mxu0 0.0
        %2828 = vmatprep.subr.mxu0 0.0
        %2829 = vmatpush1.msra.mxu0 0.0
        %2830 = vmatprep.subr.mxu0 0.0
        %2831 = vmatpush1.msra.mxu0 0.0
        %2832 = vmatprep.subr.mxu0 0.0
        %2833 = vmatpush1.msra.mxu0 0.0
        %2834 = vmatprep.subr.mxu0 0.0
        %2835 = vmatpush1.msra.mxu0 0.0
        %2836 = vmatprep.subr.mxu0 0.0
        %2837 = vmatpush1.msra.mxu0 0.0
        %2838 = vmatprep.subr.mxu0 0.0
        %2839 = vmatpush1.msra.mxu0 0.0
        %2840 = vmatprep.subr.mxu0 0.0
        %2841 = vmatpush1.msra.mxu0 0.0
        %2842 = vmatprep.subr.mxu0 0.0
        %2843 = vmatpush1.msra.mxu0 0.0
        %2844 = vmatprep.subr.mxu0 0.0
        %2845 = vmatpush1.msra.mxu0 0.0
        %2846 = vmatprep.subr.mxu0 0.0
        %2847 = vmatpush1.msra.mxu0 0.0
        %2848 = vmatprep.mubr.f32.mxu0 0.0
        %2849 = vmatmul.mubr.f32.gmra.mrb[0].mxu0 %v2772
        %v2850 = vpop.f32.mrb[0].mxu0
        %v2851 = vadd.f32 0.0, %v2850
        %v2852 = vpop.f32.mrb[0].mxu0
        %2853 = vdwg.mxu0
        %v2854 = vadd.f32 %v2779, %v2851
        %v2855 = vxor.u32 %v2854, 2147483648
        %v2856 = vmul.f32 %v2855, 1.442695
        %v2857 = vpow.pop %v2856
        %v2858 = vadd.f32 %v2857, 1.0
        %v2859 = vrcp.pop %v2858
        %v2860 = vmul.f32 1.0, %v2859
        %2861 = vmatprep.subr.mxu0 0.0
        %2862 = vmatpush1.msra.mxu0 %v1017
        %2863 = vmatprep.subr.mxu0 0.0
        %2864 = vmatpush1.msra.mxu0 %v1018
        %2865 = vmatprep.subr.mxu0 0.0
        %2866 = vmatpush1.msra.mxu0 %v1019
        %2867 = vmatprep.subr.mxu0 0.0
        %2868 = vmatpush1.msra.mxu0 %v1020
        %2869 = vmatprep.subr.mxu0 0.0
        %2870 = vmatpush1.msra.mxu0 %v1021
        %2871 = vmatprep.subr.mxu0 0.0
        %2872 = vmatpush1.msra.mxu0 %v1022
        %2873 = vmatprep.subr.mxu0 0.0
        %2874 = vmatpush1.msra.mxu0 %v1023
        %2875 = vmatprep.subr.mxu0 0.0
        %2876 = vmatpush1.msra.mxu0 %v1024
        %2877 = vmatprep.subr.mxu0 0.0
        %2878 = vmatpush1.msra.mxu0 %v1025
        %2879 = vmatprep.subr.mxu0 0.0
        %2880 = vmatpush1.msra.mxu0 %v1026
        %2881 = vmatprep.subr.mxu0 0.0
        %2882 = vmatpush1.msra.mxu0 %v1027
        %2883 = vmatprep.subr.mxu0 0.0
        %2884 = vmatpush1.msra.mxu0 %v1028
        %2885 = vmatprep.subr.mxu0 0.0
        %2886 = vmatpush1.msra.mxu0 %v1029
        %2887 = vmatprep.subr.mxu0 0.0
        %2888 = vmatpush1.msra.mxu0 %v1030
        %2889 = vmatprep.subr.mxu0 0.0
        %2890 = vmatpush1.msra.mxu0 %v1031
        %2891 = vmatprep.subr.mxu0 0.0
        %2892 = vmatpush1.msra.mxu0 %v1032
        %2893 = vmatprep.subr.mxu0 0.0
        %2894 = vmatpush1.msra.mxu0 0.0
        %2895 = vmatprep.subr.mxu0 0.0
        %2896 = vmatpush1.msra.mxu0 0.0
        %2897 = vmatprep.subr.mxu0 0.0
        %2898 = vmatpush1.msra.mxu0 0.0
        %2899 = vmatprep.subr.mxu0 0.0
        %2900 = vmatpush1.msra.mxu0 0.0
        %2901 = vmatprep.subr.mxu0 0.0
        %2902 = vmatpush1.msra.mxu0 0.0
        %2903 = vmatprep.subr.mxu0 0.0
        %2904 = vmatpush1.msra.mxu0 0.0
        %2905 = vmatprep.subr.mxu0 0.0
        %2906 = vmatpush1.msra.mxu0 0.0
        %2907 = vmatprep.subr.mxu0 0.0
        %2908 = vmatpush1.msra.mxu0 0.0
        %2909 = vmatprep.subr.mxu0 0.0
        %2910 = vmatpush1.msra.mxu0 0.0
        %2911 = vmatprep.subr.mxu0 0.0
        %2912 = vmatpush1.msra.mxu0 0.0
        %2913 = vmatprep.subr.mxu0 0.0
        %2914 = vmatpush1.msra.mxu0 0.0
        %2915 = vmatprep.subr.mxu0 0.0
        %2916 = vmatpush1.msra.mxu0 0.0
        %2917 = vmatprep.subr.mxu0 0.0
        %2918 = vmatpush1.msra.mxu0 0.0
        %2919 = vmatprep.subr.mxu0 0.0
        %2920 = vmatpush1.msra.mxu0 0.0
        %2921 = vmatprep.subr.mxu0 0.0
        %2922 = vmatpush1.msra.mxu0 0.0
        %2923 = vmatprep.subr.mxu0 0.0
        %2924 = vmatpush1.msra.mxu0 0.0
        %2925 = vmatprep.mubr.f32.mxu0 0.0
        %2926 = vmatmul.mubr.f32.gmra.mrb[0].mxu0 %v2772
        %v2927 = vpop.f32.mrb[0].mxu0
        %v2928 = vadd.f32 0.0, %v2927
        %v2929 = vpop.f32.mrb[0].mxu0
        %2930 = vdwg.mxu0
        %v2931 = vadd.f32 %v2781, %v2928
        %v2932 = vxor.u32 %v2931, 2147483648
        %v2933 = vmul.f32 %v2932, 1.442695
        %v2934 = vpow.pop %v2933
        %v2935 = vadd.f32 %v2934, 1.0
        %v2936 = vrcp.pop %v2935
        %v2937 = vmul.f32 1.0, %v2936
        %2938 = vmatprep.subr.mxu0 0.0
        %2939 = vmatpush1.msra.mxu0 %v1034
        %2940 = vmatprep.subr.mxu0 0.0
        %2941 = vmatpush1.msra.mxu0 %v1035
        %2942 = vmatprep.subr.mxu0 0.0
        %2943 = vmatpush1.msra.mxu0 %v1036
        %2944 = vmatprep.subr.mxu0 0.0
        %2945 = vmatpush1.msra.mxu0 %v1037
        %2946 = vmatprep.subr.mxu0 0.0
        %2947 = vmatpush1.msra.mxu0 %v1038
        %2948 = vmatprep.subr.mxu0 0.0
        %2949 = vmatpush1.msra.mxu0 %v1039
        %2950 = vmatprep.subr.mxu0 0.0
        %2951 = vmatpush1.msra.mxu0 %v1040
        %2952 = vmatprep.subr.mxu0 0.0
        %2953 = vmatpush1.msra.mxu0 %v1041
        %2954 = vmatprep.subr.mxu0 0.0
        %2955 = vmatpush1.msra.mxu0 %v1042
        %2956 = vmatprep.subr.mxu0 0.0
        %2957 = vmatpush1.msra.mxu0 %v1043
        %2958 = vmatprep.subr.mxu0 0.0
        %2959 = vmatpush1.msra.mxu0 %v1044
        %2960 = vmatprep.subr.mxu0 0.0
        %2961 = vmatpush1.msra.mxu0 %v1045
        %2962 = vmatprep.subr.mxu0 0.0
        %2963 = vmatpush1.msra.mxu0 %v1046
        %2964 = vmatprep.subr.mxu0 0.0
        %2965 = vmatpush1.msra.mxu0 %v1047
        %2966 = vmatprep.subr.mxu0 0.0
        %2967 = vmatpush1.msra.mxu0 %v1048
        %2968 = vmatprep.subr.mxu0 0.0
        %2969 = vmatpush1.msra.mxu0 %v1049
        %2970 = vmatprep.subr.mxu0 0.0
        %2971 = vmatpush1.msra.mxu0 0.0
        %2972 = vmatprep.subr.mxu0 0.0
        %2973 = vmatpush1.msra.mxu0 0.0
        %2974 = vmatprep.subr.mxu0 0.0
        %2975 = vmatpush1.msra.mxu0 0.0
        %2976 = vmatprep.subr.mxu0 0.0
        %2977 = vmatpush1.msra.mxu0 0.0
        %2978 = vmatprep.subr.mxu0 0.0
        %2979 = vmatpush1.msra.mxu0 0.0
        %2980 = vmatprep.subr.mxu0 0.0
        %2981 = vmatpush1.msra.mxu0 0.0
        %2982 = vmatprep.subr.mxu0 0.0
        %2983 = vmatpush1.msra.mxu0 0.0
        %2984 = vmatprep.subr.mxu0 0.0
        %2985 = vmatpush1.msra.mxu0 0.0
        %2986 = vmatprep.subr.mxu0 0.0
        %2987 = vmatpush1.msra.mxu0 0.0
        %2988 = vmatprep.subr.mxu0 0.0
        %2989 = vmatpush1.msra.mxu0 0.0
        %2990 = vmatprep.subr.mxu0 0.0
        %2991 = vmatpush1.msra.mxu0 0.0
        %2992 = vmatprep.subr.mxu0 0.0
        %2993 = vmatpush1.msra.mxu0 0.0
        %2994 = vmatprep.subr.mxu0 0.0
        %2995 = vmatpush1.msra.mxu0 0.0
        %2996 = vmatprep.subr.mxu0 0.0
        %2997 = vmatpush1.msra.mxu0 0.0
        %2998 = vmatprep.subr.mxu0 0.0
        %2999 = vmatpush1.msra.mxu0 0.0
        %3000 = vmatprep.subr.mxu0 0.0
        %3001 = vmatpush1.msra.mxu0 0.0
        %3002 = vmatprep.mubr.f32.mxu0 0.0
        %3003 = vmatmul.mubr.f32.gmra.mrb[0].mxu0 %v2772
        %v3004 = vpop.f32.mrb[0].mxu0
        %v3005 = vadd.f32 %v1060, %v3004
        %v3006 = vpop.f32.mrb[0].mxu0
        %3007 = vdwg.mxu0
        %v3008 = vmul.f32 %v2860, %v3005
        %v3009 = vadd.f32 %v2783, %v3008
        %v3010 = vtanh.pop %v3009
        %v3011 = vsub.f32 1.0, %v2937
        %v3012 = vmul.f32 %v3011, %v3010
        %v3013 = vmul.f32 %v2937, %v2772
        %v3014 = vadd.f32 %v3012, %v3013
        %v3015 = vstv %s2776
        %vm3016 = vcmp.lt.s32.totalorder %v3015, %v1053
        %v3017 = vsel %vm3016, %v3014, %v2772
        %v3018 = vsel %vm3016, %v3014, 0.0
        %s3019 = scalar_lea.vmem %s388, %s2777
        %3020 = vst [vmem:[%s3019] sm:$0xff] %v3018
        %s3021 = scalar_select %p389, 3, 8
        %s3022 = smul.u32 %s3021, 8
        %s3023 = scalar_lea.vmem [#allocation2], %s3022
        %v3024 = vld [vmem:[%s3023] sm:$0xff]
        %s3025 = scalar_lea.vmem [#allocation3], %s3022
        %v3026 = vld [vmem:[%s3025] sm:$0xff]
        %s3027 = scalar_lea.vmem [#allocation4], %s3022
        %v3028 = vld [vmem:[%s3027] sm:$0xff]
        %3029 = vmatprep.subr.mxu0 0.0
        %3030 = vmatpush1.msra.mxu0 %v1000
        %3031 = vmatprep.subr.mxu0 0.0
        %3032 = vmatpush1.msra.mxu0 %v1001
        %3033 = vmatprep.subr.mxu0 0.0
        %3034 = vmatpush1.msra.mxu0 %v1002
        %3035 = vmatprep.subr.mxu0 0.0
        %3036 = vmatpush1.msra.mxu0 %v1003
        %3037 = vmatprep.subr.mxu0 0.0
        %3038 = vmatpush1.msra.mxu0 %v1004
        %3039 = vmatprep.subr.mxu0 0.0
        %3040 = vmatpush1.msra.mxu0 %v1005
        %3041 = vmatprep.subr.mxu0 0.0
        %3042 = vmatpush1.msra.mxu0 %v1006
        %3043 = vmatprep.subr.mxu0 0.0
        %3044 = vmatpush1.msra.mxu0 %v1007
        %3045 = vmatprep.subr.mxu0 0.0
        %3046 = vmatpush1.msra.mxu0 %v1008
        %3047 = vmatprep.subr.mxu0 0.0
        %3048 = vmatpush1.msra.mxu0 %v1009
        %3049 = vmatprep.subr.mxu0 0.0
        %3050 = vmatpush1.msra.mxu0 %v1010
        %3051 = vmatprep.subr.mxu0 0.0
        %3052 = vmatpush1.msra.mxu0 %v1011
        %3053 = vmatprep.subr.mxu0 0.0
        %3054 = vmatpush1.msra.mxu0 %v1012
        %3055 = vmatprep.subr.mxu0 0.0
        %3056 = vmatpush1.msra.mxu0 %v1013
        %3057 = vmatprep.subr.mxu0 0.0
        %3058 = vmatpush1.msra.mxu0 %v1014
        %3059 = vmatprep.subr.mxu0 0.0
        %3060 = vmatpush1.msra.mxu0 %v1015
        %3061 = vmatprep.subr.mxu0 0.0
        %3062 = vmatpush1.msra.mxu0 0.0
        %3063 = vmatprep.subr.mxu0 0.0
        %3064 = vmatpush1.msra.mxu0 0.0
        %3065 = vmatprep.subr.mxu0 0.0
        %3066 = vmatpush1.msra.mxu0 0.0
        %3067 = vmatprep.subr.mxu0 0.0
        %3068 = vmatpush1.msra.mxu0 0.0
        %3069 = vmatprep.subr.mxu0 0.0
        %3070 = vmatpush1.msra.mxu0 0.0
        %3071 = vmatprep.subr.mxu0 0.0
        %3072 = vmatpush1.msra.mxu0 0.0
        %3073 = vmatprep.subr.mxu0 0.0
        %3074 = vmatpush1.msra.mxu0 0.0
        %3075 = vmatprep.subr.mxu0 0.0
        %3076 = vmatpush1.msra.mxu0 0.0
        %3077 = vmatprep.subr.mxu0 0.0
        %3078 = vmatpush1.msra.mxu0 0.0
        %3079 = vmatprep.subr.mxu0 0.0
        %3080 = vmatpush1.msra.mxu0 0.0
        %3081 = vmatprep.subr.mxu0 0.0
        %3082 = vmatpush1.msra.mxu0 0.0
        %3083 = vmatprep.subr.mxu0 0.0
        %3084 = vmatpush1.msra.mxu0 0.0
        %3085 = vmatprep.subr.mxu0 0.0
        %3086 = vmatpush1.msra.mxu0 0.0
        %3087 = vmatprep.subr.mxu0 0.0
        %3088 = vmatpush1.msra.mxu0 0.0
        %3089 = vmatprep.subr.mxu0 0.0
        %3090 = vmatpush1.msra.mxu0 0.0
        %3091 = vmatprep.subr.mxu0 0.0
        %3092 = vmatpush1.msra.mxu0 0.0
        %3093 = vmatprep.mubr.f32.mxu0 0.0
        %3094 = vmatmul.mubr.f32.gmra.mrb[0].mxu0 %v3017
        %v3095 = vpop.f32.mrb[0].mxu0
        %v3096 = vadd.f32 0.0, %v3095
        %v3097 = vpop.f32.mrb[0].mxu0
        %3098 = vdwg.mxu0
        %v3099 = vadd.f32 %v3024, %v3096
        %v3100 = vxor.u32 %v3099, 2147483648
        %v3101 = vmul.f32 %v3100, 1.442695
        %v3102 = vpow.pop %v3101
        %v3103 = vadd.f32 %v3102, 1.0
        %v3104 = vrcp.pop %v3103
        %v3105 = vmul.f32 1.0, %v3104
        %3106 = vmatprep.subr.mxu0 0.0
        %3107 = vmatpush1.msra.mxu0 %v1017
        %3108 = vmatprep.subr.mxu0 0.0
        %3109 = vmatpush1.msra.mxu0 %v1018
        %3110 = vmatprep.subr.mxu0 0.0
        %3111 = vmatpush1.msra.mxu0 %v1019
        %3112 = vmatprep.subr.mxu0 0.0
        %3113 = vmatpush1.msra.mxu0 %v1020
        %3114 = vmatprep.subr.mxu0 0.0
        %3115 = vmatpush1.msra.mxu0 %v1021
        %3116 = vmatprep.subr.mxu0 0.0
        %3117 = vmatpush1.msra.mxu0 %v1022
        %3118 = vmatprep.subr.mxu0 0.0
        %3119 = vmatpush1.msra.mxu0 %v1023
        %3120 = vmatprep.subr.mxu0 0.0
        %3121 = vmatpush1.msra.mxu0 %v1024
        %3122 = vmatprep.subr.mxu0 0.0
        %3123 = vmatpush1.msra.mxu0 %v1025
        %3124 = vmatprep.subr.mxu0 0.0
        %3125 = vmatpush1.msra.mxu0 %v1026
        %3126 = vmatprep.subr.mxu0 0.0
        %3127 = vmatpush1.msra.mxu0 %v1027
        %3128 = vmatprep.subr.mxu0 0.0
        %3129 = vmatpush1.msra.mxu0 %v1028
        %3130 = vmatprep.subr.mxu0 0.0
        %3131 = vmatpush1.msra.mxu0 %v1029
        %3132 = vmatprep.subr.mxu0 0.0
        %3133 = vmatpush1.msra.mxu0 %v1030
        %3134 = vmatprep.subr.mxu0 0.0
        %3135 = vmatpush1.msra.mxu0 %v1031
        %3136 = vmatprep.subr.mxu0 0.0
        %3137 = vmatpush1.msra.mxu0 %v1032
        %3138 = vmatprep.subr.mxu0 0.0
        %3139 = vmatpush1.msra.mxu0 0.0
        %3140 = vmatprep.subr.mxu0 0.0
        %3141 = vmatpush1.msra.mxu0 0.0
        %3142 = vmatprep.subr.mxu0 0.0
        %3143 = vmatpush1.msra.mxu0 0.0
        %3144 = vmatprep.subr.mxu0 0.0
        %3145 = vmatpush1.msra.mxu0 0.0
        %3146 = vmatprep.subr.mxu0 0.0
        %3147 = vmatpush1.msra.mxu0 0.0
        %3148 = vmatprep.subr.mxu0 0.0
        %3149 = vmatpush1.msra.mxu0 0.0
        %3150 = vmatprep.subr.mxu0 0.0
        %3151 = vmatpush1.msra.mxu0 0.0
        %3152 = vmatprep.subr.mxu0 0.0
        %3153 = vmatpush1.msra.mxu0 0.0
        %3154 = vmatprep.subr.mxu0 0.0
        %3155 = vmatpush1.msra.mxu0 0.0
        %3156 = vmatprep.subr.mxu0 0.0
        %3157 = vmatpush1.msra.mxu0 0.0
        %3158 = vmatprep.subr.mxu0 0.0
        %3159 = vmatpush1.msra.mxu0 0.0
        %3160 = vmatprep.subr.mxu0 0.0
        %3161 = vmatpush1.msra.mxu0 0.0
        %3162 = vmatprep.subr.mxu0 0.0
        %3163 = vmatpush1.msra.mxu0 0.0
        %3164 = vmatprep.subr.mxu0 0.0
        %3165 = vmatpush1.msra.mxu0 0.0
        %3166 = vmatprep.subr.mxu0 0.0
        %3167 = vmatpush1.msra.mxu0 0.0
        %3168 = vmatprep.subr.mxu0 0.0
        %3169 = vmatpush1.msra.mxu0 0.0
        %3170 = vmatprep.mubr.f32.mxu0 0.0
        %3171 = vmatmul.mubr.f32.gmra.mrb[0].mxu0 %v3017
        %v3172 = vpop.f32.mrb[0].mxu0
        %v3173 = vadd.f32 0.0, %v3172
        %v3174 = vpop.f32.mrb[0].mxu0
        %3175 = vdwg.mxu0
        %v3176 = vadd.f32 %v3026, %v3173
        %v3177 = vxor.u32 %v3176, 2147483648
        %v3178 = vmul.f32 %v3177, 1.442695
        %v3179 = vpow.pop %v3178
        %v3180 = vadd.f32 %v3179, 1.0
        %v3181 = vrcp.pop %v3180
        %v3182 = vmul.f32 1.0, %v3181
        %3183 = vmatprep.subr.mxu0 0.0
        %3184 = vmatpush1.msra.mxu0 %v1034
        %3185 = vmatprep.subr.mxu0 0.0
        %3186 = vmatpush1.msra.mxu0 %v1035
        %3187 = vmatprep.subr.mxu0 0.0
        %3188 = vmatpush1.msra.mxu0 %v1036
        %3189 = vmatprep.subr.mxu0 0.0
        %3190 = vmatpush1.msra.mxu0 %v1037
        %3191 = vmatprep.subr.mxu0 0.0
        %3192 = vmatpush1.msra.mxu0 %v1038
        %3193 = vmatprep.subr.mxu0 0.0
        %3194 = vmatpush1.msra.mxu0 %v1039
        %3195 = vmatprep.subr.mxu0 0.0
        %3196 = vmatpush1.msra.mxu0 %v1040
        %3197 = vmatprep.subr.mxu0 0.0
        %3198 = vmatpush1.msra.mxu0 %v1041
        %3199 = vmatprep.subr.mxu0 0.0
        %3200 = vmatpush1.msra.mxu0 %v1042
        %3201 = vmatprep.subr.mxu0 0.0
        %3202 = vmatpush1.msra.mxu0 %v1043
        %3203 = vmatprep.subr.mxu0 0.0
        %3204 = vmatpush1.msra.mxu0 %v1044
        %3205 = vmatprep.subr.mxu0 0.0
        %3206 = vmatpush1.msra.mxu0 %v1045
        %3207 = vmatprep.subr.mxu0 0.0
        %3208 = vmatpush1.msra.mxu0 %v1046
        %3209 = vmatprep.subr.mxu0 0.0
        %3210 = vmatpush1.msra.mxu0 %v1047
        %3211 = vmatprep.subr.mxu0 0.0
        %3212 = vmatpush1.msra.mxu0 %v1048
        %3213 = vmatprep.subr.mxu0 0.0
        %3214 = vmatpush1.msra.mxu0 %v1049
        %3215 = vmatprep.subr.mxu0 0.0
        %3216 = vmatpush1.msra.mxu0 0.0
        %3217 = vmatprep.subr.mxu0 0.0
        %3218 = vmatpush1.msra.mxu0 0.0
        %3219 = vmatprep.subr.mxu0 0.0
        %3220 = vmatpush1.msra.mxu0 0.0
        %3221 = vmatprep.subr.mxu0 0.0
        %3222 = vmatpush1.msra.mxu0 0.0
        %3223 = vmatprep.subr.mxu0 0.0
        %3224 = vmatpush1.msra.mxu0 0.0
        %3225 = vmatprep.subr.mxu0 0.0
        %3226 = vmatpush1.msra.mxu0 0.0
        %3227 = vmatprep.subr.mxu0 0.0
        %3228 = vmatpush1.msra.mxu0 0.0
        %3229 = vmatprep.subr.mxu0 0.0
        %3230 = vmatpush1.msra.mxu0 0.0
        %3231 = vmatprep.subr.mxu0 0.0
        %3232 = vmatpush1.msra.mxu0 0.0
        %3233 = vmatprep.subr.mxu0 0.0
        %3234 = vmatpush1.msra.mxu0 0.0
        %3235 = vmatprep.subr.mxu0 0.0
        %3236 = vmatpush1.msra.mxu0 0.0
        %3237 = vmatprep.subr.mxu0 0.0
        %3238 = vmatpush1.msra.mxu0 0.0
        %3239 = vmatprep.subr.mxu0 0.0
        %3240 = vmatpush1.msra.mxu0 0.0
        %3241 = vmatprep.subr.mxu0 0.0
        %3242 = vmatpush1.msra.mxu0 0.0
        %3243 = vmatprep.subr.mxu0 0.0
        %3244 = vmatpush1.msra.mxu0 0.0
        %3245 = vmatprep.subr.mxu0 0.0
        %3246 = vmatpush1.msra.mxu0 0.0
        %3247 = vmatprep.mubr.f32.mxu0 0.0
        %3248 = vmatmul.mubr.f32.gmra.mrb[0].mxu0 %v3017
        %v3249 = vpop.f32.mrb[0].mxu0
        %v3250 = vadd.f32 %v1060, %v3249
        %v3251 = vpop.f32.mrb[0].mxu0
        %3252 = vdwg.mxu0
        %v3253 = vmul.f32 %v3105, %v3250
        %v3254 = vadd.f32 %v3028, %v3253
        %v3255 = vtanh.pop %v3254
        %v3256 = vsub.f32 1.0, %v3182
        %v3257 = vmul.f32 %v3256, %v3255
        %v3258 = vmul.f32 %v3182, %v3017
        %v3259 = vadd.f32 %v3257, %v3258
        %v3260 = vstv %s3021
        %vm3261 = vcmp.lt.s32.totalorder %v3260, %v1053
        %v3262 = vsel %vm3261, %v3259, %v3017
        %v3263 = vsel %vm3261, %v3259, 0.0
        %s3264 = scalar_lea.vmem %s388, %s3022
        %3265 = vst [vmem:[%s3264] sm:$0xff] %v3263
        %s3266 = scalar_select %p389, 2, 9
        %s3267 = smul.u32 %s3266, 8
        %s3268 = scalar_lea.vmem [#allocation2], %s3267
        %v3269 = vld [vmem:[%s3268] sm:$0xff]
        %s3270 = scalar_lea.vmem [#allocation3], %s3267
        %v3271 = vld [vmem:[%s3270] sm:$0xff]
        %s3272 = scalar_lea.vmem [#allocation4], %s3267
        %v3273 = vld [vmem:[%s3272] sm:$0xff]
        %3274 = vmatprep.subr.mxu0 0.0
        %3275 = vmatpush1.msra.mxu0 %v1000
        %3276 = vmatprep.subr.mxu0 0.0
        %3277 = vmatpush1.msra.mxu0 %v1001
        %3278 = vmatprep.subr.mxu0 0.0
        %3279 = vmatpush1.msra.mxu0 %v1002
        %3280 = vmatprep.subr.mxu0 0.0
        %3281 = vmatpush1.msra.mxu0 %v1003
        %3282 = vmatprep.subr.mxu0 0.0
        %3283 = vmatpush1.msra.mxu0 %v1004
        %3284 = vmatprep.subr.mxu0 0.0
        %3285 = vmatpush1.msra.mxu0 %v1005
        %3286 = vmatprep.subr.mxu0 0.0
        %3287 = vmatpush1.msra.mxu0 %v1006
        %3288 = vmatprep.subr.mxu0 0.0
        %3289 = vmatpush1.msra.mxu0 %v1007
        %3290 = vmatprep.subr.mxu0 0.0
        %3291 = vmatpush1.msra.mxu0 %v1008
        %3292 = vmatprep.subr.mxu0 0.0
        %3293 = vmatpush1.msra.mxu0 %v1009
        %3294 = vmatprep.subr.mxu0 0.0
        %3295 = vmatpush1.msra.mxu0 %v1010
        %3296 = vmatprep.subr.mxu0 0.0
        %3297 = vmatpush1.msra.mxu0 %v1011
        %3298 = vmatprep.subr.mxu0 0.0
        %3299 = vmatpush1.msra.mxu0 %v1012
        %3300 = vmatprep.subr.mxu0 0.0
        %3301 = vmatpush1.msra.mxu0 %v1013
        %3302 = vmatprep.subr.mxu0 0.0
        %3303 = vmatpush1.msra.mxu0 %v1014
        %3304 = vmatprep.subr.mxu0 0.0
        %3305 = vmatpush1.msra.mxu0 %v1015
        %3306 = vmatprep.subr.mxu0 0.0
        %3307 = vmatpush1.msra.mxu0 0.0
        %3308 = vmatprep.subr.mxu0 0.0
        %3309 = vmatpush1.msra.mxu0 0.0
        %3310 = vmatprep.subr.mxu0 0.0
        %3311 = vmatpush1.msra.mxu0 0.0
        %3312 = vmatprep.subr.mxu0 0.0
        %3313 = vmatpush1.msra.mxu0 0.0
        %3314 = vmatprep.subr.mxu0 0.0
        %3315 = vmatpush1.msra.mxu0 0.0
        %3316 = vmatprep.subr.mxu0 0.0
        %3317 = vmatpush1.msra.mxu0 0.0
        %3318 = vmatprep.subr.mxu0 0.0
        %3319 = vmatpush1.msra.mxu0 0.0
        %3320 = vmatprep.subr.mxu0 0.0
        %3321 = vmatpush1.msra.mxu0 0.0
        %3322 = vmatprep.subr.mxu0 0.0
        %3323 = vmatpush1.msra.mxu0 0.0
        %3324 = vmatprep.subr.mxu0 0.0
        %3325 = vmatpush1.msra.mxu0 0.0
        %3326 = vmatprep.subr.mxu0 0.0
        %3327 = vmatpush1.msra.mxu0 0.0
        %3328 = vmatprep.subr.mxu0 0.0
        %3329 = vmatpush1.msra.mxu0 0.0
        %3330 = vmatprep.subr.mxu0 0.0
        %3331 = vmatpush1.msra.mxu0 0.0
        %3332 = vmatprep.subr.mxu0 0.0
        %3333 = vmatpush1.msra.mxu0 0.0
        %3334 = vmatprep.subr.mxu0 0.0
        %3335 = vmatpush1.msra.mxu0 0.0
        %3336 = vmatprep.subr.mxu0 0.0
        %3337 = vmatpush1.msra.mxu0 0.0
        %3338 = vmatprep.mubr.f32.mxu0 0.0
        %3339 = vmatmul.mubr.f32.gmra.mrb[0].mxu0 %v3262
        %v3340 = vpop.f32.mrb[0].mxu0
        %v3341 = vadd.f32 0.0, %v3340
        %v3342 = vpop.f32.mrb[0].mxu0
        %3343 = vdwg.mxu0
        %v3344 = vadd.f32 %v3269, %v3341
        %v3345 = vxor.u32 %v3344, 2147483648
        %v3346 = vmul.f32 %v3345, 1.442695
        %v3347 = vpow.pop %v3346
        %v3348 = vadd.f32 %v3347, 1.0
        %v3349 = vrcp.pop %v3348
        %v3350 = vmul.f32 1.0, %v3349
        %3351 = vmatprep.subr.mxu0 0.0
        %3352 = vmatpush1.msra.mxu0 %v1017
        %3353 = vmatprep.subr.mxu0 0.0
        %3354 = vmatpush1.msra.mxu0 %v1018
        %3355 = vmatprep.subr.mxu0 0.0
        %3356 = vmatpush1.msra.mxu0 %v1019
        %3357 = vmatprep.subr.mxu0 0.0
        %3358 = vmatpush1.msra.mxu0 %v1020
        %3359 = vmatprep.subr.mxu0 0.0
        %3360 = vmatpush1.msra.mxu0 %v1021
        %3361 = vmatprep.subr.mxu0 0.0
        %3362 = vmatpush1.msra.mxu0 %v1022
        %3363 = vmatprep.subr.mxu0 0.0
        %3364 = vmatpush1.msra.mxu0 %v1023
        %3365 = vmatprep.subr.mxu0 0.0
        %3366 = vmatpush1.msra.mxu0 %v1024
        %3367 = vmatprep.subr.mxu0 0.0
        %3368 = vmatpush1.msra.mxu0 %v1025
        %3369 = vmatprep.subr.mxu0 0.0
        %3370 = vmatpush1.msra.mxu0 %v1026
        %3371 = vmatprep.subr.mxu0 0.0
        %3372 = vmatpush1.msra.mxu0 %v1027
        %3373 = vmatprep.subr.mxu0 0.0
        %3374 = vmatpush1.msra.mxu0 %v1028
        %3375 = vmatprep.subr.mxu0 0.0
        %3376 = vmatpush1.msra.mxu0 %v1029
        %3377 = vmatprep.subr.mxu0 0.0
        %3378 = vmatpush1.msra.mxu0 %v1030
        %3379 = vmatprep.subr.mxu0 0.0
        %3380 = vmatpush1.msra.mxu0 %v1031
        %3381 = vmatprep.subr.mxu0 0.0
        %3382 = vmatpush1.msra.mxu0 %v1032
        %3383 = vmatprep.subr.mxu0 0.0
        %3384 = vmatpush1.msra.mxu0 0.0
        %3385 = vmatprep.subr.mxu0 0.0
        %3386 = vmatpush1.msra.mxu0 0.0
        %3387 = vmatprep.subr.mxu0 0.0
        %3388 = vmatpush1.msra.mxu0 0.0
        %3389 = vmatprep.subr.mxu0 0.0
        %3390 = vmatpush1.msra.mxu0 0.0
        %3391 = vmatprep.subr.mxu0 0.0
        %3392 = vmatpush1.msra.mxu0 0.0
        %3393 = vmatprep.subr.mxu0 0.0
        %3394 = vmatpush1.msra.mxu0 0.0
        %3395 = vmatprep.subr.mxu0 0.0
        %3396 = vmatpush1.msra.mxu0 0.0
        %3397 = vmatprep.subr.mxu0 0.0
        %3398 = vmatpush1.msra.mxu0 0.0
        %3399 = vmatprep.subr.mxu0 0.0
        %3400 = vmatpush1.msra.mxu0 0.0
        %3401 = vmatprep.subr.mxu0 0.0
        %3402 = vmatpush1.msra.mxu0 0.0
        %3403 = vmatprep.subr.mxu0 0.0
        %3404 = vmatpush1.msra.mxu0 0.0
        %3405 = vmatprep.subr.mxu0 0.0
        %3406 = vmatpush1.msra.mxu0 0.0
        %3407 = vmatprep.subr.mxu0 0.0
        %3408 = vmatpush1.msra.mxu0 0.0
        %3409 = vmatprep.subr.mxu0 0.0
        %3410 = vmatpush1.msra.mxu0 0.0
        %3411 = vmatprep.subr.mxu0 0.0
        %3412 = vmatpush1.msra.mxu0 0.0
        %3413 = vmatprep.subr.mxu0 0.0
        %3414 = vmatpush1.msra.mxu0 0.0
        %3415 = vmatprep.mubr.f32.mxu0 0.0
        %3416 = vmatmul.mubr.f32.gmra.mrb[0].mxu0 %v3262
        %v3417 = vpop.f32.mrb[0].mxu0
        %v3418 = vadd.f32 0.0, %v3417
        %v3419 = vpop.f32.mrb[0].mxu0
        %3420 = vdwg.mxu0
        %v3421 = vadd.f32 %v3271, %v3418
        %v3422 = vxor.u32 %v3421, 2147483648
        %v3423 = vmul.f32 %v3422, 1.442695
        %v3424 = vpow.pop %v3423
        %v3425 = vadd.f32 %v3424, 1.0
        %v3426 = vrcp.pop %v3425
        %v3427 = vmul.f32 1.0, %v3426
        %3428 = vmatprep.subr.mxu0 0.0
        %3429 = vmatpush1.msra.mxu0 %v1034
        %3430 = vmatprep.subr.mxu0 0.0
        %3431 = vmatpush1.msra.mxu0 %v1035
        %3432 = vmatprep.subr.mxu0 0.0
        %3433 = vmatpush1.msra.mxu0 %v1036
        %3434 = vmatprep.subr.mxu0 0.0
        %3435 = vmatpush1.msra.mxu0 %v1037
        %3436 = vmatprep.subr.mxu0 0.0
        %3437 = vmatpush1.msra.mxu0 %v1038
        %3438 = vmatprep.subr.mxu0 0.0
        %3439 = vmatpush1.msra.mxu0 %v1039
        %3440 = vmatprep.subr.mxu0 0.0
        %3441 = vmatpush1.msra.mxu0 %v1040
        %3442 = vmatprep.subr.mxu0 0.0
        %3443 = vmatpush1.msra.mxu0 %v1041
        %3444 = vmatprep.subr.mxu0 0.0
        %3445 = vmatpush1.msra.mxu0 %v1042
        %3446 = vmatprep.subr.mxu0 0.0
        %3447 = vmatpush1.msra.mxu0 %v1043
        %3448 = vmatprep.subr.mxu0 0.0
        %3449 = vmatpush1.msra.mxu0 %v1044
        %3450 = vmatprep.subr.mxu0 0.0
        %3451 = vmatpush1.msra.mxu0 %v1045
        %3452 = vmatprep.subr.mxu0 0.0
        %3453 = vmatpush1.msra.mxu0 %v1046
        %3454 = vmatprep.subr.mxu0 0.0
        %3455 = vmatpush1.msra.mxu0 %v1047
        %3456 = vmatprep.subr.mxu0 0.0
        %3457 = vmatpush1.msra.mxu0 %v1048
        %3458 = vmatprep.subr.mxu0 0.0
        %3459 = vmatpush1.msra.mxu0 %v1049
        %3460 = vmatprep.subr.mxu0 0.0
        %3461 = vmatpush1.msra.mxu0 0.0
        %3462 = vmatprep.subr.mxu0 0.0
        %3463 = vmatpush1.msra.mxu0 0.0
        %3464 = vmatprep.subr.mxu0 0.0
        %3465 = vmatpush1.msra.mxu0 0.0
        %3466 = vmatprep.subr.mxu0 0.0
        %3467 = vmatpush1.msra.mxu0 0.0
        %3468 = vmatprep.subr.mxu0 0.0
        %3469 = vmatpush1.msra.mxu0 0.0
        %3470 = vmatprep.subr.mxu0 0.0
        %3471 = vmatpush1.msra.mxu0 0.0
        %3472 = vmatprep.subr.mxu0 0.0
        %3473 = vmatpush1.msra.mxu0 0.0
        %3474 = vmatprep.subr.mxu0 0.0
        %3475 = vmatpush1.msra.mxu0 0.0
        %3476 = vmatprep.subr.mxu0 0.0
        %3477 = vmatpush1.msra.mxu0 0.0
        %3478 = vmatprep.subr.mxu0 0.0
        %3479 = vmatpush1.msra.mxu0 0.0
        %3480 = vmatprep.subr.mxu0 0.0
        %3481 = vmatpush1.msra.mxu0 0.0
        %3482 = vmatprep.subr.mxu0 0.0
        %3483 = vmatpush1.msra.mxu0 0.0
        %3484 = vmatprep.subr.mxu0 0.0
        %3485 = vmatpush1.msra.mxu0 0.0
        %3486 = vmatprep.subr.mxu0 0.0
        %3487 = vmatpush1.msra.mxu0 0.0
        %3488 = vmatprep.subr.mxu0 0.0
        %3489 = vmatpush1.msra.mxu0 0.0
        %3490 = vmatprep.subr.mxu0 0.0
        %3491 = vmatpush1.msra.mxu0 0.0
        %3492 = vmatprep.mubr.f32.mxu0 0.0
        %3493 = vmatmul.mubr.f32.gmra.mrb[0].mxu0 %v3262
        %v3494 = vpop.f32.mrb[0].mxu0
        %v3495 = vadd.f32 %v1060, %v3494
        %v3496 = vpop.f32.mrb[0].mxu0
        %3497 = vdwg.mxu0
        %v3498 = vmul.f32 %v3350, %v3495
        %v3499 = vadd.f32 %v3273, %v3498
        %v3500 = vtanh.pop %v3499
        %v3501 = vsub.f32 1.0, %v3427
        %v3502 = vmul.f32 %v3501, %v3500
        %v3503 = vmul.f32 %v3427, %v3262
        %v3504 = vadd.f32 %v3502, %v3503
        %v3505 = vstv %s3266
        %vm3506 = vcmp.lt.s32.totalorder %v3505, %v1053
        %v3507 = vsel %vm3506, %v3504, %v3262
        %v3508 = vsel %vm3506, %v3504, 0.0
        %s3509 = scalar_lea.vmem %s388, %s3267
        %3510 = vst [vmem:[%s3509] sm:$0xff] %v3508
        %s3511 = scalar_select %p389, 1, 10
        %s3512 = smul.u32 %s3511, 8
        %s3513 = scalar_lea.vmem [#allocation2], %s3512
        %v3514 = vld [vmem:[%s3513] sm:$0xff]
        %s3515 = scalar_lea.vmem [#allocation3], %s3512
        %v3516 = vld [vmem:[%s3515] sm:$0xff]
        %s3517 = scalar_lea.vmem [#allocation4], %s3512
        %v3518 = vld [vmem:[%s3517] sm:$0xff]
        %3519 = vmatprep.subr.mxu0 0.0
        %3520 = vmatpush1.msra.mxu0 %v1000
        %3521 = vmatprep.subr.mxu0 0.0
        %3522 = vmatpush1.msra.mxu0 %v1001
        %3523 = vmatprep.subr.mxu0 0.0
        %3524 = vmatpush1.msra.mxu0 %v1002
        %3525 = vmatprep.subr.mxu0 0.0
        %3526 = vmatpush1.msra.mxu0 %v1003
        %3527 = vmatprep.subr.mxu0 0.0
        %3528 = vmatpush1.msra.mxu0 %v1004
        %3529 = vmatprep.subr.mxu0 0.0
        %3530 = vmatpush1.msra.mxu0 %v1005
        %3531 = vmatprep.subr.mxu0 0.0
        %3532 = vmatpush1.msra.mxu0 %v1006
        %3533 = vmatprep.subr.mxu0 0.0
        %3534 = vmatpush1.msra.mxu0 %v1007
        %3535 = vmatprep.subr.mxu0 0.0
        %3536 = vmatpush1.msra.mxu0 %v1008
        %3537 = vmatprep.subr.mxu0 0.0
        %3538 = vmatpush1.msra.mxu0 %v1009
        %3539 = vmatprep.subr.mxu0 0.0
        %3540 = vmatpush1.msra.mxu0 %v1010
        %3541 = vmatprep.subr.mxu0 0.0
        %3542 = vmatpush1.msra.mxu0 %v1011
        %3543 = vmatprep.subr.mxu0 0.0
        %3544 = vmatpush1.msra.mxu0 %v1012
        %3545 = vmatprep.subr.mxu0 0.0
        %3546 = vmatpush1.msra.mxu0 %v1013
        %3547 = vmatprep.subr.mxu0 0.0
        %3548 = vmatpush1.msra.mxu0 %v1014
        %3549 = vmatprep.subr.mxu0 0.0
        %3550 = vmatpush1.msra.mxu0 %v1015
        %3551 = vmatprep.subr.mxu0 0.0
        %3552 = vmatpush1.msra.mxu0 0.0
        %3553 = vmatprep.subr.mxu0 0.0
        %3554 = vmatpush1.msra.mxu0 0.0
        %3555 = vmatprep.subr.mxu0 0.0
        %3556 = vmatpush1.msra.mxu0 0.0
        %3557 = vmatprep.subr.mxu0 0.0
        %3558 = vmatpush1.msra.mxu0 0.0
        %3559 = vmatprep.subr.mxu0 0.0
        %3560 = vmatpush1.msra.mxu0 0.0
        %3561 = vmatprep.subr.mxu0 0.0
        %3562 = vmatpush1.msra.mxu0 0.0
        %3563 = vmatprep.subr.mxu0 0.0
        %3564 = vmatpush1.msra.mxu0 0.0
        %3565 = vmatprep.subr.mxu0 0.0
        %3566 = vmatpush1.msra.mxu0 0.0
        %3567 = vmatprep.subr.mxu0 0.0
        %3568 = vmatpush1.msra.mxu0 0.0
        %3569 = vmatprep.subr.mxu0 0.0
        %3570 = vmatpush1.msra.mxu0 0.0
        %3571 = vmatprep.subr.mxu0 0.0
        %3572 = vmatpush1.msra.mxu0 0.0
        %3573 = vmatprep.subr.mxu0 0.0
        %3574 = vmatpush1.msra.mxu0 0.0
        %3575 = vmatprep.subr.mxu0 0.0
        %3576 = vmatpush1.msra.mxu0 0.0
        %3577 = vmatprep.subr.mxu0 0.0
        %3578 = vmatpush1.msra.mxu0 0.0
        %3579 = vmatprep.subr.mxu0 0.0
        %3580 = vmatpush1.msra.mxu0 0.0
        %3581 = vmatprep.subr.mxu0 0.0
        %3582 = vmatpush1.msra.mxu0 0.0
        %3583 = vmatprep.mubr.f32.mxu0 0.0
        %3584 = vmatmul.mubr.f32.gmra.mrb[0].mxu0 %v3507
        %v3585 = vpop.f32.mrb[0].mxu0
        %v3586 = vadd.f32 0.0, %v3585
        %v3587 = vpop.f32.mrb[0].mxu0
        %3588 = vdwg.mxu0
        %v3589 = vadd.f32 %v3514, %v3586
        %v3590 = vxor.u32 %v3589, 2147483648
        %v3591 = vmul.f32 %v3590, 1.442695
        %v3592 = vpow.pop %v3591
        %v3593 = vadd.f32 %v3592, 1.0
        %v3594 = vrcp.pop %v3593
        %v3595 = vmul.f32 1.0, %v3594
        %3596 = vmatprep.subr.mxu0 0.0
        %3597 = vmatpush1.msra.mxu0 %v1017
        %3598 = vmatprep.subr.mxu0 0.0
        %3599 = vmatpush1.msra.mxu0 %v1018
        %3600 = vmatprep.subr.mxu0 0.0
        %3601 = vmatpush1.msra.mxu0 %v1019
        %3602 = vmatprep.subr.mxu0 0.0
        %3603 = vmatpush1.msra.mxu0 %v1020
        %3604 = vmatprep.subr.mxu0 0.0
        %3605 = vmatpush1.msra.mxu0 %v1021
        %3606 = vmatprep.subr.mxu0 0.0
        %3607 = vmatpush1.msra.mxu0 %v1022
        %3608 = vmatprep.subr.mxu0 0.0
        %3609 = vmatpush1.msra.mxu0 %v1023
        %3610 = vmatprep.subr.mxu0 0.0
        %3611 = vmatpush1.msra.mxu0 %v1024
        %3612 = vmatprep.subr.mxu0 0.0
        %3613 = vmatpush1.msra.mxu0 %v1025
        %3614 = vmatprep.subr.mxu0 0.0
        %3615 = vmatpush1.msra.mxu0 %v1026
        %3616 = vmatprep.subr.mxu0 0.0
        %3617 = vmatpush1.msra.mxu0 %v1027
        %3618 = vmatprep.subr.mxu0 0.0
        %3619 = vmatpush1.msra.mxu0 %v1028
        %3620 = vmatprep.subr.mxu0 0.0
        %3621 = vmatpush1.msra.mxu0 %v1029
        %3622 = vmatprep.subr.mxu0 0.0
        %3623 = vmatpush1.msra.mxu0 %v1030
        %3624 = vmatprep.subr.mxu0 0.0
        %3625 = vmatpush1.msra.mxu0 %v1031
        %3626 = vmatprep.subr.mxu0 0.0
        %3627 = vmatpush1.msra.mxu0 %v1032
        %3628 = vmatprep.subr.mxu0 0.0
        %3629 = vmatpush1.msra.mxu0 0.0
        %3630 = vmatprep.subr.mxu0 0.0
        %3631 = vmatpush1.msra.mxu0 0.0
        %3632 = vmatprep.subr.mxu0 0.0
        %3633 = vmatpush1.msra.mxu0 0.0
        %3634 = vmatprep.subr.mxu0 0.0
        %3635 = vmatpush1.msra.mxu0 0.0
        %3636 = vmatprep.subr.mxu0 0.0
        %3637 = vmatpush1.msra.mxu0 0.0
        %3638 = vmatprep.subr.mxu0 0.0
        %3639 = vmatpush1.msra.mxu0 0.0
        %3640 = vmatprep.subr.mxu0 0.0
        %3641 = vmatpush1.msra.mxu0 0.0
        %3642 = vmatprep.subr.mxu0 0.0
        %3643 = vmatpush1.msra.mxu0 0.0
        %3644 = vmatprep.subr.mxu0 0.0
        %3645 = vmatpush1.msra.mxu0 0.0
        %3646 = vmatprep.subr.mxu0 0.0
        %3647 = vmatpush1.msra.mxu0 0.0
        %3648 = vmatprep.subr.mxu0 0.0
        %3649 = vmatpush1.msra.mxu0 0.0
        %3650 = vmatprep.subr.mxu0 0.0
        %3651 = vmatpush1.msra.mxu0 0.0
        %3652 = vmatprep.subr.mxu0 0.0
        %3653 = vmatpush1.msra.mxu0 0.0
        %3654 = vmatprep.subr.mxu0 0.0
        %3655 = vmatpush1.msra.mxu0 0.0
        %3656 = vmatprep.subr.mxu0 0.0
        %3657 = vmatpush1.msra.mxu0 0.0
        %3658 = vmatprep.subr.mxu0 0.0
        %3659 = vmatpush1.msra.mxu0 0.0
        %3660 = vmatprep.mubr.f32.mxu0 0.0
        %3661 = vmatmul.mubr.f32.gmra.mrb[0].mxu0 %v3507
        %v3662 = vpop.f32.mrb[0].mxu0
        %v3663 = vadd.f32 0.0, %v3662
        %v3664 = vpop.f32.mrb[0].mxu0
        %3665 = vdwg.mxu0
        %v3666 = vadd.f32 %v3516, %v3663
        %v3667 = vxor.u32 %v3666, 2147483648
        %v3668 = vmul.f32 %v3667, 1.442695
        %v3669 = vpow.pop %v3668
        %v3670 = vadd.f32 %v3669, 1.0
        %v3671 = vrcp.pop %v3670
        %v3672 = vmul.f32 1.0, %v3671
        %3673 = vmatprep.subr.mxu0 0.0
        %3674 = vmatpush1.msra.mxu0 %v1034
        %3675 = vmatprep.subr.mxu0 0.0
        %3676 = vmatpush1.msra.mxu0 %v1035
        %3677 = vmatprep.subr.mxu0 0.0
        %3678 = vmatpush1.msra.mxu0 %v1036
        %3679 = vmatprep.subr.mxu0 0.0
        %3680 = vmatpush1.msra.mxu0 %v1037
        %3681 = vmatprep.subr.mxu0 0.0
        %3682 = vmatpush1.msra.mxu0 %v1038
        %3683 = vmatprep.subr.mxu0 0.0
        %3684 = vmatpush1.msra.mxu0 %v1039
        %3685 = vmatprep.subr.mxu0 0.0
        %3686 = vmatpush1.msra.mxu0 %v1040
        %3687 = vmatprep.subr.mxu0 0.0
        %3688 = vmatpush1.msra.mxu0 %v1041
        %3689 = vmatprep.subr.mxu0 0.0
        %3690 = vmatpush1.msra.mxu0 %v1042
        %3691 = vmatprep.subr.mxu0 0.0
        %3692 = vmatpush1.msra.mxu0 %v1043
        %3693 = vmatprep.subr.mxu0 0.0
        %3694 = vmatpush1.msra.mxu0 %v1044
        %3695 = vmatprep.subr.mxu0 0.0
        %3696 = vmatpush1.msra.mxu0 %v1045
        %3697 = vmatprep.subr.mxu0 0.0
        %3698 = vmatpush1.msra.mxu0 %v1046
        %3699 = vmatprep.subr.mxu0 0.0
        %3700 = vmatpush1.msra.mxu0 %v1047
        %3701 = vmatprep.subr.mxu0 0.0
        %3702 = vmatpush1.msra.mxu0 %v1048
        %3703 = vmatprep.subr.mxu0 0.0
        %3704 = vmatpush1.msra.mxu0 %v1049
        %3705 = vmatprep.subr.mxu0 0.0
        %3706 = vmatpush1.msra.mxu0 0.0
        %3707 = vmatprep.subr.mxu0 0.0
        %3708 = vmatpush1.msra.mxu0 0.0
        %3709 = vmatprep.subr.mxu0 0.0
        %3710 = vmatpush1.msra.mxu0 0.0
        %3711 = vmatprep.subr.mxu0 0.0
        %3712 = vmatpush1.msra.mxu0 0.0
        %3713 = vmatprep.subr.mxu0 0.0
        %3714 = vmatpush1.msra.mxu0 0.0
        %3715 = vmatprep.subr.mxu0 0.0
        %3716 = vmatpush1.msra.mxu0 0.0
        %3717 = vmatprep.subr.mxu0 0.0
        %3718 = vmatpush1.msra.mxu0 0.0
        %3719 = vmatprep.subr.mxu0 0.0
        %3720 = vmatpush1.msra.mxu0 0.0
        %3721 = vmatprep.subr.mxu0 0.0
        %3722 = vmatpush1.msra.mxu0 0.0
        %3723 = vmatprep.subr.mxu0 0.0
        %3724 = vmatpush1.msra.mxu0 0.0
        %3725 = vmatprep.subr.mxu0 0.0
        %3726 = vmatpush1.msra.mxu0 0.0
        %3727 = vmatprep.subr.mxu0 0.0
        %3728 = vmatpush1.msra.mxu0 0.0
        %3729 = vmatprep.subr.mxu0 0.0
        %3730 = vmatpush1.msra.mxu0 0.0
        %3731 = vmatprep.subr.mxu0 0.0
        %3732 = vmatpush1.msra.mxu0 0.0
        %3733 = vmatprep.subr.mxu0 0.0
        %3734 = vmatpush1.msra.mxu0 0.0
        %3735 = vmatprep.subr.mxu0 0.0
        %3736 = vmatpush1.msra.mxu0 0.0
        %3737 = vmatprep.mubr.f32.mxu0 0.0
        %3738 = vmatmul.mubr.f32.gmra.mrb[0].mxu0 %v3507
        %v3739 = vpop.f32.mrb[0].mxu0
        %v3740 = vadd.f32 %v1060, %v3739
        %v3741 = vpop.f32.mrb[0].mxu0
        %3742 = vdwg.mxu0
        %v3743 = vmul.f32 %v3595, %v3740
        %v3744 = vadd.f32 %v3518, %v3743
        %v3745 = vtanh.pop %v3744
        %v3746 = vsub.f32 1.0, %v3672
        %v3747 = vmul.f32 %v3746, %v3745
        %v3748 = vmul.f32 %v3672, %v3507
        %v3749 = vadd.f32 %v3747, %v3748
        %v3750 = vstv %s3511
        %vm3751 = vcmp.lt.s32.totalorder %v3750, %v1053
        %v3752 = vsel %vm3751, %v3749, %v3507
        %v3753 = vsel %vm3751, %v3749, 0.0
        %s3754 = scalar_lea.vmem %s388, %s3512
        %3755 = vst [vmem:[%s3754] sm:$0xff] %v3753
        %s3756 = scalar_select %p389, 0, 11
        %s3757 = smul.u32 %s3756, 8
        %s3758 = scalar_lea.vmem [#allocation2], %s3757
        %v3759 = vld [vmem:[%s3758] sm:$0xff]
        %s3760 = scalar_lea.vmem [#allocation3], %s3757
        %v3761 = vld [vmem:[%s3760] sm:$0xff]
        %s3762 = scalar_lea.vmem [#allocation4], %s3757
        %v3763 = vld [vmem:[%s3762] sm:$0xff]
        %3764 = vmatprep.subr.mxu0 0.0
        %3765 = vmatpush1.msra.mxu0 %v1000
        %3766 = vmatprep.subr.mxu0 0.0
        %3767 = vmatpush1.msra.mxu0 %v1001
        %3768 = vmatprep.subr.mxu0 0.0
        %3769 = vmatpush1.msra.mxu0 %v1002
        %3770 = vmatprep.subr.mxu0 0.0
        %3771 = vmatpush1.msra.mxu0 %v1003
        %3772 = vmatprep.subr.mxu0 0.0
        %3773 = vmatpush1.msra.mxu0 %v1004
        %3774 = vmatprep.subr.mxu0 0.0
        %3775 = vmatpush1.msra.mxu0 %v1005
        %3776 = vmatprep.subr.mxu0 0.0
        %3777 = vmatpush1.msra.mxu0 %v1006
        %3778 = vmatprep.subr.mxu0 0.0
        %3779 = vmatpush1.msra.mxu0 %v1007
        %3780 = vmatprep.subr.mxu0 0.0
        %3781 = vmatpush1.msra.mxu0 %v1008
        %3782 = vmatprep.subr.mxu0 0.0
        %3783 = vmatpush1.msra.mxu0 %v1009
        %3784 = vmatprep.subr.mxu0 0.0
        %3785 = vmatpush1.msra.mxu0 %v1010
        %3786 = vmatprep.subr.mxu0 0.0
        %3787 = vmatpush1.msra.mxu0 %v1011
        %3788 = vmatprep.subr.mxu0 0.0
        %3789 = vmatpush1.msra.mxu0 %v1012
        %3790 = vmatprep.subr.mxu0 0.0
        %3791 = vmatpush1.msra.mxu0 %v1013
        %3792 = vmatprep.subr.mxu0 0.0
        %3793 = vmatpush1.msra.mxu0 %v1014
        %3794 = vmatprep.subr.mxu0 0.0
        %3795 = vmatpush1.msra.mxu0 %v1015
        %3796 = vmatprep.subr.mxu0 0.0
        %3797 = vmatpush1.msra.mxu0 0.0
        %3798 = vmatprep.subr.mxu0 0.0
        %3799 = vmatpush1.msra.mxu0 0.0
        %3800 = vmatprep.subr.mxu0 0.0
        %3801 = vmatpush1.msra.mxu0 0.0
        %3802 = vmatprep.subr.mxu0 0.0
        %3803 = vmatpush1.msra.mxu0 0.0
        %3804 = vmatprep.subr.mxu0 0.0
        %3805 = vmatpush1.msra.mxu0 0.0
        %3806 = vmatprep.subr.mxu0 0.0
        %3807 = vmatpush1.msra.mxu0 0.0
        %3808 = vmatprep.subr.mxu0 0.0
        %3809 = vmatpush1.msra.mxu0 0.0
        %3810 = vmatprep.subr.mxu0 0.0
        %3811 = vmatpush1.msra.mxu0 0.0
        %3812 = vmatprep.subr.mxu0 0.0
        %3813 = vmatpush1.msra.mxu0 0.0
        %3814 = vmatprep.subr.mxu0 0.0
        %3815 = vmatpush1.msra.mxu0 0.0
        %3816 = vmatprep.subr.mxu0 0.0
        %3817 = vmatpush1.msra.mxu0 0.0
        %3818 = vmatprep.subr.mxu0 0.0
        %3819 = vmatpush1.msra.mxu0 0.0
        %3820 = vmatprep.subr.mxu0 0.0
        %3821 = vmatpush1.msra.mxu0 0.0
        %3822 = vmatprep.subr.mxu0 0.0
        %3823 = vmatpush1.msra.mxu0 0.0
        %3824 = vmatprep.subr.mxu0 0.0
        %3825 = vmatpush1.msra.mxu0 0.0
        %3826 = vmatprep.subr.mxu0 0.0
        %3827 = vmatpush1.msra.mxu0 0.0
        %3828 = vmatprep.mubr.f32.mxu0 0.0
        %3829 = vmatmul.mubr.f32.gmra.mrb[0].mxu0 %v3752
        %v3830 = vpop.f32.mrb[0].mxu0
        %v3831 = vadd.f32 0.0, %v3830
        %v3832 = vpop.f32.mrb[0].mxu0
        %3833 = vdwg.mxu0
        %v3834 = vadd.f32 %v3759, %v3831
        %v3835 = vxor.u32 %v3834, 2147483648
        %v3836 = vmul.f32 %v3835, 1.442695
        %v3837 = vpow.pop %v3836
        %v3838 = vadd.f32 %v3837, 1.0
        %v3839 = vrcp.pop %v3838
        %v3840 = vmul.f32 1.0, %v3839
        %3841 = vmatprep.subr.mxu0 0.0
        %3842 = vmatpush1.msra.mxu0 %v1017
        %3843 = vmatprep.subr.mxu0 0.0
        %3844 = vmatpush1.msra.mxu0 %v1018
        %3845 = vmatprep.subr.mxu0 0.0
        %3846 = vmatpush1.msra.mxu0 %v1019
        %3847 = vmatprep.subr.mxu0 0.0
        %3848 = vmatpush1.msra.mxu0 %v1020
        %3849 = vmatprep.subr.mxu0 0.0
        %3850 = vmatpush1.msra.mxu0 %v1021
        %3851 = vmatprep.subr.mxu0 0.0
        %3852 = vmatpush1.msra.mxu0 %v1022
        %3853 = vmatprep.subr.mxu0 0.0
        %3854 = vmatpush1.msra.mxu0 %v1023
        %3855 = vmatprep.subr.mxu0 0.0
        %3856 = vmatpush1.msra.mxu0 %v1024
        %3857 = vmatprep.subr.mxu0 0.0
        %3858 = vmatpush1.msra.mxu0 %v1025
        %3859 = vmatprep.subr.mxu0 0.0
        %3860 = vmatpush1.msra.mxu0 %v1026
        %3861 = vmatprep.subr.mxu0 0.0
        %3862 = vmatpush1.msra.mxu0 %v1027
        %3863 = vmatprep.subr.mxu0 0.0
        %3864 = vmatpush1.msra.mxu0 %v1028
        %3865 = vmatprep.subr.mxu0 0.0
        %3866 = vmatpush1.msra.mxu0 %v1029
        %3867 = vmatprep.subr.mxu0 0.0
        %3868 = vmatpush1.msra.mxu0 %v1030
        %3869 = vmatprep.subr.mxu0 0.0
        %3870 = vmatpush1.msra.mxu0 %v1031
        %3871 = vmatprep.subr.mxu0 0.0
        %3872 = vmatpush1.msra.mxu0 %v1032
        %3873 = vmatprep.subr.mxu0 0.0
        %3874 = vmatpush1.msra.mxu0 0.0
        %3875 = vmatprep.subr.mxu0 0.0
        %3876 = vmatpush1.msra.mxu0 0.0
        %3877 = vmatprep.subr.mxu0 0.0
        %3878 = vmatpush1.msra.mxu0 0.0
        %3879 = vmatprep.subr.mxu0 0.0
        %3880 = vmatpush1.msra.mxu0 0.0
        %3881 = vmatprep.subr.mxu0 0.0
        %3882 = vmatpush1.msra.mxu0 0.0
        %3883 = vmatprep.subr.mxu0 0.0
        %3884 = vmatpush1.msra.mxu0 0.0
        %3885 = vmatprep.subr.mxu0 0.0
        %3886 = vmatpush1.msra.mxu0 0.0
        %3887 = vmatprep.subr.mxu0 0.0
        %3888 = vmatpush1.msra.mxu0 0.0
        %3889 = vmatprep.subr.mxu0 0.0
        %3890 = vmatpush1.msra.mxu0 0.0
        %3891 = vmatprep.subr.mxu0 0.0
        %3892 = vmatpush1.msra.mxu0 0.0
        %3893 = vmatprep.subr.mxu0 0.0
        %3894 = vmatpush1.msra.mxu0 0.0
        %3895 = vmatprep.subr.mxu0 0.0
        %3896 = vmatpush1.msra.mxu0 0.0
        %3897 = vmatprep.subr.mxu0 0.0
        %3898 = vmatpush1.msra.mxu0 0.0
        %3899 = vmatprep.subr.mxu0 0.0
        %3900 = vmatpush1.msra.mxu0 0.0
        %3901 = vmatprep.subr.mxu0 0.0
        %3902 = vmatpush1.msra.mxu0 0.0
        %3903 = vmatprep.subr.mxu0 0.0
        %3904 = vmatpush1.msra.mxu0 0.0
        %3905 = vmatprep.mubr.f32.mxu0 0.0
        %3906 = vmatmul.mubr.f32.gmra.mrb[0].mxu0 %v3752
        %v3907 = vpop.f32.mrb[0].mxu0
        %v3908 = vadd.f32 0.0, %v3907
        %v3909 = vpop.f32.mrb[0].mxu0
        %3910 = vdwg.mxu0
        %v3911 = vadd.f32 %v3761, %v3908
        %v3912 = vxor.u32 %v3911, 2147483648
        %v3913 = vmul.f32 %v3912, 1.442695
        %v3914 = vpow.pop %v3913
        %v3915 = vadd.f32 %v3914, 1.0
        %v3916 = vrcp.pop %v3915
        %v3917 = vmul.f32 1.0, %v3916
        %3918 = vmatprep.subr.mxu0 0.0
        %3919 = vmatpush1.msra.mxu0 %v1034
        %3920 = vmatprep.subr.mxu0 0.0
        %3921 = vmatpush1.msra.mxu0 %v1035
        %3922 = vmatprep.subr.mxu0 0.0
        %3923 = vmatpush1.msra.mxu0 %v1036
        %3924 = vmatprep.subr.mxu0 0.0
        %3925 = vmatpush1.msra.mxu0 %v1037
        %3926 = vmatprep.subr.mxu0 0.0
        %3927 = vmatpush1.msra.mxu0 %v1038
        %3928 = vmatprep.subr.mxu0 0.0
        %3929 = vmatpush1.msra.mxu0 %v1039
        %3930 = vmatprep.subr.mxu0 0.0
        %3931 = vmatpush1.msra.mxu0 %v1040
        %3932 = vmatprep.subr.mxu0 0.0
        %3933 = vmatpush1.msra.mxu0 %v1041
        %3934 = vmatprep.subr.mxu0 0.0
        %3935 = vmatpush1.msra.mxu0 %v1042
        %3936 = vmatprep.subr.mxu0 0.0
        %3937 = vmatpush1.msra.mxu0 %v1043
        %3938 = vmatprep.subr.mxu0 0.0
        %3939 = vmatpush1.msra.mxu0 %v1044
        %3940 = vmatprep.subr.mxu0 0.0
        %3941 = vmatpush1.msra.mxu0 %v1045
        %3942 = vmatprep.subr.mxu0 0.0
        %3943 = vmatpush1.msra.mxu0 %v1046
        %3944 = vmatprep.subr.mxu0 0.0
        %3945 = vmatpush1.msra.mxu0 %v1047
        %3946 = vmatprep.subr.mxu0 0.0
        %3947 = vmatpush1.msra.mxu0 %v1048
        %3948 = vmatprep.subr.mxu0 0.0
        %3949 = vmatpush1.msra.mxu0 %v1049
        %3950 = vmatprep.subr.mxu0 0.0
        %3951 = vmatpush1.msra.mxu0 0.0
        %3952 = vmatprep.subr.mxu0 0.0
        %3953 = vmatpush1.msra.mxu0 0.0
        %3954 = vmatprep.subr.mxu0 0.0
        %3955 = vmatpush1.msra.mxu0 0.0
        %3956 = vmatprep.subr.mxu0 0.0
        %3957 = vmatpush1.msra.mxu0 0.0
        %3958 = vmatprep.subr.mxu0 0.0
        %3959 = vmatpush1.msra.mxu0 0.0
        %3960 = vmatprep.subr.mxu0 0.0
        %3961 = vmatpush1.msra.mxu0 0.0
        %3962 = vmatprep.subr.mxu0 0.0
        %3963 = vmatpush1.msra.mxu0 0.0
        %3964 = vmatprep.subr.mxu0 0.0
        %3965 = vmatpush1.msra.mxu0 0.0
        %3966 = vmatprep.subr.mxu0 0.0
        %3967 = vmatpush1.msra.mxu0 0.0
        %3968 = vmatprep.subr.mxu0 0.0
        %3969 = vmatpush1.msra.mxu0 0.0
        %3970 = vmatprep.subr.mxu0 0.0
        %3971 = vmatpush1.msra.mxu0 0.0
        %3972 = vmatprep.subr.mxu0 0.0
        %3973 = vmatpush1.msra.mxu0 0.0
        %3974 = vmatprep.subr.mxu0 0.0
        %3975 = vmatpush1.msra.mxu0 0.0
        %3976 = vmatprep.subr.mxu0 0.0
        %3977 = vmatpush1.msra.mxu0 0.0
        %3978 = vmatprep.subr.mxu0 0.0
        %3979 = vmatpush1.msra.mxu0 0.0
        %3980 = vmatprep.subr.mxu0 0.0
        %3981 = vmatpush1.msra.mxu0 0.0
        %3982 = vmatprep.mubr.f32.mxu0 0.0
        %3983 = vmatmul.mubr.f32.gmra.mrb[0].mxu0 %v3752
        %v3984 = vpop.f32.mrb[0].mxu0
        %v3985 = vadd.f32 %v1060, %v3984
        %v3986 = vpop.f32.mrb[0].mxu0
        %3987 = vdwg.mxu0
        %v3988 = vmul.f32 %v3840, %v3985
        %v3989 = vadd.f32 %v3763, %v3988
        %v3990 = vtanh.pop %v3989
        %v3991 = vsub.f32 1.0, %v3917
        %v3992 = vmul.f32 %v3991, %v3990
        %v3993 = vmul.f32 %v3917, %v3752
        %v3994 = vadd.f32 %v3992, %v3993
        %v3995 = vstv %s3756
        %vm3996 = vcmp.lt.s32.totalorder %v3995, %v1053
        %v3997 = vsel %vm3996, %v3994, 0.0
        %s3998 = scalar_lea.vmem %s388, %s3757
        %3999 = vst [vmem:[%s3998] sm:$0xff] %v3997
        %p4000 = scmp.lt.s32.totalorder %s26, 1
        %s4001 = scalar_select %p4000, %s26, 1
        %s4002 = smul.addr %s4001, 12
        %s4003 = smul.addr %s4002, 8
        %s4004 = scalar_lea.vmem %s6, %s4003
        // Predicated region
        $region61: #{bigru_forward.3} parent=43 // pred_check
          %p4005 = pneg %p190
        $region62: #{bigru_forward.3} parent=43 // pred_check_branch
          %4007 = sbr.rel (%p4005) target = $region64
        $region63: #{bigru_forward.3} parent=43 // pred_region
          _
        $region64: #{bigru_forward.3} parent=43 // pred_fallthru
          _
      $region44: #{bigru_forward.3} parent=5 // pred_fallthru
        _
      %p4008 = scmp.le.s32.totalorder 2, %s21
      // Predicated region
      $region65: #{bigru_forward.3} parent=5 // pred_check
        %p4009 = pneg %p4008
      $region66: #{bigru_forward.3} parent=5 // pred_check_branch
        %4011 = sbr.rel (%p4009) target = $region68
      $region67: #{bigru_forward.3} parent=5 // pred_region
        %s4012 = ssub.s32 %s21, 2
        // Predicated region
        $region69: #{bigru_forward.3} parent=67 // pred_check
          %p4013 = pneg %p196
        $region70: #{bigru_forward.3} parent=67 // pred_check_branch
          %4015 = sbr.rel (%p4013) target = $region72
        $region71: #{bigru_forward.3} parent=67 // pred_region
          %p4016 = scmp.lt.s32.totalorder %s27, 1
          %s4017 = scalar_select %p4016, %s27, 1
          %s4018 = smul.addr %s4017, 12
          %s4019 = smul.addr %s4018, 8
          %s4020 = scalar_lea.vmem %s6, %s4019
        $region72: #{bigru_forward.3} parent=67 // pred_fallthru
          _
      $region68: #{bigru_forward.3} parent=5 // pred_fallthru
        _
    $region6: #{bigru_forward.3} parent=1 // loop_footer
      %s25 = sadd.s32 1, %s21
    $region7: #{bigru_forward.3} parent=1 // loop_footer_branch
      %20 = sbr.rel target = $region3
    $region8: #{bigru_forward.3} parent=1 // loop_exit
      _
    %4021 = vsyncpa [#allocation6], 1
    %s4022 = scalar_lea.sflag [#allocation6], 1
    %4023 = vsyncpa %s4022, 1
    %4024 = vsyncpa [#allocation8], 1
    %s4025 = scalar_lea.sflag [#allocation8], 1
    %4026 = vsyncpa %s4025, 1
    %4027 = vsyncpa [#allocation11], 1
    %s4028 = scalar_lea.sflag [#allocation11], 1
    %4029 = vsyncpa %s4028, 1

// kernel: bigru_forward.4
$region0: #{bigru_forward.4}
  #allocation0 [shape = 'u32[]', space=smem, size = 0x4, offset = 0x4, fixed_abs, tag = 'smem constant byte address 0x4 - core index']
  #allocation1 [shape = 'u32[144,128]{1,0:T(1,128)}', space=vmem, size = 0x12000, scoped, tag = 'internal scratch']
  #allocation2 [shape = 'f32[96,128]{1,0:T(8,128)}', space=vmem, size = 0xc000, scoped, tag = 'scratch operand']
  #allocation3 [shape = 'f32[96,128]{1,0:T(8,128)}', space=vmem, size = 0xc000, scoped, tag = 'scratch operand']
  #allocation4 [shape = 'f32[96,128]{1,0:T(8,128)}', space=vmem, size = 0xc000, scoped, tag = 'scratch operand']
  %s0 = inlined_call_operand.vmem [shape: f32[2,96,128], index: 0, kind: input, shape index: {}]
  %s1 = inlined_call_operand.vmem [shape: f32[2,6,128,128], index: 1, kind: input, shape index: {}]
  %s2 = inlined_call_operand.vmem [shape: f32[2,3,128,128], index: 2, kind: input, shape index: {}]
  %s3 = inlined_call_operand.vmem [shape: f32[2,3,1,128], index: 3, kind: input, shape index: {}]
  %s4 = inlined_call_operand.vmem [shape: f32[2,3,1,128], index: 4, kind: input, shape index: {}]
  %s5 = inlined_call_operand.vmem [shape: s32[8,1], index: 5, kind: input, shape index: {}]
  %s6 = inlined_call_operand.vmem [shape: f32[2,96,128], index: 6, kind: output, shape index: {}]
  %s7 = sld [smem:[#allocation0]]
  $region57: #{bigru_forward.4} parent=0
    _
  %s9 = ssub.s32 1, %s7
  %s10 = scalar_select 0, %s9, %s7
  loop: start=0, step=1, limit=4
  $region2: #{bigru_forward.4} parent=0 // loop_pre_header
    _
  $region3: #{bigru_forward.4} parent=0 // loop_header
    %s12 = sphi 0, %s16
    %p13 = scmp.ge.s32.totalorder %s12, 4
    %s20 = sphi 0, %s20
    %s22 = sphi 0, %s20
    %s23 = sphi 0, %s22
    %s37 = sphi 0, %s23
    %s43 = sphi 0, %s45
    %s46 = sphi 0, %s43
    %s47 = sphi 0, %s46
    %s63 = sphi 0, %s47
    %s69 = sphi 0, %s71
    %s72 = sphi 0, %s69
    %s73 = sphi 0, %s72
    %s89 = sphi 0, %s73
    %s95 = sphi 0, %s97
    %s98 = sphi 0, %s95
    %s99 = sphi 0, %s98
    %s115 = sphi 0, %s99
    %s121 = sphi 0, %s123
    %s124 = sphi 0, %s121
    %s125 = sphi 0, %s124
    %s141 = sphi 0, %s125
    %s145 = sphi 0, %s145
    %s147 = sphi 0, %s145
    %s148 = sphi 0, %s147
    %s162 = sphi 0, %s148
    %s168 = sphi 0, %s170
    %s171 = sphi 0, %s168
    %s172 = sphi 0, %s171
    %s188 = sphi 0, %s172
  $region4: #{bigru_forward.4} parent=0 // loop_header_branch
    %15 = sbr.rel (%p13) target = $region8
  $region5: #{bigru_forward.4} parent=0 // loop_body
    %s17 = ssub.s32 %s12, 1
    %s18 = ssub.s32 %s12, 2
    %s19 = sadd.s32 %s12, 1
    %s21 = sadd.s32 %s20, 1
    %p24 = scmp.eq.s32.totalorder %s12, 1
    %p25 = scmp.ne.s32.totalorder %s20, %s22
    %p26 = scmp.eq.s32.totalorder %s12, 0
    %p27 = por %p25, %p26
    %p28 = scmp.ne.s32.totalorder %s20, %s22
    %p29 = scmp.eq.s32.totalorder %s17, 1
    %p30 = por %p28, %p29
    %p31 = scmp.ne.s32.totalorder %s22, %s23
    %p32 = scmp.eq.s32.totalorder %s17, 0
    %p33 = por %p31, %p32
    %p34 = scmp.ne.s32.totalorder %s22, %s23
    %p35 = scmp.eq.s32.totalorder %s18, 1
    %p36 = por %p34, %p35
    %p38 = scmp.ne.s32.totalorder %s23, %s37
    %p39 = scmp.eq.s32.totalorder %s18, 0
    %p40 = por %p38, %p39
    %s41 = ssub.s32 %s12, %s19
    %p42 = scmp.eq.s32.totalorder %s41, 0
    %s44 = sadd.s32 %s43, 1
    %s45 = scalar_select %p42, %s43, %s44
    %p48 = pneg %p42
    %p49 = scmp.eq.s32.totalorder %s12, 1
    %p50 = por %p48, %p49
    %p51 = scmp.ne.s32.totalorder %s43, %s46
    %p52 = scmp.eq.s32.totalorder %s12, 0
    %p53 = por %p51, %p52
    %p54 = scmp.ne.s32.totalorder %s43, %s46
    %p55 = scmp.eq.s32.totalorder %s17, 1
    %p56 = por %p54, %p55
    %p57 = scmp.ne.s32.totalorder %s46, %s47
    %p58 = scmp.eq.s32.totalorder %s17, 0
    %p59 = por %p57, %p58
    %p60 = scmp.ne.s32.totalorder %s46, %s47
    %p61 = scmp.eq.s32.totalorder %s18, 1
    %p62 = por %p60, %p61
    %p64 = scmp.ne.s32.totalorder %s47, %s63
    %p65 = scmp.eq.s32.totalorder %s18, 0
    %p66 = por %p64, %p65
    %s67 = ssub.s32 %s12, %s19
    %p68 = scmp.eq.s32.totalorder %s67, 0
    %s70 = sadd.s32 %s69, 1
    %s71 = scalar_select %p68, %s69, %s70
    %p74 = pneg %p68
    %p75 = scmp.eq.s32.totalorder %s12, 1
    %p76 = por %p74, %p75
    %p77 = scmp.ne.s32.totalorder %s69, %s72
    %p78 = scmp.eq.s32.totalorder %s12, 0
    %p79 = por %p77, %p78
    %p80 = scmp.ne.s32.totalorder %s69, %s72
    %p81 = scmp.eq.s32.totalorder %s17, 1
    %p82 = por %p80, %p81
    %p83 = scmp.ne.s32.totalorder %s72, %s73
    %p84 = scmp.eq.s32.totalorder %s17, 0
    %p85 = por %p83, %p84
    %p86 = scmp.ne.s32.totalorder %s72, %s73
    %p87 = scmp.eq.s32.totalorder %s18, 1
    %p88 = por %p86, %p87
    %p90 = scmp.ne.s32.totalorder %s73, %s89
    %p91 = scmp.eq.s32.totalorder %s18, 0
    %p92 = por %p90, %p91
    %s93 = ssub.s32 %s12, %s19
    %p94 = scmp.eq.s32.totalorder %s93, 0
    %s96 = sadd.s32 %s95, 1
    %s97 = scalar_select %p94, %s95, %s96
    %p100 = pneg %p94
    %p101 = scmp.eq.s32.totalorder %s12, 1
    %p102 = por %p100, %p101
    %p103 = scmp.ne.s32.totalorder %s95, %s98
    %p104 = scmp.eq.s32.totalorder %s12, 0
    %p105 = por %p103, %p104
    %p106 = scmp.ne.s32.totalorder %s95, %s98
    %p107 = scmp.eq.s32.totalorder %s17, 1
    %p108 = por %p106, %p107
    %p109 = scmp.ne.s32.totalorder %s98, %s99
    %p110 = scmp.eq.s32.totalorder %s17, 0
    %p111 = por %p109, %p110
    %p112 = scmp.ne.s32.totalorder %s98, %s99
    %p113 = scmp.eq.s32.totalorder %s18, 1
    %p114 = por %p112, %p113
    %p116 = scmp.ne.s32.totalorder %s99, %s115
    %p117 = scmp.eq.s32.totalorder %s18, 0
    %p118 = por %p116, %p117
    %s119 = ssub.s32 %s12, %s19
    %p120 = scmp.eq.s32.totalorder %s119, 0
    %s122 = sadd.s32 %s121, 1
    %s123 = scalar_select %p120, %s121, %s122
    %p126 = pneg %p120
    %p127 = scmp.eq.s32.totalorder %s12, 1
    %p128 = por %p126, %p127
    %p129 = scmp.ne.s32.totalorder %s121, %s124
    %p130 = scmp.eq.s32.totalorder %s12, 0
    %p131 = por %p129, %p130
    %p132 = scmp.ne.s32.totalorder %s121, %s124
    %p133 = scmp.eq.s32.totalorder %s17, 1
    %p134 = por %p132, %p133
    %p135 = scmp.ne.s32.totalorder %s124, %s125
    %p136 = scmp.eq.s32.totalorder %s17, 0
    %p137 = por %p135, %p136
    %p138 = scmp.ne.s32.totalorder %s124, %s125
    %p139 = scmp.eq.s32.totalorder %s18, 1
    %p140 = por %p138, %p139
    %p142 = scmp.ne.s32.totalorder %s125, %s141
    %p143 = scmp.eq.s32.totalorder %s18, 0
    %p144 = por %p142, %p143
    %s146 = sadd.s32 %s145, 1
    %p149 = scmp.eq.s32.totalorder %s12, 1
    %p150 = scmp.ne.s32.totalorder %s145, %s147
    %p151 = scmp.eq.s32.totalorder %s12, 0
    %p152 = por %p150, %p151
    %p153 = scmp.ne.s32.totalorder %s145, %s147
    %p154 = scmp.eq.s32.totalorder %s17, 1
    %p155 = por %p153, %p154
    %p156 = scmp.ne.s32.totalorder %s147, %s148
    %p157 = scmp.eq.s32.totalorder %s17, 0
    %p158 = por %p156, %p157
    %p159 = scmp.ne.s32.totalorder %s147, %s148
    %p160 = scmp.eq.s32.totalorder %s18, 1
    %p161 = por %p159, %p160
    %p163 = scmp.ne.s32.totalorder %s148, %s162
    %p164 = scmp.eq.s32.totalorder %s18, 0
    %p165 = por %p163, %p164
    %s166 = ssub.s32 %s12, %s19
    %p167 = scmp.eq.s32.totalorder %s166, 0
    %s169 = sadd.s32 %s168, 1
    %s170 = scalar_select %p167, %s168, %s169
    %p173 = pneg %p167
    %p174 = scmp.eq.s32.totalorder %s12, 1
    %p175 = por %p173, %p174
    %p176 = scmp.ne.s32.totalorder %s168, %s171
    %p177 = scmp.eq.s32.totalorder %s12, 0
    %p178 = por %p176, %p177
    %p179 = scmp.ne.s32.totalorder %s168, %s171
    %p180 = scmp.eq.s32.totalorder %s17, 1
    %p181 = por %p179, %p180
    %p182 = scmp.ne.s32.totalorder %s171, %s172
    %p183 = scmp.eq.s32.totalorder %s17, 0
    %p184 = por %p182, %p183
    %p185 = scmp.ne.s32.totalorder %s171, %s172
    %p186 = scmp.eq.s32.totalorder %s18, 1
    %p187 = por %p185, %p186
    %p189 = scmp.ne.s32.totalorder %s172, %s188
    %p190 = scmp.eq.s32.totalorder %s18, 0
    %p191 = por %p189, %p190
    %p192 = scmp.le.s32.totalorder 1, %s12
    %p193 = scmp.lt.s32.totalorder %s12, 3
    %p194 = pnand %p192, %p193
    %p195 = pneg %p194
    // Predicated region
    $region9: #{bigru_forward.4} parent=5 // pred_check
      _
    $region10: #{bigru_forward.4} parent=5 // pred_check_branch
      %197 = sbr.rel (%p194) target = $region12
    $region11: #{bigru_forward.4} parent=5 // pred_region
      %s198 = ssub.s32 %s12, 1
      // Predicated region
      $region13: #{bigru_forward.4} parent=11 // pred_check
        %p199 = pneg %p33
      $region14: #{bigru_forward.4} parent=11 // pred_check_branch
        %201 = sbr.rel (%p199) target = $region16
      $region15: #{bigru_forward.4} parent=11 // pred_region
        _
      $region16: #{bigru_forward.4} parent=11 // pred_fallthru
        _
      // Predicated region
      $region17: #{bigru_forward.4} parent=11 // pred_check
        %p202 = pneg %p158
      $region18: #{bigru_forward.4} parent=11 // pred_check_branch
        %204 = sbr.rel (%p202) target = $region20
      $region19: #{bigru_forward.4} parent=11 // pred_region
        _
      $region20: #{bigru_forward.4} parent=11 // pred_fallthru
        _
    $region12: #{bigru_forward.4} parent=5 // pred_fallthru
      _
    %p205 = scmp.lt.s32.totalorder %s12, 2
    // Predicated region
    $region21: #{bigru_forward.4} parent=5 // pred_check
      %p206 = pneg %p205
    $region22: #{bigru_forward.4} parent=5 // pred_check_branch
      %208 = sbr.rel (%p206) target = $region24
    $region23: #{bigru_forward.4} parent=5 // pred_region
      // Predicated region
      $region25: #{bigru_forward.4} parent=23 // pred_check
        %p209 = pneg %p53
      $region26: #{bigru_forward.4} parent=23 // pred_check_branch
        %211 = sbr.rel (%p209) target = $region28
      $region27: #{bigru_forward.4} parent=23 // pred_region
        %p212 = scmp.lt.s32.totalorder %s12, 1
        %s213 = scalar_select %p212, %s12, 1
        %s214 = smul.addr %s213, 96
        %s215 = smul.addr %s214, 8
        %s216 = scalar_lea.vmem %s1, %s215
      $region28: #{bigru_forward.4} parent=23 // pred_fallthru
        _
      // Predicated region
      $region29: #{bigru_forward.4} parent=23 // pred_check
        %p217 = pneg %p79
      $region30: #{bigru_forward.4} parent=23 // pred_check_branch
        %219 = sbr.rel (%p217) target = $region32
      $region31: #{bigru_forward.4} parent=23 // pred_region
        %p220 = scmp.lt.s32.totalorder %s12, 1
        %s221 = scalar_select %p220, %s12, 1
        %s222 = smul.addr %s221, 48
        %s223 = smul.addr %s222, 8
        %s224 = scalar_lea.vmem %s2, %s223
      $region32: #{bigru_forward.4} parent=23 // pred_fallthru
        _
      // Predicated region
      $region33: #{bigru_forward.4} parent=23 // pred_check
        %p225 = pneg %p105
      $region34: #{bigru_forward.4} parent=23 // pred_check_branch
        %227 = sbr.rel (%p225) target = $region36
      $region35: #{bigru_forward.4} parent=23 // pred_region
        %p228 = scmp.lt.s32.totalorder %s12, 1
        %s229 = scalar_select %p228, %s12, 1
        %s230 = smul.addr %s229, 3
        %s231 = scalar_lea.vmem %s3, %s230
      $region36: #{bigru_forward.4} parent=23 // pred_fallthru
        _
      // Predicated region
      $region37: #{bigru_forward.4} parent=23 // pred_check
        %p232 = pneg %p131
      $region38: #{bigru_forward.4} parent=23 // pred_check_branch
        %234 = sbr.rel (%p232) target = $region40
      $region39: #{bigru_forward.4} parent=23 // pred_region
        %p235 = scmp.lt.s32.totalorder %s12, 1
        %s236 = scalar_select %p235, %s12, 1
        %s237 = smul.addr %s236, 3
        %s238 = scalar_lea.vmem %s4, %s237
      $region40: #{bigru_forward.4} parent=23 // pred_fallthru
        _
    $region24: #{bigru_forward.4} parent=5 // pred_fallthru
      _
    %p239 = scmp.le.s32.totalorder 1, %s12
    %p240 = scmp.lt.s32.totalorder %s12, 3
    %p241 = pnand %p239, %p240
    %p242 = pneg %p241
    // Predicated region
    $region41: #{bigru_forward.4} parent=5 // pred_check
      _
    $region42: #{bigru_forward.4} parent=5 // pred_check_branch
      %244 = sbr.rel (%p241) target = $region44
    $region43: #{bigru_forward.4} parent=5 // pred_region
      %s245 = ssub.s32 %s12, 1
      %p246 = pneg %p33
      %p247 = pneg %p30
      %p248 = scmp.lt.s32.totalorder %s17, 1
      %s249 = scalar_select %p248, %s17, 1
      %s250 = smul.addr %s249, 96
      %s251 = smul.addr %s250, 8
      %s252 = scalar_lea.vmem %s1, %s251
      %p253 = pneg %p59
      %p254 = pneg %p56
      %p255 = scmp.lt.s32.totalorder %s17, 1
      %s256 = scalar_select %p255, %s17, 1
      %s257 = smul.addr %s256, 48
      %s258 = smul.addr %s257, 8
      %s259 = scalar_lea.vmem %s2, %s258
      %p260 = pneg %p85
      %p261 = pneg %p82
      %p262 = scmp.lt.s32.totalorder %s17, 1
      %s263 = scalar_select %p262, %s17, 1
      %s264 = smul.addr %s263, 3
      %s265 = scalar_lea.vmem %s3, %s264
      %p266 = pneg %p111
      %p267 = pneg %p108
      %p268 = scmp.lt.s32.totalorder %s17, 1
      %s269 = scalar_select %p268, %s17, 1
      %s270 = smul.addr %s269, 3
      %s271 = scalar_lea.vmem %s4, %s270
      %p272 = pneg %p137
      %p273 = pneg %p134
      %p274 = pneg %p158
      %p275 = pneg %p155
      %p276 = pneg %p184
      %p277 = pneg %p181
      %p278 = scmp.lt.s32.totalorder %s17, 1
      %s279 = scalar_select %p278, %s17, 1
      %s280 = smul.addr %s279, 12
      %s281 = smul.addr %s280, 8
      %s282 = scalar_lea.vmem %s6, %s281
      %p283 = scmp.lt.s32.totalorder %s17, 1
      %s284 = scalar_select %p283, %s17, 1
      %s285 = smul.addr %s284, 96
      %s286 = smul.addr %s285, 8
      %s287 = scalar_lea.vmem %s1, %s286
      %p288 = scmp.lt.s32.totalorder %s17, 1
      %s289 = scalar_select %p288, %s17, 1
      %s290 = smul.addr %s289, 48
      %s291 = smul.addr %s290, 8
      %s292 = scalar_lea.vmem %s2, %s291
      %p293 = scmp.lt.s32.totalorder %s17, 1
      %s294 = scalar_select %p293, %s17, 1
      %s295 = smul.addr %s294, 3
      %s296 = scalar_lea.vmem %s3, %s295
      %p297 = scmp.lt.s32.totalorder %s17, 1
      %s298 = scalar_select %p297, %s17, 1
      %s299 = smul.addr %s298, 3
      %s300 = scalar_lea.vmem %s4, %s299
      %p301 = scmp.lt.s32.totalorder %s17, 1
      %s302 = scalar_select %p301, %s17, 1
      %s303 = smul.addr %s302, 12
      %s304 = smul.addr %s303, 8
      %s305 = scalar_lea.vmem %s6, %s304
      %p306 = scmp.eq.s32.totalorder %s17, 1
      %v307 = vld [vmem:[%s0] sm:$0xff]
      %v308 = vld [vmem:[%s0 + $0x8] sm:$0xff]
      %v309 = vld [vmem:[%s0 + $0x10] sm:$0xff]
      %v310 = vld [vmem:[%s0 + $0x18] sm:$0xff]
      %v311 = vld [vmem:[%s0 + $0x20] sm:$0xff]
      %v312 = vld [vmem:[%s0 + $0x28] sm:$0xff]
      %v313 = vld [vmem:[%s0 + $0x30] sm:$0xff]
      %v314 = vld [vmem:[%s0 + $0x38] sm:$0xff]
      %v315 = vld [vmem:[%s0 + $0x40] sm:$0xff]
      %v316 = vld [vmem:[%s0 + $0x48] sm:$0xff]
      %v317 = vld [vmem:[%s0 + $0x50] sm:$0xff]
      %v318 = vld [vmem:[%s0 + $0x58] sm:$0xff]
      %v319 = vld [vmem:[%s287] sm:$0xff]
      %v320 = vld [vmem:[%s287 + $0x8] sm:$0xff]
      %v321 = vld [vmem:[%s287 + $0x10] sm:$0xff]
      %v322 = vld [vmem:[%s287 + $0x18] sm:$0xff]
      %v323 = vld [vmem:[%s287 + $0x20] sm:$0xff]
      %v324 = vld [vmem:[%s287 + $0x28] sm:$0xff]
      %v325 = vld [vmem:[%s287 + $0x30] sm:$0xff]
      %v326 = vld [vmem:[%s287 + $0x38] sm:$0xff]
      %v327 = vld [vmem:[%s287 + $0x40] sm:$0xff]
      %v328 = vld [vmem:[%s287 + $0x48] sm:$0xff]
      %v329 = vld [vmem:[%s287 + $0x50] sm:$0xff]
      %v330 = vld [vmem:[%s287 + $0x58] sm:$0xff]
      %v331 = vld [vmem:[%s287 + $0x60] sm:$0xff]
      %v332 = vld [vmem:[%s287 + $0x68] sm:$0xff]
      %v333 = vld [vmem:[%s287 + $0x70] sm:$0xff]
      %v334 = vld [vmem:[%s287 + $0x78] sm:$0xff]
      %s335 = scalar_lea.vmem %s0, 96
      %v336 = vld [vmem:[%s335] sm:$0xff]
      %v337 = vld [vmem:[%s335 + $0x8] sm:$0xff]
      %v338 = vld [vmem:[%s335 + $0x10] sm:$0xff]
      %v339 = vld [vmem:[%s335 + $0x18] sm:$0xff]
      %v340 = vld [vmem:[%s335 + $0x20] sm:$0xff]
      %v341 = vld [vmem:[%s335 + $0x28] sm:$0xff]
      %v342 = vld [vmem:[%s335 + $0x30] sm:$0xff]
      %v343 = vld [vmem:[%s335 + $0x38] sm:$0xff]
      %v344 = vld [vmem:[%s335 + $0x40] sm:$0xff]
      %v345 = vld [vmem:[%s335 + $0x48] sm:$0xff]
      %v346 = vld [vmem:[%s335 + $0x50] sm:$0xff]
      %v347 = vld [vmem:[%s335 + $0x58] sm:$0xff]
      %s348 = scalar_lea.vmem %s287, 384
      %v349 = vld [vmem:[%s348] sm:$0xff]
      %v350 = vld [vmem:[%s348 + $0x8] sm:$0xff]
      %v351 = vld [vmem:[%s348 + $0x10] sm:$0xff]
      %v352 = vld [vmem:[%s348 + $0x18] sm:$0xff]
      %v353 = vld [vmem:[%s348 + $0x20] sm:$0xff]
      %v354 = vld [vmem:[%s348 + $0x28] sm:$0xff]
      %v355 = vld [vmem:[%s348 + $0x30] sm:$0xff]
      %v356 = vld [vmem:[%s348 + $0x38] sm:$0xff]
      %v357 = vld [vmem:[%s348 + $0x40] sm:$0xff]
      %v358 = vld [vmem:[%s348 + $0x48] sm:$0xff]
      %v359 = vld [vmem:[%s348 + $0x50] sm:$0xff]
      %v360 = vld [vmem:[%s348 + $0x58] sm:$0xff]
      %v361 = vld [vmem:[%s348 + $0x60] sm:$0xff]
      %v362 = vld [vmem:[%s348 + $0x68] sm:$0xff]
      %v363 = vld [vmem:[%s348 + $0x70] sm:$0xff]
      %v364 = vld [vmem:[%s348 + $0x78] sm:$0xff]
      %365 = vmatprep.subr.mxu0 0.0
      %366 = vmatpush1.msra.mxu0 %v349
      %367 = vmatprep.subr.mxu0 0.0
      %368 = vmatpush1.msra.mxu0 %v350
      %369 = vmatprep.subr.mxu0 0.0
      %370 = vmatpush1.msra.mxu0 %v351
      %371 = vmatprep.subr.mxu0 0.0
      %372 = vmatpush1.msra.mxu0 %v352
      %373 = vmatprep.subr.mxu0 0.0
      %374 = vmatpush1.msra.mxu0 %v353
      %375 = vmatprep.subr.mxu0 0.0
      %376 = vmatpush1.msra.mxu0 %v354
      %377 = vmatprep.subr.mxu0 0.0
      %378 = vmatpush1.msra.mxu0 %v355
      %379 = vmatprep.subr.mxu0 0.0
      %380 = vmatpush1.msra.mxu0 %v356
      %381 = vmatprep.subr.mxu0 0.0
      %382 = vmatpush1.msra.mxu0 %v357
      %383 = vmatprep.subr.mxu0 0.0
      %384 = vmatpush1.msra.mxu0 %v358
      %385 = vmatprep.subr.mxu0 0.0
      %386 = vmatpush1.msra.mxu0 %v359
      %387 = vmatprep.subr.mxu0 0.0
      %388 = vmatpush1.msra.mxu0 %v360
      %389 = vmatprep.subr.mxu0 0.0
      %390 = vmatpush1.msra.mxu0 %v361
      %391 = vmatprep.subr.mxu0 0.0
      %392 = vmatpush1.msra.mxu0 %v362
      %393 = vmatprep.subr.mxu0 0.0
      %394 = vmatpush1.msra.mxu0 %v363
      %395 = vmatprep.subr.mxu0 0.0
      %396 = vmatpush1.msra.mxu0 %v364
      %397 = vmatprep.subr.mxu0 0.0
      %398 = vmatpush1.msra.mxu0 0.0
      %399 = vmatprep.subr.mxu0 0.0
      %400 = vmatpush1.msra.mxu0 0.0
      %401 = vmatprep.subr.mxu0 0.0
      %402 = vmatpush1.msra.mxu0 0.0
      %403 = vmatprep.subr.mxu0 0.0
      %404 = vmatpush1.msra.mxu0 0.0
      %405 = vmatprep.subr.mxu0 0.0
      %406 = vmatpush1.msra.mxu0 0.0
      %407 = vmatprep.subr.mxu0 0.0
      %408 = vmatpush1.msra.mxu0 0.0
      %409 = vmatprep.subr.mxu0 0.0
      %410 = vmatpush1.msra.mxu0 0.0
      %411 = vmatprep.subr.mxu0 0.0
      %412 = vmatpush1.msra.mxu0 0.0
      %413 = vmatprep.subr.mxu0 0.0
      %414 = vmatpush1.msra.mxu0 0.0
      %415 = vmatprep.subr.mxu0 0.0
      %416 = vmatpush1.msra.mxu0 0.0
      %417 = vmatprep.subr.mxu0 0.0
      %418 = vmatpush1.msra.mxu0 0.0
      %419 = vmatprep.subr.mxu0 0.0
      %420 = vmatpush1.msra.mxu0 0.0
      %421 = vmatprep.subr.mxu0 0.0
      %422 = vmatpush1.msra.mxu0 0.0
      %423 = vmatprep.subr.mxu0 0.0
      %424 = vmatpush1.msra.mxu0 0.0
      %425 = vmatprep.subr.mxu0 0.0
      %426 = vmatpush1.msra.mxu0 0.0
      %427 = vmatprep.subr.mxu0 0.0
      %428 = vmatpush1.msra.mxu0 0.0
      %429 = vmatprep.mubr.f32.mxu0 0.0
      %430 = vmatmul.mubr.f32.gmra.mrb[0].mxu0 %v336
      %v431 = vpop.f32.mrb[0].mxu0
      %v432 = vadd.f32 0.0, %v431
      %v433 = vpop.f32.mrb[0].mxu0
      %434 = vmatprep.mubr.f32.mxu0 0.0
      %435 = vmatmul.mubr.f32.gmra.mrb[0].mxu0 %v337
      %v436 = vpop.f32.mrb[0].mxu0
      %v437 = vadd.f32 0.0, %v436
      %v438 = vpop.f32.mrb[0].mxu0
      %439 = vmatprep.mubr.f32.mxu0 0.0
      %440 = vmatmul.mubr.f32.gmra.mrb[0].mxu0 %v338
      %v441 = vpop.f32.mrb[0].mxu0
      %v442 = vadd.f32 0.0, %v441
      %v443 = vpop.f32.mrb[0].mxu0
      %444 = vmatprep.mubr.f32.mxu0 0.0
      %445 = vmatmul.mubr.f32.gmra.mrb[0].mxu0 %v339
      %v446 = vpop.f32.mrb[0].mxu0
      %v447 = vadd.f32 0.0, %v446
      %v448 = vpop.f32.mrb[0].mxu0
      %449 = vmatprep.mubr.f32.mxu0 0.0
      %450 = vmatmul.mubr.f32.gmra.mrb[0].mxu0 %v340
      %v451 = vpop.f32.mrb[0].mxu0
      %v452 = vadd.f32 0.0, %v451
      %v453 = vpop.f32.mrb[0].mxu0
      %454 = vmatprep.mubr.f32.mxu0 0.0
      %455 = vmatmul.mubr.f32.gmra.mrb[0].mxu0 %v341
      %v456 = vpop.f32.mrb[0].mxu0
      %v457 = vadd.f32 0.0, %v456
      %v458 = vpop.f32.mrb[0].mxu0
      %459 = vmatprep.mubr.f32.mxu0 0.0
      %460 = vmatmul.mubr.f32.gmra.mrb[0].mxu0 %v342
      %v461 = vpop.f32.mrb[0].mxu0
      %v462 = vadd.f32 0.0, %v461
      %v463 = vpop.f32.mrb[0].mxu0
      %464 = vmatprep.mubr.f32.mxu0 0.0
      %465 = vmatmul.mubr.f32.gmra.mrb[0].mxu0 %v343
      %v466 = vpop.f32.mrb[0].mxu0
      %v467 = vadd.f32 0.0, %v466
      %v468 = vpop.f32.mrb[0].mxu0
      %469 = vmatprep.mubr.f32.mxu0 0.0
      %470 = vmatmul.mubr.f32.gmra.mrb[0].mxu0 %v344
      %v471 = vpop.f32.mrb[0].mxu0
      %v472 = vadd.f32 0.0, %v471
      %v473 = vpop.f32.mrb[0].mxu0
      %474 = vmatprep.mubr.f32.mxu0 0.0
      %475 = vmatmul.mubr.f32.gmra.mrb[0].mxu0 %v345
      %v476 = vpop.f32.mrb[0].mxu0
      %v477 = vadd.f32 0.0, %v476
      %v478 = vpop.f32.mrb[0].mxu0
      %479 = vmatprep.mubr.f32.mxu0 0.0
      %480 = vmatmul.mubr.f32.gmra.mrb[0].mxu0 %v346
      %v481 = vpop.f32.mrb[0].mxu0
      %v482 = vadd.f32 0.0, %v481
      %v483 = vpop.f32.mrb[0].mxu0
      %484 = vmatprep.mubr.f32.mxu0 0.0
      %485 = vmatmul.mubr.f32.gmra.mrb[0].mxu0 %v347
      %v486 = vpop.f32.mrb[0].mxu0
      %v487 = vadd.f32 0.0, %v486
      %v488 = vpop.f32.mrb[0].mxu0
      %489 = vdwg.mxu0
      %490 = vmatprep.subr.mxu0 0.0
      %491 = vmatpush1.msra.mxu0 %v319
      %492 = vmatprep.subr.mxu0 0.0
      %493 = vmatpush1.msra.mxu0 %v320
      %494 = vmatprep.subr.mxu0 0.0
      %495 = vmatpush1.msra.mxu0 %v321
      %496 = vmatprep.subr.mxu0 0.0
      %497 = vmatpush1.msra.mxu0 %v322
      %498 = vmatprep.subr.mxu0 0.0
      %499 = vmatpush1.msra.mxu0 %v323
      %500 = vmatprep.subr.mxu0 0.0
      %501 = vmatpush1.msra.mxu0 %v324
      %502 = vmatprep.subr.mxu0 0.0
      %503 = vmatpush1.msra.mxu0 %v325
      %504 = vmatprep.subr.mxu0 0.0
      %505 = vmatpush1.msra.mxu0 %v326
      %506 = vmatprep.subr.mxu0 0.0
      %507 = vmatpush1.msra.mxu0 %v327
      %508 = vmatprep.subr.mxu0 0.0
      %509 = vmatpush1.msra.mxu0 %v328
      %510 = vmatprep.subr.mxu0 0.0
      %511 = vmatpush1.msra.mxu0 %v329
      %512 = vmatprep.subr.mxu0 0.0
      %513 = vmatpush1.msra.mxu0 %v330
      %514 = vmatprep.subr.mxu0 0.0
      %515 = vmatpush1.msra.mxu0 %v331
      %516 = vmatprep.subr.mxu0 0.0
      %517 = vmatpush1.msra.mxu0 %v332
      %518 = vmatprep.subr.mxu0 0.0
      %519 = vmatpush1.msra.mxu0 %v333
      %520 = vmatprep.subr.mxu0 0.0
      %521 = vmatpush1.msra.mxu0 %v334
      %522 = vmatprep.subr.mxu0 0.0
      %523 = vmatpush1.msra.mxu0 0.0
      %524 = vmatprep.subr.mxu0 0.0
      %525 = vmatpush1.msra.mxu0 0.0
      %526 = vmatprep.subr.mxu0 0.0
      %527 = vmatpush1.msra.mxu0 0.0
      %528 = vmatprep.subr.mxu0 0.0
      %529 = vmatpush1.msra.mxu0 0.0
      %530 = vmatprep.subr.mxu0 0.0
      %531 = vmatpush1.msra.mxu0 0.0
      %532 = vmatprep.subr.mxu0 0.0
      %533 = vmatpush1.msra.mxu0 0.0
      %534 = vmatprep.subr.mxu0 0.0
      %535 = vmatpush1.msra.mxu0 0.0
      %536 = vmatprep.subr.mxu0 0.0
      %537 = vmatpush1.msra.mxu0 0.0
      %538 = vmatprep.subr.mxu0 0.0
      %539 = vmatpush1.msra.mxu0 0.0
      %540 = vmatprep.subr.mxu0 0.0
      %541 = vmatpush1.msra.mxu0 0.0
      %542 = vmatprep.subr.mxu0 0.0
      %543 = vmatpush1.msra.mxu0 0.0
      %544 = vmatprep.subr.mxu0 0.0
      %545 = vmatpush1.msra.mxu0 0.0
      %546 = vmatprep.subr.mxu0 0.0
      %547 = vmatpush1.msra.mxu0 0.0
      %548 = vmatprep.subr.mxu0 0.0
      %549 = vmatpush1.msra.mxu0 0.0
      %550 = vmatprep.subr.mxu0 0.0
      %551 = vmatpush1.msra.mxu0 0.0
      %552 = vmatprep.subr.mxu0 0.0
      %553 = vmatpush1.msra.mxu0 0.0
      %554 = vmatprep.mubr.f32.mxu0 0.0
      %555 = vmatmul.mubr.f32.gmra.mrb[0].mxu0 %v307
      %v556 = vpop.f32.mrb[0].mxu0
      %v557 = vadd.f32 %v432, %v556
      %v558 = vpop.f32.mrb[0].mxu0
      %559 = vmatprep.mubr.f32.mxu0 0.0
      %560 = vmatmul.mubr.f32.gmra.mrb[0].mxu0 %v308
      %v561 = vpop.f32.mrb[0].mxu0
      %v562 = vadd.f32 %v437, %v561
      %v563 = vpop.f32.mrb[0].mxu0
      %564 = vmatprep.mubr.f32.mxu0 0.0
      %565 = vmatmul.mubr.f32.gmra.mrb[0].mxu0 %v309
      %v566 = vpop.f32.mrb[0].mxu0
      %v567 = vadd.f32 %v442, %v566
      %v568 = vpop.f32.mrb[0].mxu0
      %569 = vmatprep.mubr.f32.mxu0 0.0
      %570 = vmatmul.mubr.f32.gmra.mrb[0].mxu0 %v310
      %v571 = vpop.f32.mrb[0].mxu0
      %v572 = vadd.f32 %v447, %v571
      %v573 = vpop.f32.mrb[0].mxu0
      %574 = vmatprep.mubr.f32.mxu0 0.0
      %575 = vmatmul.mubr.f32.gmra.mrb[0].mxu0 %v311
      %v576 = vpop.f32.mrb[0].mxu0
      %v577 = vadd.f32 %v452, %v576
      %v578 = vpop.f32.mrb[0].mxu0
      %579 = vmatprep.mubr.f32.mxu0 0.0
      %580 = vmatmul.mubr.f32.gmra.mrb[0].mxu0 %v312
      %v581 = vpop.f32.mrb[0].mxu0
      %v582 = vadd.f32 %v457, %v581
      %v583 = vpop.f32.mrb[0].mxu0
      %584 = vmatprep.mubr.f32.mxu0 0.0
      %585 = vmatmul.mubr.f32.gmra.mrb[0].mxu0 %v313
      %v586 = vpop.f32.mrb[0].mxu0
      %v587 = vadd.f32 %v462, %v586
      %v588 = vpop.f32.mrb[0].mxu0
      %589 = vmatprep.mubr.f32.mxu0 0.0
      %590 = vmatmul.mubr.f32.gmra.mrb[0].mxu0 %v314
      %v591 = vpop.f32.mrb[0].mxu0
      %v592 = vadd.f32 %v467, %v591
      %v593 = vpop.f32.mrb[0].mxu0
      %594 = vmatprep.mubr.f32.mxu0 0.0
      %595 = vmatmul.mubr.f32.gmra.mrb[0].mxu0 %v315
      %v596 = vpop.f32.mrb[0].mxu0
      %v597 = vadd.f32 %v472, %v596
      %v598 = vpop.f32.mrb[0].mxu0
      %599 = vmatprep.mubr.f32.mxu0 0.0
      %600 = vmatmul.mubr.f32.gmra.mrb[0].mxu0 %v316
      %v601 = vpop.f32.mrb[0].mxu0
      %v602 = vadd.f32 %v477, %v601
      %v603 = vpop.f32.mrb[0].mxu0
      %604 = vmatprep.mubr.f32.mxu0 0.0
      %605 = vmatmul.mubr.f32.gmra.mrb[0].mxu0 %v317
      %v606 = vpop.f32.mrb[0].mxu0
      %v607 = vadd.f32 %v482, %v606
      %v608 = vpop.f32.mrb[0].mxu0
      %609 = vmatprep.mubr.f32.mxu0 0.0
      %610 = vmatmul.mubr.f32.gmra.mrb[0].mxu0 %v318
      %v611 = vpop.f32.mrb[0].mxu0
      %v612 = vadd.f32 %v487, %v611
      %v613 = vpop.f32.mrb[0].mxu0
      %614 = vdwg.mxu0
      %v615 = vld [vmem:[%s296] sm:$0x1]
      %v616 = vld [vmem:[%s300] sm:$0x1]
      %v617 = vadd.f32 %v615, %v616
      %v619 = vlaneseq
      %v620 = vshrl.u32 %v619, 7
      %v621 = vsub.s32 0, %v620
      %v622 = vrot.slane %v617, %v621
      %v624 = vadd.f32 %v557, %v622
      %v625 = vadd.f32 %v562, %v622
      %v626 = vadd.f32 %v567, %v622
      %v627 = vadd.f32 %v572, %v622
      %v628 = vadd.f32 %v577, %v622
      %v629 = vadd.f32 %v582, %v622
      %v630 = vadd.f32 %v587, %v622
      %v631 = vadd.f32 %v592, %v622
      %v632 = vadd.f32 %v597, %v622
      %v633 = vadd.f32 %v602, %v622
      %v634 = vadd.f32 %v607, %v622
      %v635 = vadd.f32 %v612, %v622
      %636 = vst [vmem:[#allocation2] sm:$0xff] %v624
      %637 = vst [vmem:[#allocation2 + $0x8] sm:$0xff] %v625
      %638 = vst [vmem:[#allocation2 + $0x10] sm:$0xff] %v626
      %639 = vst [vmem:[#allocation2 + $0x18] sm:$0xff] %v627
      %640 = vst [vmem:[#allocation2 + $0x20] sm:$0xff] %v628
      %641 = vst [vmem:[#allocation2 + $0x28] sm:$0xff] %v629
      %642 = vst [vmem:[#allocation2 + $0x30] sm:$0xff] %v630
      %643 = vst [vmem:[#allocation2 + $0x38] sm:$0xff] %v631
      %644 = vst [vmem:[#allocation2 + $0x40] sm:$0xff] %v632
      %645 = vst [vmem:[#allocation2 + $0x48] sm:$0xff] %v633
      %646 = vst [vmem:[#allocation2 + $0x50] sm:$0xff] %v634
      %647 = vst [vmem:[#allocation2 + $0x58] sm:$0xff] %v635
      %v648 = vld [vmem:[%s0] sm:$0xff]
      %v649 = vld [vmem:[%s0 + $0x8] sm:$0xff]
      %v650 = vld [vmem:[%s0 + $0x10] sm:$0xff]
      %v651 = vld [vmem:[%s0 + $0x18] sm:$0xff]
      %v652 = vld [vmem:[%s0 + $0x20] sm:$0xff]
      %v653 = vld [vmem:[%s0 + $0x28] sm:$0xff]
      %v654 = vld [vmem:[%s0 + $0x30] sm:$0xff]
      %v655 = vld [vmem:[%s0 + $0x38] sm:$0xff]
      %v656 = vld [vmem:[%s0 + $0x40] sm:$0xff]
      %v657 = vld [vmem:[%s0 + $0x48] sm:$0xff]
      %v658 = vld [vmem:[%s0 + $0x50] sm:$0xff]
      %v659 = vld [vmem:[%s0 + $0x58] sm:$0xff]
      %s660 = scalar_lea.vmem %s287, 128
      %v661 = vld [vmem:[%s660] sm:$0xff]
      %v662 = vld [vmem:[%s660 + $0x8] sm:$0xff]
      %v663 = vld [vmem:[%s660 + $0x10] sm:$0xff]
      %v664 = vld [vmem:[%s660 + $0x18] sm:$0xff]
      %v665 = vld [vmem:[%s660 + $0x20] sm:$0xff]
      %v666 = vld [vmem:[%s660 + $0x28] sm:$0xff]
      %v667 = vld [vmem:[%s660 + $0x30] sm:$0xff]
      %v668 = vld [vmem:[%s660 + $0x38] sm:$0xff]
      %v669 = vld [vmem:[%s660 + $0x40] sm:$0xff]
      %v670 = vld [vmem:[%s660 + $0x48] sm:$0xff]
      %v671 = vld [vmem:[%s660 + $0x50] sm:$0xff]
      %v672 = vld [vmem:[%s660 + $0x58] sm:$0xff]
      %v673 = vld [vmem:[%s660 + $0x60] sm:$0xff]
      %v674 = vld [vmem:[%s660 + $0x68] sm:$0xff]
      %v675 = vld [vmem:[%s660 + $0x70] sm:$0xff]
      %v676 = vld [vmem:[%s660 + $0x78] sm:$0xff]
      %v677 = vld [vmem:[%s335] sm:$0xff]
      %v678 = vld [vmem:[%s335 + $0x8] sm:$0xff]
      %v679 = vld [vmem:[%s335 + $0x10] sm:$0xff]
      %v680 = vld [vmem:[%s335 + $0x18] sm:$0xff]
      %v681 = vld [vmem:[%s335 + $0x20] sm:$0xff]
      %v682 = vld [vmem:[%s335 + $0x28] sm:$0xff]
      %v683 = vld [vmem:[%s335 + $0x30] sm:$0xff]
      %v684 = vld [vmem:[%s335 + $0x38] sm:$0xff]
      %v685 = vld [vmem:[%s335 + $0x40] sm:$0xff]
      %v686 = vld [vmem:[%s335 + $0x48] sm:$0xff]
      %v687 = vld [vmem:[%s335 + $0x50] sm:$0xff]
      %v688 = vld [vmem:[%s335 + $0x58] sm:$0xff]
      %s689 = scalar_lea.vmem %s287, 512
      %v690 = vld [vmem:[%s689] sm:$0xff]
      %v691 = vld [vmem:[%s689 + $0x8] sm:$0xff]
      %v692 = vld [vmem:[%s689 + $0x10] sm:$0xff]
      %v693 = vld [vmem:[%s689 + $0x18] sm:$0xff]
      %v694 = vld [vmem:[%s689 + $0x20] sm:$0xff]
      %v695 = vld [vmem:[%s689 + $0x28] sm:$0xff]
      %v696 = vld [vmem:[%s689 + $0x30] sm:$0xff]
      %v697 = vld [vmem:[%s689 + $0x38] sm:$0xff]
      %v698 = vld [vmem:[%s689 + $0x40] sm:$0xff]
      %v699 = vld [vmem:[%s689 + $0x48] sm:$0xff]
      %v700 = vld [vmem:[%s689 + $0x50] sm:$0xff]
      %v701 = vld [vmem:[%s689 + $0x58] sm:$0xff]
      %v702 = vld [vmem:[%s689 + $0x60] sm:$0xff]
      %v703 = vld [vmem:[%s689 + $0x68] sm:$0xff]
      %v704 = vld [vmem:[%s689 + $0x70] sm:$0xff]
      %v705 = vld [vmem:[%s689 + $0x78] sm:$0xff]
      %706 = vmatprep.subr.mxu0 0.0
      %707 = vmatpush1.msra.mxu0 %v690
      %708 = vmatprep.subr.mxu0 0.0
      %709 = vmatpush1.msra.mxu0 %v691
      %710 = vmatprep.subr.mxu0 0.0
      %711 = vmatpush1.msra.mxu0 %v692
      %712 = vmatprep.subr.mxu0 0.0
      %713 = vmatpush1.msra.mxu0 %v693
      %714 = vmatprep.subr.mxu0 0.0
      %715 = vmatpush1.msra.mxu0 %v694
      %716 = vmatprep.subr.mxu0 0.0
      %717 = vmatpush1.msra.mxu0 %v695
      %718 = vmatprep.subr.mxu0 0.0
      %719 = vmatpush1.msra.mxu0 %v696
      %720 = vmatprep.subr.mxu0 0.0
      %721 = vmatpush1.msra.mxu0 %v697
      %722 = vmatprep.subr.mxu0 0.0
      %723 = vmatpush1.msra.mxu0 %v698
      %724 = vmatprep.subr.mxu0 0.0
      %725 = vmatpush1.msra.mxu0 %v699
      %726 = vmatprep.subr.mxu0 0.0
      %727 = vmatpush1.msra.mxu0 %v700
      %728 = vmatprep.subr.mxu0 0.0
      %729 = vmatpush1.msra.mxu0 %v701
      %730 = vmatprep.subr.mxu0 0.0
      %731 = vmatpush1.msra.mxu0 %v702
      %732 = vmatprep.subr.mxu0 0.0
      %733 = vmatpush1.msra.mxu0 %v703
      %734 = vmatprep.subr.mxu0 0.0
      %735 = vmatpush1.msra.mxu0 %v704
      %736 = vmatprep.subr.mxu0 0.0
      %737 = vmatpush1.msra.mxu0 %v705
      %738 = vmatprep.subr.mxu0 0.0
      %739 = vmatpush1.msra.mxu0 0.0
      %740 = vmatprep.subr.mxu0 0.0
      %741 = vmatpush1.msra.mxu0 0.0
      %742 = vmatprep.subr.mxu0 0.0
      %743 = vmatpush1.msra.mxu0 0.0
      %744 = vmatprep.subr.mxu0 0.0
      %745 = vmatpush1.msra.mxu0 0.0
      %746 = vmatprep.subr.mxu0 0.0
      %747 = vmatpush1.msra.mxu0 0.0
      %748 = vmatprep.subr.mxu0 0.0
      %749 = vmatpush1.msra.mxu0 0.0
      %750 = vmatprep.subr.mxu0 0.0
      %751 = vmatpush1.msra.mxu0 0.0
      %752 = vmatprep.subr.mxu0 0.0
      %753 = vmatpush1.msra.mxu0 0.0
      %754 = vmatprep.subr.mxu0 0.0
      %755 = vmatpush1.msra.mxu0 0.0
      %756 = vmatprep.subr.mxu0 0.0
      %757 = vmatpush1.msra.mxu0 0.0
      %758 = vmatprep.subr.mxu0 0.0
      %759 = vmatpush1.msra.mxu0 0.0
      %760 = vmatprep.subr.mxu0 0.0
      %761 = vmatpush1.msra.mxu0 0.0
      %762 = vmatprep.subr.mxu0 0.0
      %763 = vmatpush1.msra.mxu0 0.0
      %764 = vmatprep.subr.mxu0 0.0
      %765 = vmatpush1.msra.mxu0 0.0
      %766 = vmatprep.subr.mxu0 0.0
      %767 = vmatpush1.msra.mxu0 0.0
      %768 = vmatprep.subr.mxu0 0.0
      %769 = vmatpush1.msra.mxu0 0.0
      %770 = vmatprep.mubr.f32.mxu0 0.0
      %771 = vmatmul.mubr.f32.gmra.mrb[0].mxu0 %v677
      %v772 = vpop.f32.mrb[0].mxu0
      %v773 = vadd.f32 0.0, %v772
      %v774 = vpop.f32.mrb[0].mxu0
      %775 = vmatprep.mubr.f32.mxu0 0.0
      %776 = vmatmul.mubr.f32.gmra.mrb[0].mxu0 %v678
      %v777 = vpop.f32.mrb[0].mxu0
      %v778 = vadd.f32 0.0, %v777
      %v779 = vpop.f32.mrb[0].mxu0
      %780 = vmatprep.mubr.f32.mxu0 0.0
      %781 = vmatmul.mubr.f32.gmra.mrb[0].mxu0 %v679
      %v782 = vpop.f32.mrb[0].mxu0
      %v783 = vadd.f32 0.0, %v782
      %v784 = vpop.f32.mrb[0].mxu0
      %785 = vmatprep.mubr.f32.mxu0 0.0
      %786 = vmatmul.mubr.f32.gmra.mrb[0].mxu0 %v680
      %v787 = vpop.f32.mrb[0].mxu0
      %v788 = vadd.f32 0.0, %v787
      %v789 = vpop.f32.mrb[0].mxu0
      %790 = vmatprep.mubr.f32.mxu0 0.0
      %791 = vmatmul.mubr.f32.gmra.mrb[0].mxu0 %v681
      %v792 = vpop.f32.mrb[0].mxu0
      %v793 = vadd.f32 0.0, %v792
      %v794 = vpop.f32.mrb[0].mxu0
      %795 = vmatprep.mubr.f32.mxu0 0.0
      %796 = vmatmul.mubr.f32.gmra.mrb[0].mxu0 %v682
      %v797 = vpop.f32.mrb[0].mxu0
      %v798 = vadd.f32 0.0, %v797
      %v799 = vpop.f32.mrb[0].mxu0
      %800 = vmatprep.mubr.f32.mxu0 0.0
      %801 = vmatmul.mubr.f32.gmra.mrb[0].mxu0 %v683
      %v802 = vpop.f32.mrb[0].mxu0
      %v803 = vadd.f32 0.0, %v802
      %v804 = vpop.f32.mrb[0].mxu0
      %805 = vmatprep.mubr.f32.mxu0 0.0
      %806 = vmatmul.mubr.f32.gmra.mrb[0].mxu0 %v684
      %v807 = vpop.f32.mrb[0].mxu0
      %v808 = vadd.f32 0.0, %v807
      %v809 = vpop.f32.mrb[0].mxu0
      %810 = vmatprep.mubr.f32.mxu0 0.0
      %811 = vmatmul.mubr.f32.gmra.mrb[0].mxu0 %v685
      %v812 = vpop.f32.mrb[0].mxu0
      %v813 = vadd.f32 0.0, %v812
      %v814 = vpop.f32.mrb[0].mxu0
      %815 = vmatprep.mubr.f32.mxu0 0.0
      %816 = vmatmul.mubr.f32.gmra.mrb[0].mxu0 %v686
      %v817 = vpop.f32.mrb[0].mxu0
      %v818 = vadd.f32 0.0, %v817
      %v819 = vpop.f32.mrb[0].mxu0
      %820 = vmatprep.mubr.f32.mxu0 0.0
      %821 = vmatmul.mubr.f32.gmra.mrb[0].mxu0 %v687
      %v822 = vpop.f32.mrb[0].mxu0
      %v823 = vadd.f32 0.0, %v822
      %v824 = vpop.f32.mrb[0].mxu0
      %825 = vmatprep.mubr.f32.mxu0 0.0
      %826 = vmatmul.mubr.f32.gmra.mrb[0].mxu0 %v688
      %v827 = vpop.f32.mrb[0].mxu0
      %v828 = vadd.f32 0.0, %v827
      %v829 = vpop.f32.mrb[0].mxu0
      %830 = vdwg.mxu0
      %831 = vmatprep.subr.mxu0 0.0
      %832 = vmatpush1.msra.mxu0 %v661
      %833 = vmatprep.subr.mxu0 0.0
      %834 = vmatpush1.msra.mxu0 %v662
      %835 = vmatprep.subr.mxu0 0.0
      %836 = vmatpush1.msra.mxu0 %v663
      %837 = vmatprep.subr.mxu0 0.0
      %838 = vmatpush1.msra.mxu0 %v664
      %839 = vmatprep.subr.mxu0 0.0
      %840 = vmatpush1.msra.mxu0 %v665
      %841 = vmatprep.subr.mxu0 0.0
      %842 = vmatpush1.msra.mxu0 %v666
      %843 = vmatprep.subr.mxu0 0.0
      %844 = vmatpush1.msra.mxu0 %v667
      %845 = vmatprep.subr.mxu0 0.0
      %846 = vmatpush1.msra.mxu0 %v668
      %847 = vmatprep.subr.mxu0 0.0
      %848 = vmatpush1.msra.mxu0 %v669
      %849 = vmatprep.subr.mxu0 0.0
      %850 = vmatpush1.msra.mxu0 %v670
      %851 = vmatprep.subr.mxu0 0.0
      %852 = vmatpush1.msra.mxu0 %v671
      %853 = vmatprep.subr.mxu0 0.0
      %854 = vmatpush1.msra.mxu0 %v672
      %855 = vmatprep.subr.mxu0 0.0
      %856 = vmatpush1.msra.mxu0 %v673
      %857 = vmatprep.subr.mxu0 0.0
      %858 = vmatpush1.msra.mxu0 %v674
      %859 = vmatprep.subr.mxu0 0.0
      %860 = vmatpush1.msra.mxu0 %v675
      %861 = vmatprep.subr.mxu0 0.0
      %862 = vmatpush1.msra.mxu0 %v676
      %863 = vmatprep.subr.mxu0 0.0
      %864 = vmatpush1.msra.mxu0 0.0
      %865 = vmatprep.subr.mxu0 0.0
      %866 = vmatpush1.msra.mxu0 0.0
      %867 = vmatprep.subr.mxu0 0.0
      %868 = vmatpush1.msra.mxu0 0.0
      %869 = vmatprep.subr.mxu0 0.0
      %870 = vmatpush1.msra.mxu0 0.0
      %871 = vmatprep.subr.mxu0 0.0
      %872 = vmatpush1.msra.mxu0 0.0
      %873 = vmatprep.subr.mxu0 0.0
      %874 = vmatpush1.msra.mxu0 0.0
      %875 = vmatprep.subr.mxu0 0.0
      %876 = vmatpush1.msra.mxu0 0.0
      %877 = vmatprep.subr.mxu0 0.0
      %878 = vmatpush1.msra.mxu0 0.0
      %879 = vmatprep.subr.mxu0 0.0
      %880 = vmatpush1.msra.mxu0 0.0
      %881 = vmatprep.subr.mxu0 0.0
      %882 = vmatpush1.msra.mxu0 0.0
      %883 = vmatprep.subr.mxu0 0.0
      %884 = vmatpush1.msra.mxu0 0.0
      %885 = vmatprep.subr.mxu0 0.0
      %886 = vmatpush1.msra.mxu0 0.0
      %887 = vmatprep.subr.mxu0 0.0
      %888 = vmatpush1.msra.mxu0 0.0
      %889 = vmatprep.subr.mxu0 0.0
      %890 = vmatpush1.msra.mxu0 0.0
      %891 = vmatprep.subr.mxu0 0.0
      %892 = vmatpush1.msra.mxu0 0.0
      %893 = vmatprep.subr.mxu0 0.0
      %894 = vmatpush1.msra.mxu0 0.0
      %895 = vmatprep.mubr.f32.mxu0 0.0
      %896 = vmatmul.mubr.f32.gmra.mrb[0].mxu0 %v648
      %v897 = vpop.f32.mrb[0].mxu0
      %v898 = vadd.f32 %v773, %v897
      %v899 = vpop.f32.mrb[0].mxu0
      %900 = vmatprep.mubr.f32.mxu0 0.0
      %901 = vmatmul.mubr.f32.gmra.mrb[0].mxu0 %v649
      %v902 = vpop.f32.mrb[0].mxu0
      %v903 = vadd.f32 %v778, %v902
      %v904 = vpop.f32.mrb[0].mxu0
      %905 = vmatprep.mubr.f32.mxu0 0.0
      %906 = vmatmul.mubr.f32.gmra.mrb[0].mxu0 %v650
      %v907 = vpop.f32.mrb[0].mxu0
      %v908 = vadd.f32 %v783, %v907
      %v909 = vpop.f32.mrb[0].mxu0
      %910 = vmatprep.mubr.f32.mxu0 0.0
      %911 = vmatmul.mubr.f32.gmra.mrb[0].mxu0 %v651
      %v912 = vpop.f32.mrb[0].mxu0
      %v913 = vadd.f32 %v788, %v912
      %v914 = vpop.f32.mrb[0].mxu0
      %915 = vmatprep.mubr.f32.mxu0 0.0
      %916 = vmatmul.mubr.f32.gmra.mrb[0].mxu0 %v652
      %v917 = vpop.f32.mrb[0].mxu0
      %v918 = vadd.f32 %v793, %v917
      %v919 = vpop.f32.mrb[0].mxu0
      %920 = vmatprep.mubr.f32.mxu0 0.0
      %921 = vmatmul.mubr.f32.gmra.mrb[0].mxu0 %v653
      %v922 = vpop.f32.mrb[0].mxu0
      %v923 = vadd.f32 %v798, %v922
      %v924 = vpop.f32.mrb[0].mxu0
      %925 = vmatprep.mubr.f32.mxu0 0.0
      %926 = vmatmul.mubr.f32.gmra.mrb[0].mxu0 %v654
      %v927 = vpop.f32.mrb[0].mxu0
      %v928 = vadd.f32 %v803, %v927
      %v929 = vpop.f32.mrb[0].mxu0
      %930 = vmatprep.mubr.f32.mxu0 0.0
      %931 = vmatmul.mubr.f32.gmra.mrb[0].mxu0 %v655
      %v932 = vpop.f32.mrb[0].mxu0
      %v933 = vadd.f32 %v808, %v932
      %v934 = vpop.f32.mrb[0].mxu0
      %935 = vmatprep.mubr.f32.mxu0 0.0
      %936 = vmatmul.mubr.f32.gmra.mrb[0].mxu0 %v656
      %v937 = vpop.f32.mrb[0].mxu0
      %v938 = vadd.f32 %v813, %v937
      %v939 = vpop.f32.mrb[0].mxu0
      %940 = vmatprep.mubr.f32.mxu0 0.0
      %941 = vmatmul.mubr.f32.gmra.mrb[0].mxu0 %v657
      %v942 = vpop.f32.mrb[0].mxu0
      %v943 = vadd.f32 %v818, %v942
      %v944 = vpop.f32.mrb[0].mxu0
      %945 = vmatprep.mubr.f32.mxu0 0.0
      %946 = vmatmul.mubr.f32.gmra.mrb[0].mxu0 %v658
      %v947 = vpop.f32.mrb[0].mxu0
      %v948 = vadd.f32 %v823, %v947
      %v949 = vpop.f32.mrb[0].mxu0
      %950 = vmatprep.mubr.f32.mxu0 0.0
      %951 = vmatmul.mubr.f32.gmra.mrb[0].mxu0 %v659
      %v952 = vpop.f32.mrb[0].mxu0
      %v953 = vadd.f32 %v828, %v952
      %v954 = vpop.f32.mrb[0].mxu0
      %955 = vdwg.mxu0
      %s956 = scalar_lea.vmem %s296, 1
      %v957 = vld [vmem:[%s956] sm:$0x1]
      %s958 = scalar_lea.vmem %s300, 1
      %v959 = vld [vmem:[%s958] sm:$0x1]
      %v960 = vadd.f32 %v957, %v959
      %v962 = vlaneseq
      %v963 = vshrl.u32 %v962, 7
      %v964 = vsub.s32 0, %v963
      %v965 = vrot.slane %v960, %v964
      %v967 = vadd.f32 %v898, %v965
      %v968 = vadd.f32 %v903, %v965
      %v969 = vadd.f32 %v908, %v965
      %v970 = vadd.f32 %v913, %v965
      %v971 = vadd.f32 %v918, %v965
      %v972 = vadd.f32 %v923, %v965
      %v973 = vadd.f32 %v928, %v965
      %v974 = vadd.f32 %v933, %v965
      %v975 = vadd.f32 %v938, %v965
      %v976 = vadd.f32 %v943, %v965
      %v977 = vadd.f32 %v948, %v965
      %v978 = vadd.f32 %v953, %v965
      %979 = vst [vmem:[#allocation3] sm:$0xff] %v967
      %980 = vst [vmem:[#allocation3 + $0x8] sm:$0xff] %v968
      %981 = vst [vmem:[#allocation3 + $0x10] sm:$0xff] %v969
      %982 = vst [vmem:[#allocation3 + $0x18] sm:$0xff] %v970
      %983 = vst [vmem:[#allocation3 + $0x20] sm:$0xff] %v971
      %984 = vst [vmem:[#allocation3 + $0x28] sm:$0xff] %v972
      %985 = vst [vmem:[#allocation3 + $0x30] sm:$0xff] %v973
      %986 = vst [vmem:[#allocation3 + $0x38] sm:$0xff] %v974
      %987 = vst [vmem:[#allocation3 + $0x40] sm:$0xff] %v975
      %988 = vst [vmem:[#allocation3 + $0x48] sm:$0xff] %v976
      %989 = vst [vmem:[#allocation3 + $0x50] sm:$0xff] %v977
      %990 = vst [vmem:[#allocation3 + $0x58] sm:$0xff] %v978
      %v991 = vld [vmem:[%s0] sm:$0xff]
      %v992 = vld [vmem:[%s0 + $0x8] sm:$0xff]
      %v993 = vld [vmem:[%s0 + $0x10] sm:$0xff]
      %v994 = vld [vmem:[%s0 + $0x18] sm:$0xff]
      %v995 = vld [vmem:[%s0 + $0x20] sm:$0xff]
      %v996 = vld [vmem:[%s0 + $0x28] sm:$0xff]
      %v997 = vld [vmem:[%s0 + $0x30] sm:$0xff]
      %v998 = vld [vmem:[%s0 + $0x38] sm:$0xff]
      %v999 = vld [vmem:[%s0 + $0x40] sm:$0xff]
      %v1000 = vld [vmem:[%s0 + $0x48] sm:$0xff]
      %v1001 = vld [vmem:[%s0 + $0x50] sm:$0xff]
      %v1002 = vld [vmem:[%s0 + $0x58] sm:$0xff]
      %s1003 = scalar_lea.vmem %s287, 256
      %v1004 = vld [vmem:[%s1003] sm:$0xff]
      %v1005 = vld [vmem:[%s1003 + $0x8] sm:$0xff]
      %v1006 = vld [vmem:[%s1003 + $0x10] sm:$0xff]
      %v1007 = vld [vmem:[%s1003 + $0x18] sm:$0xff]
      %v1008 = vld [vmem:[%s1003 + $0x20] sm:$0xff]
      %v1009 = vld [vmem:[%s1003 + $0x28] sm:$0xff]
      %v1010 = vld [vmem:[%s1003 + $0x30] sm:$0xff]
      %v1011 = vld [vmem:[%s1003 + $0x38] sm:$0xff]
      %v1012 = vld [vmem:[%s1003 + $0x40] sm:$0xff]
      %v1013 = vld [vmem:[%s1003 + $0x48] sm:$0xff]
      %v1014 = vld [vmem:[%s1003 + $0x50] sm:$0xff]
      %v1015 = vld [vmem:[%s1003 + $0x58] sm:$0xff]
      %v1016 = vld [vmem:[%s1003 + $0x60] sm:$0xff]
      %v1017 = vld [vmem:[%s1003 + $0x68] sm:$0xff]
      %v1018 = vld [vmem:[%s1003 + $0x70] sm:$0xff]
      %v1019 = vld [vmem:[%s1003 + $0x78] sm:$0xff]
      %v1020 = vld [vmem:[%s335] sm:$0xff]
      %v1021 = vld [vmem:[%s335 + $0x8] sm:$0xff]
      %v1022 = vld [vmem:[%s335 + $0x10] sm:$0xff]
      %v1023 = vld [vmem:[%s335 + $0x18] sm:$0xff]
      %v1024 = vld [vmem:[%s335 + $0x20] sm:$0xff]
      %v1025 = vld [vmem:[%s335 + $0x28] sm:$0xff]
      %v1026 = vld [vmem:[%s335 + $0x30] sm:$0xff]
      %v1027 = vld [vmem:[%s335 + $0x38] sm:$0xff]
      %v1028 = vld [vmem:[%s335 + $0x40] sm:$0xff]
      %v1029 = vld [vmem:[%s335 + $0x48] sm:$0xff]
      %v1030 = vld [vmem:[%s335 + $0x50] sm:$0xff]
      %v1031 = vld [vmem:[%s335 + $0x58] sm:$0xff]
      %s1032 = scalar_lea.vmem %s287, 640
      %v1033 = vld [vmem:[%s1032] sm:$0xff]
      %v1034 = vld [vmem:[%s1032 + $0x8] sm:$0xff]
      %v1035 = vld [vmem:[%s1032 + $0x10] sm:$0xff]
      %v1036 = vld [vmem:[%s1032 + $0x18] sm:$0xff]
      %v1037 = vld [vmem:[%s1032 + $0x20] sm:$0xff]
      %v1038 = vld [vmem:[%s1032 + $0x28] sm:$0xff]
      %v1039 = vld [vmem:[%s1032 + $0x30] sm:$0xff]
      %v1040 = vld [vmem:[%s1032 + $0x38] sm:$0xff]
      %v1041 = vld [vmem:[%s1032 + $0x40] sm:$0xff]
      %v1042 = vld [vmem:[%s1032 + $0x48] sm:$0xff]
      %v1043 = vld [vmem:[%s1032 + $0x50] sm:$0xff]
      %v1044 = vld [vmem:[%s1032 + $0x58] sm:$0xff]
      %v1045 = vld [vmem:[%s1032 + $0x60] sm:$0xff]
      %v1046 = vld [vmem:[%s1032 + $0x68] sm:$0xff]
      %v1047 = vld [vmem:[%s1032 + $0x70] sm:$0xff]
      %v1048 = vld [vmem:[%s1032 + $0x78] sm:$0xff]
      %1049 = vmatprep.subr.mxu0 0.0
      %1050 = vmatpush1.msra.mxu0 %v1033
      %1051 = vmatprep.subr.mxu0 0.0
      %1052 = vmatpush1.msra.mxu0 %v1034
      %1053 = vmatprep.subr.mxu0 0.0
      %1054 = vmatpush1.msra.mxu0 %v1035
      %1055 = vmatprep.subr.mxu0 0.0
      %1056 = vmatpush1.msra.mxu0 %v1036
      %1057 = vmatprep.subr.mxu0 0.0
      %1058 = vmatpush1.msra.mxu0 %v1037
      %1059 = vmatprep.subr.mxu0 0.0
      %1060 = vmatpush1.msra.mxu0 %v1038
      %1061 = vmatprep.subr.mxu0 0.0
      %1062 = vmatpush1.msra.mxu0 %v1039
      %1063 = vmatprep.subr.mxu0 0.0
      %1064 = vmatpush1.msra.mxu0 %v1040
      %1065 = vmatprep.subr.mxu0 0.0
      %1066 = vmatpush1.msra.mxu0 %v1041
      %1067 = vmatprep.subr.mxu0 0.0
      %1068 = vmatpush1.msra.mxu0 %v1042
      %1069 = vmatprep.subr.mxu0 0.0
      %1070 = vmatpush1.msra.mxu0 %v1043
      %1071 = vmatprep.subr.mxu0 0.0
      %1072 = vmatpush1.msra.mxu0 %v1044
      %1073 = vmatprep.subr.mxu0 0.0
      %1074 = vmatpush1.msra.mxu0 %v1045
      %1075 = vmatprep.subr.mxu0 0.0
      %1076 = vmatpush1.msra.mxu0 %v1046
      %1077 = vmatprep.subr.mxu0 0.0
      %1078 = vmatpush1.msra.mxu0 %v1047
      %1079 = vmatprep.subr.mxu0 0.0
      %1080 = vmatpush1.msra.mxu0 %v1048
      %1081 = vmatprep.subr.mxu0 0.0
      %1082 = vmatpush1.msra.mxu0 0.0
      %1083 = vmatprep.subr.mxu0 0.0
      %1084 = vmatpush1.msra.mxu0 0.0
      %1085 = vmatprep.subr.mxu0 0.0
      %1086 = vmatpush1.msra.mxu0 0.0
      %1087 = vmatprep.subr.mxu0 0.0
      %1088 = vmatpush1.msra.mxu0 0.0
      %1089 = vmatprep.subr.mxu0 0.0
      %1090 = vmatpush1.msra.mxu0 0.0
      %1091 = vmatprep.subr.mxu0 0.0
      %1092 = vmatpush1.msra.mxu0 0.0
      %1093 = vmatprep.subr.mxu0 0.0
      %1094 = vmatpush1.msra.mxu0 0.0
      %1095 = vmatprep.subr.mxu0 0.0
      %1096 = vmatpush1.msra.mxu0 0.0
      %1097 = vmatprep.subr.mxu0 0.0
      %1098 = vmatpush1.msra.mxu0 0.0
      %1099 = vmatprep.subr.mxu0 0.0
      %1100 = vmatpush1.msra.mxu0 0.0
      %1101 = vmatprep.subr.mxu0 0.0
      %1102 = vmatpush1.msra.mxu0 0.0
      %1103 = vmatprep.subr.mxu0 0.0
      %1104 = vmatpush1.msra.mxu0 0.0
      %1105 = vmatprep.subr.mxu0 0.0
      %1106 = vmatpush1.msra.mxu0 0.0
      %1107 = vmatprep.subr.mxu0 0.0
      %1108 = vmatpush1.msra.mxu0 0.0
      %1109 = vmatprep.subr.mxu0 0.0
      %1110 = vmatpush1.msra.mxu0 0.0
      %1111 = vmatprep.subr.mxu0 0.0
      %1112 = vmatpush1.msra.mxu0 0.0
      %1113 = vmatprep.mubr.f32.mxu0 0.0
      %1114 = vmatmul.mubr.f32.gmra.mrb[0].mxu0 %v1020
      %v1115 = vpop.f32.mrb[0].mxu0
      %v1116 = vadd.f32 0.0, %v1115
      %v1117 = vpop.f32.mrb[0].mxu0
      %1118 = vmatprep.mubr.f32.mxu0 0.0
      %1119 = vmatmul.mubr.f32.gmra.mrb[0].mxu0 %v1021
      %v1120 = vpop.f32.mrb[0].mxu0
      %v1121 = vadd.f32 0.0, %v1120
      %v1122 = vpop.f32.mrb[0].mxu0
      %1123 = vmatprep.mubr.f32.mxu0 0.0
      %1124 = vmatmul.mubr.f32.gmra.mrb[0].mxu0 %v1022
      %v1125 = vpop.f32.mrb[0].mxu0
      %v1126 = vadd.f32 0.0, %v1125
      %v1127 = vpop.f32.mrb[0].mxu0
      %1128 = vmatprep.mubr.f32.mxu0 0.0
      %1129 = vmatmul.mubr.f32.gmra.mrb[0].mxu0 %v1023
      %v1130 = vpop.f32.mrb[0].mxu0
      %v1131 = vadd.f32 0.0, %v1130
      %v1132 = vpop.f32.mrb[0].mxu0
      %1133 = vmatprep.mubr.f32.mxu0 0.0
      %1134 = vmatmul.mubr.f32.gmra.mrb[0].mxu0 %v1024
      %v1135 = vpop.f32.mrb[0].mxu0
      %v1136 = vadd.f32 0.0, %v1135
      %v1137 = vpop.f32.mrb[0].mxu0
      %1138 = vmatprep.mubr.f32.mxu0 0.0
      %1139 = vmatmul.mubr.f32.gmra.mrb[0].mxu0 %v1025
      %v1140 = vpop.f32.mrb[0].mxu0
      %v1141 = vadd.f32 0.0, %v1140
      %v1142 = vpop.f32.mrb[0].mxu0
      %1143 = vmatprep.mubr.f32.mxu0 0.0
      %1144 = vmatmul.mubr.f32.gmra.mrb[0].mxu0 %v1026
      %v1145 = vpop.f32.mrb[0].mxu0
      %v1146 = vadd.f32 0.0, %v1145
      %v1147 = vpop.f32.mrb[0].mxu0
      %1148 = vmatprep.mubr.f32.mxu0 0.0
      %1149 = vmatmul.mubr.f32.gmra.mrb[0].mxu0 %v1027
      %v1150 = vpop.f32.mrb[0].mxu0
      %v1151 = vadd.f32 0.0, %v1150
      %v1152 = vpop.f32.mrb[0].mxu0
      %1153 = vmatprep.mubr.f32.mxu0 0.0
      %1154 = vmatmul.mubr.f32.gmra.mrb[0].mxu0 %v1028
      %v1155 = vpop.f32.mrb[0].mxu0
      %v1156 = vadd.f32 0.0, %v1155
      %v1157 = vpop.f32.mrb[0].mxu0
      %1158 = vmatprep.mubr.f32.mxu0 0.0
      %1159 = vmatmul.mubr.f32.gmra.mrb[0].mxu0 %v1029
      %v1160 = vpop.f32.mrb[0].mxu0
      %v1161 = vadd.f32 0.0, %v1160
      %v1162 = vpop.f32.mrb[0].mxu0
      %1163 = vmatprep.mubr.f32.mxu0 0.0
      %1164 = vmatmul.mubr.f32.gmra.mrb[0].mxu0 %v1030
      %v1165 = vpop.f32.mrb[0].mxu0
      %v1166 = vadd.f32 0.0, %v1165
      %v1167 = vpop.f32.mrb[0].mxu0
      %1168 = vmatprep.mubr.f32.mxu0 0.0
      %1169 = vmatmul.mubr.f32.gmra.mrb[0].mxu0 %v1031
      %v1170 = vpop.f32.mrb[0].mxu0
      %v1171 = vadd.f32 0.0, %v1170
      %v1172 = vpop.f32.mrb[0].mxu0
      %1173 = vdwg.mxu0
      %1174 = vmatprep.subr.mxu0 0.0
      %1175 = vmatpush1.msra.mxu0 %v1004
      %1176 = vmatprep.subr.mxu0 0.0
      %1177 = vmatpush1.msra.mxu0 %v1005
      %1178 = vmatprep.subr.mxu0 0.0
      %1179 = vmatpush1.msra.mxu0 %v1006
      %1180 = vmatprep.subr.mxu0 0.0
      %1181 = vmatpush1.msra.mxu0 %v1007
      %1182 = vmatprep.subr.mxu0 0.0
      %1183 = vmatpush1.msra.mxu0 %v1008
      %1184 = vmatprep.subr.mxu0 0.0
      %1185 = vmatpush1.msra.mxu0 %v1009
      %1186 = vmatprep.subr.mxu0 0.0
      %1187 = vmatpush1.msra.mxu0 %v1010
      %1188 = vmatprep.subr.mxu0 0.0
      %1189 = vmatpush1.msra.mxu0 %v1011
      %1190 = vmatprep.subr.mxu0 0.0
      %1191 = vmatpush1.msra.mxu0 %v1012
      %1192 = vmatprep.subr.mxu0 0.0
      %1193 = vmatpush1.msra.mxu0 %v1013
      %1194 = vmatprep.subr.mxu0 0.0
      %1195 = vmatpush1.msra.mxu0 %v1014
      %1196 = vmatprep.subr.mxu0 0.0
      %1197 = vmatpush1.msra.mxu0 %v1015
      %1198 = vmatprep.subr.mxu0 0.0
      %1199 = vmatpush1.msra.mxu0 %v1016
      %1200 = vmatprep.subr.mxu0 0.0
      %1201 = vmatpush1.msra.mxu0 %v1017
      %1202 = vmatprep.subr.mxu0 0.0
      %1203 = vmatpush1.msra.mxu0 %v1018
      %1204 = vmatprep.subr.mxu0 0.0
      %1205 = vmatpush1.msra.mxu0 %v1019
      %1206 = vmatprep.subr.mxu0 0.0
      %1207 = vmatpush1.msra.mxu0 0.0
      %1208 = vmatprep.subr.mxu0 0.0
      %1209 = vmatpush1.msra.mxu0 0.0
      %1210 = vmatprep.subr.mxu0 0.0
      %1211 = vmatpush1.msra.mxu0 0.0
      %1212 = vmatprep.subr.mxu0 0.0
      %1213 = vmatpush1.msra.mxu0 0.0
      %1214 = vmatprep.subr.mxu0 0.0
      %1215 = vmatpush1.msra.mxu0 0.0
      %1216 = vmatprep.subr.mxu0 0.0
      %1217 = vmatpush1.msra.mxu0 0.0
      %1218 = vmatprep.subr.mxu0 0.0
      %1219 = vmatpush1.msra.mxu0 0.0
      %1220 = vmatprep.subr.mxu0 0.0
      %1221 = vmatpush1.msra.mxu0 0.0
      %1222 = vmatprep.subr.mxu0 0.0
      %1223 = vmatpush1.msra.mxu0 0.0
      %1224 = vmatprep.subr.mxu0 0.0
      %1225 = vmatpush1.msra.mxu0 0.0
      %1226 = vmatprep.subr.mxu0 0.0
      %1227 = vmatpush1.msra.mxu0 0.0
      %1228 = vmatprep.subr.mxu0 0.0
      %1229 = vmatpush1.msra.mxu0 0.0
      %1230 = vmatprep.subr.mxu0 0.0
      %1231 = vmatpush1.msra.mxu0 0.0
      %1232 = vmatprep.subr.mxu0 0.0
      %1233 = vmatpush1.msra.mxu0 0.0
      %1234 = vmatprep.subr.mxu0 0.0
      %1235 = vmatpush1.msra.mxu0 0.0
      %1236 = vmatprep.subr.mxu0 0.0
      %1237 = vmatpush1.msra.mxu0 0.0
      %1238 = vmatprep.mubr.f32.mxu0 0.0
      %1239 = vmatmul.mubr.f32.gmra.mrb[0].mxu0 %v991
      %v1240 = vpop.f32.mrb[0].mxu0
      %v1241 = vadd.f32 %v1116, %v1240
      %v1242 = vpop.f32.mrb[0].mxu0
      %1243 = vmatprep.mubr.f32.mxu0 0.0
      %1244 = vmatmul.mubr.f32.gmra.mrb[0].mxu0 %v992
      %v1245 = vpop.f32.mrb[0].mxu0
      %v1246 = vadd.f32 %v1121, %v1245
      %v1247 = vpop.f32.mrb[0].mxu0
      %1248 = vmatprep.mubr.f32.mxu0 0.0
      %1249 = vmatmul.mubr.f32.gmra.mrb[0].mxu0 %v993
      %v1250 = vpop.f32.mrb[0].mxu0
      %v1251 = vadd.f32 %v1126, %v1250
      %v1252 = vpop.f32.mrb[0].mxu0
      %1253 = vmatprep.mubr.f32.mxu0 0.0
      %1254 = vmatmul.mubr.f32.gmra.mrb[0].mxu0 %v994
      %v1255 = vpop.f32.mrb[0].mxu0
      %v1256 = vadd.f32 %v1131, %v1255
      %v1257 = vpop.f32.mrb[0].mxu0
      %1258 = vmatprep.mubr.f32.mxu0 0.0
      %1259 = vmatmul.mubr.f32.gmra.mrb[0].mxu0 %v995
      %v1260 = vpop.f32.mrb[0].mxu0
      %v1261 = vadd.f32 %v1136, %v1260
      %v1262 = vpop.f32.mrb[0].mxu0
      %1263 = vmatprep.mubr.f32.mxu0 0.0
      %1264 = vmatmul.mubr.f32.gmra.mrb[0].mxu0 %v996
      %v1265 = vpop.f32.mrb[0].mxu0
      %v1266 = vadd.f32 %v1141, %v1265
      %v1267 = vpop.f32.mrb[0].mxu0
      %1268 = vmatprep.mubr.f32.mxu0 0.0
      %1269 = vmatmul.mubr.f32.gmra.mrb[0].mxu0 %v997
      %v1270 = vpop.f32.mrb[0].mxu0
      %v1271 = vadd.f32 %v1146, %v1270
      %v1272 = vpop.f32.mrb[0].mxu0
      %1273 = vmatprep.mubr.f32.mxu0 0.0
      %1274 = vmatmul.mubr.f32.gmra.mrb[0].mxu0 %v998
      %v1275 = vpop.f32.mrb[0].mxu0
      %v1276 = vadd.f32 %v1151, %v1275
      %v1277 = vpop.f32.mrb[0].mxu0
      %1278 = vmatprep.mubr.f32.mxu0 0.0
      %1279 = vmatmul.mubr.f32.gmra.mrb[0].mxu0 %v999
      %v1280 = vpop.f32.mrb[0].mxu0
      %v1281 = vadd.f32 %v1156, %v1280
      %v1282 = vpop.f32.mrb[0].mxu0
      %1283 = vmatprep.mubr.f32.mxu0 0.0
      %1284 = vmatmul.mubr.f32.gmra.mrb[0].mxu0 %v1000
      %v1285 = vpop.f32.mrb[0].mxu0
      %v1286 = vadd.f32 %v1161, %v1285
      %v1287 = vpop.f32.mrb[0].mxu0
      %1288 = vmatprep.mubr.f32.mxu0 0.0
      %1289 = vmatmul.mubr.f32.gmra.mrb[0].mxu0 %v1001
      %v1290 = vpop.f32.mrb[0].mxu0
      %v1291 = vadd.f32 %v1166, %v1290
      %v1292 = vpop.f32.mrb[0].mxu0
      %1293 = vmatprep.mubr.f32.mxu0 0.0
      %1294 = vmatmul.mubr.f32.gmra.mrb[0].mxu0 %v1002
      %v1295 = vpop.f32.mrb[0].mxu0
      %v1296 = vadd.f32 %v1171, %v1295
      %v1297 = vpop.f32.mrb[0].mxu0
      %1298 = vdwg.mxu0
      %s1299 = scalar_lea.vmem %s296, 2
      %v1300 = vld [vmem:[%s1299] sm:$0x1]
      %v1302 = vlaneseq
      %v1303 = vshrl.u32 %v1302, 7
      %v1304 = vsub.s32 0, %v1303
      %v1305 = vrot.slane %v1300, %v1304
      %v1307 = vadd.f32 %v1241, %v1305
      %v1308 = vadd.f32 %v1246, %v1305
      %v1309 = vadd.f32 %v1251, %v1305
      %v1310 = vadd.f32 %v1256, %v1305
      %v1311 = vadd.f32 %v1261, %v1305
      %v1312 = vadd.f32 %v1266, %v1305
      %v1313 = vadd.f32 %v1271, %v1305
      %v1314 = vadd.f32 %v1276, %v1305
      %v1315 = vadd.f32 %v1281, %v1305
      %v1316 = vadd.f32 %v1286, %v1305
      %v1317 = vadd.f32 %v1291, %v1305
      %v1318 = vadd.f32 %v1296, %v1305
      %1319 = vst [vmem:[#allocation4] sm:$0xff] %v1307
      %1320 = vst [vmem:[#allocation4 + $0x8] sm:$0xff] %v1308
      %1321 = vst [vmem:[#allocation4 + $0x10] sm:$0xff] %v1309
      %1322 = vst [vmem:[#allocation4 + $0x18] sm:$0xff] %v1310
      %1323 = vst [vmem:[#allocation4 + $0x20] sm:$0xff] %v1311
      %1324 = vst [vmem:[#allocation4 + $0x28] sm:$0xff] %v1312
      %1325 = vst [vmem:[#allocation4 + $0x30] sm:$0xff] %v1313
      %1326 = vst [vmem:[#allocation4 + $0x38] sm:$0xff] %v1314
      %1327 = vst [vmem:[#allocation4 + $0x40] sm:$0xff] %v1315
      %1328 = vst [vmem:[#allocation4 + $0x48] sm:$0xff] %v1316
      %1329 = vst [vmem:[#allocation4 + $0x50] sm:$0xff] %v1317
      %1330 = vst [vmem:[#allocation4 + $0x58] sm:$0xff] %v1318
      %v1331 = vld [vmem:[%s292] sm:$0xff]
      %v1332 = vld [vmem:[%s292 + $0x8] sm:$0xff]
      %v1333 = vld [vmem:[%s292 + $0x10] sm:$0xff]
      %v1334 = vld [vmem:[%s292 + $0x18] sm:$0xff]
      %v1335 = vld [vmem:[%s292 + $0x20] sm:$0xff]
      %v1336 = vld [vmem:[%s292 + $0x28] sm:$0xff]
      %v1337 = vld [vmem:[%s292 + $0x30] sm:$0xff]
      %v1338 = vld [vmem:[%s292 + $0x38] sm:$0xff]
      %v1339 = vld [vmem:[%s292 + $0x40] sm:$0xff]
      %v1340 = vld [vmem:[%s292 + $0x48] sm:$0xff]
      %v1341 = vld [vmem:[%s292 + $0x50] sm:$0xff]
      %v1342 = vld [vmem:[%s292 + $0x58] sm:$0xff]
      %v1343 = vld [vmem:[%s292 + $0x60] sm:$0xff]
      %v1344 = vld [vmem:[%s292 + $0x68] sm:$0xff]
      %v1345 = vld [vmem:[%s292 + $0x70] sm:$0xff]
      %v1346 = vld [vmem:[%s292 + $0x78] sm:$0xff]
      %s1347 = scalar_lea.vmem %s292, 128
      %v1348 = vld [vmem:[%s1347] sm:$0xff]
      %v1349 = vld [vmem:[%s1347 + $0x8] sm:$0xff]
      %v1350 = vld [vmem:[%s1347 + $0x10] sm:$0xff]
      %v1351 = vld [vmem:[%s1347 + $0x18] sm:$0xff]
      %v1352 = vld [vmem:[%s1347 + $0x20] sm:$0xff]
      %v1353 = vld [vmem:[%s1347 + $0x28] sm:$0xff]
      %v1354 = vld [vmem:[%s1347 + $0x30] sm:$0xff]
      %v1355 = vld [vmem:[%s1347 + $0x38] sm:$0xff]
      %v1356 = vld [vmem:[%s1347 + $0x40] sm:$0xff]
      %v1357 = vld [vmem:[%s1347 + $0x48] sm:$0xff]
      %v1358 = vld [vmem:[%s1347 + $0x50] sm:$0xff]
      %v1359 = vld [vmem:[%s1347 + $0x58] sm:$0xff]
      %v1360 = vld [vmem:[%s1347 + $0x60] sm:$0xff]
      %v1361 = vld [vmem:[%s1347 + $0x68] sm:$0xff]
      %v1362 = vld [vmem:[%s1347 + $0x70] sm:$0xff]
      %v1363 = vld [vmem:[%s1347 + $0x78] sm:$0xff]
      %s1364 = scalar_lea.vmem %s292, 256
      %v1365 = vld [vmem:[%s1364] sm:$0xff]
      %v1366 = vld [vmem:[%s1364 + $0x8] sm:$0xff]
      %v1367 = vld [vmem:[%s1364 + $0x10] sm:$0xff]
      %v1368 = vld [vmem:[%s1364 + $0x18] sm:$0xff]
      %v1369 = vld [vmem:[%s1364 + $0x20] sm:$0xff]
      %v1370 = vld [vmem:[%s1364 + $0x28] sm:$0xff]
      %v1371 = vld [vmem:[%s1364 + $0x30] sm:$0xff]
      %v1372 = vld [vmem:[%s1364 + $0x38] sm:$0xff]
      %v1373 = vld [vmem:[%s1364 + $0x40] sm:$0xff]
      %v1374 = vld [vmem:[%s1364 + $0x48] sm:$0xff]
      %v1375 = vld [vmem:[%s1364 + $0x50] sm:$0xff]
      %v1376 = vld [vmem:[%s1364 + $0x58] sm:$0xff]
      %v1377 = vld [vmem:[%s1364 + $0x60] sm:$0xff]
      %v1378 = vld [vmem:[%s1364 + $0x68] sm:$0xff]
      %v1379 = vld [vmem:[%s1364 + $0x70] sm:$0xff]
      %v1380 = vld [vmem:[%s1364 + $0x78] sm:$0xff]
      %v1381 = vld [vmem:[%s5] sm:$0xff]
      %1382 = vset.pattern.permute.xlu0 0
      %1383 = vperm.xlu0 %1382, %v1381
      %v1384 = vpop.permute.xlu0 %1383
      %s1385 = scalar_lea.vmem %s300, 2
      %v1386 = vld [vmem:[%s1385] sm:$0x1]
      %v1388 = vlaneseq
      %v1389 = vshrl.u32 %v1388, 7
      %v1390 = vsub.s32 0, %v1389
      %v1391 = vrot.slane %v1386, %v1390
      %s1393 = scalar_select %p306, 11, 0
      %s1394 = smul.u32 %s1393, 8
      %s1395 = scalar_lea.vmem [#allocation2], %s1394
      %v1396 = vld [vmem:[%s1395] sm:$0xff]
      %s1397 = scalar_lea.vmem [#allocation3], %s1394
      %v1398 = vld [vmem:[%s1397] sm:$0xff]
      %s1399 = scalar_lea.vmem [#allocation4], %s1394
      %v1400 = vld [vmem:[%s1399] sm:$0xff]
      %1401 = vmatprep.subr.mxu0 0.0
      %1402 = vmatpush1.msra.mxu0 %v1331
      %1403 = vmatprep.subr.mxu0 0.0
      %1404 = vmatpush1.msra.mxu0 %v1332
      %1405 = vmatprep.subr.mxu0 0.0
      %1406 = vmatpush1.msra.mxu0 %v1333
      %1407 = vmatprep.subr.mxu0 0.0
      %1408 = vmatpush1.msra.mxu0 %v1334
      %1409 = vmatprep.subr.mxu0 0.0
      %1410 = vmatpush1.msra.mxu0 %v1335
      %1411 = vmatprep.subr.mxu0 0.0
      %1412 = vmatpush1.msra.mxu0 %v1336
      %1413 = vmatprep.subr.mxu0 0.0
      %1414 = vmatpush1.msra.mxu0 %v1337
      %1415 = vmatprep.subr.mxu0 0.0
      %1416 = vmatpush1.msra.mxu0 %v1338
      %1417 = vmatprep.subr.mxu0 0.0
      %1418 = vmatpush1.msra.mxu0 %v1339
      %1419 = vmatprep.subr.mxu0 0.0
      %1420 = vmatpush1.msra.mxu0 %v1340
      %1421 = vmatprep.subr.mxu0 0.0
      %1422 = vmatpush1.msra.mxu0 %v1341
      %1423 = vmatprep.subr.mxu0 0.0
      %1424 = vmatpush1.msra.mxu0 %v1342
      %1425 = vmatprep.subr.mxu0 0.0
      %1426 = vmatpush1.msra.mxu0 %v1343
      %1427 = vmatprep.subr.mxu0 0.0
      %1428 = vmatpush1.msra.mxu0 %v1344
      %1429 = vmatprep.subr.mxu0 0.0
      %1430 = vmatpush1.msra.mxu0 %v1345
      %1431 = vmatprep.subr.mxu0 0.0
      %1432 = vmatpush1.msra.mxu0 %v1346
      %1433 = vmatprep.subr.mxu0 0.0
      %1434 = vmatpush1.msra.mxu0 0.0
      %1435 = vmatprep.subr.mxu0 0.0
      %1436 = vmatpush1.msra.mxu0 0.0
      %1437 = vmatprep.subr.mxu0 0.0
      %1438 = vmatpush1.msra.mxu0 0.0
      %1439 = vmatprep.subr.mxu0 0.0
      %1440 = vmatpush1.msra.mxu0 0.0
      %1441 = vmatprep.subr.mxu0 0.0
      %1442 = vmatpush1.msra.mxu0 0.0
      %1443 = vmatprep.subr.mxu0 0.0
      %1444 = vmatpush1.msra.mxu0 0.0
      %1445 = vmatprep.subr.mxu0 0.0
      %1446 = vmatpush1.msra.mxu0 0.0
      %1447 = vmatprep.subr.mxu0 0.0
      %1448 = vmatpush1.msra.mxu0 0.0
      %1449 = vmatprep.subr.mxu0 0.0
      %1450 = vmatpush1.msra.mxu0 0.0
      %1451 = vmatprep.subr.mxu0 0.0
      %1452 = vmatpush1.msra.mxu0 0.0
      %1453 = vmatprep.subr.mxu0 0.0
      %1454 = vmatpush1.msra.mxu0 0.0
      %1455 = vmatprep.subr.mxu0 0.0
      %1456 = vmatpush1.msra.mxu0 0.0
      %1457 = vmatprep.subr.mxu0 0.0
      %1458 = vmatpush1.msra.mxu0 0.0
      %1459 = vmatprep.subr.mxu0 0.0
      %1460 = vmatpush1.msra.mxu0 0.0
      %1461 = vmatprep.subr.mxu0 0.0
      %1462 = vmatpush1.msra.mxu0 0.0
      %1463 = vmatprep.subr.mxu0 0.0
      %1464 = vmatpush1.msra.mxu0 0.0
      %1465 = vmatprep.mubr.f32.mxu0 0.0
      %1466 = vmatmul.mubr.f32.gmra.mrb[0].mxu0 0.0
      %v1467 = vpop.f32.mrb[0].mxu0
      %v1468 = vadd.f32 0.0, %v1467
      %v1469 = vpop.f32.mrb[0].mxu0
      %1470 = vdwg.mxu0
      %v1471 = vadd.f32 %v1396, %v1468
      %v1472 = vxor.u32 %v1471, 2147483648
      %v1473 = vmul.f32 %v1472, 1.442695
      %v1474 = vpow.pop %v1473
      %v1475 = vadd.f32 %v1474, 1.0
      %v1476 = vrcp.pop %v1475
      %v1477 = vmul.f32 1.0, %v1476
      %1478 = vmatprep.subr.mxu0 0.0
      %1479 = vmatpush1.msra.mxu0 %v1348
      %1480 = vmatprep.subr.mxu0 0.0
      %1481 = vmatpush1.msra.mxu0 %v1349
      %1482 = vmatprep.subr.mxu0 0.0
      %1483 = vmatpush1.msra.mxu0 %v1350
      %1484 = vmatprep.subr.mxu0 0.0
      %1485 = vmatpush1.msra.mxu0 %v1351
      %1486 = vmatprep.subr.mxu0 0.0
      %1487 = vmatpush1.msra.mxu0 %v1352
      %1488 = vmatprep.subr.mxu0 0.0
      %1489 = vmatpush1.msra.mxu0 %v1353
      %1490 = vmatprep.subr.mxu0 0.0
      %1491 = vmatpush1.msra.mxu0 %v1354
      %1492 = vmatprep.subr.mxu0 0.0
      %1493 = vmatpush1.msra.mxu0 %v1355
      %1494 = vmatprep.subr.mxu0 0.0
      %1495 = vmatpush1.msra.mxu0 %v1356
      %1496 = vmatprep.subr.mxu0 0.0
      %1497 = vmatpush1.msra.mxu0 %v1357
      %1498 = vmatprep.subr.mxu0 0.0
      %1499 = vmatpush1.msra.mxu0 %v1358
      %1500 = vmatprep.subr.mxu0 0.0
      %1501 = vmatpush1.msra.mxu0 %v1359
      %1502 = vmatprep.subr.mxu0 0.0
      %1503 = vmatpush1.msra.mxu0 %v1360
      %1504 = vmatprep.subr.mxu0 0.0
      %1505 = vmatpush1.msra.mxu0 %v1361
      %1506 = vmatprep.subr.mxu0 0.0
      %1507 = vmatpush1.msra.mxu0 %v1362
      %1508 = vmatprep.subr.mxu0 0.0
      %1509 = vmatpush1.msra.mxu0 %v1363
      %1510 = vmatprep.subr.mxu0 0.0
      %1511 = vmatpush1.msra.mxu0 0.0
      %1512 = vmatprep.subr.mxu0 0.0
      %1513 = vmatpush1.msra.mxu0 0.0
      %1514 = vmatprep.subr.mxu0 0.0
      %1515 = vmatpush1.msra.mxu0 0.0
      %1516 = vmatprep.subr.mxu0 0.0
      %1517 = vmatpush1.msra.mxu0 0.0
      %1518 = vmatprep.subr.mxu0 0.0
      %1519 = vmatpush1.msra.mxu0 0.0
      %1520 = vmatprep.subr.mxu0 0.0
      %1521 = vmatpush1.msra.mxu0 0.0
      %1522 = vmatprep.subr.mxu0 0.0
      %1523 = vmatpush1.msra.mxu0 0.0
      %1524 = vmatprep.subr.mxu0 0.0
      %1525 = vmatpush1.msra.mxu0 0.0
      %1526 = vmatprep.subr.mxu0 0.0
      %1527 = vmatpush1.msra.mxu0 0.0
      %1528 = vmatprep.subr.mxu0 0.0
      %1529 = vmatpush1.msra.mxu0 0.0
      %1530 = vmatprep.subr.mxu0 0.0
      %1531 = vmatpush1.msra.mxu0 0.0
      %1532 = vmatprep.subr.mxu0 0.0
      %1533 = vmatpush1.msra.mxu0 0.0
      %1534 = vmatprep.subr.mxu0 0.0
      %1535 = vmatpush1.msra.mxu0 0.0
      %1536 = vmatprep.subr.mxu0 0.0
      %1537 = vmatpush1.msra.mxu0 0.0
      %1538 = vmatprep.subr.mxu0 0.0
      %1539 = vmatpush1.msra.mxu0 0.0
      %1540 = vmatprep.subr.mxu0 0.0
      %1541 = vmatpush1.msra.mxu0 0.0
      %1542 = vmatprep.mubr.f32.mxu0 0.0
      %1543 = vmatmul.mubr.f32.gmra.mrb[0].mxu0 0.0
      %v1544 = vpop.f32.mrb[0].mxu0
      %v1545 = vadd.f32 0.0, %v1544
      %v1546 = vpop.f32.mrb[0].mxu0
      %1547 = vdwg.mxu0
      %v1548 = vadd.f32 %v1398, %v1545
      %v1549 = vxor.u32 %v1548, 2147483648
      %v1550 = vmul.f32 %v1549, 1.442695
      %v1551 = vpow.pop %v1550
      %v1552 = vadd.f32 %v1551, 1.0
      %v1553 = vrcp.pop %v1552
      %v1554 = vmul.f32 1.0, %v1553
      %1555 = vmatprep.subr.mxu0 0.0
      %1556 = vmatpush1.msra.mxu0 %v1365
      %1557 = vmatprep.subr.mxu0 0.0
      %1558 = vmatpush1.msra.mxu0 %v1366
      %1559 = vmatprep.subr.mxu0 0.0
      %1560 = vmatpush1.msra.mxu0 %v1367
      %1561 = vmatprep.subr.mxu0 0.0
      %1562 = vmatpush1.msra.mxu0 %v1368
      %1563 = vmatprep.subr.mxu0 0.0
      %1564 = vmatpush1.msra.mxu0 %v1369
      %1565 = vmatprep.subr.mxu0 0.0
      %1566 = vmatpush1.msra.mxu0 %v1370
      %1567 = vmatprep.subr.mxu0 0.0
      %1568 = vmatpush1.msra.mxu0 %v1371
      %1569 = vmatprep.subr.mxu0 0.0
      %1570 = vmatpush1.msra.mxu0 %v1372
      %1571 = vmatprep.subr.mxu0 0.0
      %1572 = vmatpush1.msra.mxu0 %v1373
      %1573 = vmatprep.subr.mxu0 0.0
      %1574 = vmatpush1.msra.mxu0 %v1374
      %1575 = vmatprep.subr.mxu0 0.0
      %1576 = vmatpush1.msra.mxu0 %v1375
      %1577 = vmatprep.subr.mxu0 0.0
      %1578 = vmatpush1.msra.mxu0 %v1376
      %1579 = vmatprep.subr.mxu0 0.0
      %1580 = vmatpush1.msra.mxu0 %v1377
      %1581 = vmatprep.subr.mxu0 0.0
      %1582 = vmatpush1.msra.mxu0 %v1378
      %1583 = vmatprep.subr.mxu0 0.0
      %1584 = vmatpush1.msra.mxu0 %v1379
      %1585 = vmatprep.subr.mxu0 0.0
      %1586 = vmatpush1.msra.mxu0 %v1380
      %1587 = vmatprep.subr.mxu0 0.0
      %1588 = vmatpush1.msra.mxu0 0.0
      %1589 = vmatprep.subr.mxu0 0.0
      %1590 = vmatpush1.msra.mxu0 0.0
      %1591 = vmatprep.subr.mxu0 0.0
      %1592 = vmatpush1.msra.mxu0 0.0
      %1593 = vmatprep.subr.mxu0 0.0
      %1594 = vmatpush1.msra.mxu0 0.0
      %1595 = vmatprep.subr.mxu0 0.0
      %1596 = vmatpush1.msra.mxu0 0.0
      %1597 = vmatprep.subr.mxu0 0.0
      %1598 = vmatpush1.msra.mxu0 0.0
      %1599 = vmatprep.subr.mxu0 0.0
      %1600 = vmatpush1.msra.mxu0 0.0
      %1601 = vmatprep.subr.mxu0 0.0
      %1602 = vmatpush1.msra.mxu0 0.0
      %1603 = vmatprep.subr.mxu0 0.0
      %1604 = vmatpush1.msra.mxu0 0.0
      %1605 = vmatprep.subr.mxu0 0.0
      %1606 = vmatpush1.msra.mxu0 0.0
      %1607 = vmatprep.subr.mxu0 0.0
      %1608 = vmatpush1.msra.mxu0 0.0
      %1609 = vmatprep.subr.mxu0 0.0
      %1610 = vmatpush1.msra.mxu0 0.0
      %1611 = vmatprep.subr.mxu0 0.0
      %1612 = vmatpush1.msra.mxu0 0.0
      %1613 = vmatprep.subr.mxu0 0.0
      %1614 = vmatpush1.msra.mxu0 0.0
      %1615 = vmatprep.subr.mxu0 0.0
      %1616 = vmatpush1.msra.mxu0 0.0
      %1617 = vmatprep.subr.mxu0 0.0
      %1618 = vmatpush1.msra.mxu0 0.0
      %1619 = vmatprep.mubr.f32.mxu0 0.0
      %1620 = vmatmul.mubr.f32.gmra.mrb[0].mxu0 0.0
      %v1621 = vpop.f32.mrb[0].mxu0
      %v1622 = vadd.f32 %v1391, %v1621
      %v1623 = vpop.f32.mrb[0].mxu0
      %1624 = vdwg.mxu0
      %v1625 = vmul.f32 %v1477, %v1622
      %v1626 = vadd.f32 %v1400, %v1625
      %v1627 = vtanh.pop %v1626
      %v1628 = vsub.f32 1.0, %v1554
      %v1629 = vmul.f32 %v1628, %v1627
      %v1630 = vmul.f32 %v1554, 0.0
      %v1631 = vadd.f32 %v1629, %v1630
      %v1632 = vstv %s1393
      %vm1633 = vcmp.lt.s32.totalorder %v1632, %v1384
      %v1634 = vsel %vm1633, %v1631, 0.0
      %s1635 = scalar_lea.vmem %s305, %s1394
      %1636 = vst [vmem:[%s1635] sm:$0xff] %v1634
      %s1637 = scalar_select %p306, 10, 1
      %s1638 = smul.u32 %s1637, 8
      %s1639 = scalar_lea.vmem [#allocation2], %s1638
      %v1640 = vld [vmem:[%s1639] sm:$0xff]
      %s1641 = scalar_lea.vmem [#allocation3], %s1638
      %v1642 = vld [vmem:[%s1641] sm:$0xff]
      %s1643 = scalar_lea.vmem [#allocation4], %s1638
      %v1644 = vld [vmem:[%s1643] sm:$0xff]
      %1645 = vmatprep.subr.mxu0 0.0
      %1646 = vmatpush1.msra.mxu0 %v1331
      %1647 = vmatprep.subr.mxu0 0.0
      %1648 = vmatpush1.msra.mxu0 %v1332
      %1649 = vmatprep.subr.mxu0 0.0
      %1650 = vmatpush1.msra.mxu0 %v1333
      %1651 = vmatprep.subr.mxu0 0.0
      %1652 = vmatpush1.msra.mxu0 %v1334
      %1653 = vmatprep.subr.mxu0 0.0
      %1654 = vmatpush1.msra.mxu0 %v1335
      %1655 = vmatprep.subr.mxu0 0.0
      %1656 = vmatpush1.msra.mxu0 %v1336
      %1657 = vmatprep.subr.mxu0 0.0
      %1658 = vmatpush1.msra.mxu0 %v1337
      %1659 = vmatprep.subr.mxu0 0.0
      %1660 = vmatpush1.msra.mxu0 %v1338
      %1661 = vmatprep.subr.mxu0 0.0
      %1662 = vmatpush1.msra.mxu0 %v1339
      %1663 = vmatprep.subr.mxu0 0.0
      %1664 = vmatpush1.msra.mxu0 %v1340
      %1665 = vmatprep.subr.mxu0 0.0
      %1666 = vmatpush1.msra.mxu0 %v1341
      %1667 = vmatprep.subr.mxu0 0.0
      %1668 = vmatpush1.msra.mxu0 %v1342
      %1669 = vmatprep.subr.mxu0 0.0
      %1670 = vmatpush1.msra.mxu0 %v1343
      %1671 = vmatprep.subr.mxu0 0.0
      %1672 = vmatpush1.msra.mxu0 %v1344
      %1673 = vmatprep.subr.mxu0 0.0
      %1674 = vmatpush1.msra.mxu0 %v1345
      %1675 = vmatprep.subr.mxu0 0.0
      %1676 = vmatpush1.msra.mxu0 %v1346
      %1677 = vmatprep.subr.mxu0 0.0
      %1678 = vmatpush1.msra.mxu0 0.0
      %1679 = vmatprep.subr.mxu0 0.0
      %1680 = vmatpush1.msra.mxu0 0.0
      %1681 = vmatprep.subr.mxu0 0.0
      %1682 = vmatpush1.msra.mxu0 0.0
      %1683 = vmatprep.subr.mxu0 0.0
      %1684 = vmatpush1.msra.mxu0 0.0
      %1685 = vmatprep.subr.mxu0 0.0
      %1686 = vmatpush1.msra.mxu0 0.0
      %1687 = vmatprep.subr.mxu0 0.0
      %1688 = vmatpush1.msra.mxu0 0.0
      %1689 = vmatprep.subr.mxu0 0.0
      %1690 = vmatpush1.msra.mxu0 0.0
      %1691 = vmatprep.subr.mxu0 0.0
      %1692 = vmatpush1.msra.mxu0 0.0
      %1693 = vmatprep.subr.mxu0 0.0
      %1694 = vmatpush1.msra.mxu0 0.0
      %1695 = vmatprep.subr.mxu0 0.0
      %1696 = vmatpush1.msra.mxu0 0.0
      %1697 = vmatprep.subr.mxu0 0.0
      %1698 = vmatpush1.msra.mxu0 0.0
      %1699 = vmatprep.subr.mxu0 0.0
      %1700 = vmatpush1.msra.mxu0 0.0
      %1701 = vmatprep.subr.mxu0 0.0
      %1702 = vmatpush1.msra.mxu0 0.0
      %1703 = vmatprep.subr.mxu0 0.0
      %1704 = vmatpush1.msra.mxu0 0.0
      %1705 = vmatprep.subr.mxu0 0.0
      %1706 = vmatpush1.msra.mxu0 0.0
      %1707 = vmatprep.subr.mxu0 0.0
      %1708 = vmatpush1.msra.mxu0 0.0
      %1709 = vmatprep.mubr.f32.mxu0 0.0
      %1710 = vmatmul.mubr.f32.gmra.mrb[0].mxu0 %v1634
      %v1711 = vpop.f32.mrb[0].mxu0
      %v1712 = vadd.f32 0.0, %v1711
      %v1713 = vpop.f32.mrb[0].mxu0
      %1714 = vdwg.mxu0
      %v1715 = vadd.f32 %v1640, %v1712
      %v1716 = vxor.u32 %v1715, 2147483648
      %v1717 = vmul.f32 %v1716, 1.442695
      %v1718 = vpow.pop %v1717
      %v1719 = vadd.f32 %v1718, 1.0
      %v1720 = vrcp.pop %v1719
      %v1721 = vmul.f32 1.0, %v1720
      %1722 = vmatprep.subr.mxu0 0.0
      %1723 = vmatpush1.msra.mxu0 %v1348
      %1724 = vmatprep.subr.mxu0 0.0
      %1725 = vmatpush1.msra.mxu0 %v1349
      %1726 = vmatprep.subr.mxu0 0.0
      %1727 = vmatpush1.msra.mxu0 %v1350
      %1728 = vmatprep.subr.mxu0 0.0
      %1729 = vmatpush1.msra.mxu0 %v1351
      %1730 = vmatprep.subr.mxu0 0.0
      %1731 = vmatpush1.msra.mxu0 %v1352
      %1732 = vmatprep.subr.mxu0 0.0
      %1733 = vmatpush1.msra.mxu0 %v1353
      %1734 = vmatprep.subr.mxu0 0.0
      %1735 = vmatpush1.msra.mxu0 %v1354
      %1736 = vmatprep.subr.mxu0 0.0
      %1737 = vmatpush1.msra.mxu0 %v1355
      %1738 = vmatprep.subr.mxu0 0.0
      %1739 = vmatpush1.msra.mxu0 %v1356
      %1740 = vmatprep.subr.mxu0 0.0
      %1741 = vmatpush1.msra.mxu0 %v1357
      %1742 = vmatprep.subr.mxu0 0.0
      %1743 = vmatpush1.msra.mxu0 %v1358
      %1744 = vmatprep.subr.mxu0 0.0
      %1745 = vmatpush1.msra.mxu0 %v1359
      %1746 = vmatprep.subr.mxu0 0.0
      %1747 = vmatpush1.msra.mxu0 %v1360
      %1748 = vmatprep.subr.mxu0 0.0
      %1749 = vmatpush1.msra.mxu0 %v1361
      %1750 = vmatprep.subr.mxu0 0.0
      %1751 = vmatpush1.msra.mxu0 %v1362
      %1752 = vmatprep.subr.mxu0 0.0
      %1753 = vmatpush1.msra.mxu0 %v1363
      %1754 = vmatprep.subr.mxu0 0.0
      %1755 = vmatpush1.msra.mxu0 0.0
      %1756 = vmatprep.subr.mxu0 0.0
      %1757 = vmatpush1.msra.mxu0 0.0
      %1758 = vmatprep.subr.mxu0 0.0
      %1759 = vmatpush1.msra.mxu0 0.0
      %1760 = vmatprep.subr.mxu0 0.0
      %1761 = vmatpush1.msra.mxu0 0.0
      %1762 = vmatprep.subr.mxu0 0.0
      %1763 = vmatpush1.msra.mxu0 0.0
      %1764 = vmatprep.subr.mxu0 0.0
      %1765 = vmatpush1.msra.mxu0 0.0
      %1766 = vmatprep.subr.mxu0 0.0
      %1767 = vmatpush1.msra.mxu0 0.0
      %1768 = vmatprep.subr.mxu0 0.0
      %1769 = vmatpush1.msra.mxu0 0.0
      %1770 = vmatprep.subr.mxu0 0.0
      %1771 = vmatpush1.msra.mxu0 0.0
      %1772 = vmatprep.subr.mxu0 0.0
      %1773 = vmatpush1.msra.mxu0 0.0
      %1774 = vmatprep.subr.mxu0 0.0
      %1775 = vmatpush1.msra.mxu0 0.0
      %1776 = vmatprep.subr.mxu0 0.0
      %1777 = vmatpush1.msra.mxu0 0.0
      %1778 = vmatprep.subr.mxu0 0.0
      %1779 = vmatpush1.msra.mxu0 0.0
      %1780 = vmatprep.subr.mxu0 0.0
      %1781 = vmatpush1.msra.mxu0 0.0
      %1782 = vmatprep.subr.mxu0 0.0
      %1783 = vmatpush1.msra.mxu0 0.0
      %1784 = vmatprep.subr.mxu0 0.0
      %1785 = vmatpush1.msra.mxu0 0.0
      %1786 = vmatprep.mubr.f32.mxu0 0.0
      %1787 = vmatmul.mubr.f32.gmra.mrb[0].mxu0 %v1634
      %v1788 = vpop.f32.mrb[0].mxu0
      %v1789 = vadd.f32 0.0, %v1788
      %v1790 = vpop.f32.mrb[0].mxu0
      %1791 = vdwg.mxu0
      %v1792 = vadd.f32 %v1642, %v1789
      %v1793 = vxor.u32 %v1792, 2147483648
      %v1794 = vmul.f32 %v1793, 1.442695
      %v1795 = vpow.pop %v1794
      %v1796 = vadd.f32 %v1795, 1.0
      %v1797 = vrcp.pop %v1796
      %v1798 = vmul.f32 1.0, %v1797
      %1799 = vmatprep.subr.mxu0 0.0
      %1800 = vmatpush1.msra.mxu0 %v1365
      %1801 = vmatprep.subr.mxu0 0.0
      %1802 = vmatpush1.msra.mxu0 %v1366
      %1803 = vmatprep.subr.mxu0 0.0
      %1804 = vmatpush1.msra.mxu0 %v1367
      %1805 = vmatprep.subr.mxu0 0.0
      %1806 = vmatpush1.msra.mxu0 %v1368
      %1807 = vmatprep.subr.mxu0 0.0
      %1808 = vmatpush1.msra.mxu0 %v1369
      %1809 = vmatprep.subr.mxu0 0.0
      %1810 = vmatpush1.msra.mxu0 %v1370
      %1811 = vmatprep.subr.mxu0 0.0
      %1812 = vmatpush1.msra.mxu0 %v1371
      %1813 = vmatprep.subr.mxu0 0.0
      %1814 = vmatpush1.msra.mxu0 %v1372
      %1815 = vmatprep.subr.mxu0 0.0
      %1816 = vmatpush1.msra.mxu0 %v1373
      %1817 = vmatprep.subr.mxu0 0.0
      %1818 = vmatpush1.msra.mxu0 %v1374
      %1819 = vmatprep.subr.mxu0 0.0
      %1820 = vmatpush1.msra.mxu0 %v1375
      %1821 = vmatprep.subr.mxu0 0.0
      %1822 = vmatpush1.msra.mxu0 %v1376
      %1823 = vmatprep.subr.mxu0 0.0
      %1824 = vmatpush1.msra.mxu0 %v1377
      %1825 = vmatprep.subr.mxu0 0.0
      %1826 = vmatpush1.msra.mxu0 %v1378
      %1827 = vmatprep.subr.mxu0 0.0
      %1828 = vmatpush1.msra.mxu0 %v1379
      %1829 = vmatprep.subr.mxu0 0.0
      %1830 = vmatpush1.msra.mxu0 %v1380
      %1831 = vmatprep.subr.mxu0 0.0
      %1832 = vmatpush1.msra.mxu0 0.0
      %1833 = vmatprep.subr.mxu0 0.0
      %1834 = vmatpush1.msra.mxu0 0.0
      %1835 = vmatprep.subr.mxu0 0.0
      %1836 = vmatpush1.msra.mxu0 0.0
      %1837 = vmatprep.subr.mxu0 0.0
      %1838 = vmatpush1.msra.mxu0 0.0
      %1839 = vmatprep.subr.mxu0 0.0
      %1840 = vmatpush1.msra.mxu0 0.0
      %1841 = vmatprep.subr.mxu0 0.0
      %1842 = vmatpush1.msra.mxu0 0.0
      %1843 = vmatprep.subr.mxu0 0.0
      %1844 = vmatpush1.msra.mxu0 0.0
      %1845 = vmatprep.subr.mxu0 0.0
      %1846 = vmatpush1.msra.mxu0 0.0
      %1847 = vmatprep.subr.mxu0 0.0
      %1848 = vmatpush1.msra.mxu0 0.0
      %1849 = vmatprep.subr.mxu0 0.0
      %1850 = vmatpush1.msra.mxu0 0.0
      %1851 = vmatprep.subr.mxu0 0.0
      %1852 = vmatpush1.msra.mxu0 0.0
      %1853 = vmatprep.subr.mxu0 0.0
      %1854 = vmatpush1.msra.mxu0 0.0
      %1855 = vmatprep.subr.mxu0 0.0
      %1856 = vmatpush1.msra.mxu0 0.0
      %1857 = vmatprep.subr.mxu0 0.0
      %1858 = vmatpush1.msra.mxu0 0.0
      %1859 = vmatprep.subr.mxu0 0.0
      %1860 = vmatpush1.msra.mxu0 0.0
      %1861 = vmatprep.subr.mxu0 0.0
      %1862 = vmatpush1.msra.mxu0 0.0
      %1863 = vmatprep.mubr.f32.mxu0 0.0
      %1864 = vmatmul.mubr.f32.gmra.mrb[0].mxu0 %v1634
      %v1865 = vpop.f32.mrb[0].mxu0
      %v1866 = vadd.f32 %v1391, %v1865
      %v1867 = vpop.f32.mrb[0].mxu0
      %1868 = vdwg.mxu0
      %v1869 = vmul.f32 %v1721, %v1866
      %v1870 = vadd.f32 %v1644, %v1869
      %v1871 = vtanh.pop %v1870
      %v1872 = vsub.f32 1.0, %v1798
      %v1873 = vmul.f32 %v1872, %v1871
      %v1874 = vmul.f32 %v1798, %v1634
      %v1875 = vadd.f32 %v1873, %v1874
      %v1876 = vstv %s1637
      %vm1877 = vcmp.lt.s32.totalorder %v1876, %v1384
      %v1878 = vsel %vm1877, %v1875, %v1634
      %v1879 = vsel %vm1877, %v1875, 0.0
      %s1880 = scalar_lea.vmem %s305, %s1638
      %1881 = vst [vmem:[%s1880] sm:$0xff] %v1879
      %s1882 = scalar_select %p306, 9, 2
      %s1883 = smul.u32 %s1882, 8
      %s1884 = scalar_lea.vmem [#allocation2], %s1883
      %v1885 = vld [vmem:[%s1884] sm:$0xff]
      %s1886 = scalar_lea.vmem [#allocation3], %s1883
      %v1887 = vld [vmem:[%s1886] sm:$0xff]
      %s1888 = scalar_lea.vmem [#allocation4], %s1883
      %v1889 = vld [vmem:[%s1888] sm:$0xff]
      %1890 = vmatprep.subr.mxu0 0.0
      %1891 = vmatpush1.msra.mxu0 %v1331
      %1892 = vmatprep.subr.mxu0 0.0
      %1893 = vmatpush1.msra.mxu0 %v1332
      %1894 = vmatprep.subr.mxu0 0.0
      %1895 = vmatpush1.msra.mxu0 %v1333
      %1896 = vmatprep.subr.mxu0 0.0
      %1897 = vmatpush1.msra.mxu0 %v1334
      %1898 = vmatprep.subr.mxu0 0.0
      %1899 = vmatpush1.msra.mxu0 %v1335
      %1900 = vmatprep.subr.mxu0 0.0
      %1901 = vmatpush1.msra.mxu0 %v1336
      %1902 = vmatprep.subr.mxu0 0.0
      %1903 = vmatpush1.msra.mxu0 %v1337
      %1904 = vmatprep.subr.mxu0 0.0
      %1905 = vmatpush1.msra.mxu0 %v1338
      %1906 = vmatprep.subr.mxu0 0.0
      %1907 = vmatpush1.msra.mxu0 %v1339
      %1908 = vmatprep.subr.mxu0 0.0
      %1909 = vmatpush1.msra.mxu0 %v1340
      %1910 = vmatprep.subr.mxu0 0.0
      %1911 = vmatpush1.msra.mxu0 %v1341
      %1912 = vmatprep.subr.mxu0 0.0
      %1913 = vmatpush1.msra.mxu0 %v1342
      %1914 = vmatprep.subr.mxu0 0.0
      %1915 = vmatpush1.msra.mxu0 %v1343
      %1916 = vmatprep.subr.mxu0 0.0
      %1917 = vmatpush1.msra.mxu0 %v1344
      %1918 = vmatprep.subr.mxu0 0.0
      %1919 = vmatpush1.msra.mxu0 %v1345
      %1920 = vmatprep.subr.mxu0 0.0
      %1921 = vmatpush1.msra.mxu0 %v1346
      %1922 = vmatprep.subr.mxu0 0.0
      %1923 = vmatpush1.msra.mxu0 0.0
      %1924 = vmatprep.subr.mxu0 0.0
      %1925 = vmatpush1.msra.mxu0 0.0
      %1926 = vmatprep.subr.mxu0 0.0
      %1927 = vmatpush1.msra.mxu0 0.0
      %1928 = vmatprep.subr.mxu0 0.0
      %1929 = vmatpush1.msra.mxu0 0.0
      %1930 = vmatprep.subr.mxu0 0.0
      %1931 = vmatpush1.msra.mxu0 0.0
      %1932 = vmatprep.subr.mxu0 0.0
      %1933 = vmatpush1.msra.mxu0 0.0
      %1934 = vmatprep.subr.mxu0 0.0
      %1935 = vmatpush1.msra.mxu0 0.0
      %1936 = vmatprep.subr.mxu0 0.0
      %1937 = vmatpush1.msra.mxu0 0.0
      %1938 = vmatprep.subr.mxu0 0.0
      %1939 = vmatpush1.msra.mxu0 0.0
      %1940 = vmatprep.subr.mxu0 0.0
      %1941 = vmatpush1.msra.mxu0 0.0
      %1942 = vmatprep.subr.mxu0 0.0
      %1943 = vmatpush1.msra.mxu0 0.0
      %1944 = vmatprep.subr.mxu0 0.0
      %1945 = vmatpush1.msra.mxu0 0.0
      %1946 = vmatprep.subr.mxu0 0.0
      %1947 = vmatpush1.msra.mxu0 0.0
      %1948 = vmatprep.subr.mxu0 0.0
      %1949 = vmatpush1.msra.mxu0 0.0
      %1950 = vmatprep.subr.mxu0 0.0
      %1951 = vmatpush1.msra.mxu0 0.0
      %1952 = vmatprep.subr.mxu0 0.0
      %1953 = vmatpush1.msra.mxu0 0.0
      %1954 = vmatprep.mubr.f32.mxu0 0.0
      %1955 = vmatmul.mubr.f32.gmra.mrb[0].mxu0 %v1878
      %v1956 = vpop.f32.mrb[0].mxu0
      %v1957 = vadd.f32 0.0, %v1956
      %v1958 = vpop.f32.mrb[0].mxu0
      %1959 = vdwg.mxu0
      %v1960 = vadd.f32 %v1885, %v1957
      %v1961 = vxor.u32 %v1960, 2147483648
      %v1962 = vmul.f32 %v1961, 1.442695
      %v1963 = vpow.pop %v1962
      %v1964 = vadd.f32 %v1963, 1.0
      %v1965 = vrcp.pop %v1964
      %v1966 = vmul.f32 1.0, %v1965
      %1967 = vmatprep.subr.mxu0 0.0
      %1968 = vmatpush1.msra.mxu0 %v1348
      %1969 = vmatprep.subr.mxu0 0.0
      %1970 = vmatpush1.msra.mxu0 %v1349
      %1971 = vmatprep.subr.mxu0 0.0
      %1972 = vmatpush1.msra.mxu0 %v1350
      %1973 = vmatprep.subr.mxu0 0.0
      %1974 = vmatpush1.msra.mxu0 %v1351
      %1975 = vmatprep.subr.mxu0 0.0
      %1976 = vmatpush1.msra.mxu0 %v1352
      %1977 = vmatprep.subr.mxu0 0.0
      %1978 = vmatpush1.msra.mxu0 %v1353
      %1979 = vmatprep.subr.mxu0 0.0
      %1980 = vmatpush1.msra.mxu0 %v1354
      %1981 = vmatprep.subr.mxu0 0.0
      %1982 = vmatpush1.msra.mxu0 %v1355
      %1983 = vmatprep.subr.mxu0 0.0
      %1984 = vmatpush1.msra.mxu0 %v1356
      %1985 = vmatprep.subr.mxu0 0.0
      %1986 = vmatpush1.msra.mxu0 %v1357
      %1987 = vmatprep.subr.mxu0 0.0
      %1988 = vmatpush1.msra.mxu0 %v1358
      %1989 = vmatprep.subr.mxu0 0.0
      %1990 = vmatpush1.msra.mxu0 %v1359
      %1991 = vmatprep.subr.mxu0 0.0
      %1992 = vmatpush1.msra.mxu0 %v1360
      %1993 = vmatprep.subr.mxu0 0.0
      %1994 = vmatpush1.msra.mxu0 %v1361
      %1995 = vmatprep.subr.mxu0 0.0
      %1996 = vmatpush1.msra.mxu0 %v1362
      %1997 = vmatprep.subr.mxu0 0.0
      %1998 = vmatpush1.msra.mxu0 %v1363
      %1999 = vmatprep.subr.mxu0 0.0
      %2000 = vmatpush1.msra.mxu0 0.0
      %2001 = vmatprep.subr.mxu0 0.0
      %2002 = vmatpush1.msra.mxu0 0.0
      %2003 = vmatprep.subr.mxu0 0.0
      %2004 = vmatpush1.msra.mxu0 0.0
      %2005 = vmatprep.subr.mxu0 0.0
      %2006 = vmatpush1.msra.mxu0 0.0
      %2007 = vmatprep.subr.mxu0 0.0
      %2008 = vmatpush1.msra.mxu0 0.0
      %2009 = vmatprep.subr.mxu0 0.0
      %2010 = vmatpush1.msra.mxu0 0.0
      %2011 = vmatprep.subr.mxu0 0.0
      %2012 = vmatpush1.msra.mxu0 0.0
      %2013 = vmatprep.subr.mxu0 0.0
      %2014 = vmatpush1.msra.mxu0 0.0
      %2015 = vmatprep.subr.mxu0 0.0
      %2016 = vmatpush1.msra.mxu0 0.0
      %2017 = vmatprep.subr.mxu0 0.0
      %2018 = vmatpush1.msra.mxu0 0.0
      %2019 = vmatprep.subr.mxu0 0.0
      %2020 = vmatpush1.msra.mxu0 0.0
      %2021 = vmatprep.subr.mxu0 0.0
      %2022 = vmatpush1.msra.mxu0 0.0
      %2023 = vmatprep.subr.mxu0 0.0
      %2024 = vmatpush1.msra.mxu0 0.0
      %2025 = vmatprep.subr.mxu0 0.0
      %2026 = vmatpush1.msra.mxu0 0.0
      %2027 = vmatprep.subr.mxu0 0.0
      %2028 = vmatpush1.msra.mxu0 0.0
      %2029 = vmatprep.subr.mxu0 0.0
      %2030 = vmatpush1.msra.mxu0 0.0
      %2031 = vmatprep.mubr.f32.mxu0 0.0
      %2032 = vmatmul.mubr.f32.gmra.mrb[0].mxu0 %v1878
      %v2033 = vpop.f32.mrb[0].mxu0
      %v2034 = vadd.f32 0.0, %v2033
      %v2035 = vpop.f32.mrb[0].mxu0
      %2036 = vdwg.mxu0
      %v2037 = vadd.f32 %v1887, %v2034
      %v2038 = vxor.u32 %v2037, 2147483648
      %v2039 = vmul.f32 %v2038, 1.442695
      %v2040 = vpow.pop %v2039
      %v2041 = vadd.f32 %v2040, 1.0
      %v2042 = vrcp.pop %v2041
      %v2043 = vmul.f32 1.0, %v2042
      %2044 = vmatprep.subr.mxu0 0.0
      %2045 = vmatpush1.msra.mxu0 %v1365
      %2046 = vmatprep.subr.mxu0 0.0
      %2047 = vmatpush1.msra.mxu0 %v1366
      %2048 = vmatprep.subr.mxu0 0.0
      %2049 = vmatpush1.msra.mxu0 %v1367
      %2050 = vmatprep.subr.mxu0 0.0
      %2051 = vmatpush1.msra.mxu0 %v1368
      %2052 = vmatprep.subr.mxu0 0.0
      %2053 = vmatpush1.msra.mxu0 %v1369
      %2054 = vmatprep.subr.mxu0 0.0
      %2055 = vmatpush1.msra.mxu0 %v1370
      %2056 = vmatprep.subr.mxu0 0.0
      %2057 = vmatpush1.msra.mxu0 %v1371
      %2058 = vmatprep.subr.mxu0 0.0
      %2059 = vmatpush1.msra.mxu0 %v1372
      %2060 = vmatprep.subr.mxu0 0.0
      %2061 = vmatpush1.msra.mxu0 %v1373
      %2062 = vmatprep.subr.mxu0 0.0
      %2063 = vmatpush1.msra.mxu0 %v1374
      %2064 = vmatprep.subr.mxu0 0.0
      %2065 = vmatpush1.msra.mxu0 %v1375
      %2066 = vmatprep.subr.mxu0 0.0
      %2067 = vmatpush1.msra.mxu0 %v1376
      %2068 = vmatprep.subr.mxu0 0.0
      %2069 = vmatpush1.msra.mxu0 %v1377
      %2070 = vmatprep.subr.mxu0 0.0
      %2071 = vmatpush1.msra.mxu0 %v1378
      %2072 = vmatprep.subr.mxu0 0.0
      %2073 = vmatpush1.msra.mxu0 %v1379
      %2074 = vmatprep.subr.mxu0 0.0
      %2075 = vmatpush1.msra.mxu0 %v1380
      %2076 = vmatprep.subr.mxu0 0.0
      %2077 = vmatpush1.msra.mxu0 0.0
      %2078 = vmatprep.subr.mxu0 0.0
      %2079 = vmatpush1.msra.mxu0 0.0
      %2080 = vmatprep.subr.mxu0 0.0
      %2081 = vmatpush1.msra.mxu0 0.0
      %2082 = vmatprep.subr.mxu0 0.0
      %2083 = vmatpush1.msra.mxu0 0.0
      %2084 = vmatprep.subr.mxu0 0.0
      %2085 = vmatpush1.msra.mxu0 0.0
      %2086 = vmatprep.subr.mxu0 0.0
      %2087 = vmatpush1.msra.mxu0 0.0
      %2088 = vmatprep.subr.mxu0 0.0
      %2089 = vmatpush1.msra.mxu0 0.0
      %2090 = vmatprep.subr.mxu0 0.0
      %2091 = vmatpush1.msra.mxu0 0.0
      %2092 = vmatprep.subr.mxu0 0.0
      %2093 = vmatpush1.msra.mxu0 0.0
      %2094 = vmatprep.subr.mxu0 0.0
      %2095 = vmatpush1.msra.mxu0 0.0
      %2096 = vmatprep.subr.mxu0 0.0
      %2097 = vmatpush1.msra.mxu0 0.0
      %2098 = vmatprep.subr.mxu0 0.0
      %2099 = vmatpush1.msra.mxu0 0.0
      %2100 = vmatprep.subr.mxu0 0.0
      %2101 = vmatpush1.msra.mxu0 0.0
      %2102 = vmatprep.subr.mxu0 0.0
      %2103 = vmatpush1.msra.mxu0 0.0
      %2104 = vmatprep.subr.mxu0 0.0
      %2105 = vmatpush1.msra.mxu0 0.0
      %2106 = vmatprep.subr.mxu0 0.0
      %2107 = vmatpush1.msra.mxu0 0.0
      %2108 = vmatprep.mubr.f32.mxu0 0.0
      %2109 = vmatmul.mubr.f32.gmra.mrb[0].mxu0 %v1878
      %v2110 = vpop.f32.mrb[0].mxu0
      %v2111 = vadd.f32 %v1391, %v2110
      %v2112 = vpop.f32.mrb[0].mxu0
      %2113 = vdwg.mxu0
      %v2114 = vmul.f32 %v1966, %v2111
      %v2115 = vadd.f32 %v1889, %v2114
      %v2116 = vtanh.pop %v2115
      %v2117 = vsub.f32 1.0, %v2043
      %v2118 = vmul.f32 %v2117, %v2116
      %v2119 = vmul.f32 %v2043, %v1878
      %v2120 = vadd.f32 %v2118, %v2119
      %v2121 = vstv %s1882
      %vm2122 = vcmp.lt.s32.totalorder %v2121, %v1384
      %v2123 = vsel %vm2122, %v2120, %v1878
      %v2124 = vsel %vm2122, %v2120, 0.0
      %s2125 = scalar_lea.vmem %s305, %s1883
      %2126 = vst [vmem:[%s2125] sm:$0xff] %v2124
      %s2127 = scalar_select %p306, 8, 3
      %s2128 = smul.u32 %s2127, 8
      %s2129 = scalar_lea.vmem [#allocation2], %s2128
      %v2130 = vld [vmem:[%s2129] sm:$0xff]
      %s2131 = scalar_lea.vmem [#allocation3], %s2128
      %v2132 = vld [vmem:[%s2131] sm:$0xff]
      %s2133 = scalar_lea.vmem [#allocation4], %s2128
      %v2134 = vld [vmem:[%s2133] sm:$0xff]
      %2135 = vmatprep.subr.mxu0 0.0
      %2136 = vmatpush1.msra.mxu0 %v1331
      %2137 = vmatprep.subr.mxu0 0.0
      %2138 = vmatpush1.msra.mxu0 %v1332
      %2139 = vmatprep.subr.mxu0 0.0
      %2140 = vmatpush1.msra.mxu0 %v1333
      %2141 = vmatprep.subr.mxu0 0.0
      %2142 = vmatpush1.msra.mxu0 %v1334
      %2143 = vmatprep.subr.mxu0 0.0
      %2144 = vmatpush1.msra.mxu0 %v1335
      %2145 = vmatprep.subr.mxu0 0.0
      %2146 = vmatpush1.msra.mxu0 %v1336
      %2147 = vmatprep.subr.mxu0 0.0
      %2148 = vmatpush1.msra.mxu0 %v1337
      %2149 = vmatprep.subr.mxu0 0.0
      %2150 = vmatpush1.msra.mxu0 %v1338
      %2151 = vmatprep.subr.mxu0 0.0
      %2152 = vmatpush1.msra.mxu0 %v1339
      %2153 = vmatprep.subr.mxu0 0.0
      %2154 = vmatpush1.msra.mxu0 %v1340
      %2155 = vmatprep.subr.mxu0 0.0
      %2156 = vmatpush1.msra.mxu0 %v1341
      %2157 = vmatprep.subr.mxu0 0.0
      %2158 = vmatpush1.msra.mxu0 %v1342
      %2159 = vmatprep.subr.mxu0 0.0
      %2160 = vmatpush1.msra.mxu0 %v1343
      %2161 = vmatprep.subr.mxu0 0.0
      %2162 = vmatpush1.msra.mxu0 %v1344
      %2163 = vmatprep.subr.mxu0 0.0
      %2164 = vmatpush1.msra.mxu0 %v1345
      %2165 = vmatprep.subr.mxu0 0.0
      %2166 = vmatpush1.msra.mxu0 %v1346
      %2167 = vmatprep.subr.mxu0 0.0
      %2168 = vmatpush1.msra.mxu0 0.0
      %2169 = vmatprep.subr.mxu0 0.0
      %2170 = vmatpush1.msra.mxu0 0.0
      %2171 = vmatprep.subr.mxu0 0.0
      %2172 = vmatpush1.msra.mxu0 0.0
      %2173 = vmatprep.subr.mxu0 0.0
      %2174 = vmatpush1.msra.mxu0 0.0
      %2175 = vmatprep.subr.mxu0 0.0
      %2176 = vmatpush1.msra.mxu0 0.0
      %2177 = vmatprep.subr.mxu0 0.0
      %2178 = vmatpush1.msra.mxu0 0.0
      %2179 = vmatprep.subr.mxu0 0.0
      %2180 = vmatpush1.msra.mxu0 0.0
      %2181 = vmatprep.subr.mxu0 0.0
      %2182 = vmatpush1.msra.mxu0 0.0
      %2183 = vmatprep.subr.mxu0 0.0
      %2184 = vmatpush1.msra.mxu0 0.0
      %2185 = vmatprep.subr.mxu0 0.0
      %2186 = vmatpush1.msra.mxu0 0.0
      %2187 = vmatprep.subr.mxu0 0.0
      %2188 = vmatpush1.msra.mxu0 0.0
      %2189 = vmatprep.subr.mxu0 0.0
      %2190 = vmatpush1.msra.mxu0 0.0
      %2191 = vmatprep.subr.mxu0 0.0
      %2192 = vmatpush1.msra.mxu0 0.0
      %2193 = vmatprep.subr.mxu0 0.0
      %2194 = vmatpush1.msra.mxu0 0.0
      %2195 = vmatprep.subr.mxu0 0.0
      %2196 = vmatpush1.msra.mxu0 0.0
      %2197 = vmatprep.subr.mxu0 0.0
      %2198 = vmatpush1.msra.mxu0 0.0
      %2199 = vmatprep.mubr.f32.mxu0 0.0
      %2200 = vmatmul.mubr.f32.gmra.mrb[0].mxu0 %v2123
      %v2201 = vpop.f32.mrb[0].mxu0
      %v2202 = vadd.f32 0.0, %v2201
      %v2203 = vpop.f32.mrb[0].mxu0
      %2204 = vdwg.mxu0
      %v2205 = vadd.f32 %v2130, %v2202
      %v2206 = vxor.u32 %v2205, 2147483648
      %v2207 = vmul.f32 %v2206, 1.442695
      %v2208 = vpow.pop %v2207
      %v2209 = vadd.f32 %v2208, 1.0
      %v2210 = vrcp.pop %v2209
      %v2211 = vmul.f32 1.0, %v2210
      %2212 = vmatprep.subr.mxu0 0.0
      %2213 = vmatpush1.msra.mxu0 %v1348
      %2214 = vmatprep.subr.mxu0 0.0
      %2215 = vmatpush1.msra.mxu0 %v1349
      %2216 = vmatprep.subr.mxu0 0.0
      %2217 = vmatpush1.msra.mxu0 %v1350
      %2218 = vmatprep.subr.mxu0 0.0
      %2219 = vmatpush1.msra.mxu0 %v1351
      %2220 = vmatprep.subr.mxu0 0.0
      %2221 = vmatpush1.msra.mxu0 %v1352
      %2222 = vmatprep.subr.mxu0 0.0
      %2223 = vmatpush1.msra.mxu0 %v1353
      %2224 = vmatprep.subr.mxu0 0.0
      %2225 = vmatpush1.msra.mxu0 %v1354
      %2226 = vmatprep.subr.mxu0 0.0
      %2227 = vmatpush1.msra.mxu0 %v1355
      %2228 = vmatprep.subr.mxu0 0.0
      %2229 = vmatpush1.msra.mxu0 %v1356
      %2230 = vmatprep.subr.mxu0 0.0
      %2231 = vmatpush1.msra.mxu0 %v1357
      %2232 = vmatprep.subr.mxu0 0.0
      %2233 = vmatpush1.msra.mxu0 %v1358
      %2234 = vmatprep.subr.mxu0 0.0
      %2235 = vmatpush1.msra.mxu0 %v1359
      %2236 = vmatprep.subr.mxu0 0.0
      %2237 = vmatpush1.msra.mxu0 %v1360
      %2238 = vmatprep.subr.mxu0 0.0
      %2239 = vmatpush1.msra.mxu0 %v1361
      %2240 = vmatprep.subr.mxu0 0.0
      %2241 = vmatpush1.msra.mxu0 %v1362
      %2242 = vmatprep.subr.mxu0 0.0
      %2243 = vmatpush1.msra.mxu0 %v1363
      %2244 = vmatprep.subr.mxu0 0.0
      %2245 = vmatpush1.msra.mxu0 0.0
      %2246 = vmatprep.subr.mxu0 0.0
      %2247 = vmatpush1.msra.mxu0 0.0
      %2248 = vmatprep.subr.mxu0 0.0
      %2249 = vmatpush1.msra.mxu0 0.0
      %2250 = vmatprep.subr.mxu0 0.0
      %2251 = vmatpush1.msra.mxu0 0.0
      %2252 = vmatprep.subr.mxu0 0.0
      %2253 = vmatpush1.msra.mxu0 0.0
      %2254 = vmatprep.subr.mxu0 0.0
      %2255 = vmatpush1.msra.mxu0 0.0
      %2256 = vmatprep.subr.mxu0 0.0
      %2257 = vmatpush1.msra.mxu0 0.0
      %2258 = vmatprep.subr.mxu0 0.0
      %2259 = vmatpush1.msra.mxu0 0.0
      %2260 = vmatprep.subr.mxu0 0.0
      %2261 = vmatpush1.msra.mxu0 0.0
      %2262 = vmatprep.subr.mxu0 0.0
      %2263 = vmatpush1.msra.mxu0 0.0
      %2264 = vmatprep.subr.mxu0 0.0
      %2265 = vmatpush1.msra.mxu0 0.0
      %2266 = vmatprep.subr.mxu0 0.0
      %2267 = vmatpush1.msra.mxu0 0.0
      %2268 = vmatprep.subr.mxu0 0.0
      %2269 = vmatpush1.msra.mxu0 0.0
      %2270 = vmatprep.subr.mxu0 0.0
      %2271 = vmatpush1.msra.mxu0 0.0
      %2272 = vmatprep.subr.mxu0 0.0
      %2273 = vmatpush1.msra.mxu0 0.0
      %2274 = vmatprep.subr.mxu0 0.0
      %2275 = vmatpush1.msra.mxu0 0.0
      %2276 = vmatprep.mubr.f32.mxu0 0.0
      %2277 = vmatmul.mubr.f32.gmra.mrb[0].mxu0 %v2123
      %v2278 = vpop.f32.mrb[0].mxu0
      %v2279 = vadd.f32 0.0, %v2278
      %v2280 = vpop.f32.mrb[0].mxu0
      %2281 = vdwg.mxu0
      %v2282 = vadd.f32 %v2132, %v2279
      %v2283 = vxor.u32 %v2282, 2147483648
      %v2284 = vmul.f32 %v2283, 1.442695
      %v2285 = vpow.pop %v2284
      %v2286 = vadd.f32 %v2285, 1.0
      %v2287 = vrcp.pop %v2286
      %v2288 = vmul.f32 1.0, %v2287
      %2289 = vmatprep.subr.mxu0 0.0
      %2290 = vmatpush1.msra.mxu0 %v1365
      %2291 = vmatprep.subr.mxu0 0.0
      %2292 = vmatpush1.msra.mxu0 %v1366
      %2293 = vmatprep.subr.mxu0 0.0
      %2294 = vmatpush1.msra.mxu0 %v1367
      %2295 = vmatprep.subr.mxu0 0.0
      %2296 = vmatpush1.msra.mxu0 %v1368
      %2297 = vmatprep.subr.mxu0 0.0
      %2298 = vmatpush1.msra.mxu0 %v1369
      %2299 = vmatprep.subr.mxu0 0.0
      %2300 = vmatpush1.msra.mxu0 %v1370
      %2301 = vmatprep.subr.mxu0 0.0
      %2302 = vmatpush1.msra.mxu0 %v1371
      %2303 = vmatprep.subr.mxu0 0.0
      %2304 = vmatpush1.msra.mxu0 %v1372
      %2305 = vmatprep.subr.mxu0 0.0
      %2306 = vmatpush1.msra.mxu0 %v1373
      %2307 = vmatprep.subr.mxu0 0.0
      %2308 = vmatpush1.msra.mxu0 %v1374
      %2309 = vmatprep.subr.mxu0 0.0
      %2310 = vmatpush1.msra.mxu0 %v1375
      %2311 = vmatprep.subr.mxu0 0.0
      %2312 = vmatpush1.msra.mxu0 %v1376
      %2313 = vmatprep.subr.mxu0 0.0
      %2314 = vmatpush1.msra.mxu0 %v1377
      %2315 = vmatprep.subr.mxu0 0.0
      %2316 = vmatpush1.msra.mxu0 %v1378
      %2317 = vmatprep.subr.mxu0 0.0
      %2318 = vmatpush1.msra.mxu0 %v1379
      %2319 = vmatprep.subr.mxu0 0.0
      %2320 = vmatpush1.msra.mxu0 %v1380
      %2321 = vmatprep.subr.mxu0 0.0
      %2322 = vmatpush1.msra.mxu0 0.0
      %2323 = vmatprep.subr.mxu0 0.0
      %2324 = vmatpush1.msra.mxu0 0.0
      %2325 = vmatprep.subr.mxu0 0.0
      %2326 = vmatpush1.msra.mxu0 0.0
      %2327 = vmatprep.subr.mxu0 0.0
      %2328 = vmatpush1.msra.mxu0 0.0
      %2329 = vmatprep.subr.mxu0 0.0
      %2330 = vmatpush1.msra.mxu0 0.0
      %2331 = vmatprep.subr.mxu0 0.0
      %2332 = vmatpush1.msra.mxu0 0.0
      %2333 = vmatprep.subr.mxu0 0.0
      %2334 = vmatpush1.msra.mxu0 0.0
      %2335 = vmatprep.subr.mxu0 0.0
      %2336 = vmatpush1.msra.mxu0 0.0
      %2337 = vmatprep.subr.mxu0 0.0
      %2338 = vmatpush1.msra.mxu0 0.0
      %2339 = vmatprep.subr.mxu0 0.0
      %2340 = vmatpush1.msra.mxu0 0.0
      %2341 = vmatprep.subr.mxu0 0.0
      %2342 = vmatpush1.msra.mxu0 0.0
      %2343 = vmatprep.subr.mxu0 0.0
      %2344 = vmatpush1.msra.mxu0 0.0
      %2345 = vmatprep.subr.mxu0 0.0
      %2346 = vmatpush1.msra.mxu0 0.0
      %2347 = vmatprep.subr.mxu0 0.0
      %2348 = vmatpush1.msra.mxu0 0.0
      %2349 = vmatprep.subr.mxu0 0.0
      %2350 = vmatpush1.msra.mxu0 0.0
      %2351 = vmatprep.subr.mxu0 0.0
      %2352 = vmatpush1.msra.mxu0 0.0
      %2353 = vmatprep.mubr.f32.mxu0 0.0
      %2354 = vmatmul.mubr.f32.gmra.mrb[0].mxu0 %v2123
      %v2355 = vpop.f32.mrb[0].mxu0
      %v2356 = vadd.f32 %v1391, %v2355
      %v2357 = vpop.f32.mrb[0].mxu0
      %2358 = vdwg.mxu0
      %v2359 = vmul.f32 %v2211, %v2356
      %v2360 = vadd.f32 %v2134, %v2359
      %v2361 = vtanh.pop %v2360
      %v2362 = vsub.f32 1.0, %v2288
      %v2363 = vmul.f32 %v2362, %v2361
      %v2364 = vmul.f32 %v2288, %v2123
      %v2365 = vadd.f32 %v2363, %v2364
      %v2366 = vstv %s2127
      %vm2367 = vcmp.lt.s32.totalorder %v2366, %v1384
      %v2368 = vsel %vm2367, %v2365, %v2123
      %v2369 = vsel %vm2367, %v2365, 0.0
      %s2370 = scalar_lea.vmem %s305, %s2128
      %2371 = vst [vmem:[%s2370] sm:$0xff] %v2369
      %s2372 = scalar_select %p306, 7, 4
      %s2373 = smul.u32 %s2372, 8
      %s2374 = scalar_lea.vmem [#allocation2], %s2373
      %v2375 = vld [vmem:[%s2374] sm:$0xff]
      %s2376 = scalar_lea.vmem [#allocation3], %s2373
      %v2377 = vld [vmem:[%s2376] sm:$0xff]
      %s2378 = scalar_lea.vmem [#allocation4], %s2373
      %v2379 = vld [vmem:[%s2378] sm:$0xff]
      %2380 = vmatprep.subr.mxu0 0.0
      %2381 = vmatpush1.msra.mxu0 %v1331
      %2382 = vmatprep.subr.mxu0 0.0
      %2383 = vmatpush1.msra.mxu0 %v1332
      %2384 = vmatprep.subr.mxu0 0.0
      %2385 = vmatpush1.msra.mxu0 %v1333
      %2386 = vmatprep.subr.mxu0 0.0
      %2387 = vmatpush1.msra.mxu0 %v1334
      %2388 = vmatprep.subr.mxu0 0.0
      %2389 = vmatpush1.msra.mxu0 %v1335
      %2390 = vmatprep.subr.mxu0 0.0
      %2391 = vmatpush1.msra.mxu0 %v1336
      %2392 = vmatprep.subr.mxu0 0.0
      %2393 = vmatpush1.msra.mxu0 %v1337
      %2394 = vmatprep.subr.mxu0 0.0
      %2395 = vmatpush1.msra.mxu0 %v1338
      %2396 = vmatprep.subr.mxu0 0.0
      %2397 = vmatpush1.msra.mxu0 %v1339
      %2398 = vmatprep.subr.mxu0 0.0
      %2399 = vmatpush1.msra.mxu0 %v1340
      %2400 = vmatprep.subr.mxu0 0.0
      %2401 = vmatpush1.msra.mxu0 %v1341
      %2402 = vmatprep.subr.mxu0 0.0
      %2403 = vmatpush1.msra.mxu0 %v1342
      %2404 = vmatprep.subr.mxu0 0.0
      %2405 = vmatpush1.msra.mxu0 %v1343
      %2406 = vmatprep.subr.mxu0 0.0
      %2407 = vmatpush1.msra.mxu0 %v1344
      %2408 = vmatprep.subr.mxu0 0.0
      %2409 = vmatpush1.msra.mxu0 %v1345
      %2410 = vmatprep.subr.mxu0 0.0
      %2411 = vmatpush1.msra.mxu0 %v1346
      %2412 = vmatprep.subr.mxu0 0.0
      %2413 = vmatpush1.msra.mxu0 0.0
      %2414 = vmatprep.subr.mxu0 0.0
      %2415 = vmatpush1.msra.mxu0 0.0
      %2416 = vmatprep.subr.mxu0 0.0
      %2417 = vmatpush1.msra.mxu0 0.0
      %2418 = vmatprep.subr.mxu0 0.0
      %2419 = vmatpush1.msra.mxu0 0.0
      %2420 = vmatprep.subr.mxu0 0.0
      %2421 = vmatpush1.msra.mxu0 0.0
      %2422 = vmatprep.subr.mxu0 0.0
      %2423 = vmatpush1.msra.mxu0 0.0
      %2424 = vmatprep.subr.mxu0 0.0
      %2425 = vmatpush1.msra.mxu0 0.0
      %2426 = vmatprep.subr.mxu0 0.0
      %2427 = vmatpush1.msra.mxu0 0.0
      %2428 = vmatprep.subr.mxu0 0.0
      %2429 = vmatpush1.msra.mxu0 0.0
      %2430 = vmatprep.subr.mxu0 0.0
      %2431 = vmatpush1.msra.mxu0 0.0
      %2432 = vmatprep.subr.mxu0 0.0
      %2433 = vmatpush1.msra.mxu0 0.0
      %2434 = vmatprep.subr.mxu0 0.0
      %2435 = vmatpush1.msra.mxu0 0.0
      %2436 = vmatprep.subr.mxu0 0.0
      %2437 = vmatpush1.msra.mxu0 0.0
      %2438 = vmatprep.subr.mxu0 0.0
      %2439 = vmatpush1.msra.mxu0 0.0
      %2440 = vmatprep.subr.mxu0 0.0
      %2441 = vmatpush1.msra.mxu0 0.0
      %2442 = vmatprep.subr.mxu0 0.0
      %2443 = vmatpush1.msra.mxu0 0.0
      %2444 = vmatprep.mubr.f32.mxu0 0.0
      %2445 = vmatmul.mubr.f32.gmra.mrb[0].mxu0 %v2368
      %v2446 = vpop.f32.mrb[0].mxu0
      %v2447 = vadd.f32 0.0, %v2446
      %v2448 = vpop.f32.mrb[0].mxu0
      %2449 = vdwg.mxu0
      %v2450 = vadd.f32 %v2375, %v2447
      %v2451 = vxor.u32 %v2450, 2147483648
      %v2452 = vmul.f32 %v2451, 1.442695
      %v2453 = vpow.pop %v2452
      %v2454 = vadd.f32 %v2453, 1.0
      %v2455 = vrcp.pop %v2454
      %v2456 = vmul.f32 1.0, %v2455
      %2457 = vmatprep.subr.mxu0 0.0
      %2458 = vmatpush1.msra.mxu0 %v1348
      %2459 = vmatprep.subr.mxu0 0.0
      %2460 = vmatpush1.msra.mxu0 %v1349
      %2461 = vmatprep.subr.mxu0 0.0
      %2462 = vmatpush1.msra.mxu0 %v1350
      %2463 = vmatprep.subr.mxu0 0.0
      %2464 = vmatpush1.msra.mxu0 %v1351
      %2465 = vmatprep.subr.mxu0 0.0
      %2466 = vmatpush1.msra.mxu0 %v1352
      %2467 = vmatprep.subr.mxu0 0.0
      %2468 = vmatpush1.msra.mxu0 %v1353
      %2469 = vmatprep.subr.mxu0 0.0
      %2470 = vmatpush1.msra.mxu0 %v1354
      %2471 = vmatprep.subr.mxu0 0.0
      %2472 = vmatpush1.msra.mxu0 %v1355
      %2473 = vmatprep.subr.mxu0 0.0
      %2474 = vmatpush1.msra.mxu0 %v1356
      %2475 = vmatprep.subr.mxu0 0.0
      %2476 = vmatpush1.msra.mxu0 %v1357
      %2477 = vmatprep.subr.mxu0 0.0
      %2478 = vmatpush1.msra.mxu0 %v1358
      %2479 = vmatprep.subr.mxu0 0.0
      %2480 = vmatpush1.msra.mxu0 %v1359
      %2481 = vmatprep.subr.mxu0 0.0
      %2482 = vmatpush1.msra.mxu0 %v1360
      %2483 = vmatprep.subr.mxu0 0.0
      %2484 = vmatpush1.msra.mxu0 %v1361
      %2485 = vmatprep.subr.mxu0 0.0
      %2486 = vmatpush1.msra.mxu0 %v1362
      %2487 = vmatprep.subr.mxu0 0.0
      %2488 = vmatpush1.msra.mxu0 %v1363
      %2489 = vmatprep.subr.mxu0 0.0
      %2490 = vmatpush1.msra.mxu0 0.0
      %2491 = vmatprep.subr.mxu0 0.0
      %2492 = vmatpush1.msra.mxu0 0.0
      %2493 = vmatprep.subr.mxu0 0.0
      %2494 = vmatpush1.msra.mxu0 0.0
      %2495 = vmatprep.subr.mxu0 0.0
      %2496 = vmatpush1.msra.mxu0 0.0
      %2497 = vmatprep.subr.mxu0 0.0
      %2498 = vmatpush1.msra.mxu0 0.0
      %2499 = vmatprep.subr.mxu0 0.0
      %2500 = vmatpush1.msra.mxu0 0.0
      %2501 = vmatprep.subr.mxu0 0.0
      %2502 = vmatpush1.msra.mxu0 0.0
      %2503 = vmatprep.subr.mxu0 0.0
      %2504 = vmatpush1.msra.mxu0 0.0
      %2505 = vmatprep.subr.mxu0 0.0
      %2506 = vmatpush1.msra.mxu0 0.0
      %2507 = vmatprep.subr.mxu0 0.0
      %2508 = vmatpush1.msra.mxu0 0.0
      %2509 = vmatprep.subr.mxu0 0.0
      %2510 = vmatpush1.msra.mxu0 0.0
      %2511 = vmatprep.subr.mxu0 0.0
      %2512 = vmatpush1.msra.mxu0 0.0
      %2513 = vmatprep.subr.mxu0 0.0
      %2514 = vmatpush1.msra.mxu0 0.0
      %2515 = vmatprep.subr.mxu0 0.0
      %2516 = vmatpush1.msra.mxu0 0.0
      %2517 = vmatprep.subr.mxu0 0.0
      %2518 = vmatpush1.msra.mxu0 0.0
      %2519 = vmatprep.subr.mxu0 0.0
      %2520 = vmatpush1.msra.mxu0 0.0
      %2521 = vmatprep.mubr.f32.mxu0 0.0
      %2522 = vmatmul.mubr.f32.gmra.mrb[0].mxu0 %v2368
      %v2523 = vpop.f32.mrb[0].mxu0
      %v2524 = vadd.f32 0.0, %v2523
      %v2525 = vpop.f32.mrb[0].mxu0
      %2526 = vdwg.mxu0
      %v2527 = vadd.f32 %v2377, %v2524
      %v2528 = vxor.u32 %v2527, 2147483648
      %v2529 = vmul.f32 %v2528, 1.442695
      %v2530 = vpow.pop %v2529
      %v2531 = vadd.f32 %v2530, 1.0
      %v2532 = vrcp.pop %v2531
      %v2533 = vmul.f32 1.0, %v2532
      %2534 = vmatprep.subr.mxu0 0.0
      %2535 = vmatpush1.msra.mxu0 %v1365
      %2536 = vmatprep.subr.mxu0 0.0
      %2537 = vmatpush1.msra.mxu0 %v1366
      %2538 = vmatprep.subr.mxu0 0.0
      %2539 = vmatpush1.msra.mxu0 %v1367
      %2540 = vmatprep.subr.mxu0 0.0
      %2541 = vmatpush1.msra.mxu0 %v1368
      %2542 = vmatprep.subr.mxu0 0.0
      %2543 = vmatpush1.msra.mxu0 %v1369
      %2544 = vmatprep.subr.mxu0 0.0
      %2545 = vmatpush1.msra.mxu0 %v1370
      %2546 = vmatprep.subr.mxu0 0.0
      %2547 = vmatpush1.msra.mxu0 %v1371
      %2548 = vmatprep.subr.mxu0 0.0
      %2549 = vmatpush1.msra.mxu0 %v1372
      %2550 = vmatprep.subr.mxu0 0.0
      %2551 = vmatpush1.msra.mxu0 %v1373
      %2552 = vmatprep.subr.mxu0 0.0
      %2553 = vmatpush1.msra.mxu0 %v1374
      %2554 = vmatprep.subr.mxu0 0.0
      %2555 = vmatpush1.msra.mxu0 %v1375
      %2556 = vmatprep.subr.mxu0 0.0
      %2557 = vmatpush1.msra.mxu0 %v1376
      %2558 = vmatprep.subr.mxu0 0.0
      %2559 = vmatpush1.msra.mxu0 %v1377
      %2560 = vmatprep.subr.mxu0 0.0
      %2561 = vmatpush1.msra.mxu0 %v1378
      %2562 = vmatprep.subr.mxu0 0.0
      %2563 = vmatpush1.msra.mxu0 %v1379
      %2564 = vmatprep.subr.mxu0 0.0
      %2565 = vmatpush1.msra.mxu0 %v1380
      %2566 = vmatprep.subr.mxu0 0.0
      %2567 = vmatpush1.msra.mxu0 0.0
      %2568 = vmatprep.subr.mxu0 0.0
      %2569 = vmatpush1.msra.mxu0 0.0
      %2570 = vmatprep.subr.mxu0 0.0
      %2571 = vmatpush1.msra.mxu0 0.0
      %2572 = vmatprep.subr.mxu0 0.0
      %2573 = vmatpush1.msra.mxu0 0.0
      %2574 = vmatprep.subr.mxu0 0.0
      %2575 = vmatpush1.msra.mxu0 0.0
      %2576 = vmatprep.subr.mxu0 0.0
      %2577 = vmatpush1.msra.mxu0 0.0
      %2578 = vmatprep.subr.mxu0 0.0
      %2579 = vmatpush1.msra.mxu0 0.0
      %2580 = vmatprep.subr.mxu0 0.0
      %2581 = vmatpush1.msra.mxu0 0.0
      %2582 = vmatprep.subr.mxu0 0.0
      %2583 = vmatpush1.msra.mxu0 0.0
      %2584 = vmatprep.subr.mxu0 0.0
      %2585 = vmatpush1.msra.mxu0 0.0
      %2586 = vmatprep.subr.mxu0 0.0
      %2587 = vmatpush1.msra.mxu0 0.0
      %2588 = vmatprep.subr.mxu0 0.0
      %2589 = vmatpush1.msra.mxu0 0.0
      %2590 = vmatprep.subr.mxu0 0.0
      %2591 = vmatpush1.msra.mxu0 0.0
      %2592 = vmatprep.subr.mxu0 0.0
      %2593 = vmatpush1.msra.mxu0 0.0
      %2594 = vmatprep.subr.mxu0 0.0
      %2595 = vmatpush1.msra.mxu0 0.0
      %2596 = vmatprep.subr.mxu0 0.0
      %2597 = vmatpush1.msra.mxu0 0.0
      %2598 = vmatprep.mubr.f32.mxu0 0.0
      %2599 = vmatmul.mubr.f32.gmra.mrb[0].mxu0 %v2368
      %v2600 = vpop.f32.mrb[0].mxu0
      %v2601 = vadd.f32 %v1391, %v2600
      %v2602 = vpop.f32.mrb[0].mxu0
      %2603 = vdwg.mxu0
      %v2604 = vmul.f32 %v2456, %v2601
      %v2605 = vadd.f32 %v2379, %v2604
      %v2606 = vtanh.pop %v2605
      %v2607 = vsub.f32 1.0, %v2533
      %v2608 = vmul.f32 %v2607, %v2606
      %v2609 = vmul.f32 %v2533, %v2368
      %v2610 = vadd.f32 %v2608, %v2609
      %v2611 = vstv %s2372
      %vm2612 = vcmp.lt.s32.totalorder %v2611, %v1384
      %v2613 = vsel %vm2612, %v2610, %v2368
      %v2614 = vsel %vm2612, %v2610, 0.0
      %s2615 = scalar_lea.vmem %s305, %s2373
      %2616 = vst [vmem:[%s2615] sm:$0xff] %v2614
      %s2617 = scalar_select %p306, 6, 5
      %s2618 = smul.u32 %s2617, 8
      %s2619 = scalar_lea.vmem [#allocation2], %s2618
      %v2620 = vld [vmem:[%s2619] sm:$0xff]
      %s2621 = scalar_lea.vmem [#allocation3], %s2618
      %v2622 = vld [vmem:[%s2621] sm:$0xff]
      %s2623 = scalar_lea.vmem [#allocation4], %s2618
      %v2624 = vld [vmem:[%s2623] sm:$0xff]
      %2625 = vmatprep.subr.mxu0 0.0
      %2626 = vmatpush1.msra.mxu0 %v1331
      %2627 = vmatprep.subr.mxu0 0.0
      %2628 = vmatpush1.msra.mxu0 %v1332
      %2629 = vmatprep.subr.mxu0 0.0
      %2630 = vmatpush1.msra.mxu0 %v1333
      %2631 = vmatprep.subr.mxu0 0.0
      %2632 = vmatpush1.msra.mxu0 %v1334
      %2633 = vmatprep.subr.mxu0 0.0
      %2634 = vmatpush1.msra.mxu0 %v1335
      %2635 = vmatprep.subr.mxu0 0.0
      %2636 = vmatpush1.msra.mxu0 %v1336
      %2637 = vmatprep.subr.mxu0 0.0
      %2638 = vmatpush1.msra.mxu0 %v1337
      %2639 = vmatprep.subr.mxu0 0.0
      %2640 = vmatpush1.msra.mxu0 %v1338
      %2641 = vmatprep.subr.mxu0 0.0
      %2642 = vmatpush1.msra.mxu0 %v1339
      %2643 = vmatprep.subr.mxu0 0.0
      %2644 = vmatpush1.msra.mxu0 %v1340
      %2645 = vmatprep.subr.mxu0 0.0
      %2646 = vmatpush1.msra.mxu0 %v1341
      %2647 = vmatprep.subr.mxu0 0.0
      %2648 = vmatpush1.msra.mxu0 %v1342
      %2649 = vmatprep.subr.mxu0 0.0
      %2650 = vmatpush1.msra.mxu0 %v1343
      %2651 = vmatprep.subr.mxu0 0.0
      %2652 = vmatpush1.msra.mxu0 %v1344
      %2653 = vmatprep.subr.mxu0 0.0
      %2654 = vmatpush1.msra.mxu0 %v1345
      %2655 = vmatprep.subr.mxu0 0.0
      %2656 = vmatpush1.msra.mxu0 %v1346
      %2657 = vmatprep.subr.mxu0 0.0
      %2658 = vmatpush1.msra.mxu0 0.0
      %2659 = vmatprep.subr.mxu0 0.0
      %2660 = vmatpush1.msra.mxu0 0.0
      %2661 = vmatprep.subr.mxu0 0.0
      %2662 = vmatpush1.msra.mxu0 0.0
      %2663 = vmatprep.subr.mxu0 0.0
      %2664 = vmatpush1.msra.mxu0 0.0
      %2665 = vmatprep.subr.mxu0 0.0
      %2666 = vmatpush1.msra.mxu0 0.0
      %2667 = vmatprep.subr.mxu0 0.0
      %2668 = vmatpush1.msra.mxu0 0.0
      %2669 = vmatprep.subr.mxu0 0.0
      %2670 = vmatpush1.msra.mxu0 0.0
      %2671 = vmatprep.subr.mxu0 0.0
      %2672 = vmatpush1.msra.mxu0 0.0
      %2673 = vmatprep.subr.mxu0 0.0
      %2674 = vmatpush1.msra.mxu0 0.0
      %2675 = vmatprep.subr.mxu0 0.0
      %2676 = vmatpush1.msra.mxu0 0.0
      %2677 = vmatprep.subr.mxu0 0.0
      %2678 = vmatpush1.msra.mxu0 0.0
      %2679 = vmatprep.subr.mxu0 0.0
      %2680 = vmatpush1.msra.mxu0 0.0
      %2681 = vmatprep.subr.mxu0 0.0
      %2682 = vmatpush1.msra.mxu0 0.0
      %2683 = vmatprep.subr.mxu0 0.0
      %2684 = vmatpush1.msra.mxu0 0.0
      %2685 = vmatprep.subr.mxu0 0.0
      %2686 = vmatpush1.msra.mxu0 0.0
      %2687 = vmatprep.subr.mxu0 0.0
      %2688 = vmatpush1.msra.mxu0 0.0
      %2689 = vmatprep.mubr.f32.mxu0 0.0
      %2690 = vmatmul.mubr.f32.gmra.mrb[0].mxu0 %v2613
      %v2691 = vpop.f32.mrb[0].mxu0
      %v2692 = vadd.f32 0.0, %v2691
      %v2693 = vpop.f32.mrb[0].mxu0
      %2694 = vdwg.mxu0
      %v2695 = vadd.f32 %v2620, %v2692
      %v2696 = vxor.u32 %v2695, 2147483648
      %v2697 = vmul.f32 %v2696, 1.442695
      %v2698 = vpow.pop %v2697
      %v2699 = vadd.f32 %v2698, 1.0
      %v2700 = vrcp.pop %v2699
      %v2701 = vmul.f32 1.0, %v2700
      %2702 = vmatprep.subr.mxu0 0.0
      %2703 = vmatpush1.msra.mxu0 %v1348
      %2704 = vmatprep.subr.mxu0 0.0
      %2705 = vmatpush1.msra.mxu0 %v1349
      %2706 = vmatprep.subr.mxu0 0.0
      %2707 = vmatpush1.msra.mxu0 %v1350
      %2708 = vmatprep.subr.mxu0 0.0
      %2709 = vmatpush1.msra.mxu0 %v1351
      %2710 = vmatprep.subr.mxu0 0.0
      %2711 = vmatpush1.msra.mxu0 %v1352
      %2712 = vmatprep.subr.mxu0 0.0
      %2713 = vmatpush1.msra.mxu0 %v1353
      %2714 = vmatprep.subr.mxu0 0.0
      %2715 = vmatpush1.msra.mxu0 %v1354
      %2716 = vmatprep.subr.mxu0 0.0
      %2717 = vmatpush1.msra.mxu0 %v1355
      %2718 = vmatprep.subr.mxu0 0.0
      %2719 = vmatpush1.msra.mxu0 %v1356
      %2720 = vmatprep.subr.mxu0 0.0
      %2721 = vmatpush1.msra.mxu0 %v1357
      %2722 = vmatprep.subr.mxu0 0.0
      %2723 = vmatpush1.msra.mxu0 %v1358
      %2724 = vmatprep.subr.mxu0 0.0
      %2725 = vmatpush1.msra.mxu0 %v1359
      %2726 = vmatprep.subr.mxu0 0.0
      %2727 = vmatpush1.msra.mxu0 %v1360
      %2728 = vmatprep.subr.mxu0 0.0
      %2729 = vmatpush1.msra.mxu0 %v1361
      %2730 = vmatprep.subr.mxu0 0.0
      %2731 = vmatpush1.msra.mxu0 %v1362
      %2732 = vmatprep.subr.mxu0 0.0
      %2733 = vmatpush1.msra.mxu0 %v1363
      %2734 = vmatprep.subr.mxu0 0.0
      %2735 = vmatpush1.msra.mxu0 0.0
      %2736 = vmatprep.subr.mxu0 0.0
      %2737 = vmatpush1.msra.mxu0 0.0
      %2738 = vmatprep.subr.mxu0 0.0
      %2739 = vmatpush1.msra.mxu0 0.0
      %2740 = vmatprep.subr.mxu0 0.0
      %2741 = vmatpush1.msra.mxu0 0.0
      %2742 = vmatprep.subr.mxu0 0.0
      %2743 = vmatpush1.msra.mxu0 0.0
      %2744 = vmatprep.subr.mxu0 0.0
      %2745 = vmatpush1.msra.mxu0 0.0
      %2746 = vmatprep.subr.mxu0 0.0
      %2747 = vmatpush1.msra.mxu0 0.0
      %2748 = vmatprep.subr.mxu0 0.0
      %2749 = vmatpush1.msra.mxu0 0.0
      %2750 = vmatprep.subr.mxu0 0.0
      %2751 = vmatpush1.msra.mxu0 0.0
      %2752 = vmatprep.subr.mxu0 0.0
      %2753 = vmatpush1.msra.mxu0 0.0
      %2754 = vmatprep.subr.mxu0 0.0
      %2755 = vmatpush1.msra.mxu0 0.0
      %2756 = vmatprep.subr.mxu0 0.0
      %2757 = vmatpush1.msra.mxu0 0.0
      %2758 = vmatprep.subr.mxu0 0.0
      %2759 = vmatpush1.msra.mxu0 0.0
      %2760 = vmatprep.subr.mxu0 0.0
      %2761 = vmatpush1.msra.mxu0 0.0
      %2762 = vmatprep.subr.mxu0 0.0
      %2763 = vmatpush1.msra.mxu0 0.0
      %2764 = vmatprep.subr.mxu0 0.0
      %2765 = vmatpush1.msra.mxu0 0.0
      %2766 = vmatprep.mubr.f32.mxu0 0.0
      %2767 = vmatmul.mubr.f32.gmra.mrb[0].mxu0 %v2613
      %v2768 = vpop.f32.mrb[0].mxu0
      %v2769 = vadd.f32 0.0, %v2768
      %v2770 = vpop.f32.mrb[0].mxu0
      %2771 = vdwg.mxu0
      %v2772 = vadd.f32 %v2622, %v2769
      %v2773 = vxor.u32 %v2772, 2147483648
      %v2774 = vmul.f32 %v2773, 1.442695
      %v2775 = vpow.pop %v2774
      %v2776 = vadd.f32 %v2775, 1.0
      %v2777 = vrcp.pop %v2776
      %v2778 = vmul.f32 1.0, %v2777
      %2779 = vmatprep.subr.mxu0 0.0
      %2780 = vmatpush1.msra.mxu0 %v1365
      %2781 = vmatprep.subr.mxu0 0.0
      %2782 = vmatpush1.msra.mxu0 %v1366
      %2783 = vmatprep.subr.mxu0 0.0
      %2784 = vmatpush1.msra.mxu0 %v1367
      %2785 = vmatprep.subr.mxu0 0.0
      %2786 = vmatpush1.msra.mxu0 %v1368
      %2787 = vmatprep.subr.mxu0 0.0
      %2788 = vmatpush1.msra.mxu0 %v1369
      %2789 = vmatprep.subr.mxu0 0.0
      %2790 = vmatpush1.msra.mxu0 %v1370
      %2791 = vmatprep.subr.mxu0 0.0
      %2792 = vmatpush1.msra.mxu0 %v1371
      %2793 = vmatprep.subr.mxu0 0.0
      %2794 = vmatpush1.msra.mxu0 %v1372
      %2795 = vmatprep.subr.mxu0 0.0
      %2796 = vmatpush1.msra.mxu0 %v1373
      %2797 = vmatprep.subr.mxu0 0.0
      %2798 = vmatpush1.msra.mxu0 %v1374
      %2799 = vmatprep.subr.mxu0 0.0
      %2800 = vmatpush1.msra.mxu0 %v1375
      %2801 = vmatprep.subr.mxu0 0.0
      %2802 = vmatpush1.msra.mxu0 %v1376
      %2803 = vmatprep.subr.mxu0 0.0
      %2804 = vmatpush1.msra.mxu0 %v1377
      %2805 = vmatprep.subr.mxu0 0.0
      %2806 = vmatpush1.msra.mxu0 %v1378
      %2807 = vmatprep.subr.mxu0 0.0
      %2808 = vmatpush1.msra.mxu0 %v1379
      %2809 = vmatprep.subr.mxu0 0.0
      %2810 = vmatpush1.msra.mxu0 %v1380
      %2811 = vmatprep.subr.mxu0 0.0
      %2812 = vmatpush1.msra.mxu0 0.0
      %2813 = vmatprep.subr.mxu0 0.0
      %2814 = vmatpush1.msra.mxu0 0.0
      %2815 = vmatprep.subr.mxu0 0.0
      %2816 = vmatpush1.msra.mxu0 0.0
      %2817 = vmatprep.subr.mxu0 0.0
      %2818 = vmatpush1.msra.mxu0 0.0
      %2819 = vmatprep.subr.mxu0 0.0
      %2820 = vmatpush1.msra.mxu0 0.0
      %2821 = vmatprep.subr.mxu0 0.0
      %2822 = vmatpush1.msra.mxu0 0.0
      %2823 = vmatprep.subr.mxu0 0.0
      %2824 = vmatpush1.msra.mxu0 0.0
      %2825 = vmatprep.subr.mxu0 0.0
      %2826 = vmatpush1.msra.mxu0 0.0
      %2827 = vmatprep.subr.mxu0 0.0
      %2828 = vmatpush1.msra.mxu0 0.0
      %2829 = vmatprep.subr.mxu0 0.0
      %2830 = vmatpush1.msra.mxu0 0.0
      %2831 = vmatprep.subr.mxu0 0.0
      %2832 = vmatpush1.msra.mxu0 0.0
      %2833 = vmatprep.subr.mxu0 0.0
      %2834 = vmatpush1.msra.mxu0 0.0
      %2835 = vmatprep.subr.mxu0 0.0
      %2836 = vmatpush1.msra.mxu0 0.0
      %2837 = vmatprep.subr.mxu0 0.0
      %2838 = vmatpush1.msra.mxu0 0.0
      %2839 = vmatprep.subr.mxu0 0.0
      %2840 = vmatpush1.msra.mxu0 0.0
      %2841 = vmatprep.subr.mxu0 0.0
      %2842 = vmatpush1.msra.mxu0 0.0
      %2843 = vmatprep.mubr.f32.mxu0 0.0
      %2844 = vmatmul.mubr.f32.gmra.mrb[0].mxu0 %v2613
      %v2845 = vpop.f32.mrb[0].mxu0
      %v2846 = vadd.f32 %v1391, %v2845
      %v2847 = vpop.f32.mrb[0].mxu0
      %2848 = vdwg.mxu0
      %v2849 = vmul.f32 %v2701, %v2846
      %v2850 = vadd.f32 %v2624, %v2849
      %v2851 = vtanh.pop %v2850
      %v2852 = vsub.f32 1.0, %v2778
      %v2853 = vmul.f32 %v2852, %v2851
      %v2854 = vmul.f32 %v2778, %v2613
      %v2855 = vadd.f32 %v2853, %v2854
      %v2856 = vstv %s2617
      %vm2857 = vcmp.lt.s32.totalorder %v2856, %v1384
      %v2858 = vsel %vm2857, %v2855, %v2613
      %v2859 = vsel %vm2857, %v2855, 0.0
      %s2860 = scalar_lea.vmem %s305, %s2618
      %2861 = vst [vmem:[%s2860] sm:$0xff] %v2859
      %s2862 = scalar_select %p306, 5, 6
      %s2863 = smul.u32 %s2862, 8
      %s2864 = scalar_lea.vmem [#allocation2], %s2863
      %v2865 = vld [vmem:[%s2864] sm:$0xff]
      %s2866 = scalar_lea.vmem [#allocation3], %s2863
      %v2867 = vld [vmem:[%s2866] sm:$0xff]
      %s2868 = scalar_lea.vmem [#allocation4], %s2863
      %v2869 = vld [vmem:[%s2868] sm:$0xff]
      %2870 = vmatprep.subr.mxu0 0.0
      %2871 = vmatpush1.msra.mxu0 %v1331
      %2872 = vmatprep.subr.mxu0 0.0
      %2873 = vmatpush1.msra.mxu0 %v1332
      %2874 = vmatprep.subr.mxu0 0.0
      %2875 = vmatpush1.msra.mxu0 %v1333
      %2876 = vmatprep.subr.mxu0 0.0
      %2877 = vmatpush1.msra.mxu0 %v1334
      %2878 = vmatprep.subr.mxu0 0.0
      %2879 = vmatpush1.msra.mxu0 %v1335
      %2880 = vmatprep.subr.mxu0 0.0
      %2881 = vmatpush1.msra.mxu0 %v1336
      %2882 = vmatprep.subr.mxu0 0.0
      %2883 = vmatpush1.msra.mxu0 %v1337
      %2884 = vmatprep.subr.mxu0 0.0
      %2885 = vmatpush1.msra.mxu0 %v1338
      %2886 = vmatprep.subr.mxu0 0.0
      %2887 = vmatpush1.msra.mxu0 %v1339
      %2888 = vmatprep.subr.mxu0 0.0
      %2889 = vmatpush1.msra.mxu0 %v1340
      %2890 = vmatprep.subr.mxu0 0.0
      %2891 = vmatpush1.msra.mxu0 %v1341
      %2892 = vmatprep.subr.mxu0 0.0
      %2893 = vmatpush1.msra.mxu0 %v1342
      %2894 = vmatprep.subr.mxu0 0.0
      %2895 = vmatpush1.msra.mxu0 %v1343
      %2896 = vmatprep.subr.mxu0 0.0
      %2897 = vmatpush1.msra.mxu0 %v1344
      %2898 = vmatprep.subr.mxu0 0.0
      %2899 = vmatpush1.msra.mxu0 %v1345
      %2900 = vmatprep.subr.mxu0 0.0
      %2901 = vmatpush1.msra.mxu0 %v1346
      %2902 = vmatprep.subr.mxu0 0.0
      %2903 = vmatpush1.msra.mxu0 0.0
      %2904 = vmatprep.subr.mxu0 0.0
      %2905 = vmatpush1.msra.mxu0 0.0
      %2906 = vmatprep.subr.mxu0 0.0
      %2907 = vmatpush1.msra.mxu0 0.0
      %2908 = vmatprep.subr.mxu0 0.0
      %2909 = vmatpush1.msra.mxu0 0.0
      %2910 = vmatprep.subr.mxu0 0.0
      %2911 = vmatpush1.msra.mxu0 0.0
      %2912 = vmatprep.subr.mxu0 0.0
      %2913 = vmatpush1.msra.mxu0 0.0
      %2914 = vmatprep.subr.mxu0 0.0
      %2915 = vmatpush1.msra.mxu0 0.0
      %2916 = vmatprep.subr.mxu0 0.0
      %2917 = vmatpush1.msra.mxu0 0.0
      %2918 = vmatprep.subr.mxu0 0.0
      %2919 = vmatpush1.msra.mxu0 0.0
      %2920 = vmatprep.subr.mxu0 0.0
      %2921 = vmatpush1.msra.mxu0 0.0
      %2922 = vmatprep.subr.mxu0 0.0
      %2923 = vmatpush1.msra.mxu0 0.0
      %2924 = vmatprep.subr.mxu0 0.0
      %2925 = vmatpush1.msra.mxu0 0.0
      %2926 = vmatprep.subr.mxu0 0.0
      %2927 = vmatpush1.msra.mxu0 0.0
      %2928 = vmatprep.subr.mxu0 0.0
      %2929 = vmatpush1.msra.mxu0 0.0
      %2930 = vmatprep.subr.mxu0 0.0
      %2931 = vmatpush1.msra.mxu0 0.0
      %2932 = vmatprep.subr.mxu0 0.0
      %2933 = vmatpush1.msra.mxu0 0.0
      %2934 = vmatprep.mubr.f32.mxu0 0.0
      %2935 = vmatmul.mubr.f32.gmra.mrb[0].mxu0 %v2858
      %v2936 = vpop.f32.mrb[0].mxu0
      %v2937 = vadd.f32 0.0, %v2936
      %v2938 = vpop.f32.mrb[0].mxu0
      %2939 = vdwg.mxu0
      %v2940 = vadd.f32 %v2865, %v2937
      %v2941 = vxor.u32 %v2940, 2147483648
      %v2942 = vmul.f32 %v2941, 1.442695
      %v2943 = vpow.pop %v2942
      %v2944 = vadd.f32 %v2943, 1.0
      %v2945 = vrcp.pop %v2944
      %v2946 = vmul.f32 1.0, %v2945
      %2947 = vmatprep.subr.mxu0 0.0
      %2948 = vmatpush1.msra.mxu0 %v1348
      %2949 = vmatprep.subr.mxu0 0.0
      %2950 = vmatpush1.msra.mxu0 %v1349
      %2951 = vmatprep.subr.mxu0 0.0
      %2952 = vmatpush1.msra.mxu0 %v1350
      %2953 = vmatprep.subr.mxu0 0.0
      %2954 = vmatpush1.msra.mxu0 %v1351
      %2955 = vmatprep.subr.mxu0 0.0
      %2956 = vmatpush1.msra.mxu0 %v1352
      %2957 = vmatprep.subr.mxu0 0.0
      %2958 = vmatpush1.msra.mxu0 %v1353
      %2959 = vmatprep.subr.mxu0 0.0
      %2960 = vmatpush1.msra.mxu0 %v1354
      %2961 = vmatprep.subr.mxu0 0.0
      %2962 = vmatpush1.msra.mxu0 %v1355
      %2963 = vmatprep.subr.mxu0 0.0
      %2964 = vmatpush1.msra.mxu0 %v1356
      %2965 = vmatprep.subr.mxu0 0.0
      %2966 = vmatpush1.msra.mxu0 %v1357
      %2967 = vmatprep.subr.mxu0 0.0
      %2968 = vmatpush1.msra.mxu0 %v1358
      %2969 = vmatprep.subr.mxu0 0.0
      %2970 = vmatpush1.msra.mxu0 %v1359
      %2971 = vmatprep.subr.mxu0 0.0
      %2972 = vmatpush1.msra.mxu0 %v1360
      %2973 = vmatprep.subr.mxu0 0.0
      %2974 = vmatpush1.msra.mxu0 %v1361
      %2975 = vmatprep.subr.mxu0 0.0
      %2976 = vmatpush1.msra.mxu0 %v1362
      %2977 = vmatprep.subr.mxu0 0.0
      %2978 = vmatpush1.msra.mxu0 %v1363
      %2979 = vmatprep.subr.mxu0 0.0
      %2980 = vmatpush1.msra.mxu0 0.0
      %2981 = vmatprep.subr.mxu0 0.0
      %2982 = vmatpush1.msra.mxu0 0.0
      %2983 = vmatprep.subr.mxu0 0.0
      %2984 = vmatpush1.msra.mxu0 0.0
      %2985 = vmatprep.subr.mxu0 0.0
      %2986 = vmatpush1.msra.mxu0 0.0
      %2987 = vmatprep.subr.mxu0 0.0
      %2988 = vmatpush1.msra.mxu0 0.0
      %2989 = vmatprep.subr.mxu0 0.0
      %2990 = vmatpush1.msra.mxu0 0.0
      %2991 = vmatprep.subr.mxu0 0.0
      %2992 = vmatpush1.msra.mxu0 0.0
      %2993 = vmatprep.subr.mxu0 0.0
      %2994 = vmatpush1.msra.mxu0 0.0
      %2995 = vmatprep.subr.mxu0 0.0
      %2996 = vmatpush1.msra.mxu0 0.0
      %2997 = vmatprep.subr.mxu0 0.0
      %2998 = vmatpush1.msra.mxu0 0.0
      %2999 = vmatprep.subr.mxu0 0.0
      %3000 = vmatpush1.msra.mxu0 0.0
      %3001 = vmatprep.subr.mxu0 0.0
      %3002 = vmatpush1.msra.mxu0 0.0
      %3003 = vmatprep.subr.mxu0 0.0
      %3004 = vmatpush1.msra.mxu0 0.0
      %3005 = vmatprep.subr.mxu0 0.0
      %3006 = vmatpush1.msra.mxu0 0.0
      %3007 = vmatprep.subr.mxu0 0.0
      %3008 = vmatpush1.msra.mxu0 0.0
      %3009 = vmatprep.subr.mxu0 0.0
      %3010 = vmatpush1.msra.mxu0 0.0
      %3011 = vmatprep.mubr.f32.mxu0 0.0
      %3012 = vmatmul.mubr.f32.gmra.mrb[0].mxu0 %v2858
      %v3013 = vpop.f32.mrb[0].mxu0
      %v3014 = vadd.f32 0.0, %v3013
      %v3015 = vpop.f32.mrb[0].mxu0
      %3016 = vdwg.mxu0
      %v3017 = vadd.f32 %v2867, %v3014
      %v3018 = vxor.u32 %v3017, 2147483648
      %v3019 = vmul.f32 %v3018, 1.442695
      %v3020 = vpow.pop %v3019
      %v3021 = vadd.f32 %v3020, 1.0
      %v3022 = vrcp.pop %v3021
      %v3023 = vmul.f32 1.0, %v3022
      %3024 = vmatprep.subr.mxu0 0.0
      %3025 = vmatpush1.msra.mxu0 %v1365
      %3026 = vmatprep.subr.mxu0 0.0
      %3027 = vmatpush1.msra.mxu0 %v1366
      %3028 = vmatprep.subr.mxu0 0.0
      %3029 = vmatpush1.msra.mxu0 %v1367
      %3030 = vmatprep.subr.mxu0 0.0
      %3031 = vmatpush1.msra.mxu0 %v1368
      %3032 = vmatprep.subr.mxu0 0.0
      %3033 = vmatpush1.msra.mxu0 %v1369
      %3034 = vmatprep.subr.mxu0 0.0
      %3035 = vmatpush1.msra.mxu0 %v1370
      %3036 = vmatprep.subr.mxu0 0.0
      %3037 = vmatpush1.msra.mxu0 %v1371
      %3038 = vmatprep.subr.mxu0 0.0
      %3039 = vmatpush1.msra.mxu0 %v1372
      %3040 = vmatprep.subr.mxu0 0.0
      %3041 = vmatpush1.msra.mxu0 %v1373
      %3042 = vmatprep.subr.mxu0 0.0
      %3043 = vmatpush1.msra.mxu0 %v1374
      %3044 = vmatprep.subr.mxu0 0.0
      %3045 = vmatpush1.msra.mxu0 %v1375
      %3046 = vmatprep.subr.mxu0 0.0
      %3047 = vmatpush1.msra.mxu0 %v1376
      %3048 = vmatprep.subr.mxu0 0.0
      %3049 = vmatpush1.msra.mxu0 %v1377
      %3050 = vmatprep.subr.mxu0 0.0
      %3051 = vmatpush1.msra.mxu0 %v1378
      %3052 = vmatprep.subr.mxu0 0.0
      %3053 = vmatpush1.msra.mxu0 %v1379
      %3054 = vmatprep.subr.mxu0 0.0
      %3055 = vmatpush1.msra.mxu0 %v1380
      %3056 = vmatprep.subr.mxu0 0.0
      %3057 = vmatpush1.msra.mxu0 0.0
      %3058 = vmatprep.subr.mxu0 0.0
      %3059 = vmatpush1.msra.mxu0 0.0
      %3060 = vmatprep.subr.mxu0 0.0
      %3061 = vmatpush1.msra.mxu0 0.0
      %3062 = vmatprep.subr.mxu0 0.0
      %3063 = vmatpush1.msra.mxu0 0.0
      %3064 = vmatprep.subr.mxu0 0.0
      %3065 = vmatpush1.msra.mxu0 0.0
      %3066 = vmatprep.subr.mxu0 0.0
      %3067 = vmatpush1.msra.mxu0 0.0
      %3068 = vmatprep.subr.mxu0 0.0
      %3069 = vmatpush1.msra.mxu0 0.0
      %3070 = vmatprep.subr.mxu0 0.0
      %3071 = vmatpush1.msra.mxu0 0.0
      %3072 = vmatprep.subr.mxu0 0.0
      %3073 = vmatpush1.msra.mxu0 0.0
      %3074 = vmatprep.subr.mxu0 0.0
      %3075 = vmatpush1.msra.mxu0 0.0
      %3076 = vmatprep.subr.mxu0 0.0
      %3077 = vmatpush1.msra.mxu0 0.0
      %3078 = vmatprep.subr.mxu0 0.0
      %3079 = vmatpush1.msra.mxu0 0.0
      %3080 = vmatprep.subr.mxu0 0.0
      %3081 = vmatpush1.msra.mxu0 0.0
      %3082 = vmatprep.subr.mxu0 0.0
      %3083 = vmatpush1.msra.mxu0 0.0
      %3084 = vmatprep.subr.mxu0 0.0
      %3085 = vmatpush1.msra.mxu0 0.0
      %3086 = vmatprep.subr.mxu0 0.0
      %3087 = vmatpush1.msra.mxu0 0.0
      %3088 = vmatprep.mubr.f32.mxu0 0.0
      %3089 = vmatmul.mubr.f32.gmra.mrb[0].mxu0 %v2858
      %v3090 = vpop.f32.mrb[0].mxu0
      %v3091 = vadd.f32 %v1391, %v3090
      %v3092 = vpop.f32.mrb[0].mxu0
      %3093 = vdwg.mxu0
      %v3094 = vmul.f32 %v2946, %v3091
      %v3095 = vadd.f32 %v2869, %v3094
      %v3096 = vtanh.pop %v3095
      %v3097 = vsub.f32 1.0, %v3023
      %v3098 = vmul.f32 %v3097, %v3096
      %v3099 = vmul.f32 %v3023, %v2858
      %v3100 = vadd.f32 %v3098, %v3099
      %v3101 = vstv %s2862
      %vm3102 = vcmp.lt.s32.totalorder %v3101, %v1384
      %v3103 = vsel %vm3102, %v3100, %v2858
      %v3104 = vsel %vm3102, %v3100, 0.0
      %s3105 = scalar_lea.vmem %s305, %s2863
      %3106 = vst [vmem:[%s3105] sm:$0xff] %v3104
      %s3107 = scalar_select %p306, 4, 7
      %s3108 = smul.u32 %s3107, 8
      %s3109 = scalar_lea.vmem [#allocation2], %s3108
      %v3110 = vld [vmem:[%s3109] sm:$0xff]
      %s3111 = scalar_lea.vmem [#allocation3], %s3108
      %v3112 = vld [vmem:[%s3111] sm:$0xff]
      %s3113 = scalar_lea.vmem [#allocation4], %s3108
      %v3114 = vld [vmem:[%s3113] sm:$0xff]
      %3115 = vmatprep.subr.mxu0 0.0
      %3116 = vmatpush1.msra.mxu0 %v1331
      %3117 = vmatprep.subr.mxu0 0.0
      %3118 = vmatpush1.msra.mxu0 %v1332
      %3119 = vmatprep.subr.mxu0 0.0
      %3120 = vmatpush1.msra.mxu0 %v1333
      %3121 = vmatprep.subr.mxu0 0.0
      %3122 = vmatpush1.msra.mxu0 %v1334
      %3123 = vmatprep.subr.mxu0 0.0
      %3124 = vmatpush1.msra.mxu0 %v1335
      %3125 = vmatprep.subr.mxu0 0.0
      %3126 = vmatpush1.msra.mxu0 %v1336
      %3127 = vmatprep.subr.mxu0 0.0
      %3128 = vmatpush1.msra.mxu0 %v1337
      %3129 = vmatprep.subr.mxu0 0.0
      %3130 = vmatpush1.msra.mxu0 %v1338
      %3131 = vmatprep.subr.mxu0 0.0
      %3132 = vmatpush1.msra.mxu0 %v1339
      %3133 = vmatprep.subr.mxu0 0.0
      %3134 = vmatpush1.msra.mxu0 %v1340
      %3135 = vmatprep.subr.mxu0 0.0
      %3136 = vmatpush1.msra.mxu0 %v1341
      %3137 = vmatprep.subr.mxu0 0.0
      %3138 = vmatpush1.msra.mxu0 %v1342
      %3139 = vmatprep.subr.mxu0 0.0
      %3140 = vmatpush1.msra.mxu0 %v1343
      %3141 = vmatprep.subr.mxu0 0.0
      %3142 = vmatpush1.msra.mxu0 %v1344
      %3143 = vmatprep.subr.mxu0 0.0
      %3144 = vmatpush1.msra.mxu0 %v1345
      %3145 = vmatprep.subr.mxu0 0.0
      %3146 = vmatpush1.msra.mxu0 %v1346
      %3147 = vmatprep.subr.mxu0 0.0
      %3148 = vmatpush1.msra.mxu0 0.0
      %3149 = vmatprep.subr.mxu0 0.0
      %3150 = vmatpush1.msra.mxu0 0.0
      %3151 = vmatprep.subr.mxu0 0.0
      %3152 = vmatpush1.msra.mxu0 0.0
      %3153 = vmatprep.subr.mxu0 0.0
      %3154 = vmatpush1.msra.mxu0 0.0
      %3155 = vmatprep.subr.mxu0 0.0
      %3156 = vmatpush1.msra.mxu0 0.0
      %3157 = vmatprep.subr.mxu0 0.0
      %3158 = vmatpush1.msra.mxu0 0.0
      %3159 = vmatprep.subr.mxu0 0.0
      %3160 = vmatpush1.msra.mxu0 0.0
      %3161 = vmatprep.subr.mxu0 0.0
      %3162 = vmatpush1.msra.mxu0 0.0
      %3163 = vmatprep.subr.mxu0 0.0
      %3164 = vmatpush1.msra.mxu0 0.0
      %3165 = vmatprep.subr.mxu0 0.0
      %3166 = vmatpush1.msra.mxu0 0.0
      %3167 = vmatprep.subr.mxu0 0.0
      %3168 = vmatpush1.msra.mxu0 0.0
      %3169 = vmatprep.subr.mxu0 0.0
      %3170 = vmatpush1.msra.mxu0 0.0
      %3171 = vmatprep.subr.mxu0 0.0
      %3172 = vmatpush1.msra.mxu0 0.0
      %3173 = vmatprep.subr.mxu0 0.0
      %3174 = vmatpush1.msra.mxu0 0.0
      %3175 = vmatprep.subr.mxu0 0.0
      %3176 = vmatpush1.msra.mxu0 0.0
      %3177 = vmatprep.subr.mxu0 0.0
      %3178 = vmatpush1.msra.mxu0 0.0
      %3179 = vmatprep.mubr.f32.mxu0 0.0
      %3180 = vmatmul.mubr.f32.gmra.mrb[0].mxu0 %v3103
      %v3181 = vpop.f32.mrb[0].mxu0
      %v3182 = vadd.f32 0.0, %v3181
      %v3183 = vpop.f32.mrb[0].mxu0
      %3184 = vdwg.mxu0
      %v3185 = vadd.f32 %v3110, %v3182
      %v3186 = vxor.u32 %v3185, 2147483648
      %v3187 = vmul.f32 %v3186, 1.442695
      %v3188 = vpow.pop %v3187
      %v3189 = vadd.f32 %v3188, 1.0
      %v3190 = vrcp.pop %v3189
      %v3191 = vmul.f32 1.0, %v3190
      %3192 = vmatprep.subr.mxu0 0.0
      %3193 = vmatpush1.msra.mxu0 %v1348
      %3194 = vmatprep.subr.mxu0 0.0
      %3195 = vmatpush1.msra.mxu0 %v1349
      %3196 = vmatprep.subr.mxu0 0.0
      %3197 = vmatpush1.msra.mxu0 %v1350
      %3198 = vmatprep.subr.mxu0 0.0
      %3199 = vmatpush1.msra.mxu0 %v1351
      %3200 = vmatprep.subr.mxu0 0.0
      %3201 = vmatpush1.msra.mxu0 %v1352
      %3202 = vmatprep.subr.mxu0 0.0
      %3203 = vmatpush1.msra.mxu0 %v1353
      %3204 = vmatprep.subr.mxu0 0.0
      %3205 = vmatpush1.msra.mxu0 %v1354
      %3206 = vmatprep.subr.mxu0 0.0
      %3207 = vmatpush1.msra.mxu0 %v1355
      %3208 = vmatprep.subr.mxu0 0.0
      %3209 = vmatpush1.msra.mxu0 %v1356
      %3210 = vmatprep.subr.mxu0 0.0
      %3211 = vmatpush1.msra.mxu0 %v1357
      %3212 = vmatprep.subr.mxu0 0.0
      %3213 = vmatpush1.msra.mxu0 %v1358
      %3214 = vmatprep.subr.mxu0 0.0
      %3215 = vmatpush1.msra.mxu0 %v1359
      %3216 = vmatprep.subr.mxu0 0.0
      %3217 = vmatpush1.msra.mxu0 %v1360
      %3218 = vmatprep.subr.mxu0 0.0
      %3219 = vmatpush1.msra.mxu0 %v1361
      %3220 = vmatprep.subr.mxu0 0.0
      %3221 = vmatpush1.msra.mxu0 %v1362
      %3222 = vmatprep.subr.mxu0 0.0
      %3223 = vmatpush1.msra.mxu0 %v1363
      %3224 = vmatprep.subr.mxu0 0.0
      %3225 = vmatpush1.msra.mxu0 0.0
      %3226 = vmatprep.subr.mxu0 0.0
      %3227 = vmatpush1.msra.mxu0 0.0
      %3228 = vmatprep.subr.mxu0 0.0
      %3229 = vmatpush1.msra.mxu0 0.0
      %3230 = vmatprep.subr.mxu0 0.0
      %3231 = vmatpush1.msra.mxu0 0.0
      %3232 = vmatprep.subr.mxu0 0.0
      %3233 = vmatpush1.msra.mxu0 0.0
      %3234 = vmatprep.subr.mxu0 0.0
      %3235 = vmatpush1.msra.mxu0 0.0
      %3236 = vmatprep.subr.mxu0 0.0
      %3237 = vmatpush1.msra.mxu0 0.0
      %3238 = vmatprep.subr.mxu0 0.0
      %3239 = vmatpush1.msra.mxu0 0.0
      %3240 = vmatprep.subr.mxu0 0.0
      %3241 = vmatpush1.msra.mxu0 0.0
      %3242 = vmatprep.subr.mxu0 0.0
      %3243 = vmatpush1.msra.mxu0 0.0
      %3244 = vmatprep.subr.mxu0 0.0
      %3245 = vmatpush1.msra.mxu0 0.0
      %3246 = vmatprep.subr.mxu0 0.0
      %3247 = vmatpush1.msra.mxu0 0.0
      %3248 = vmatprep.subr.mxu0 0.0
      %3249 = vmatpush1.msra.mxu0 0.0
      %3250 = vmatprep.subr.mxu0 0.0
      %3251 = vmatpush1.msra.mxu0 0.0
      %3252 = vmatprep.subr.mxu0 0.0
      %3253 = vmatpush1.msra.mxu0 0.0
      %3254 = vmatprep.subr.mxu0 0.0
      %3255 = vmatpush1.msra.mxu0 0.0
      %3256 = vmatprep.mubr.f32.mxu0 0.0
      %3257 = vmatmul.mubr.f32.gmra.mrb[0].mxu0 %v3103
      %v3258 = vpop.f32.mrb[0].mxu0
      %v3259 = vadd.f32 0.0, %v3258
      %v3260 = vpop.f32.mrb[0].mxu0
      %3261 = vdwg.mxu0
      %v3262 = vadd.f32 %v3112, %v3259
      %v3263 = vxor.u32 %v3262, 2147483648
      %v3264 = vmul.f32 %v3263, 1.442695
      %v3265 = vpow.pop %v3264
      %v3266 = vadd.f32 %v3265, 1.0
      %v3267 = vrcp.pop %v3266
      %v3268 = vmul.f32 1.0, %v3267
      %3269 = vmatprep.subr.mxu0 0.0
      %3270 = vmatpush1.msra.mxu0 %v1365
      %3271 = vmatprep.subr.mxu0 0.0
      %3272 = vmatpush1.msra.mxu0 %v1366
      %3273 = vmatprep.subr.mxu0 0.0
      %3274 = vmatpush1.msra.mxu0 %v1367
      %3275 = vmatprep.subr.mxu0 0.0
      %3276 = vmatpush1.msra.mxu0 %v1368
      %3277 = vmatprep.subr.mxu0 0.0
      %3278 = vmatpush1.msra.mxu0 %v1369
      %3279 = vmatprep.subr.mxu0 0.0
      %3280 = vmatpush1.msra.mxu0 %v1370
      %3281 = vmatprep.subr.mxu0 0.0
      %3282 = vmatpush1.msra.mxu0 %v1371
      %3283 = vmatprep.subr.mxu0 0.0
      %3284 = vmatpush1.msra.mxu0 %v1372
      %3285 = vmatprep.subr.mxu0 0.0
      %3286 = vmatpush1.msra.mxu0 %v1373
      %3287 = vmatprep.subr.mxu0 0.0
      %3288 = vmatpush1.msra.mxu0 %v1374
      %3289 = vmatprep.subr.mxu0 0.0
      %3290 = vmatpush1.msra.mxu0 %v1375
      %3291 = vmatprep.subr.mxu0 0.0
      %3292 = vmatpush1.msra.mxu0 %v1376
      %3293 = vmatprep.subr.mxu0 0.0
      %3294 = vmatpush1.msra.mxu0 %v1377
      %3295 = vmatprep.subr.mxu0 0.0
      %3296 = vmatpush1.msra.mxu0 %v1378
      %3297 = vmatprep.subr.mxu0 0.0
      %3298 = vmatpush1.msra.mxu0 %v1379
      %3299 = vmatprep.subr.mxu0 0.0
      %3300 = vmatpush1.msra.mxu0 %v1380
      %3301 = vmatprep.subr.mxu0 0.0
      %3302 = vmatpush1.msra.mxu0 0.0
      %3303 = vmatprep.subr.mxu0 0.0
      %3304 = vmatpush1.msra.mxu0 0.0
      %3305 = vmatprep.subr.mxu0 0.0
      %3306 = vmatpush1.msra.mxu0 0.0
      %3307 = vmatprep.subr.mxu0 0.0
      %3308 = vmatpush1.msra.mxu0 0.0
      %3309 = vmatprep.subr.mxu0 0.0
      %3310 = vmatpush1.msra.mxu0 0.0
      %3311 = vmatprep.subr.mxu0 0.0
      %3312 = vmatpush1.msra.mxu0 0.0
      %3313 = vmatprep.subr.mxu0 0.0
      %3314 = vmatpush1.msra.mxu0 0.0
      %3315 = vmatprep.subr.mxu0 0.0
      %3316 = vmatpush1.msra.mxu0 0.0
      %3317 = vmatprep.subr.mxu0 0.0
      %3318 = vmatpush1.msra.mxu0 0.0
      %3319 = vmatprep.subr.mxu0 0.0
      %3320 = vmatpush1.msra.mxu0 0.0
      %3321 = vmatprep.subr.mxu0 0.0
      %3322 = vmatpush1.msra.mxu0 0.0
      %3323 = vmatprep.subr.mxu0 0.0
      %3324 = vmatpush1.msra.mxu0 0.0
      %3325 = vmatprep.subr.mxu0 0.0
      %3326 = vmatpush1.msra.mxu0 0.0
      %3327 = vmatprep.subr.mxu0 0.0
      %3328 = vmatpush1.msra.mxu0 0.0
      %3329 = vmatprep.subr.mxu0 0.0
      %3330 = vmatpush1.msra.mxu0 0.0
      %3331 = vmatprep.subr.mxu0 0.0
      %3332 = vmatpush1.msra.mxu0 0.0
      %3333 = vmatprep.mubr.f32.mxu0 0.0
      %3334 = vmatmul.mubr.f32.gmra.mrb[0].mxu0 %v3103
      %v3335 = vpop.f32.mrb[0].mxu0
      %v3336 = vadd.f32 %v1391, %v3335
      %v3337 = vpop.f32.mrb[0].mxu0
      %3338 = vdwg.mxu0
      %v3339 = vmul.f32 %v3191, %v3336
      %v3340 = vadd.f32 %v3114, %v3339
      %v3341 = vtanh.pop %v3340
      %v3342 = vsub.f32 1.0, %v3268
      %v3343 = vmul.f32 %v3342, %v3341
      %v3344 = vmul.f32 %v3268, %v3103
      %v3345 = vadd.f32 %v3343, %v3344
      %v3346 = vstv %s3107
      %vm3347 = vcmp.lt.s32.totalorder %v3346, %v1384
      %v3348 = vsel %vm3347, %v3345, %v3103
      %v3349 = vsel %vm3347, %v3345, 0.0
      %s3350 = scalar_lea.vmem %s305, %s3108
      %3351 = vst [vmem:[%s3350] sm:$0xff] %v3349
      %s3352 = scalar_select %p306, 3, 8
      %s3353 = smul.u32 %s3352, 8
      %s3354 = scalar_lea.vmem [#allocation2], %s3353
      %v3355 = vld [vmem:[%s3354] sm:$0xff]
      %s3356 = scalar_lea.vmem [#allocation3], %s3353
      %v3357 = vld [vmem:[%s3356] sm:$0xff]
      %s3358 = scalar_lea.vmem [#allocation4], %s3353
      %v3359 = vld [vmem:[%s3358] sm:$0xff]
      %3360 = vmatprep.subr.mxu0 0.0
      %3361 = vmatpush1.msra.mxu0 %v1331
      %3362 = vmatprep.subr.mxu0 0.0
      %3363 = vmatpush1.msra.mxu0 %v1332
      %3364 = vmatprep.subr.mxu0 0.0
      %3365 = vmatpush1.msra.mxu0 %v1333
      %3366 = vmatprep.subr.mxu0 0.0
      %3367 = vmatpush1.msra.mxu0 %v1334
      %3368 = vmatprep.subr.mxu0 0.0
      %3369 = vmatpush1.msra.mxu0 %v1335
      %3370 = vmatprep.subr.mxu0 0.0
      %3371 = vmatpush1.msra.mxu0 %v1336
      %3372 = vmatprep.subr.mxu0 0.0
      %3373 = vmatpush1.msra.mxu0 %v1337
      %3374 = vmatprep.subr.mxu0 0.0
      %3375 = vmatpush1.msra.mxu0 %v1338
      %3376 = vmatprep.subr.mxu0 0.0
      %3377 = vmatpush1.msra.mxu0 %v1339
      %3378 = vmatprep.subr.mxu0 0.0
      %3379 = vmatpush1.msra.mxu0 %v1340
      %3380 = vmatprep.subr.mxu0 0.0
      %3381 = vmatpush1.msra.mxu0 %v1341
      %3382 = vmatprep.subr.mxu0 0.0
      %3383 = vmatpush1.msra.mxu0 %v1342
      %3384 = vmatprep.subr.mxu0 0.0
      %3385 = vmatpush1.msra.mxu0 %v1343
      %3386 = vmatprep.subr.mxu0 0.0
      %3387 = vmatpush1.msra.mxu0 %v1344
      %3388 = vmatprep.subr.mxu0 0.0
      %3389 = vmatpush1.msra.mxu0 %v1345
      %3390 = vmatprep.subr.mxu0 0.0
      %3391 = vmatpush1.msra.mxu0 %v1346
      %3392 = vmatprep.subr.mxu0 0.0
      %3393 = vmatpush1.msra.mxu0 0.0
      %3394 = vmatprep.subr.mxu0 0.0
      %3395 = vmatpush1.msra.mxu0 0.0
      %3396 = vmatprep.subr.mxu0 0.0
      %3397 = vmatpush1.msra.mxu0 0.0
      %3398 = vmatprep.subr.mxu0 0.0
      %3399 = vmatpush1.msra.mxu0 0.0
      %3400 = vmatprep.subr.mxu0 0.0
      %3401 = vmatpush1.msra.mxu0 0.0
      %3402 = vmatprep.subr.mxu0 0.0
      %3403 = vmatpush1.msra.mxu0 0.0
      %3404 = vmatprep.subr.mxu0 0.0
      %3405 = vmatpush1.msra.mxu0 0.0
      %3406 = vmatprep.subr.mxu0 0.0
      %3407 = vmatpush1.msra.mxu0 0.0
      %3408 = vmatprep.subr.mxu0 0.0
      %3409 = vmatpush1.msra.mxu0 0.0
      %3410 = vmatprep.subr.mxu0 0.0
      %3411 = vmatpush1.msra.mxu0 0.0
      %3412 = vmatprep.subr.mxu0 0.0
      %3413 = vmatpush1.msra.mxu0 0.0
      %3414 = vmatprep.subr.mxu0 0.0
      %3415 = vmatpush1.msra.mxu0 0.0
      %3416 = vmatprep.subr.mxu0 0.0
      %3417 = vmatpush1.msra.mxu0 0.0
      %3418 = vmatprep.subr.mxu0 0.0
      %3419 = vmatpush1.msra.mxu0 0.0
      %3420 = vmatprep.subr.mxu0 0.0
      %3421 = vmatpush1.msra.mxu0 0.0
      %3422 = vmatprep.subr.mxu0 0.0
      %3423 = vmatpush1.msra.mxu0 0.0
      %3424 = vmatprep.mubr.f32.mxu0 0.0
      %3425 = vmatmul.mubr.f32.gmra.mrb[0].mxu0 %v3348
      %v3426 = vpop.f32.mrb[0].mxu0
      %v3427 = vadd.f32 0.0, %v3426
      %v3428 = vpop.f32.mrb[0].mxu0
      %3429 = vdwg.mxu0
      %v3430 = vadd.f32 %v3355, %v3427
      %v3431 = vxor.u32 %v3430, 2147483648
      %v3432 = vmul.f32 %v3431, 1.442695
      %v3433 = vpow.pop %v3432
      %v3434 = vadd.f32 %v3433, 1.0
      %v3435 = vrcp.pop %v3434
      %v3436 = vmul.f32 1.0, %v3435
      %3437 = vmatprep.subr.mxu0 0.0
      %3438 = vmatpush1.msra.mxu0 %v1348
      %3439 = vmatprep.subr.mxu0 0.0
      %3440 = vmatpush1.msra.mxu0 %v1349
      %3441 = vmatprep.subr.mxu0 0.0
      %3442 = vmatpush1.msra.mxu0 %v1350
      %3443 = vmatprep.subr.mxu0 0.0
      %3444 = vmatpush1.msra.mxu0 %v1351
      %3445 = vmatprep.subr.mxu0 0.0
      %3446 = vmatpush1.msra.mxu0 %v1352
      %3447 = vmatprep.subr.mxu0 0.0
      %3448 = vmatpush1.msra.mxu0 %v1353
      %3449 = vmatprep.subr.mxu0 0.0
      %3450 = vmatpush1.msra.mxu0 %v1354
      %3451 = vmatprep.subr.mxu0 0.0
      %3452 = vmatpush1.msra.mxu0 %v1355
      %3453 = vmatprep.subr.mxu0 0.0
      %3454 = vmatpush1.msra.mxu0 %v1356
      %3455 = vmatprep.subr.mxu0 0.0
      %3456 = vmatpush1.msra.mxu0 %v1357
      %3457 = vmatprep.subr.mxu0 0.0
      %3458 = vmatpush1.msra.mxu0 %v1358
      %3459 = vmatprep.subr.mxu0 0.0
      %3460 = vmatpush1.msra.mxu0 %v1359
      %3461 = vmatprep.subr.mxu0 0.0
      %3462 = vmatpush1.msra.mxu0 %v1360
      %3463 = vmatprep.subr.mxu0 0.0
      %3464 = vmatpush1.msra.mxu0 %v1361
      %3465 = vmatprep.subr.mxu0 0.0
      %3466 = vmatpush1.msra.mxu0 %v1362
      %3467 = vmatprep.subr.mxu0 0.0
      %3468 = vmatpush1.msra.mxu0 %v1363
      %3469 = vmatprep.subr.mxu0 0.0
      %3470 = vmatpush1.msra.mxu0 0.0
      %3471 = vmatprep.subr.mxu0 0.0
      %3472 = vmatpush1.msra.mxu0 0.0
      %3473 = vmatprep.subr.mxu0 0.0
      %3474 = vmatpush1.msra.mxu0 0.0
      %3475 = vmatprep.subr.mxu0 0.0
      %3476 = vmatpush1.msra.mxu0 0.0
      %3477 = vmatprep.subr.mxu0 0.0
      %3478 = vmatpush1.msra.mxu0 0.0
      %3479 = vmatprep.subr.mxu0 0.0
      %3480 = vmatpush1.msra.mxu0 0.0
      %3481 = vmatprep.subr.mxu0 0.0
      %3482 = vmatpush1.msra.mxu0 0.0
      %3483 = vmatprep.subr.mxu0 0.0
      %3484 = vmatpush1.msra.mxu0 0.0
      %3485 = vmatprep.subr.mxu0 0.0
      %3486 = vmatpush1.msra.mxu0 0.0
      %3487 = vmatprep.subr.mxu0 0.0
      %3488 = vmatpush1.msra.mxu0 0.0
      %3489 = vmatprep.subr.mxu0 0.0
      %3490 = vmatpush1.msra.mxu0 0.0
      %3491 = vmatprep.subr.mxu0 0.0
      %3492 = vmatpush1.msra.mxu0 0.0
      %3493 = vmatprep.subr.mxu0 0.0
      %3494 = vmatpush1.msra.mxu0 0.0
      %3495 = vmatprep.subr.mxu0 0.0
      %3496 = vmatpush1.msra.mxu0 0.0
      %3497 = vmatprep.subr.mxu0 0.0
      %3498 = vmatpush1.msra.mxu0 0.0
      %3499 = vmatprep.subr.mxu0 0.0
      %3500 = vmatpush1.msra.mxu0 0.0
      %3501 = vmatprep.mubr.f32.mxu0 0.0
      %3502 = vmatmul.mubr.f32.gmra.mrb[0].mxu0 %v3348
      %v3503 = vpop.f32.mrb[0].mxu0
      %v3504 = vadd.f32 0.0, %v3503
      %v3505 = vpop.f32.mrb[0].mxu0
      %3506 = vdwg.mxu0
      %v3507 = vadd.f32 %v3357, %v3504
      %v3508 = vxor.u32 %v3507, 2147483648
      %v3509 = vmul.f32 %v3508, 1.442695
      %v3510 = vpow.pop %v3509
      %v3511 = vadd.f32 %v3510, 1.0
      %v3512 = vrcp.pop %v3511
      %v3513 = vmul.f32 1.0, %v3512
      %3514 = vmatprep.subr.mxu0 0.0
      %3515 = vmatpush1.msra.mxu0 %v1365
      %3516 = vmatprep.subr.mxu0 0.0
      %3517 = vmatpush1.msra.mxu0 %v1366
      %3518 = vmatprep.subr.mxu0 0.0
      %3519 = vmatpush1.msra.mxu0 %v1367
      %3520 = vmatprep.subr.mxu0 0.0
      %3521 = vmatpush1.msra.mxu0 %v1368
      %3522 = vmatprep.subr.mxu0 0.0
      %3523 = vmatpush1.msra.mxu0 %v1369
      %3524 = vmatprep.subr.mxu0 0.0
      %3525 = vmatpush1.msra.mxu0 %v1370
      %3526 = vmatprep.subr.mxu0 0.0
      %3527 = vmatpush1.msra.mxu0 %v1371
      %3528 = vmatprep.subr.mxu0 0.0
      %3529 = vmatpush1.msra.mxu0 %v1372
      %3530 = vmatprep.subr.mxu0 0.0
      %3531 = vmatpush1.msra.mxu0 %v1373
      %3532 = vmatprep.subr.mxu0 0.0
      %3533 = vmatpush1.msra.mxu0 %v1374
      %3534 = vmatprep.subr.mxu0 0.0
      %3535 = vmatpush1.msra.mxu0 %v1375
      %3536 = vmatprep.subr.mxu0 0.0
      %3537 = vmatpush1.msra.mxu0 %v1376
      %3538 = vmatprep.subr.mxu0 0.0
      %3539 = vmatpush1.msra.mxu0 %v1377
      %3540 = vmatprep.subr.mxu0 0.0
      %3541 = vmatpush1.msra.mxu0 %v1378
      %3542 = vmatprep.subr.mxu0 0.0
      %3543 = vmatpush1.msra.mxu0 %v1379
      %3544 = vmatprep.subr.mxu0 0.0
      %3545 = vmatpush1.msra.mxu0 %v1380
      %3546 = vmatprep.subr.mxu0 0.0
      %3547 = vmatpush1.msra.mxu0 0.0
      %3548 = vmatprep.subr.mxu0 0.0
      %3549 = vmatpush1.msra.mxu0 0.0
      %3550 = vmatprep.subr.mxu0 0.0
      %3551 = vmatpush1.msra.mxu0 0.0
      %3552 = vmatprep.subr.mxu0 0.0
      %3553 = vmatpush1.msra.mxu0 0.0
      %3554 = vmatprep.subr.mxu0 0.0
      %3555 = vmatpush1.msra.mxu0 0.0
      %3556 = vmatprep.subr.mxu0 0.0
      %3557 = vmatpush1.msra.mxu0 0.0
      %3558 = vmatprep.subr.mxu0 0.0
      %3559 = vmatpush1.msra.mxu0 0.0
      %3560 = vmatprep.subr.mxu0 0.0
      %3561 = vmatpush1.msra.mxu0 0.0
      %3562 = vmatprep.subr.mxu0 0.0
      %3563 = vmatpush1.msra.mxu0 0.0
      %3564 = vmatprep.subr.mxu0 0.0
      %3565 = vmatpush1.msra.mxu0 0.0
      %3566 = vmatprep.subr.mxu0 0.0
      %3567 = vmatpush1.msra.mxu0 0.0
      %3568 = vmatprep.subr.mxu0 0.0
      %3569 = vmatpush1.msra.mxu0 0.0
      %3570 = vmatprep.subr.mxu0 0.0
      %3571 = vmatpush1.msra.mxu0 0.0
      %3572 = vmatprep.subr.mxu0 0.0
      %3573 = vmatpush1.msra.mxu0 0.0
      %3574 = vmatprep.subr.mxu0 0.0
      %3575 = vmatpush1.msra.mxu0 0.0
      %3576 = vmatprep.subr.mxu0 0.0
      %3577 = vmatpush1.msra.mxu0 0.0
      %3578 = vmatprep.mubr.f32.mxu0 0.0
      %3579 = vmatmul.mubr.f32.gmra.mrb[0].mxu0 %v3348
      %v3580 = vpop.f32.mrb[0].mxu0
      %v3581 = vadd.f32 %v1391, %v3580
      %v3582 = vpop.f32.mrb[0].mxu0
      %3583 = vdwg.mxu0
      %v3584 = vmul.f32 %v3436, %v3581
      %v3585 = vadd.f32 %v3359, %v3584
      %v3586 = vtanh.pop %v3585
      %v3587 = vsub.f32 1.0, %v3513
      %v3588 = vmul.f32 %v3587, %v3586
      %v3589 = vmul.f32 %v3513, %v3348
      %v3590 = vadd.f32 %v3588, %v3589
      %v3591 = vstv %s3352
      %vm3592 = vcmp.lt.s32.totalorder %v3591, %v1384
      %v3593 = vsel %vm3592, %v3590, %v3348
      %v3594 = vsel %vm3592, %v3590, 0.0
      %s3595 = scalar_lea.vmem %s305, %s3353
      %3596 = vst [vmem:[%s3595] sm:$0xff] %v3594
      %s3597 = scalar_select %p306, 2, 9
      %s3598 = smul.u32 %s3597, 8
      %s3599 = scalar_lea.vmem [#allocation2], %s3598
      %v3600 = vld [vmem:[%s3599] sm:$0xff]
      %s3601 = scalar_lea.vmem [#allocation3], %s3598
      %v3602 = vld [vmem:[%s3601] sm:$0xff]
      %s3603 = scalar_lea.vmem [#allocation4], %s3598
      %v3604 = vld [vmem:[%s3603] sm:$0xff]
      %3605 = vmatprep.subr.mxu0 0.0
      %3606 = vmatpush1.msra.mxu0 %v1331
      %3607 = vmatprep.subr.mxu0 0.0
      %3608 = vmatpush1.msra.mxu0 %v1332
      %3609 = vmatprep.subr.mxu0 0.0
      %3610 = vmatpush1.msra.mxu0 %v1333
      %3611 = vmatprep.subr.mxu0 0.0
      %3612 = vmatpush1.msra.mxu0 %v1334
      %3613 = vmatprep.subr.mxu0 0.0
      %3614 = vmatpush1.msra.mxu0 %v1335
      %3615 = vmatprep.subr.mxu0 0.0
      %3616 = vmatpush1.msra.mxu0 %v1336
      %3617 = vmatprep.subr.mxu0 0.0
      %3618 = vmatpush1.msra.mxu0 %v1337
      %3619 = vmatprep.subr.mxu0 0.0
      %3620 = vmatpush1.msra.mxu0 %v1338
      %3621 = vmatprep.subr.mxu0 0.0
      %3622 = vmatpush1.msra.mxu0 %v1339
      %3623 = vmatprep.subr.mxu0 0.0
      %3624 = vmatpush1.msra.mxu0 %v1340
      %3625 = vmatprep.subr.mxu0 0.0
      %3626 = vmatpush1.msra.mxu0 %v1341
      %3627 = vmatprep.subr.mxu0 0.0
      %3628 = vmatpush1.msra.mxu0 %v1342
      %3629 = vmatprep.subr.mxu0 0.0
      %3630 = vmatpush1.msra.mxu0 %v1343
      %3631 = vmatprep.subr.mxu0 0.0
      %3632 = vmatpush1.msra.mxu0 %v1344
      %3633 = vmatprep.subr.mxu0 0.0
      %3634 = vmatpush1.msra.mxu0 %v1345
      %3635 = vmatprep.subr.mxu0 0.0
      %3636 = vmatpush1.msra.mxu0 %v1346
      %3637 = vmatprep.subr.mxu0 0.0
      %3638 = vmatpush1.msra.mxu0 0.0
      %3639 = vmatprep.subr.mxu0 0.0
      %3640 = vmatpush1.msra.mxu0 0.0
      %3641 = vmatprep.subr.mxu0 0.0
      %3642 = vmatpush1.msra.mxu0 0.0
      %3643 = vmatprep.subr.mxu0 0.0
      %3644 = vmatpush1.msra.mxu0 0.0
      %3645 = vmatprep.subr.mxu0 0.0
      %3646 = vmatpush1.msra.mxu0 0.0
      %3647 = vmatprep.subr.mxu0 0.0
      %3648 = vmatpush1.msra.mxu0 0.0
      %3649 = vmatprep.subr.mxu0 0.0
      %3650 = vmatpush1.msra.mxu0 0.0
      %3651 = vmatprep.subr.mxu0 0.0
      %3652 = vmatpush1.msra.mxu0 0.0
      %3653 = vmatprep.subr.mxu0 0.0
      %3654 = vmatpush1.msra.mxu0 0.0
      %3655 = vmatprep.subr.mxu0 0.0
      %3656 = vmatpush1.msra.mxu0 0.0
      %3657 = vmatprep.subr.mxu0 0.0
      %3658 = vmatpush1.msra.mxu0 0.0
      %3659 = vmatprep.subr.mxu0 0.0
      %3660 = vmatpush1.msra.mxu0 0.0
      %3661 = vmatprep.subr.mxu0 0.0
      %3662 = vmatpush1.msra.mxu0 0.0
      %3663 = vmatprep.subr.mxu0 0.0
      %3664 = vmatpush1.msra.mxu0 0.0
      %3665 = vmatprep.subr.mxu0 0.0
      %3666 = vmatpush1.msra.mxu0 0.0
      %3667 = vmatprep.subr.mxu0 0.0
      %3668 = vmatpush1.msra.mxu0 0.0
      %3669 = vmatprep.mubr.f32.mxu0 0.0
      %3670 = vmatmul.mubr.f32.gmra.mrb[0].mxu0 %v3593
      %v3671 = vpop.f32.mrb[0].mxu0
      %v3672 = vadd.f32 0.0, %v3671
      %v3673 = vpop.f32.mrb[0].mxu0
      %3674 = vdwg.mxu0
      %v3675 = vadd.f32 %v3600, %v3672
      %v3676 = vxor.u32 %v3675, 2147483648
      %v3677 = vmul.f32 %v3676, 1.442695
      %v3678 = vpow.pop %v3677
      %v3679 = vadd.f32 %v3678, 1.0
      %v3680 = vrcp.pop %v3679
      %v3681 = vmul.f32 1.0, %v3680
      %3682 = vmatprep.subr.mxu0 0.0
      %3683 = vmatpush1.msra.mxu0 %v1348
      %3684 = vmatprep.subr.mxu0 0.0
      %3685 = vmatpush1.msra.mxu0 %v1349
      %3686 = vmatprep.subr.mxu0 0.0
      %3687 = vmatpush1.msra.mxu0 %v1350
      %3688 = vmatprep.subr.mxu0 0.0
      %3689 = vmatpush1.msra.mxu0 %v1351
      %3690 = vmatprep.subr.mxu0 0.0
      %3691 = vmatpush1.msra.mxu0 %v1352
      %3692 = vmatprep.subr.mxu0 0.0
      %3693 = vmatpush1.msra.mxu0 %v1353
      %3694 = vmatprep.subr.mxu0 0.0
      %3695 = vmatpush1.msra.mxu0 %v1354
      %3696 = vmatprep.subr.mxu0 0.0
      %3697 = vmatpush1.msra.mxu0 %v1355
      %3698 = vmatprep.subr.mxu0 0.0
      %3699 = vmatpush1.msra.mxu0 %v1356
      %3700 = vmatprep.subr.mxu0 0.0
      %3701 = vmatpush1.msra.mxu0 %v1357
      %3702 = vmatprep.subr.mxu0 0.0
      %3703 = vmatpush1.msra.mxu0 %v1358
      %3704 = vmatprep.subr.mxu0 0.0
      %3705 = vmatpush1.msra.mxu0 %v1359
      %3706 = vmatprep.subr.mxu0 0.0
      %3707 = vmatpush1.msra.mxu0 %v1360
      %3708 = vmatprep.subr.mxu0 0.0
      %3709 = vmatpush1.msra.mxu0 %v1361
      %3710 = vmatprep.subr.mxu0 0.0
      %3711 = vmatpush1.msra.mxu0 %v1362
      %3712 = vmatprep.subr.mxu0 0.0
      %3713 = vmatpush1.msra.mxu0 %v1363
      %3714 = vmatprep.subr.mxu0 0.0
      %3715 = vmatpush1.msra.mxu0 0.0
      %3716 = vmatprep.subr.mxu0 0.0
      %3717 = vmatpush1.msra.mxu0 0.0
      %3718 = vmatprep.subr.mxu0 0.0
      %3719 = vmatpush1.msra.mxu0 0.0
      %3720 = vmatprep.subr.mxu0 0.0
      %3721 = vmatpush1.msra.mxu0 0.0
      %3722 = vmatprep.subr.mxu0 0.0
      %3723 = vmatpush1.msra.mxu0 0.0
      %3724 = vmatprep.subr.mxu0 0.0
      %3725 = vmatpush1.msra.mxu0 0.0
      %3726 = vmatprep.subr.mxu0 0.0
      %3727 = vmatpush1.msra.mxu0 0.0
      %3728 = vmatprep.subr.mxu0 0.0
      %3729 = vmatpush1.msra.mxu0 0.0
      %3730 = vmatprep.subr.mxu0 0.0
      %3731 = vmatpush1.msra.mxu0 0.0
      %3732 = vmatprep.subr.mxu0 0.0
      %3733 = vmatpush1.msra.mxu0 0.0
      %3734 = vmatprep.subr.mxu0 0.0
      %3735 = vmatpush1.msra.mxu0 0.0
      %3736 = vmatprep.subr.mxu0 0.0
      %3737 = vmatpush1.msra.mxu0 0.0
      %3738 = vmatprep.subr.mxu0 0.0
      %3739 = vmatpush1.msra.mxu0 0.0
      %3740 = vmatprep.subr.mxu0 0.0
      %3741 = vmatpush1.msra.mxu0 0.0
      %3742 = vmatprep.subr.mxu0 0.0
      %3743 = vmatpush1.msra.mxu0 0.0
      %3744 = vmatprep.subr.mxu0 0.0
      %3745 = vmatpush1.msra.mxu0 0.0
      %3746 = vmatprep.mubr.f32.mxu0 0.0
      %3747 = vmatmul.mubr.f32.gmra.mrb[0].mxu0 %v3593
      %v3748 = vpop.f32.mrb[0].mxu0
      %v3749 = vadd.f32 0.0, %v3748
      %v3750 = vpop.f32.mrb[0].mxu0
      %3751 = vdwg.mxu0
      %v3752 = vadd.f32 %v3602, %v3749
      %v3753 = vxor.u32 %v3752, 2147483648
      %v3754 = vmul.f32 %v3753, 1.442695
      %v3755 = vpow.pop %v3754
      %v3756 = vadd.f32 %v3755, 1.0
      %v3757 = vrcp.pop %v3756
      %v3758 = vmul.f32 1.0, %v3757
      %3759 = vmatprep.subr.mxu0 0.0
      %3760 = vmatpush1.msra.mxu0 %v1365
      %3761 = vmatprep.subr.mxu0 0.0
      %3762 = vmatpush1.msra.mxu0 %v1366
      %3763 = vmatprep.subr.mxu0 0.0
      %3764 = vmatpush1.msra.mxu0 %v1367
      %3765 = vmatprep.subr.mxu0 0.0
      %3766 = vmatpush1.msra.mxu0 %v1368
      %3767 = vmatprep.subr.mxu0 0.0
      %3768 = vmatpush1.msra.mxu0 %v1369
      %3769 = vmatprep.subr.mxu0 0.0
      %3770 = vmatpush1.msra.mxu0 %v1370
      %3771 = vmatprep.subr.mxu0 0.0
      %3772 = vmatpush1.msra.mxu0 %v1371
      %3773 = vmatprep.subr.mxu0 0.0
      %3774 = vmatpush1.msra.mxu0 %v1372
      %3775 = vmatprep.subr.mxu0 0.0
      %3776 = vmatpush1.msra.mxu0 %v1373
      %3777 = vmatprep.subr.mxu0 0.0
      %3778 = vmatpush1.msra.mxu0 %v1374
      %3779 = vmatprep.subr.mxu0 0.0
      %3780 = vmatpush1.msra.mxu0 %v1375
      %3781 = vmatprep.subr.mxu0 0.0
      %3782 = vmatpush1.msra.mxu0 %v1376
      %3783 = vmatprep.subr.mxu0 0.0
      %3784 = vmatpush1.msra.mxu0 %v1377
      %3785 = vmatprep.subr.mxu0 0.0
      %3786 = vmatpush1.msra.mxu0 %v1378
      %3787 = vmatprep.subr.mxu0 0.0
      %3788 = vmatpush1.msra.mxu0 %v1379
      %3789 = vmatprep.subr.mxu0 0.0
      %3790 = vmatpush1.msra.mxu0 %v1380
      %3791 = vmatprep.subr.mxu0 0.0
      %3792 = vmatpush1.msra.mxu0 0.0
      %3793 = vmatprep.subr.mxu0 0.0
      %3794 = vmatpush1.msra.mxu0 0.0
      %3795 = vmatprep.subr.mxu0 0.0
      %3796 = vmatpush1.msra.mxu0 0.0
      %3797 = vmatprep.subr.mxu0 0.0
      %3798 = vmatpush1.msra.mxu0 0.0
      %3799 = vmatprep.subr.mxu0 0.0
      %3800 = vmatpush1.msra.mxu0 0.0
      %3801 = vmatprep.subr.mxu0 0.0
      %3802 = vmatpush1.msra.mxu0 0.0
      %3803 = vmatprep.subr.mxu0 0.0
      %3804 = vmatpush1.msra.mxu0 0.0
      %3805 = vmatprep.subr.mxu0 0.0
      %3806 = vmatpush1.msra.mxu0 0.0
      %3807 = vmatprep.subr.mxu0 0.0
      %3808 = vmatpush1.msra.mxu0 0.0
      %3809 = vmatprep.subr.mxu0 0.0
      %3810 = vmatpush1.msra.mxu0 0.0
      %3811 = vmatprep.subr.mxu0 0.0
      %3812 = vmatpush1.msra.mxu0 0.0
      %3813 = vmatprep.subr.mxu0 0.0
      %3814 = vmatpush1.msra.mxu0 0.0
      %3815 = vmatprep.subr.mxu0 0.0
      %3816 = vmatpush1.msra.mxu0 0.0
      %3817 = vmatprep.subr.mxu0 0.0
      %3818 = vmatpush1.msra.mxu0 0.0
      %3819 = vmatprep.subr.mxu0 0.0
      %3820 = vmatpush1.msra.mxu0 0.0
      %3821 = vmatprep.subr.mxu0 0.0
      %3822 = vmatpush1.msra.mxu0 0.0
      %3823 = vmatprep.mubr.f32.mxu0 0.0
      %3824 = vmatmul.mubr.f32.gmra.mrb[0].mxu0 %v3593
      %v3825 = vpop.f32.mrb[0].mxu0
      %v3826 = vadd.f32 %v1391, %v3825
      %v3827 = vpop.f32.mrb[0].mxu0
      %3828 = vdwg.mxu0
      %v3829 = vmul.f32 %v3681, %v3826
      %v3830 = vadd.f32 %v3604, %v3829
      %v3831 = vtanh.pop %v3830
      %v3832 = vsub.f32 1.0, %v3758
      %v3833 = vmul.f32 %v3832, %v3831
      %v3834 = vmul.f32 %v3758, %v3593
      %v3835 = vadd.f32 %v3833, %v3834
      %v3836 = vstv %s3597
      %vm3837 = vcmp.lt.s32.totalorder %v3836, %v1384
      %v3838 = vsel %vm3837, %v3835, %v3593
      %v3839 = vsel %vm3837, %v3835, 0.0
      %s3840 = scalar_lea.vmem %s305, %s3598
      %3841 = vst [vmem:[%s3840] sm:$0xff] %v3839
      %s3842 = scalar_select %p306, 1, 10
      %s3843 = smul.u32 %s3842, 8
      %s3844 = scalar_lea.vmem [#allocation2], %s3843
      %v3845 = vld [vmem:[%s3844] sm:$0xff]
      %s3846 = scalar_lea.vmem [#allocation3], %s3843
      %v3847 = vld [vmem:[%s3846] sm:$0xff]
      %s3848 = scalar_lea.vmem [#allocation4], %s3843
      %v3849 = vld [vmem:[%s3848] sm:$0xff]
      %3850 = vmatprep.subr.mxu0 0.0
      %3851 = vmatpush1.msra.mxu0 %v1331
      %3852 = vmatprep.subr.mxu0 0.0
      %3853 = vmatpush1.msra.mxu0 %v1332
      %3854 = vmatprep.subr.mxu0 0.0
      %3855 = vmatpush1.msra.mxu0 %v1333
      %3856 = vmatprep.subr.mxu0 0.0
      %3857 = vmatpush1.msra.mxu0 %v1334
      %3858 = vmatprep.subr.mxu0 0.0
      %3859 = vmatpush1.msra.mxu0 %v1335
      %3860 = vmatprep.subr.mxu0 0.0
      %3861 = vmatpush1.msra.mxu0 %v1336
      %3862 = vmatprep.subr.mxu0 0.0
      %3863 = vmatpush1.msra.mxu0 %v1337
      %3864 = vmatprep.subr.mxu0 0.0
      %3865 = vmatpush1.msra.mxu0 %v1338
      %3866 = vmatprep.subr.mxu0 0.0
      %3867 = vmatpush1.msra.mxu0 %v1339
      %3868 = vmatprep.subr.mxu0 0.0
      %3869 = vmatpush1.msra.mxu0 %v1340
      %3870 = vmatprep.subr.mxu0 0.0
      %3871 = vmatpush1.msra.mxu0 %v1341
      %3872 = vmatprep.subr.mxu0 0.0
      %3873 = vmatpush1.msra.mxu0 %v1342
      %3874 = vmatprep.subr.mxu0 0.0
      %3875 = vmatpush1.msra.mxu0 %v1343
      %3876 = vmatprep.subr.mxu0 0.0
      %3877 = vmatpush1.msra.mxu0 %v1344
      %3878 = vmatprep.subr.mxu0 0.0
      %3879 = vmatpush1.msra.mxu0 %v1345
      %3880 = vmatprep.subr.mxu0 0.0
      %3881 = vmatpush1.msra.mxu0 %v1346
      %3882 = vmatprep.subr.mxu0 0.0
      %3883 = vmatpush1.msra.mxu0 0.0
      %3884 = vmatprep.subr.mxu0 0.0
      %3885 = vmatpush1.msra.mxu0 0.0
      %3886 = vmatprep.subr.mxu0 0.0
      %3887 = vmatpush1.msra.mxu0 0.0
      %3888 = vmatprep.subr.mxu0 0.0
      %3889 = vmatpush1.msra.mxu0 0.0
      %3890 = vmatprep.subr.mxu0 0.0
      %3891 = vmatpush1.msra.mxu0 0.0
      %3892 = vmatprep.subr.mxu0 0.0
      %3893 = vmatpush1.msra.mxu0 0.0
      %3894 = vmatprep.subr.mxu0 0.0
      %3895 = vmatpush1.msra.mxu0 0.0
      %3896 = vmatprep.subr.mxu0 0.0
      %3897 = vmatpush1.msra.mxu0 0.0
      %3898 = vmatprep.subr.mxu0 0.0
      %3899 = vmatpush1.msra.mxu0 0.0
      %3900 = vmatprep.subr.mxu0 0.0
      %3901 = vmatpush1.msra.mxu0 0.0
      %3902 = vmatprep.subr.mxu0 0.0
      %3903 = vmatpush1.msra.mxu0 0.0
      %3904 = vmatprep.subr.mxu0 0.0
      %3905 = vmatpush1.msra.mxu0 0.0
      %3906 = vmatprep.subr.mxu0 0.0
      %3907 = vmatpush1.msra.mxu0 0.0
      %3908 = vmatprep.subr.mxu0 0.0
      %3909 = vmatpush1.msra.mxu0 0.0
      %3910 = vmatprep.subr.mxu0 0.0
      %3911 = vmatpush1.msra.mxu0 0.0
      %3912 = vmatprep.subr.mxu0 0.0
      %3913 = vmatpush1.msra.mxu0 0.0
      %3914 = vmatprep.mubr.f32.mxu0 0.0
      %3915 = vmatmul.mubr.f32.gmra.mrb[0].mxu0 %v3838
      %v3916 = vpop.f32.mrb[0].mxu0
      %v3917 = vadd.f32 0.0, %v3916
      %v3918 = vpop.f32.mrb[0].mxu0
      %3919 = vdwg.mxu0
      %v3920 = vadd.f32 %v3845, %v3917
      %v3921 = vxor.u32 %v3920, 2147483648
      %v3922 = vmul.f32 %v3921, 1.442695
      %v3923 = vpow.pop %v3922
      %v3924 = vadd.f32 %v3923, 1.0
      %v3925 = vrcp.pop %v3924
      %v3926 = vmul.f32 1.0, %v3925
      %3927 = vmatprep.subr.mxu0 0.0
      %3928 = vmatpush1.msra.mxu0 %v1348
      %3929 = vmatprep.subr.mxu0 0.0
      %3930 = vmatpush1.msra.mxu0 %v1349
      %3931 = vmatprep.subr.mxu0 0.0
      %3932 = vmatpush1.msra.mxu0 %v1350
      %3933 = vmatprep.subr.mxu0 0.0
      %3934 = vmatpush1.msra.mxu0 %v1351
      %3935 = vmatprep.subr.mxu0 0.0
      %3936 = vmatpush1.msra.mxu0 %v1352
      %3937 = vmatprep.subr.mxu0 0.0
      %3938 = vmatpush1.msra.mxu0 %v1353
      %3939 = vmatprep.subr.mxu0 0.0
      %3940 = vmatpush1.msra.mxu0 %v1354
      %3941 = vmatprep.subr.mxu0 0.0
      %3942 = vmatpush1.msra.mxu0 %v1355
      %3943 = vmatprep.subr.mxu0 0.0
      %3944 = vmatpush1.msra.mxu0 %v1356
      %3945 = vmatprep.subr.mxu0 0.0
      %3946 = vmatpush1.msra.mxu0 %v1357
      %3947 = vmatprep.subr.mxu0 0.0
      %3948 = vmatpush1.msra.mxu0 %v1358
      %3949 = vmatprep.subr.mxu0 0.0
      %3950 = vmatpush1.msra.mxu0 %v1359
      %3951 = vmatprep.subr.mxu0 0.0
      %3952 = vmatpush1.msra.mxu0 %v1360
      %3953 = vmatprep.subr.mxu0 0.0
      %3954 = vmatpush1.msra.mxu0 %v1361
      %3955 = vmatprep.subr.mxu0 0.0
      %3956 = vmatpush1.msra.mxu0 %v1362
      %3957 = vmatprep.subr.mxu0 0.0
      %3958 = vmatpush1.msra.mxu0 %v1363
      %3959 = vmatprep.subr.mxu0 0.0
      %3960 = vmatpush1.msra.mxu0 0.0
      %3961 = vmatprep.subr.mxu0 0.0
      %3962 = vmatpush1.msra.mxu0 0.0
      %3963 = vmatprep.subr.mxu0 0.0
      %3964 = vmatpush1.msra.mxu0 0.0
      %3965 = vmatprep.subr.mxu0 0.0
      %3966 = vmatpush1.msra.mxu0 0.0
      %3967 = vmatprep.subr.mxu0 0.0
      %3968 = vmatpush1.msra.mxu0 0.0
      %3969 = vmatprep.subr.mxu0 0.0
      %3970 = vmatpush1.msra.mxu0 0.0
      %3971 = vmatprep.subr.mxu0 0.0
      %3972 = vmatpush1.msra.mxu0 0.0
      %3973 = vmatprep.subr.mxu0 0.0
      %3974 = vmatpush1.msra.mxu0 0.0
      %3975 = vmatprep.subr.mxu0 0.0
      %3976 = vmatpush1.msra.mxu0 0.0
      %3977 = vmatprep.subr.mxu0 0.0
      %3978 = vmatpush1.msra.mxu0 0.0
      %3979 = vmatprep.subr.mxu0 0.0
      %3980 = vmatpush1.msra.mxu0 0.0
      %3981 = vmatprep.subr.mxu0 0.0
      %3982 = vmatpush1.msra.mxu0 0.0
      %3983 = vmatprep.subr.mxu0 0.0
      %3984 = vmatpush1.msra.mxu0 0.0
      %3985 = vmatprep.subr.mxu0 0.0
      %3986 = vmatpush1.msra.mxu0 0.0
      %3987 = vmatprep.subr.mxu0 0.0
      %3988 = vmatpush1.msra.mxu0 0.0
      %3989 = vmatprep.subr.mxu0 0.0
      %3990 = vmatpush1.msra.mxu0 0.0
      %3991 = vmatprep.mubr.f32.mxu0 0.0
      %3992 = vmatmul.mubr.f32.gmra.mrb[0].mxu0 %v3838
      %v3993 = vpop.f32.mrb[0].mxu0
      %v3994 = vadd.f32 0.0, %v3993
      %v3995 = vpop.f32.mrb[0].mxu0
      %3996 = vdwg.mxu0
      %v3997 = vadd.f32 %v3847, %v3994
      %v3998 = vxor.u32 %v3997, 2147483648
      %v3999 = vmul.f32 %v3998, 1.442695
      %v4000 = vpow.pop %v3999
      %v4001 = vadd.f32 %v4000, 1.0
      %v4002 = vrcp.pop %v4001
      %v4003 = vmul.f32 1.0, %v4002
      %4004 = vmatprep.subr.mxu0 0.0
      %4005 = vmatpush1.msra.mxu0 %v1365
      %4006 = vmatprep.subr.mxu0 0.0
      %4007 = vmatpush1.msra.mxu0 %v1366
      %4008 = vmatprep.subr.mxu0 0.0
      %4009 = vmatpush1.msra.mxu0 %v1367
      %4010 = vmatprep.subr.mxu0 0.0
      %4011 = vmatpush1.msra.mxu0 %v1368
      %4012 = vmatprep.subr.mxu0 0.0
      %4013 = vmatpush1.msra.mxu0 %v1369
      %4014 = vmatprep.subr.mxu0 0.0
      %4015 = vmatpush1.msra.mxu0 %v1370
      %4016 = vmatprep.subr.mxu0 0.0
      %4017 = vmatpush1.msra.mxu0 %v1371
      %4018 = vmatprep.subr.mxu0 0.0
      %4019 = vmatpush1.msra.mxu0 %v1372
      %4020 = vmatprep.subr.mxu0 0.0
      %4021 = vmatpush1.msra.mxu0 %v1373
      %4022 = vmatprep.subr.mxu0 0.0
      %4023 = vmatpush1.msra.mxu0 %v1374
      %4024 = vmatprep.subr.mxu0 0.0
      %4025 = vmatpush1.msra.mxu0 %v1375
      %4026 = vmatprep.subr.mxu0 0.0
      %4027 = vmatpush1.msra.mxu0 %v1376
      %4028 = vmatprep.subr.mxu0 0.0
      %4029 = vmatpush1.msra.mxu0 %v1377
      %4030 = vmatprep.subr.mxu0 0.0
      %4031 = vmatpush1.msra.mxu0 %v1378
      %4032 = vmatprep.subr.mxu0 0.0
      %4033 = vmatpush1.msra.mxu0 %v1379
      %4034 = vmatprep.subr.mxu0 0.0
      %4035 = vmatpush1.msra.mxu0 %v1380
      %4036 = vmatprep.subr.mxu0 0.0
      %4037 = vmatpush1.msra.mxu0 0.0
      %4038 = vmatprep.subr.mxu0 0.0
      %4039 = vmatpush1.msra.mxu0 0.0
      %4040 = vmatprep.subr.mxu0 0.0
      %4041 = vmatpush1.msra.mxu0 0.0
      %4042 = vmatprep.subr.mxu0 0.0
      %4043 = vmatpush1.msra.mxu0 0.0
      %4044 = vmatprep.subr.mxu0 0.0
      %4045 = vmatpush1.msra.mxu0 0.0
      %4046 = vmatprep.subr.mxu0 0.0
      %4047 = vmatpush1.msra.mxu0 0.0
      %4048 = vmatprep.subr.mxu0 0.0
      %4049 = vmatpush1.msra.mxu0 0.0
      %4050 = vmatprep.subr.mxu0 0.0
      %4051 = vmatpush1.msra.mxu0 0.0
      %4052 = vmatprep.subr.mxu0 0.0
      %4053 = vmatpush1.msra.mxu0 0.0
      %4054 = vmatprep.subr.mxu0 0.0
      %4055 = vmatpush1.msra.mxu0 0.0
      %4056 = vmatprep.subr.mxu0 0.0
      %4057 = vmatpush1.msra.mxu0 0.0
      %4058 = vmatprep.subr.mxu0 0.0
      %4059 = vmatpush1.msra.mxu0 0.0
      %4060 = vmatprep.subr.mxu0 0.0
      %4061 = vmatpush1.msra.mxu0 0.0
      %4062 = vmatprep.subr.mxu0 0.0
      %4063 = vmatpush1.msra.mxu0 0.0
      %4064 = vmatprep.subr.mxu0 0.0
      %4065 = vmatpush1.msra.mxu0 0.0
      %4066 = vmatprep.subr.mxu0 0.0
      %4067 = vmatpush1.msra.mxu0 0.0
      %4068 = vmatprep.mubr.f32.mxu0 0.0
      %4069 = vmatmul.mubr.f32.gmra.mrb[0].mxu0 %v3838
      %v4070 = vpop.f32.mrb[0].mxu0
      %v4071 = vadd.f32 %v1391, %v4070
      %v4072 = vpop.f32.mrb[0].mxu0
      %4073 = vdwg.mxu0
      %v4074 = vmul.f32 %v3926, %v4071
      %v4075 = vadd.f32 %v3849, %v4074
      %v4076 = vtanh.pop %v4075
      %v4077 = vsub.f32 1.0, %v4003
      %v4078 = vmul.f32 %v4077, %v4076
      %v4079 = vmul.f32 %v4003, %v3838
      %v4080 = vadd.f32 %v4078, %v4079
      %v4081 = vstv %s3842
      %vm4082 = vcmp.lt.s32.totalorder %v4081, %v1384
      %v4083 = vsel %vm4082, %v4080, %v3838
      %v4084 = vsel %vm4082, %v4080, 0.0
      %s4085 = scalar_lea.vmem %s305, %s3843
      %4086 = vst [vmem:[%s4085] sm:$0xff] %v4084
      %s4087 = scalar_select %p306, 0, 11
      %s4088 = smul.u32 %s4087, 8
      %s4089 = scalar_lea.vmem [#allocation2], %s4088
      %v4090 = vld [vmem:[%s4089] sm:$0xff]
      %s4091 = scalar_lea.vmem [#allocation3], %s4088
      %v4092 = vld [vmem:[%s4091] sm:$0xff]
      %s4093 = scalar_lea.vmem [#allocation4], %s4088
      %v4094 = vld [vmem:[%s4093] sm:$0xff]
      %4095 = vmatprep.subr.mxu0 0.0
      %4096 = vmatpush1.msra.mxu0 %v1331
      %4097 = vmatprep.subr.mxu0 0.0
      %4098 = vmatpush1.msra.mxu0 %v1332
      %4099 = vmatprep.subr.mxu0 0.0
      %4100 = vmatpush1.msra.mxu0 %v1333
      %4101 = vmatprep.subr.mxu0 0.0
      %4102 = vmatpush1.msra.mxu0 %v1334
      %4103 = vmatprep.subr.mxu0 0.0
      %4104 = vmatpush1.msra.mxu0 %v1335
      %4105 = vmatprep.subr.mxu0 0.0
      %4106 = vmatpush1.msra.mxu0 %v1336
      %4107 = vmatprep.subr.mxu0 0.0
      %4108 = vmatpush1.msra.mxu0 %v1337
      %4109 = vmatprep.subr.mxu0 0.0
      %4110 = vmatpush1.msra.mxu0 %v1338
      %4111 = vmatprep.subr.mxu0 0.0
      %4112 = vmatpush1.msra.mxu0 %v1339
      %4113 = vmatprep.subr.mxu0 0.0
      %4114 = vmatpush1.msra.mxu0 %v1340
      %4115 = vmatprep.subr.mxu0 0.0
      %4116 = vmatpush1.msra.mxu0 %v1341
      %4117 = vmatprep.subr.mxu0 0.0
      %4118 = vmatpush1.msra.mxu0 %v1342
      %4119 = vmatprep.subr.mxu0 0.0
      %4120 = vmatpush1.msra.mxu0 %v1343
      %4121 = vmatprep.subr.mxu0 0.0
      %4122 = vmatpush1.msra.mxu0 %v1344
      %4123 = vmatprep.subr.mxu0 0.0
      %4124 = vmatpush1.msra.mxu0 %v1345
      %4125 = vmatprep.subr.mxu0 0.0
      %4126 = vmatpush1.msra.mxu0 %v1346
      %4127 = vmatprep.subr.mxu0 0.0
      %4128 = vmatpush1.msra.mxu0 0.0
      %4129 = vmatprep.subr.mxu0 0.0
      %4130 = vmatpush1.msra.mxu0 0.0
      %4131 = vmatprep.subr.mxu0 0.0
      %4132 = vmatpush1.msra.mxu0 0.0
      %4133 = vmatprep.subr.mxu0 0.0
      %4134 = vmatpush1.msra.mxu0 0.0
      %4135 = vmatprep.subr.mxu0 0.0
      %4136 = vmatpush1.msra.mxu0 0.0
      %4137 = vmatprep.subr.mxu0 0.0
      %4138 = vmatpush1.msra.mxu0 0.0
      %4139 = vmatprep.subr.mxu0 0.0
      %4140 = vmatpush1.msra.mxu0 0.0
      %4141 = vmatprep.subr.mxu0 0.0
      %4142 = vmatpush1.msra.mxu0 0.0
      %4143 = vmatprep.subr.mxu0 0.0
      %4144 = vmatpush1.msra.mxu0 0.0
      %4145 = vmatprep.subr.mxu0 0.0
      %4146 = vmatpush1.msra.mxu0 0.0
      %4147 = vmatprep.subr.mxu0 0.0
      %4148 = vmatpush1.msra.mxu0 0.0
      %4149 = vmatprep.subr.mxu0 0.0
      %4150 = vmatpush1.msra.mxu0 0.0
      %4151 = vmatprep.subr.mxu0 0.0
      %4152 = vmatpush1.msra.mxu0 0.0
      %4153 = vmatprep.subr.mxu0 0.0
      %4154 = vmatpush1.msra.mxu0 0.0
      %4155 = vmatprep.subr.mxu0 0.0
      %4156 = vmatpush1.msra.mxu0 0.0
      %4157 = vmatprep.subr.mxu0 0.0
      %4158 = vmatpush1.msra.mxu0 0.0
      %4159 = vmatprep.mubr.f32.mxu0 0.0
      %4160 = vmatmul.mubr.f32.gmra.mrb[0].mxu0 %v4083
      %v4161 = vpop.f32.mrb[0].mxu0
      %v4162 = vadd.f32 0.0, %v4161
      %v4163 = vpop.f32.mrb[0].mxu0
      %4164 = vdwg.mxu0
      %v4165 = vadd.f32 %v4090, %v4162
      %v4166 = vxor.u32 %v4165, 2147483648
      %v4167 = vmul.f32 %v4166, 1.442695
      %v4168 = vpow.pop %v4167
      %v4169 = vadd.f32 %v4168, 1.0
      %v4170 = vrcp.pop %v4169
      %v4171 = vmul.f32 1.0, %v4170
      %4172 = vmatprep.subr.mxu0 0.0
      %4173 = vmatpush1.msra.mxu0 %v1348
      %4174 = vmatprep.subr.mxu0 0.0
      %4175 = vmatpush1.msra.mxu0 %v1349
      %4176 = vmatprep.subr.mxu0 0.0
      %4177 = vmatpush1.msra.mxu0 %v1350
      %4178 = vmatprep.subr.mxu0 0.0
      %4179 = vmatpush1.msra.mxu0 %v1351
      %4180 = vmatprep.subr.mxu0 0.0
      %4181 = vmatpush1.msra.mxu0 %v1352
      %4182 = vmatprep.subr.mxu0 0.0
      %4183 = vmatpush1.msra.mxu0 %v1353
      %4184 = vmatprep.subr.mxu0 0.0
      %4185 = vmatpush1.msra.mxu0 %v1354
      %4186 = vmatprep.subr.mxu0 0.0
      %4187 = vmatpush1.msra.mxu0 %v1355
      %4188 = vmatprep.subr.mxu0 0.0
      %4189 = vmatpush1.msra.mxu0 %v1356
      %4190 = vmatprep.subr.mxu0 0.0
      %4191 = vmatpush1.msra.mxu0 %v1357
      %4192 = vmatprep.subr.mxu0 0.0
      %4193 = vmatpush1.msra.mxu0 %v1358
      %4194 = vmatprep.subr.mxu0 0.0
      %4195 = vmatpush1.msra.mxu0 %v1359
      %4196 = vmatprep.subr.mxu0 0.0
      %4197 = vmatpush1.msra.mxu0 %v1360
      %4198 = vmatprep.subr.mxu0 0.0
      %4199 = vmatpush1.msra.mxu0 %v1361
      %4200 = vmatprep.subr.mxu0 0.0
      %4201 = vmatpush1.msra.mxu0 %v1362
      %4202 = vmatprep.subr.mxu0 0.0
      %4203 = vmatpush1.msra.mxu0 %v1363
      %4204 = vmatprep.subr.mxu0 0.0
      %4205 = vmatpush1.msra.mxu0 0.0
      %4206 = vmatprep.subr.mxu0 0.0
      %4207 = vmatpush1.msra.mxu0 0.0
      %4208 = vmatprep.subr.mxu0 0.0
      %4209 = vmatpush1.msra.mxu0 0.0
      %4210 = vmatprep.subr.mxu0 0.0
      %4211 = vmatpush1.msra.mxu0 0.0
      %4212 = vmatprep.subr.mxu0 0.0
      %4213 = vmatpush1.msra.mxu0 0.0
      %4214 = vmatprep.subr.mxu0 0.0
      %4215 = vmatpush1.msra.mxu0 0.0
      %4216 = vmatprep.subr.mxu0 0.0
      %4217 = vmatpush1.msra.mxu0 0.0
      %4218 = vmatprep.subr.mxu0 0.0
      %4219 = vmatpush1.msra.mxu0 0.0
      %4220 = vmatprep.subr.mxu0 0.0
      %4221 = vmatpush1.msra.mxu0 0.0
      %4222 = vmatprep.subr.mxu0 0.0
      %4223 = vmatpush1.msra.mxu0 0.0
      %4224 = vmatprep.subr.mxu0 0.0
      %4225 = vmatpush1.msra.mxu0 0.0
      %4226 = vmatprep.subr.mxu0 0.0
      %4227 = vmatpush1.msra.mxu0 0.0
      %4228 = vmatprep.subr.mxu0 0.0
      %4229 = vmatpush1.msra.mxu0 0.0
      %4230 = vmatprep.subr.mxu0 0.0
      %4231 = vmatpush1.msra.mxu0 0.0
      %4232 = vmatprep.subr.mxu0 0.0
      %4233 = vmatpush1.msra.mxu0 0.0
      %4234 = vmatprep.subr.mxu0 0.0
      %4235 = vmatpush1.msra.mxu0 0.0
      %4236 = vmatprep.mubr.f32.mxu0 0.0
      %4237 = vmatmul.mubr.f32.gmra.mrb[0].mxu0 %v4083
      %v4238 = vpop.f32.mrb[0].mxu0
      %v4239 = vadd.f32 0.0, %v4238
      %v4240 = vpop.f32.mrb[0].mxu0
      %4241 = vdwg.mxu0
      %v4242 = vadd.f32 %v4092, %v4239
      %v4243 = vxor.u32 %v4242, 2147483648
      %v4244 = vmul.f32 %v4243, 1.442695
      %v4245 = vpow.pop %v4244
      %v4246 = vadd.f32 %v4245, 1.0
      %v4247 = vrcp.pop %v4246
      %v4248 = vmul.f32 1.0, %v4247
      %4249 = vmatprep.subr.mxu0 0.0
      %4250 = vmatpush1.msra.mxu0 %v1365
      %4251 = vmatprep.subr.mxu0 0.0
      %4252 = vmatpush1.msra.mxu0 %v1366
      %4253 = vmatprep.subr.mxu0 0.0
      %4254 = vmatpush1.msra.mxu0 %v1367
      %4255 = vmatprep.subr.mxu0 0.0
      %4256 = vmatpush1.msra.mxu0 %v1368
      %4257 = vmatprep.subr.mxu0 0.0
      %4258 = vmatpush1.msra.mxu0 %v1369
      %4259 = vmatprep.subr.mxu0 0.0
      %4260 = vmatpush1.msra.mxu0 %v1370
      %4261 = vmatprep.subr.mxu0 0.0
      %4262 = vmatpush1.msra.mxu0 %v1371
      %4263 = vmatprep.subr.mxu0 0.0
      %4264 = vmatpush1.msra.mxu0 %v1372
      %4265 = vmatprep.subr.mxu0 0.0
      %4266 = vmatpush1.msra.mxu0 %v1373
      %4267 = vmatprep.subr.mxu0 0.0
      %4268 = vmatpush1.msra.mxu0 %v1374
      %4269 = vmatprep.subr.mxu0 0.0
      %4270 = vmatpush1.msra.mxu0 %v1375
      %4271 = vmatprep.subr.mxu0 0.0
      %4272 = vmatpush1.msra.mxu0 %v1376
      %4273 = vmatprep.subr.mxu0 0.0
      %4274 = vmatpush1.msra.mxu0 %v1377
      %4275 = vmatprep.subr.mxu0 0.0
      %4276 = vmatpush1.msra.mxu0 %v1378
      %4277 = vmatprep.subr.mxu0 0.0
      %4278 = vmatpush1.msra.mxu0 %v1379
      %4279 = vmatprep.subr.mxu0 0.0
      %4280 = vmatpush1.msra.mxu0 %v1380
      %4281 = vmatprep.subr.mxu0 0.0
      %4282 = vmatpush1.msra.mxu0 0.0
      %4283 = vmatprep.subr.mxu0 0.0
      %4284 = vmatpush1.msra.mxu0 0.0
      %4285 = vmatprep.subr.mxu0 0.0
      %4286 = vmatpush1.msra.mxu0 0.0
      %4287 = vmatprep.subr.mxu0 0.0
      %4288 = vmatpush1.msra.mxu0 0.0
      %4289 = vmatprep.subr.mxu0 0.0
      %4290 = vmatpush1.msra.mxu0 0.0
      %4291 = vmatprep.subr.mxu0 0.0
      %4292 = vmatpush1.msra.mxu0 0.0
      %4293 = vmatprep.subr.mxu0 0.0
      %4294 = vmatpush1.msra.mxu0 0.0
      %4295 = vmatprep.subr.mxu0 0.0
      %4296 = vmatpush1.msra.mxu0 0.0
      %4297 = vmatprep.subr.mxu0 0.0
      %4298 = vmatpush1.msra.mxu0 0.0
      %4299 = vmatprep.subr.mxu0 0.0
      %4300 = vmatpush1.msra.mxu0 0.0
      %4301 = vmatprep.subr.mxu0 0.0
      %4302 = vmatpush1.msra.mxu0 0.0
      %4303 = vmatprep.subr.mxu0 0.0
      %4304 = vmatpush1.msra.mxu0 0.0
      %4305 = vmatprep.subr.mxu0 0.0
      %4306 = vmatpush1.msra.mxu0 0.0
      %4307 = vmatprep.subr.mxu0 0.0
      %4308 = vmatpush1.msra.mxu0 0.0
      %4309 = vmatprep.subr.mxu0 0.0
      %4310 = vmatpush1.msra.mxu0 0.0
      %4311 = vmatprep.subr.mxu0 0.0
      %4312 = vmatpush1.msra.mxu0 0.0
      %4313 = vmatprep.mubr.f32.mxu0 0.0
      %4314 = vmatmul.mubr.f32.gmra.mrb[0].mxu0 %v4083
      %v4315 = vpop.f32.mrb[0].mxu0
      %v4316 = vadd.f32 %v1391, %v4315
      %v4317 = vpop.f32.mrb[0].mxu0
      %4318 = vdwg.mxu0
      %v4319 = vmul.f32 %v4171, %v4316
      %v4320 = vadd.f32 %v4094, %v4319
      %v4321 = vtanh.pop %v4320
      %v4322 = vsub.f32 1.0, %v4248
      %v4323 = vmul.f32 %v4322, %v4321
      %v4324 = vmul.f32 %v4248, %v4083
      %v4325 = vadd.f32 %v4323, %v4324
      %v4326 = vstv %s4087
      %vm4327 = vcmp.lt.s32.totalorder %v4326, %v1384
      %v4328 = vsel %vm4327, %v4325, 0.0
      %s4329 = scalar_lea.vmem %s305, %s4088
      %4330 = vst [vmem:[%s4329] sm:$0xff] %v4328
      %p4331 = scmp.lt.s32.totalorder %s17, 1
      %s4332 = scalar_select %p4331, %s17, 1
      %s4333 = smul.addr %s4332, 12
      %s4334 = smul.addr %s4333, 8
      %s4335 = scalar_lea.vmem %s6, %s4334
      // Predicated region
      $region45: #{bigru_forward.4} parent=43 // pred_check
        %p4336 = pneg %p181
      $region46: #{bigru_forward.4} parent=43 // pred_check_branch
        %4338 = sbr.rel (%p4336) target = $region48
      $region47: #{bigru_forward.4} parent=43 // pred_region
        _
      $region48: #{bigru_forward.4} parent=43 // pred_fallthru
        _
    $region44: #{bigru_forward.4} parent=5 // pred_fallthru
      _
    %p4339 = scmp.le.s32.totalorder 2, %s12
    // Predicated region
    $region49: #{bigru_forward.4} parent=5 // pred_check
      %p4340 = pneg %p4339
    $region50: #{bigru_forward.4} parent=5 // pred_check_branch
      %4342 = sbr.rel (%p4340) target = $region52
    $region51: #{bigru_forward.4} parent=5 // pred_region
      %s4343 = ssub.s32 %s12, 2
      // Predicated region
      $region53: #{bigru_forward.4} parent=51 // pred_check
        %p4344 = pneg %p187
      $region54: #{bigru_forward.4} parent=51 // pred_check_branch
        %4346 = sbr.rel (%p4344) target = $region56
      $region55: #{bigru_forward.4} parent=51 // pred_region
        %p4347 = scmp.lt.s32.totalorder %s18, 1
        %s4348 = scalar_select %p4347, %s18, 1
        %s4349 = smul.addr %s4348, 12
        %s4350 = smul.addr %s4349, 8
        %s4351 = scalar_lea.vmem %s6, %s4350
      $region56: #{bigru_forward.4} parent=51 // pred_fallthru
        _
    $region52: #{bigru_forward.4} parent=5 // pred_fallthru
      _
  $region6: #{bigru_forward.4} parent=0 // loop_footer
    %s16 = sadd.s32 1, %s12
  $region7: #{bigru_forward.4} parent=0 // loop_footer_branch
    %11 = sbr.rel target = $region3
  $region8: #{bigru_forward.4} parent=0 // loop_exit
    _

</llo_original>
